<compile_context>
chip_gen: v7x
topology: tpu7x:2x2x1
jax: 0.10.0
libtpu: 0.0.40
codegen_flags: <defaults>
</compile_context>

<pallas_src>
import functools
import math

import jax
import jax.numpy as jnp
from jax.experimental import pallas as pl
from jax.experimental.pallas import tpu as pltpu

BN_EPS = 1e-5

_VMEM = pl.BlockSpec(memory_space=pltpu.MemorySpace.VMEM)


def _round_up(v, m):
    return ((v + m - 1) // m) * m


# ----------------------------------------------------------------------------
# Pallas kernels (gridless: one program per call, whole operands live in VMEM)
# ----------------------------------------------------------------------------
def _grouped_linear_max_relu(xg_ref, np_ref, w_ref, shift_ref, acc_ref, nsample):
    """relu(max_k(Linear([rel_xyz_k || feat_k])) + bn_shift) for one stage.

    xg_ref:    (nsample*G, cin_pad) bf16 -- gathered [abs_xyz || feat || 0-pad]
    np_ref:    (G, cin_pad)         bf16 -- sampled centers, xyz in cols 0..2
    w_ref:     (cin_pad, cout)      bf16 -- Linear weight with BN scale folded in
    shift_ref: (1, cout)            f32  -- folded BN shift
    acc_ref:   (nsample*G, cout)    f32 VMEM scratch for the single MXU pass

    The absolute->relative xyz shift is applied after the matmul via linearity:
        (xg_k - [new_p, 0]) @ W == xg_k @ W - new_p_pad @ W
    so the per-group correction is one tiny extra matmul instead of nsample
    subtractions, and only ONE neighbour gather is needed host-side.  The bias
    and ReLU commute with the neighbour max (bias constant over k, relu monotone).
    """
    g = np_ref.shape[0]
    w = w_ref[...]
    # One MXU pass over all nsample*G rows (instead of nsample small matmuls).
    acc_ref[...] = jnp.dot(xg_ref[...], w, preferred_element_type=jnp.float32)
    bias = shift_ref[...] - jnp.dot(np_ref[...], w, preferred_element_type=jnp.float32)
    m = acc_ref[0:g, :]
    for k in range(1, nsample):                       # VPU max over neighbours
        m = jnp.maximum(m, acc_ref[k * g:(k + 1) * g, :])
    return jnp.maximum(m + bias, 0.0)                 # (G, cout) f32


def _stage_kernel(xg_ref, np_ref, w_ref, shift_ref, o_ref, acc_ref, *, nsample):
    o_ref[...] = _grouped_linear_max_relu(
        xg_ref, np_ref, w_ref, shift_ref, acc_ref, nsample).astype(o_ref.dtype)


def _final_kernel(xg_ref, np_ref, w_ref, shift_ref,
                  w1_ref, b1_ref, w2_ref, b2_ref, w3_ref, b3_ref,
                  o_ref, acc_ref, *, nsample, batch):
    """Last TransitionDown + adaptive_max_pool1d + 3-layer classifier, one kernel."""
    feats = _grouped_linear_max_relu(
        xg_ref, np_ref, w_ref, shift_ref, acc_ref, nsample)          # (B*M, emb) f32
    g, emb = feats.shape
    pooled = jnp.max(feats.reshape(batch, g // batch, emb), axis=1)  # (B, emb)
    h = jnp.dot(pooled, w1_ref[...], preferred_element_type=jnp.float32) + b1_ref[...]
    h = jnp.maximum(h, 0.0)
    h = jnp.dot(h, w2_ref[...], preferred_element_type=jnp.float32) + b2_ref[...]
    h = jnp.maximum(h, 0.0)
    o_ref[...] = (jnp.dot(h, w3_ref[...], preferred_element_type=jnp.float32)
                  + b3_ref[...]).astype(o_ref.dtype)


# ----------------------------------------------------------------------------
# Pallas wrappers
# ----------------------------------------------------------------------------
def fused_transition_down(xg, np_pad, w_pad, shift, *, nsample):
    rows, _ = xg.shape
    g = np_pad.shape[0]
    cout = w_pad.shape[1]
    return pl.pallas_call(
        functools.partial(_stage_kernel, nsample=nsample),
        out_shape=jax.ShapeDtypeStruct((g, cout), jnp.bfloat16),
        in_specs=[_VMEM] * 4,
        out_specs=_VMEM,
        scratch_shapes=[pltpu.VMEM((rows, cout), jnp.float32)],
    )(xg, np_pad, w_pad, shift)


def fused_final_stage(xg, np_pad, w_pad, shift, cls, *, nsample, batch):
    rows, _ = xg.shape
    cout = w_pad.shape[1]
    k = cls["w3"].shape[1]
    return pl.pallas_call(
        functools.partial(_final_kernel, nsample=nsample, batch=batch),
        out_shape=jax.ShapeDtypeStruct((batch, k), jnp.float32),
        in_specs=[_VMEM] * 10,
        out_specs=_VMEM,
        scratch_shapes=[pltpu.VMEM((rows, cout), jnp.float32)],
    )(xg, np_pad, w_pad, shift,
      cls["w1"], cls["b1"], cls["w2"], cls["b2"], cls["w3"], cls["b3"])


# ----------------------------------------------------------------------------
# Plain-JAX glue (data-dependent sampling / grouping)
# ----------------------------------------------------------------------------
# TODO(synk): pointops.furthestsampling / knnquery are sequential, data-dependent
# selection ops; kept as plain-JAX glue (fori_loop FPS + lax.top_k) rather than
# Pallas.  One pairwise-distance matrix per stage is shared by FPS and kNN.
def _farthest_point_sample(d2, m):
    """FPS from precomputed pairwise sq-distances, start at index 0 (matches pointops)."""
    _, N, _ = d2.shape

    def one(db):
        def body(i, carry):
            idxs, dist, last = carry
            dist = jnp.minimum(dist, db[last])
            nxt = jnp.argmax(dist).astype(jnp.int32)
            return idxs.at[i].set(nxt), dist, nxt

        init = (jnp.zeros((m,), jnp.int32),
                jnp.full((N,), jnp.inf, jnp.float32),
                jnp.int32(0))
        idxs, _, _ = jax.lax.fori_loop(1, m, body, init)
        return idxs

    return jax.vmap(one)(d2)


def _grouped_stage_inputs(p, x, cin_pad, *, stride, nsample):
    """FPS + kNN + ONE [xyz||feat] neighbour gather, in kernel-ready layout."""
    B, N, C = x.shape
    M = N // stride
    G = B * M

    # One pairwise-distance matrix per stage, shared by FPS and kNN.
    d2 = jnp.sum((p[:, :, None, :] - p[:, None, :, :]) ** 2, axis=-1)   # (B,N,N)
    idx = _farthest_point_sample(d2, M)                                 # (B,M)
    gather_rows = jax.vmap(lambda a, i: a[i])                           # per batch
    new_p = gather_rows(p, idx)                                         # (B,M,3)
    d_knn = gather_rows(d2, idx)                                        # (B,M,N)
    _, nidx = jax.lax.top_k(-d_knn, nsample)                            # (B,M,ns)

    # [abs_xyz || feat || 0-pad] slab, built once per stage, gathered once.
    parts = [p.astype(jnp.bfloat16), x.astype(jnp.bfloat16)]
    pad_c = cin_pad - 3 - C
    if pad_c:
        parts.append(jnp.zeros((B, N, pad_c), jnp.bfloat16))
    px = jnp.concatenate(parts, axis=-1)                                # (B,N,cin_pad)

    nidx_t = jnp.transpose(nidx, (2, 0, 1))                             # (ns,B,M)
    xg = jax.vmap(lambda i: gather_rows(px, i))(nidx_t)                 # (ns,B,M,cin_pad)
    xg = xg.reshape(nsample * G, cin_pad)                               # kernel layout

    np_pad = jnp.pad(new_p.reshape(G, 3).astype(jnp.bfloat16),
                     ((0, 0), (0, cin_pad - 3)))                        # (G,cin_pad)
    return new_p, xg, np_pad


# ----------------------------------------------------------------------------
# Model
# ----------------------------------------------------------------------------
def init_params(key, c=3, planes=(8, 16, 32, 64, 128), k=40, strides=(1, 2, 2, 2, 2)):
    """Random weights matching a fresh PointTransformerClsNet in eval mode.

    Eval-mode BatchNorm (mean=0, var=1, gamma=1, beta=0) is folded into the
    weights/shifts here (hoisted out of the traced forward), and the grouped
    Linear weights are zero-padded to cin_pad (multiple of 16 for bf16 packing).
    """
    keys = jax.random.split(key, 11)
    s = 1.0 / math.sqrt(1.0 + BN_EPS)

    enc = []
    in_p = c
    for i, out_p in enumerate(planes):
        cin = in_p if strides[i] == 1 else 3 + in_p
        w = jax.random.normal(keys[i], (cin, out_p), jnp.float32) / math.sqrt(cin)
        w = w * s                                        # fold BN scale
        shift = jnp.zeros((1, out_p), jnp.float32)       # Linear(bias=False), BN beta=0
        if strides[i] == 1:
            enc.append(dict(w=w, shift=shift))
        else:
            cin_pad = _round_up(cin, 16)
            w_pad = jnp.zeros((cin_pad, out_p), jnp.float32).at[:cin].set(w)
            enc.append(dict(w=w_pad.astype(jnp.bfloat16), shift=shift))
        in_p = out_p

    emb = planes[-1]
    w1 = jax.random.normal(keys[5], (emb, emb), jnp.float32) / math.sqrt(emb)
    b1 = 0.01 * jax.random.normal(keys[6], (emb,), jnp.float32)
    w2 = jax.random.normal(keys[7], (emb, emb // 2), jnp.float32) / math.sqrt(emb)
    b2 = 0.01 * jax.random.normal(keys[8], (emb // 2,), jnp.float32)
    w3 = jax.random.normal(keys[9], (emb // 2, k), jnp.float32) / math.sqrt(emb // 2)
    b3 = 0.01 * jax.random.normal(keys[10], (k,), jnp.float32)
    cls = dict(w1=w1 * s, b1=(b1 * s).reshape(1, -1),     # Linear+BN folded
               w2=w2 * s, b2=(b2 * s).reshape(1, -1),
               w3=w3, b3=b3.reshape(1, -1))               # final Linear
    return dict(enc=enc, cls=cls)


def point_transformer_cls_forward(params, pcd, *, strides, nsamples):
    B, C, N = pcd.shape
    assert C == 3
    assert strides[0] == 1 and all(st > 1 for st in strides[1:])
    p = jnp.transpose(pcd, (0, 2, 1)).astype(jnp.float32)       # (B,N,3)
    x = p                                                       # x0 = p0

    # enc1 (stride=1): tiny Linear+BN+ReLU -- plain jnp, XLA fuses it into the glue.
    s0 = params["enc"][0]
    x = jnp.maximum(jnp.dot(x, s0["w"]) + s0["shift"], 0.0)     # (B,N,planes0)

    # enc2..enc4: one fused Pallas kernel per TransitionDown.
    for st, stride, ns in zip(params["enc"][1:-1], strides[1:-1], nsamples[1:-1]):
        cin_pad = st["w"].shape[0]
        new_p, xg, np_pad = _grouped_stage_inputs(p, x, cin_pad,
                                                  stride=stride, nsample=ns)
        y = fused_transition_down(xg, np_pad, st["w"], st["shift"], nsample=ns)
        p, x = new_p, y.reshape(B, new_p.shape[1], -1)

    # enc5 + adaptive_max_pool1d + classifier MLP fused into ONE kernel.
    # Dropout(0.5) is the eval-mode identity (folded away).
    st = params["enc"][-1]
    cin_pad = st["w"].shape[0]
    _, xg, np_pad = _grouped_stage_inputs(p, x, cin_pad,
                                          stride=strides[-1], nsample=nsamples[-1])
    logits = fused_final_stage(xg, np_pad, st["w"], st["shift"], params["cls"],
                               nsample=nsamples[-1], batch=B)
    return logits                                               # (B, k)


if __name__ == "__main__":
    key = jax.random.PRNGKey(0)
    pkey, wkey = jax.random.split(key)

    B, N, K = 2, 128, 40
    planes = (8, 16, 32, 64, 128)
    strides = (1, 2, 2, 2, 2)
    nsamples = (16, 16, 16, 16, 16)
    # blocks = (1, 1, 1, 1, 1): Bottleneck transformer blocks are only built
    # when blocks[i] > 1, so each encoder stage is exactly one TransitionDown.

    params = init_params(wkey, c=3, planes=planes, k=K, strides=strides)
    pcd = jax.random.normal(pkey, (B, 3, N), jnp.float32)       # PyTorch input (B, 3, N)

    fwd = jax.jit(functools.partial(point_transformer_cls_forward,
                                    strides=strides, nsamples=nsamples))
    logits = jax.block_until_ready(fwd(params, pcd))
    assert logits.shape == (B, K)
    assert bool(jnp.all(jnp.isfinite(logits)))
    print("KERNEL_OK")
</pallas_src>

<mosaic_0001>
module attributes {stable_mosaic.version = 11 : i64} {
  func.func @_stage_kernel(%arg0: memref<2048x16xbf16, #tpu.memory_space<vmem>>, %arg1: memref<128x16xbf16, #tpu.memory_space<vmem>>, %arg2: memref<16x16xbf16, #tpu.memory_space<vmem>>, %arg3: memref<1x16xf32, #tpu.memory_space<vmem>>, %arg4: memref<128x16xbf16, #tpu.memory_space<vmem>>, %arg5: memref<2048x16xf32, #tpu.memory_space<vmem>>) attributes {dimension_semantics = [], scalar_prefetch = 0 : i64, scratch_operands = 1 : i64, tpu.core_type = #tpu.core_type<tc>} {
    %c0 = arith.constant 0 : index
    %c0_0 = arith.constant 0 : index
    %0 = vector.load %arg2[%c0, %c0_0] : memref<16x16xbf16, #tpu.memory_space<vmem>>, vector<16x16xbf16>
    %c0_1 = arith.constant 0 : index
    %c0_2 = arith.constant 0 : index
    %1 = vector.load %arg0[%c0_1, %c0_2] : memref<2048x16xbf16, #tpu.memory_space<vmem>>, vector<2048x16xbf16>
    %cst = arith.constant dense<0.000000e+00> : vector<2048x16xf32>
    %2 = tpu.matmul %1, %0, %cst {dimension_numbers = #tpu.dot_dimension_numbers<[1], [0], [0], [1], [0, 0, 1, 1], [], []>} : vector<2048x16xbf16>, vector<16x16xbf16>, vector<2048x16xf32> -> vector<2048x16xf32>
    %c0_3 = arith.constant 0 : index
    %c0_4 = arith.constant 0 : index
    %3 = vector.load %arg5[%c0_3, %c0_4] : memref<2048x16xf32, #tpu.memory_space<vmem>>, vector<2048x16xf32>
    tpu.vector_store %arg5[%c0_3, %c0_4], %2 {strides = array<i32>} : memref<2048x16xf32, #tpu.memory_space<vmem>>, vector<2048x16xf32>,
    %c0_5 = arith.constant 0 : index
    %c0_6 = arith.constant 0 : index
    %4 = vector.load %arg3[%c0_5, %c0_6] : memref<1x16xf32, #tpu.memory_space<vmem>>, vector<1x16xf32>
    %c0_7 = arith.constant 0 : index
    %c0_8 = arith.constant 0 : index
    %5 = vector.load %arg1[%c0_7, %c0_8] : memref<128x16xbf16, #tpu.memory_space<vmem>>, vector<128x16xbf16>
    %cst_9 = arith.constant dense<0.000000e+00> : vector<128x16xf32>
    %6 = tpu.matmul %5, %0, %cst_9 {dimension_numbers = #tpu.dot_dimension_numbers<[1], [0], [0], [1], [0, 0, 1, 1], [], []>} : vector<128x16xbf16>, vector<16x16xbf16>, vector<128x16xf32> -> vector<128x16xf32>
    %7 = vector.broadcast %4 : vector<1x16xf32> to vector<128x16xf32>
    %8 = arith.subf %7, %6 : vector<128x16xf32>
    %c0_10 = arith.constant 0 : index
    %c0_11 = arith.constant 0 : index
    %9 = vector.load %arg5[%c0_10, %c0_11] : memref<2048x16xf32, #tpu.memory_space<vmem>>, vector<128x16xf32>
    %c128 = arith.constant 128 : index
    %c0_12 = arith.constant 0 : index
    %10 = vector.load %arg5[%c128, %c0_12] : memref<2048x16xf32, #tpu.memory_space<vmem>>, vector<128x16xf32>
    %11 = arith.maximumf %9, %10 : vector<128x16xf32>
    %c256 = arith.constant 256 : index
    %c0_13 = arith.constant 0 : index
    %12 = vector.load %arg5[%c256, %c0_13] : memref<2048x16xf32, #tpu.memory_space<vmem>>, vector<128x16xf32>
    %13 = arith.maximumf %11, %12 : vector<128x16xf32>
    %c384 = arith.constant 384 : index
    %c0_14 = arith.constant 0 : index
    %14 = vector.load %arg5[%c384, %c0_14] : memref<2048x16xf32, #tpu.memory_space<vmem>>, vector<128x16xf32>
    %15 = arith.maximumf %13, %14 : vector<128x16xf32>
    %c512 = arith.constant 512 : index
    %c0_15 = arith.constant 0 : index
    %16 = vector.load %arg5[%c512, %c0_15] : memref<2048x16xf32, #tpu.memory_space<vmem>>, vector<128x16xf32>
    %17 = arith.maximumf %15, %16 : vector<128x16xf32>
    %c640 = arith.constant 640 : index
    %c0_16 = arith.constant 0 : index
    %18 = vector.load %arg5[%c640, %c0_16] : memref<2048x16xf32, #tpu.memory_space<vmem>>, vector<128x16xf32>
    %19 = arith.maximumf %17, %18 : vector<128x16xf32>
    %c768 = arith.constant 768 : index
    %c0_17 = arith.constant 0 : index
    %20 = vector.load %arg5[%c768, %c0_17] : memref<2048x16xf32, #tpu.memory_space<vmem>>, vector<128x16xf32>
    %21 = arith.maximumf %19, %20 : vector<128x16xf32>
    %c896 = arith.constant 896 : index
    %c0_18 = arith.constant 0 : index
    %22 = vector.load %arg5[%c896, %c0_18] : memref<2048x16xf32, #tpu.memory_space<vmem>>, vector<128x16xf32>
    %23 = arith.maximumf %21, %22 : vector<128x16xf32>
    %c1024 = arith.constant 1024 : index
    %c0_19 = arith.constant 0 : index
    %24 = vector.load %arg5[%c1024, %c0_19] : memref<2048x16xf32, #tpu.memory_space<vmem>>, vector<128x16xf32>
    %25 = arith.maximumf %23, %24 : vector<128x16xf32>
    %c1152 = arith.constant 1152 : index
    %c0_20 = arith.constant 0 : index
    %26 = vector.load %arg5[%c1152, %c0_20] : memref<2048x16xf32, #tpu.memory_space<vmem>>, vector<128x16xf32>
    %27 = arith.maximumf %25, %26 : vector<128x16xf32>
    %c1280 = arith.constant 1280 : index
    %c0_21 = arith.constant 0 : index
    %28 = vector.load %arg5[%c1280, %c0_21] : memref<2048x16xf32, #tpu.memory_space<vmem>>, vector<128x16xf32>
    %29 = arith.maximumf %27, %28 : vector<128x16xf32>
    %c1408 = arith.constant 1408 : index
    %c0_22 = arith.constant 0 : index
    %30 = vector.load %arg5[%c1408, %c0_22] : memref<2048x16xf32, #tpu.memory_space<vmem>>, vector<128x16xf32>
    %31 = arith.maximumf %29, %30 : vector<128x16xf32>
    %c1536 = arith.constant 1536 : index
    %c0_23 = arith.constant 0 : index
    %32 = vector.load %arg5[%c1536, %c0_23] : memref<2048x16xf32, #tpu.memory_space<vmem>>, vector<128x16xf32>
    %33 = arith.maximumf %31, %32 : vector<128x16xf32>
    %c1664 = arith.constant 1664 : index
    %c0_24 = arith.constant 0 : index
    %34 = vector.load %arg5[%c1664, %c0_24] : memref<2048x16xf32, #tpu.memory_space<vmem>>, vector<128x16xf32>
    %35 = arith.maximumf %33, %34 : vector<128x16xf32>
    %c1792 = arith.constant 1792 : index
    %c0_25 = arith.constant 0 : index
    %36 = vector.load %arg5[%c1792, %c0_25] : memref<2048x16xf32, #tpu.memory_space<vmem>>, vector<128x16xf32>
    %37 = arith.maximumf %35, %36 : vector<128x16xf32>
    %c1920 = arith.constant 1920 : index
    %c0_26 = arith.constant 0 : index
    %38 = vector.load %arg5[%c1920, %c0_26] : memref<2048x16xf32, #tpu.memory_space<vmem>>, vector<128x16xf32>
    %39 = arith.maximumf %37, %38 : vector<128x16xf32>
    %40 = arith.addf %39, %8 : vector<128x16xf32>
    %cst_27 = arith.constant 0.000000e+00 : f32
    %41 = vector.broadcast %cst_27 : f32 to vector<128x16xf32>
    %42 = arith.maximumf %40, %41 : vector<128x16xf32>
    %43 = arith.truncf %42 : vector<128x16xf32> to vector<128x16xbf16>
    %c0_28 = arith.constant 0 : index
    %c0_29 = arith.constant 0 : index
    %44 = vector.load %arg4[%c0_28, %c0_29] : memref<128x16xbf16, #tpu.memory_space<vmem>>, vector<128x16xbf16>
    tpu.vector_store %arg4[%c0_28, %c0_29], %43 {strides = array<i32>} : memref<128x16xbf16, #tpu.memory_space<vmem>>, vector<128x16xbf16>,
    return
  }
}

module attributes {stable_mosaic.version = 11 : i64} {
  func.func @_stage_kernel(%arg0: memref<1024x32xbf16, #tpu.memory_space<vmem>>, %arg1: memref<64x32xbf16, #tpu.memory_space<vmem>>, %arg2: memref<32x32xbf16, #tpu.memory_space<vmem>>, %arg3: memref<1x32xf32, #tpu.memory_space<vmem>>, %arg4: memref<64x32xbf16, #tpu.memory_space<vmem>>, %arg5: memref<1024x32xf32, #tpu.memory_space<vmem>>) attributes {dimension_semantics = [], scalar_prefetch = 0 : i64, scratch_operands = 1 : i64, tpu.core_type = #tpu.core_type<tc>} {
    %c0 = arith.constant 0 : index
    %c0_0 = arith.constant 0 : index
    %0 = vector.load %arg2[%c0, %c0_0] : memref<32x32xbf16, #tpu.memory_space<vmem>>, vector<32x32xbf16>
    %c0_1 = arith.constant 0 : index
    %c0_2 = arith.constant 0 : index
    %1 = vector.load %arg0[%c0_1, %c0_2] : memref<1024x32xbf16, #tpu.memory_space<vmem>>, vector<1024x32xbf16>
    %cst = arith.constant dense<0.000000e+00> : vector<1024x32xf32>
    %2 = tpu.matmul %1, %0, %cst {dimension_numbers = #tpu.dot_dimension_numbers<[1], [0], [0], [1], [0, 0, 1, 1], [], []>} : vector<1024x32xbf16>, vector<32x32xbf16>, vector<1024x32xf32> -> vector<1024x32xf32>
    %c0_3 = arith.constant 0 : index
    %c0_4 = arith.constant 0 : index
    %3 = vector.load %arg5[%c0_3, %c0_4] : memref<1024x32xf32, #tpu.memory_space<vmem>>, vector<1024x32xf32>
    tpu.vector_store %arg5[%c0_3, %c0_4], %2 {strides = array<i32>} : memref<1024x32xf32, #tpu.memory_space<vmem>>, vector<1024x32xf32>,
    %c0_5 = arith.constant 0 : index
    %c0_6 = arith.constant 0 : index
    %4 = vector.load %arg3[%c0_5, %c0_6] : memref<1x32xf32, #tpu.memory_space<vmem>>, vector<1x32xf32>
    %c0_7 = arith.constant 0 : index
    %c0_8 = arith.constant 0 : index
    %5 = vector.load %arg1[%c0_7, %c0_8] : memref<64x32xbf16, #tpu.memory_space<vmem>>, vector<64x32xbf16>
    %cst_9 = arith.constant dense<0.000000e+00> : vector<64x32xf32>
    %6 = tpu.matmul %5, %0, %cst_9 {dimension_numbers = #tpu.dot_dimension_numbers<[1], [0], [0], [1], [0, 0, 1, 1], [], []>} : vector<64x32xbf16>, vector<32x32xbf16>, vector<64x32xf32> -> vector<64x32xf32>
    %7 = vector.broadcast %4 : vector<1x32xf32> to vector<64x32xf32>
    %8 = arith.subf %7, %6 : vector<64x32xf32>
    %c0_10 = arith.constant 0 : index
    %c0_11 = arith.constant 0 : index
    %9 = vector.load %arg5[%c0_10, %c0_11] : memref<1024x32xf32, #tpu.memory_space<vmem>>, vector<64x32xf32>
    %c64 = arith.constant 64 : index
    %c0_12 = arith.constant 0 : index
    %10 = vector.load %arg5[%c64, %c0_12] : memref<1024x32xf32, #tpu.memory_space<vmem>>, vector<64x32xf32>
    %11 = arith.maximumf %9, %10 : vector<64x32xf32>
    %c128 = arith.constant 128 : index
    %c0_13 = arith.constant 0 : index
    %12 = vector.load %arg5[%c128, %c0_13] : memref<1024x32xf32, #tpu.memory_space<vmem>>, vector<64x32xf32>
    %13 = arith.maximumf %11, %12 : vector<64x32xf32>
    %c192 = arith.constant 192 : index
    %c0_14 = arith.constant 0 : index
    %14 = vector.load %arg5[%c192, %c0_14] : memref<1024x32xf32, #tpu.memory_space<vmem>>, vector<64x32xf32>
    %15 = arith.maximumf %13, %14 : vector<64x32xf32>
    %c256 = arith.constant 256 : index
    %c0_15 = arith.constant 0 : index
    %16 = vector.load %arg5[%c256, %c0_15] : memref<1024x32xf32, #tpu.memory_space<vmem>>, vector<64x32xf32>
    %17 = arith.maximumf %15, %16 : vector<64x32xf32>
    %c320 = arith.constant 320 : index
    %c0_16 = arith.constant 0 : index
    %18 = vector.load %arg5[%c320, %c0_16] : memref<1024x32xf32, #tpu.memory_space<vmem>>, vector<64x32xf32>
    %19 = arith.maximumf %17, %18 : vector<64x32xf32>
    %c384 = arith.constant 384 : index
    %c0_17 = arith.constant 0 : index
    %20 = vector.load %arg5[%c384, %c0_17] : memref<1024x32xf32, #tpu.memory_space<vmem>>, vector<64x32xf32>
    %21 = arith.maximumf %19, %20 : vector<64x32xf32>
    %c448 = arith.constant 448 : index
    %c0_18 = arith.constant 0 : index
    %22 = vector.load %arg5[%c448, %c0_18] : memref<1024x32xf32, #tpu.memory_space<vmem>>, vector<64x32xf32>
    %23 = arith.maximumf %21, %22 : vector<64x32xf32>
    %c512 = arith.constant 512 : index
    %c0_19 = arith.constant 0 : index
    %24 = vector.load %arg5[%c512, %c0_19] : memref<1024x32xf32, #tpu.memory_space<vmem>>, vector<64x32xf32>
    %25 = arith.maximumf %23, %24 : vector<64x32xf32>
    %c576 = arith.constant 576 : index
    %c0_20 = arith.constant 0 : index
    %26 = vector.load %arg5[%c576, %c0_20] : memref<1024x32xf32, #tpu.memory_space<vmem>>, vector<64x32xf32>
    %27 = arith.maximumf %25, %26 : vector<64x32xf32>
    %c640 = arith.constant 640 : index
    %c0_21 = arith.constant 0 : index
    %28 = vector.load %arg5[%c640, %c0_21] : memref<1024x32xf32, #tpu.memory_space<vmem>>, vector<64x32xf32>
    %29 = arith.maximumf %27, %28 : vector<64x32xf32>
    %c704 = arith.constant 704 : index
    %c0_22 = arith.constant 0 : index
    %30 = vector.load %arg5[%c704, %c0_22] : memref<1024x32xf32, #tpu.memory_space<vmem>>, vector<64x32xf32>
    %31 = arith.maximumf %29, %30 : vector<64x32xf32>
    %c768 = arith.constant 768 : index
    %c0_23 = arith.constant 0 : index
    %32 = vector.load %arg5[%c768, %c0_23] : memref<1024x32xf32, #tpu.memory_space<vmem>>, vector<64x32xf32>
    %33 = arith.maximumf %31, %32 : vector<64x32xf32>
    %c832 = arith.constant 832 : index
    %c0_24 = arith.constant 0 : index
    %34 = vector.load %arg5[%c832, %c0_24] : memref<1024x32xf32, #tpu.memory_space<vmem>>, vector<64x32xf32>
    %35 = arith.maximumf %33, %34 : vector<64x32xf32>
    %c896 = arith.constant 896 : index
    %c0_25 = arith.constant 0 : index
    %36 = vector.load %arg5[%c896, %c0_25] : memref<1024x32xf32, #tpu.memory_space<vmem>>, vector<64x32xf32>
    %37 = arith.maximumf %35, %36 : vector<64x32xf32>
    %c960 = arith.constant 960 : index
    %c0_26 = arith.constant 0 : index
    %38 = vector.load %arg5[%c960, %c0_26] : memref<1024x32xf32, #tpu.memory_space<vmem>>, vector<64x32xf32>
    %39 = arith.maximumf %37, %38 : vector<64x32xf32>
    %40 = arith.addf %39, %8 : vector<64x32xf32>
    %cst_27 = arith.constant 0.000000e+00 : f32
    %41 = vector.broadcast %cst_27 : f32 to vector<64x32xf32>
    %42 = arith.maximumf %40, %41 : vector<64x32xf32>
    %43 = arith.truncf %42 : vector<64x32xf32> to vector<64x32xbf16>
    %c0_28 = arith.constant 0 : index
    %c0_29 = arith.constant 0 : index
    %44 = vector.load %arg4[%c0_28, %c0_29] : memref<64x32xbf16, #tpu.memory_space<vmem>>, vector<64x32xbf16>
    tpu.vector_store %arg4[%c0_28, %c0_29], %43 {strides = array<i32>} : memref<64x32xbf16, #tpu.memory_space<vmem>>, vector<64x32xbf16>,
    return
  }
}

module attributes {stable_mosaic.version = 11 : i64} {
  func.func @_stage_kernel(%arg0: memref<512x48xbf16, #tpu.memory_space<vmem>>, %arg1: memref<32x48xbf16, #tpu.memory_space<vmem>>, %arg2: memref<48x64xbf16, #tpu.memory_space<vmem>>, %arg3: memref<1x64xf32, #tpu.memory_space<vmem>>, %arg4: memref<32x64xbf16, #tpu.memory_space<vmem>>, %arg5: memref<512x64xf32, #tpu.memory_space<vmem>>) attributes {dimension_semantics = [], scalar_prefetch = 0 : i64, scratch_operands = 1 : i64, tpu.core_type = #tpu.core_type<tc>} {
    %c0 = arith.constant 0 : index
    %c0_0 = arith.constant 0 : index
    %0 = vector.load %arg2[%c0, %c0_0] : memref<48x64xbf16, #tpu.memory_space<vmem>>, vector<48x64xbf16>
    %c0_1 = arith.constant 0 : index
    %c0_2 = arith.constant 0 : index
    %1 = vector.load %arg0[%c0_1, %c0_2] : memref<512x48xbf16, #tpu.memory_space<vmem>>, vector<512x48xbf16>
    %cst = arith.constant dense<0.000000e+00> : vector<512x64xf32>
    %2 = tpu.matmul %1, %0, %cst {dimension_numbers = #tpu.dot_dimension_numbers<[1], [0], [0], [1], [0, 0, 1, 1], [], []>} : vector<512x48xbf16>, vector<48x64xbf16>, vector<512x64xf32> -> vector<512x64xf32>
    %c0_3 = arith.constant 0 : index
    %c0_4 = arith.constant 0 : index
    %3 = vector.load %arg5[%c0_3, %c0_4] : memref<512x64xf32, #tpu.memory_space<vmem>>, vector<512x64xf32>
    tpu.vector_store %arg5[%c0_3, %c0_4], %2 {strides = array<i32>} : memref<512x64xf32, #tpu.memory_space<vmem>>, vector<512x64xf32>,
    %c0_5 = arith.constant 0 : index
    %c0_6 = arith.constant 0 : index
    %4 = vector.load %arg3[%c0_5, %c0_6] : memref<1x64xf32, #tpu.memory_space<vmem>>, vector<1x64xf32>
    %c0_7 = arith.constant 0 : index
    %c0_8 = arith.constant 0 : index
    %5 = vector.load %arg1[%c0_7, %c0_8] : memref<32x48xbf16, #tpu.memory_space<vmem>>, vector<32x48xbf16>
    %cst_9 = arith.constant dense<0.000000e+00> : vector<32x64xf32>
    %6 = tpu.matmul %5, %0, %cst_9 {dimension_numbers = #tpu.dot_dimension_numbers<[1], [0], [0], [1], [0, 0, 1, 1], [], []>} : vector<32x48xbf16>, vector<48x64xbf16>, vector<32x64xf32> -> vector<32x64xf32>
    %7 = vector.broadcast %4 : vector<1x64xf32> to vector<32x64xf32>
    %8 = arith.subf %7, %6 : vector<32x64xf32>
    %c0_10 = arith.constant 0 : index
    %c0_11 = arith.constant 0 : index
    %9 = vector.load %arg5[%c0_10, %c0_11] : memref<512x64xf32, #tpu.memory_space<vmem>>, vector<32x64xf32>
    %c32 = arith.constant 32 : index
    %c0_12 = arith.constant 0 : index
    %10 = vector.load %arg5[%c32, %c0_12] : memref<512x64xf32, #tpu.memory_space<vmem>>, vector<32x64xf32>
    %11 = arith.maximumf %9, %10 : vector<32x64xf32>
    %c64 = arith.constant 64 : index
    %c0_13 = arith.constant 0 : index
    %12 = vector.load %arg5[%c64, %c0_13] : memref<512x64xf32, #tpu.memory_space<vmem>>, vector<32x64xf32>
    %13 = arith.maximumf %11, %12 : vector<32x64xf32>
    %c96 = arith.constant 96 : index
    %c0_14 = arith.constant 0 : index
    %14 = vector.load %arg5[%c96, %c0_14] : memref<512x64xf32, #tpu.memory_space<vmem>>, vector<32x64xf32>
    %15 = arith.maximumf %13, %14 : vector<32x64xf32>
    %c128 = arith.constant 128 : index
    %c0_15 = arith.constant 0 : index
    %16 = vector.load %arg5[%c128, %c0_15] : memref<512x64xf32, #tpu.memory_space<vmem>>, vector<32x64xf32>
    %17 = arith.maximumf %15, %16 : vector<32x64xf32>
    %c160 = arith.constant 160 : index
    %c0_16 = arith.constant 0 : index
    %18 = vector.load %arg5[%c160, %c0_16] : memref<512x64xf32, #tpu.memory_space<vmem>>, vector<32x64xf32>
    %19 = arith.maximumf %17, %18 : vector<32x64xf32>
    %c192 = arith.constant 192 : index
    %c0_17 = arith.constant 0 : index
    %20 = vector.load %arg5[%c192, %c0_17] : memref<512x64xf32, #tpu.memory_space<vmem>>, vector<32x64xf32>
    %21 = arith.maximumf %19, %20 : vector<32x64xf32>
    %c224 = arith.constant 224 : index
    %c0_18 = arith.constant 0 : index
    %22 = vector.load %arg5[%c224, %c0_18] : memref<512x64xf32, #tpu.memory_space<vmem>>, vector<32x64xf32>
    %23 = arith.maximumf %21, %22 : vector<32x64xf32>
    %c256 = arith.constant 256 : index
    %c0_19 = arith.constant 0 : index
    %24 = vector.load %arg5[%c256, %c0_19] : memref<512x64xf32, #tpu.memory_space<vmem>>, vector<32x64xf32>
    %25 = arith.maximumf %23, %24 : vector<32x64xf32>
    %c288 = arith.constant 288 : index
    %c0_20 = arith.constant 0 : index
    %26 = vector.load %arg5[%c288, %c0_20] : memref<512x64xf32, #tpu.memory_space<vmem>>, vector<32x64xf32>
    %27 = arith.maximumf %25, %26 : vector<32x64xf32>
    %c320 = arith.constant 320 : index
    %c0_21 = arith.constant 0 : index
    %28 = vector.load %arg5[%c320, %c0_21] : memref<512x64xf32, #tpu.memory_space<vmem>>, vector<32x64xf32>
    %29 = arith.maximumf %27, %28 : vector<32x64xf32>
    %c352 = arith.constant 352 : index
    %c0_22 = arith.constant 0 : index
    %30 = vector.load %arg5[%c352, %c0_22] : memref<512x64xf32, #tpu.memory_space<vmem>>, vector<32x64xf32>
    %31 = arith.maximumf %29, %30 : vector<32x64xf32>
    %c384 = arith.constant 384 : index
    %c0_23 = arith.constant 0 : index
    %32 = vector.load %arg5[%c384, %c0_23] : memref<512x64xf32, #tpu.memory_space<vmem>>, vector<32x64xf32>
    %33 = arith.maximumf %31, %32 : vector<32x64xf32>
    %c416 = arith.constant 416 : index
    %c0_24 = arith.constant 0 : index
    %34 = vector.load %arg5[%c416, %c0_24] : memref<512x64xf32, #tpu.memory_space<vmem>>, vector<32x64xf32>
    %35 = arith.maximumf %33, %34 : vector<32x64xf32>
    %c448 = arith.constant 448 : index
    %c0_25 = arith.constant 0 : index
    %36 = vector.load %arg5[%c448, %c0_25] : memref<512x64xf32, #tpu.memory_space<vmem>>, vector<32x64xf32>
    %37 = arith.maximumf %35, %36 : vector<32x64xf32>
    %c480 = arith.constant 480 : index
    %c0_26 = arith.constant 0 : index
    %38 = vector.load %arg5[%c480, %c0_26] : memref<512x64xf32, #tpu.memory_space<vmem>>, vector<32x64xf32>
    %39 = arith.maximumf %37, %38 : vector<32x64xf32>
    %40 = arith.addf %39, %8 : vector<32x64xf32>
    %cst_27 = arith.constant 0.000000e+00 : f32
    %41 = vector.broadcast %cst_27 : f32 to vector<32x64xf32>
    %42 = arith.maximumf %40, %41 : vector<32x64xf32>
    %43 = arith.truncf %42 : vector<32x64xf32> to vector<32x64xbf16>
    %c0_28 = arith.constant 0 : index
    %c0_29 = arith.constant 0 : index
    %44 = vector.load %arg4[%c0_28, %c0_29] : memref<32x64xbf16, #tpu.memory_space<vmem>>, vector<32x64xbf16>
    tpu.vector_store %arg4[%c0_28, %c0_29], %43 {strides = array<i32>} : memref<32x64xbf16, #tpu.memory_space<vmem>>, vector<32x64xbf16>,
    return
  }
}

module attributes {stable_mosaic.version = 11 : i64} {
  func.func @_final_kernel(%arg0: memref<256x80xbf16, #tpu.memory_space<vmem>>, %arg1: memref<16x80xbf16, #tpu.memory_space<vmem>>, %arg2: memref<80x128xbf16, #tpu.memory_space<vmem>>, %arg3: memref<1x128xf32, #tpu.memory_space<vmem>>, %arg4: memref<128x128xf32, #tpu.memory_space<vmem>>, %arg5: memref<1x128xf32, #tpu.memory_space<vmem>>, %arg6: memref<128x64xf32, #tpu.memory_space<vmem>>, %arg7: memref<1x64xf32, #tpu.memory_space<vmem>>, %arg8: memref<64x40xf32, #tpu.memory_space<vmem>>, %arg9: memref<1x40xf32, #tpu.memory_space<vmem>>, %arg10: memref<2x40xf32, #tpu.memory_space<vmem>>, %arg11: memref<256x128xf32, #tpu.memory_space<vmem>>) attributes {dimension_semantics = [], scalar_prefetch = 0 : i64, scratch_operands = 1 : i64, tpu.core_type = #tpu.core_type<tc>} {
    %c0 = arith.constant 0 : index
    %c0_0 = arith.constant 0 : index
    %0 = vector.load %arg2[%c0, %c0_0] : memref<80x128xbf16, #tpu.memory_space<vmem>>, vector<80x128xbf16>
    %c0_1 = arith.constant 0 : index
    %c0_2 = arith.constant 0 : index
    %1 = vector.load %arg0[%c0_1, %c0_2] : memref<256x80xbf16, #tpu.memory_space<vmem>>, vector<256x80xbf16>
    %cst = arith.constant dense<0.000000e+00> : vector<256x128xf32>
    %2 = tpu.matmul %1, %0, %cst {dimension_numbers = #tpu.dot_dimension_numbers<[1], [0], [0], [1], [0, 0, 1, 1], [], []>} : vector<256x80xbf16>, vector<80x128xbf16>, vector<256x128xf32> -> vector<256x128xf32>
    %c0_3 = arith.constant 0 : index
    %c0_4 = arith.constant 0 : index
    %3 = vector.load %arg11[%c0_3, %c0_4] : memref<256x128xf32, #tpu.memory_space<vmem>>, vector<256x128xf32>
    tpu.vector_store %arg11[%c0_3, %c0_4], %2 {strides = array<i32>} : memref<256x128xf32, #tpu.memory_space<vmem>>, vector<256x128xf32>,
    %c0_5 = arith.constant 0 : index
    %c0_6 = arith.constant 0 : index
    %4 = vector.load %arg3[%c0_5, %c0_6] : memref<1x128xf32, #tpu.memory_space<vmem>>, vector<1x128xf32>
    %c0_7 = arith.constant 0 : index
    %c0_8 = arith.constant 0 : index
    %5 = vector.load %arg1[%c0_7, %c0_8] : memref<16x80xbf16, #tpu.memory_space<vmem>>, vector<16x80xbf16>
    %cst_9 = arith.constant dense<0.000000e+00> : vector<16x128xf32>
    %6 = tpu.matmul %5, %0, %cst_9 {dimension_numbers = #tpu.dot_dimension_numbers<[1], [0], [0], [1], [0, 0, 1, 1], [], []>} : vector<16x80xbf16>, vector<80x128xbf16>, vector<16x128xf32> -> vector<16x128xf32>
    %7 = vector.broadcast %4 : vector<1x128xf32> to vector<16x128xf32>
    %8 = arith.subf %7, %6 : vector<16x128xf32>
    %c0_10 = arith.constant 0 : index
    %c0_11 = arith.constant 0 : index
    %9 = vector.load %arg11[%c0_10, %c0_11] : memref<256x128xf32, #tpu.memory_space<vmem>>, vector<16x128xf32>
    %c16 = arith.constant 16 : index
    %c0_12 = arith.constant 0 : index
    %10 = vector.load %arg11[%c16, %c0_12] : memref<256x128xf32, #tpu.memory_space<vmem>>, vector<16x128xf32>
    %11 = arith.maximumf %9, %10 : vector<16x128xf32>
    %c32 = arith.constant 32 : index
    %c0_13 = arith.constant 0 : index
    %12 = vector.load %arg11[%c32, %c0_13] : memref<256x128xf32, #tpu.memory_space<vmem>>, vector<16x128xf32>
    %13 = arith.maximumf %11, %12 : vector<16x128xf32>
    %c48 = arith.constant 48 : index
    %c0_14 = arith.constant 0 : index
    %14 = vector.load %arg11[%c48, %c0_14] : memref<256x128xf32, #tpu.memory_space<vmem>>, vector<16x128xf32>
    %15 = arith.maximumf %13, %14 : vector<16x128xf32>
    %c64 = arith.constant 64 : index
    %c0_15 = arith.constant 0 : index
    %16 = vector.load %arg11[%c64, %c0_15] : memref<256x128xf32, #tpu.memory_space<vmem>>, vector<16x128xf32>
    %17 = arith.maximumf %15, %16 : vector<16x128xf32>
    %c80 = arith.constant 80 : index
    %c0_16 = arith.constant 0 : index
    %18 = vector.load %arg11[%c80, %c0_16] : memref<256x128xf32, #tpu.memory_space<vmem>>, vector<16x128xf32>
    %19 = arith.maximumf %17, %18 : vector<16x128xf32>
    %c96 = arith.constant 96 : index
    %c0_17 = arith.constant 0 : index
    %20 = vector.load %arg11[%c96, %c0_17] : memref<256x128xf32, #tpu.memory_space<vmem>>, vector<16x128xf32>
    %21 = arith.maximumf %19, %20 : vector<16x128xf32>
    %c112 = arith.constant 112 : index
    %c0_18 = arith.constant 0 : index
    %22 = vector.load %arg11[%c112, %c0_18] : memref<256x128xf32, #tpu.memory_space<vmem>>, vector<16x128xf32>
    %23 = arith.maximumf %21, %22 : vector<16x128xf32>
    %c128 = arith.constant 128 : index
    %c0_19 = arith.constant 0 : index
    %24 = vector.load %arg11[%c128, %c0_19] : memref<256x128xf32, #tpu.memory_space<vmem>>, vector<16x128xf32>
    %25 = arith.maximumf %23, %24 : vector<16x128xf32>
    %c144 = arith.constant 144 : index
    %c0_20 = arith.constant 0 : index
    %26 = vector.load %arg11[%c144, %c0_20] : memref<256x128xf32, #tpu.memory_space<vmem>>, vector<16x128xf32>
    %27 = arith.maximumf %25, %26 : vector<16x128xf32>
    %c160 = arith.constant 160 : index
    %c0_21 = arith.constant 0 : index
    %28 = vector.load %arg11[%c160, %c0_21] : memref<256x128xf32, #tpu.memory_space<vmem>>, vector<16x128xf32>
    %29 = arith.maximumf %27, %28 : vector<16x128xf32>
    %c176 = arith.constant 176 : index
    %c0_22 = arith.constant 0 : index
    %30 = vector.load %arg11[%c176, %c0_22] : memref<256x128xf32, #tpu.memory_space<vmem>>, vector<16x128xf32>
    %31 = arith.maximumf %29, %30 : vector<16x128xf32>
    %c192 = arith.constant 192 : index
    %c0_23 = arith.constant 0 : index
    %32 = vector.load %arg11[%c192, %c0_23] : memref<256x128xf32, #tpu.memory_space<vmem>>, vector<16x128xf32>
    %33 = arith.maximumf %31, %32 : vector<16x128xf32>
    %c208 = arith.constant 208 : index
    %c0_24 = arith.constant 0 : index
    %34 = vector.load %arg11[%c208, %c0_24] : memref<256x128xf32, #tpu.memory_space<vmem>>, vector<16x128xf32>
    %35 = arith.maximumf %33, %34 : vector<16x128xf32>
    %c224 = arith.constant 224 : index
    %c0_25 = arith.constant 0 : index
    %36 = vector.load %arg11[%c224, %c0_25] : memref<256x128xf32, #tpu.memory_space<vmem>>, vector<16x128xf32>
    %37 = arith.maximumf %35, %36 : vector<16x128xf32>
    %c240 = arith.constant 240 : index
    %c0_26 = arith.constant 0 : index
    %38 = vector.load %arg11[%c240, %c0_26] : memref<256x128xf32, #tpu.memory_space<vmem>>, vector<16x128xf32>
    %39 = arith.maximumf %37, %38 : vector<16x128xf32>
    %40 = arith.addf %39, %8 : vector<16x128xf32>
    %cst_27 = arith.constant 0.000000e+00 : f32
    %41 = vector.broadcast %cst_27 : f32 to vector<16x128xf32>
    %42 = arith.maximumf %40, %41 : vector<16x128xf32>
    %43 = vector.shape_cast %42 : vector<16x128xf32> to vector<2x8x128xf32>
    %cst_28 = arith.constant dense<0xFF800000> : vector<2x128xf32>
    %44 = vector.multi_reduction <maximumf>, %43, %cst_28 [1] : vector<2x8x128xf32> to vector<2x128xf32>
    %c0_29 = arith.constant 0 : index
    %c0_30 = arith.constant 0 : index
    %45 = vector.load %arg4[%c0_29, %c0_30] : memref<128x128xf32, #tpu.memory_space<vmem>>, vector<128x128xf32>
    %cst_31 = arith.constant dense<0.000000e+00> : vector<2x128xf32>
    %46 = tpu.matmul %44, %45, %cst_31 {dimension_numbers = #tpu.dot_dimension_numbers<[1], [0], [0], [1], [0, 0, 1, 1], [], []>} : vector<2x128xf32>, vector<128x128xf32>, vector<2x128xf32> -> vector<2x128xf32>
    %c0_32 = arith.constant 0 : index
    %c0_33 = arith.constant 0 : index
    %47 = vector.load %arg5[%c0_32, %c0_33] : memref<1x128xf32, #tpu.memory_space<vmem>>, vector<1x128xf32>
    %48 = vector.broadcast %47 : vector<1x128xf32> to vector<2x128xf32>
    %49 = arith.addf %46, %48 : vector<2x128xf32>
    %cst_34 = arith.constant 0.000000e+00 : f32
    %50 = vector.broadcast %cst_34 : f32 to vector<2x128xf32>
    %51 = arith.maximumf %49, %50 : vector<2x128xf32>
    %c0_35 = arith.constant 0 : index
    %c0_36 = arith.constant 0 : index
    %52 = vector.load %arg6[%c0_35, %c0_36] : memref<128x64xf32, #tpu.memory_space<vmem>>, vector<128x64xf32>
    %cst_37 = arith.constant dense<0.000000e+00> : vector<2x64xf32>
    %53 = tpu.matmul %51, %52, %cst_37 {dimension_numbers = #tpu.dot_dimension_numbers<[1], [0], [0], [1], [0, 0, 1, 1], [], []>} : vector<2x128xf32>, vector<128x64xf32>, vector<2x64xf32> -> vector<2x64xf32>
    %c0_38 = arith.constant 0 : index
    %c0_39 = arith.constant 0 : index
    %54 = vector.load %arg7[%c0_38, %c0_39] : memref<1x64xf32, #tpu.memory_space<vmem>>, vector<1x64xf32>
    %55 = vector.broadcast %54 : vector<1x64xf32> to vector<2x64xf32>
    %56 = arith.addf %53, %55 : vector<2x64xf32>
    %cst_40 = arith.constant 0.000000e+00 : f32
    %57 = vector.broadcast %cst_40 : f32 to vector<2x64xf32>
    %58 = arith.maximumf %56, %57 : vector<2x64xf32>
    %c0_41 = arith.constant 0 : index
    %c0_42 = arith.constant 0 : index
    %59 = vector.load %arg8[%c0_41, %c0_42] : memref<64x40xf32, #tpu.memory_space<vmem>>, vector<64x40xf32>
    %cst_43 = arith.constant dense<0.000000e+00> : vector<2x40xf32>
    %60 = tpu.matmul %58, %59, %cst_43 {dimension_numbers = #tpu.dot_dimension_numbers<[1], [0], [0], [1], [0, 0, 1, 1], [], []>} : vector<2x64xf32>, vector<64x40xf32>, vector<2x40xf32> -> vector<2x40xf32>
    %c0_44 = arith.constant 0 : index
    %c0_45 = arith.constant 0 : index
    %61 = vector.load %arg9[%c0_44, %c0_45] : memref<1x40xf32, #tpu.memory_space<vmem>>, vector<1x40xf32>
    %62 = vector.broadcast %61 : vector<1x40xf32> to vector<2x40xf32>
    %63 = arith.addf %60, %62 : vector<2x40xf32>
    %c0_46 = arith.constant 0 : index
    %c0_47 = arith.constant 0 : index
    %64 = vector.load %arg10[%c0_46, %c0_47] : memref<2x40xf32, #tpu.memory_space<vmem>>, vector<2x40xf32>
    tpu.vector_store %arg10[%c0_46, %c0_47], %63 {strides = array<i32>} : memref<2x40xf32, #tpu.memory_space<vmem>>, vector<2x40xf32>,
    return
  }
}

</mosaic_0001>

<llo_original>
// kernel: custom-call.32
$region0: #{custom-call.32}
  %s0 = inlined_call_operand.vmem [shape: f32[2,128], index: 0, kind: output, shape index: {}]

// kernel: neg.0
$region0: #{neg.0}
  #allocation0 [shape = 's32[1]{0}', space=sflag, size = 0x4, scoped, tag = 'scoped memory for neg.0']
  %s0 = inlined_call_operand.vmem [shape: f32[128,128], index: 0, kind: input, shape index: {}]
  %s1 = inlined_call_operand.vmem [shape: f32[128,128], index: 1, kind: output, shape index: {}]
  %v2 = vld [vmem:[%s0] sm:$0xff]
  %3 = xla_tuple %v2
  %4 = xla_tuple %3
  %v5 = vxor.u32 %v2, 2147483648
  %6 = xla_tuple %v5
  %7 = vst [vmem:[%s1] sm:$0xff] %v5
  %s8 = scalar_lea.vmem %s0, 8
  %v9 = vld [vmem:[%s8] sm:$0xff]
  %10 = xla_tuple %v9
  %11 = xla_tuple %10
  %v12 = vxor.u32 %v9, 2147483648
  %13 = xla_tuple %v12
  %s14 = scalar_lea.vmem %s1, 8
  %15 = vst [vmem:[%s14] sm:$0xff] %v12
  %s16 = scalar_lea.vmem %s0, 16
  %v17 = vld [vmem:[%s16] sm:$0xff]
  %18 = xla_tuple %v17
  %19 = xla_tuple %18
  %v20 = vxor.u32 %v17, 2147483648
  %21 = xla_tuple %v20
  %s22 = scalar_lea.vmem %s1, 16
  %23 = vst [vmem:[%s22] sm:$0xff] %v20
  %s24 = scalar_lea.vmem %s0, 24
  %v25 = vld [vmem:[%s24] sm:$0xff]
  %26 = xla_tuple %v25
  %27 = xla_tuple %26
  %v28 = vxor.u32 %v25, 2147483648
  %29 = xla_tuple %v28
  %s30 = scalar_lea.vmem %s1, 24
  %31 = vst [vmem:[%s30] sm:$0xff] %v28
  %s32 = scalar_lea.vmem %s0, 32
  %v33 = vld [vmem:[%s32] sm:$0xff]
  %34 = xla_tuple %v33
  %35 = xla_tuple %34
  %v36 = vxor.u32 %v33, 2147483648
  %37 = xla_tuple %v36
  %s38 = scalar_lea.vmem %s1, 32
  %39 = vst [vmem:[%s38] sm:$0xff] %v36
  %s40 = scalar_lea.vmem %s0, 40
  %v41 = vld [vmem:[%s40] sm:$0xff]
  %42 = xla_tuple %v41
  %43 = xla_tuple %42
  %v44 = vxor.u32 %v41, 2147483648
  %45 = xla_tuple %v44
  %s46 = scalar_lea.vmem %s1, 40
  %47 = vst [vmem:[%s46] sm:$0xff] %v44
  %s48 = scalar_lea.vmem %s0, 48
  %v49 = vld [vmem:[%s48] sm:$0xff]
  %50 = xla_tuple %v49
  %51 = xla_tuple %50
  %v52 = vxor.u32 %v49, 2147483648
  %53 = xla_tuple %v52
  %s54 = scalar_lea.vmem %s1, 48
  %55 = vst [vmem:[%s54] sm:$0xff] %v52
  %s56 = scalar_lea.vmem %s0, 56
  %v57 = vld [vmem:[%s56] sm:$0xff]
  %58 = xla_tuple %v57
  %59 = xla_tuple %58
  %v60 = vxor.u32 %v57, 2147483648
  %61 = xla_tuple %v60
  %s62 = scalar_lea.vmem %s1, 56
  %63 = vst [vmem:[%s62] sm:$0xff] %v60
  %s64 = scalar_lea.vmem %s0, 64
  %v65 = vld [vmem:[%s64] sm:$0xff]
  %66 = xla_tuple %v65
  %67 = xla_tuple %66
  %v68 = vxor.u32 %v65, 2147483648
  %69 = xla_tuple %v68
  %s70 = scalar_lea.vmem %s1, 64
  %71 = vst [vmem:[%s70] sm:$0xff] %v68
  %s72 = scalar_lea.vmem %s0, 72
  %v73 = vld [vmem:[%s72] sm:$0xff]
  %74 = xla_tuple %v73
  %75 = xla_tuple %74
  %v76 = vxor.u32 %v73, 2147483648
  %77 = xla_tuple %v76
  %s78 = scalar_lea.vmem %s1, 72
  %79 = vst [vmem:[%s78] sm:$0xff] %v76
  %s80 = scalar_lea.vmem %s0, 80
  %v81 = vld [vmem:[%s80] sm:$0xff]
  %82 = xla_tuple %v81
  %83 = xla_tuple %82
  %v84 = vxor.u32 %v81, 2147483648
  %85 = xla_tuple %v84
  %s86 = scalar_lea.vmem %s1, 80
  %87 = vst [vmem:[%s86] sm:$0xff] %v84
  %s88 = scalar_lea.vmem %s0, 88
  %v89 = vld [vmem:[%s88] sm:$0xff]
  %90 = xla_tuple %v89
  %91 = xla_tuple %90
  %v92 = vxor.u32 %v89, 2147483648
  %93 = xla_tuple %v92
  %s94 = scalar_lea.vmem %s1, 88
  %95 = vst [vmem:[%s94] sm:$0xff] %v92
  %s96 = scalar_lea.vmem %s0, 96
  %v97 = vld [vmem:[%s96] sm:$0xff]
  %98 = xla_tuple %v97
  %99 = xla_tuple %98
  %v100 = vxor.u32 %v97, 2147483648
  %101 = xla_tuple %v100
  %s102 = scalar_lea.vmem %s1, 96
  %103 = vst [vmem:[%s102] sm:$0xff] %v100
  %s104 = scalar_lea.vmem %s0, 104
  %v105 = vld [vmem:[%s104] sm:$0xff]
  %106 = xla_tuple %v105
  %107 = xla_tuple %106
  %v108 = vxor.u32 %v105, 2147483648
  %109 = xla_tuple %v108
  %s110 = scalar_lea.vmem %s1, 104
  %111 = vst [vmem:[%s110] sm:$0xff] %v108
  %s112 = scalar_lea.vmem %s0, 112
  %v113 = vld [vmem:[%s112] sm:$0xff]
  %114 = xla_tuple %v113
  %115 = xla_tuple %114
  %v116 = vxor.u32 %v113, 2147483648
  %117 = xla_tuple %v116
  %s118 = scalar_lea.vmem %s1, 112
  %119 = vst [vmem:[%s118] sm:$0xff] %v116
  %s120 = scalar_lea.vmem %s0, 120
  %v121 = vld [vmem:[%s120] sm:$0xff]
  %122 = xla_tuple %v121
  %123 = xla_tuple %122
  %v124 = vxor.u32 %v121, 2147483648
  %125 = xla_tuple %v124
  %s126 = scalar_lea.vmem %s1, 120
  %127 = vst [vmem:[%s126] sm:$0xff] %v124

// kernel: custom-call.33
$region0: #{custom-call.33}
  %s0 = inlined_call_operand.vmem [shape: f32[2,64], index: 0, kind: output, shape index: {}]

// kernel: neg.1
$region0: #{neg.1}
  #allocation0 [shape = 's32[1]{0}', space=sflag, size = 0x4, scoped, tag = 'scoped memory for neg.1']
  %s0 = inlined_call_operand.vmem [shape: f32[64,64], index: 0, kind: input, shape index: {}]
  %s1 = inlined_call_operand.vmem [shape: f32[64,64], index: 1, kind: output, shape index: {}]
  %v2 = vld [vmem:[%s0] sm:$0xff]
  %3 = xla_tuple %v2
  %4 = xla_tuple %3
  %v5 = vxor.u32 %v2, 2147483648
  %6 = xla_tuple %v5
  %7 = vst [vmem:[%s1] sm:$0xff] %v5
  %s8 = scalar_lea.vmem %s0, 8
  %v9 = vld [vmem:[%s8] sm:$0xff]
  %10 = xla_tuple %v9
  %11 = xla_tuple %10
  %v12 = vxor.u32 %v9, 2147483648
  %13 = xla_tuple %v12
  %s14 = scalar_lea.vmem %s1, 8
  %15 = vst [vmem:[%s14] sm:$0xff] %v12
  %s16 = scalar_lea.vmem %s0, 16
  %v17 = vld [vmem:[%s16] sm:$0xff]
  %18 = xla_tuple %v17
  %19 = xla_tuple %18
  %v20 = vxor.u32 %v17, 2147483648
  %21 = xla_tuple %v20
  %s22 = scalar_lea.vmem %s1, 16
  %23 = vst [vmem:[%s22] sm:$0xff] %v20
  %s24 = scalar_lea.vmem %s0, 24
  %v25 = vld [vmem:[%s24] sm:$0xff]
  %26 = xla_tuple %v25
  %27 = xla_tuple %26
  %v28 = vxor.u32 %v25, 2147483648
  %29 = xla_tuple %v28
  %s30 = scalar_lea.vmem %s1, 24
  %31 = vst [vmem:[%s30] sm:$0xff] %v28
  %s32 = scalar_lea.vmem %s0, 32
  %v33 = vld [vmem:[%s32] sm:$0xff]
  %34 = xla_tuple %v33
  %35 = xla_tuple %34
  %v36 = vxor.u32 %v33, 2147483648
  %37 = xla_tuple %v36
  %s38 = scalar_lea.vmem %s1, 32
  %39 = vst [vmem:[%s38] sm:$0xff] %v36
  %s40 = scalar_lea.vmem %s0, 40
  %v41 = vld [vmem:[%s40] sm:$0xff]
  %42 = xla_tuple %v41
  %43 = xla_tuple %42
  %v44 = vxor.u32 %v41, 2147483648
  %45 = xla_tuple %v44
  %s46 = scalar_lea.vmem %s1, 40
  %47 = vst [vmem:[%s46] sm:$0xff] %v44
  %s48 = scalar_lea.vmem %s0, 48
  %v49 = vld [vmem:[%s48] sm:$0xff]
  %50 = xla_tuple %v49
  %51 = xla_tuple %50
  %v52 = vxor.u32 %v49, 2147483648
  %53 = xla_tuple %v52
  %s54 = scalar_lea.vmem %s1, 48
  %55 = vst [vmem:[%s54] sm:$0xff] %v52
  %s56 = scalar_lea.vmem %s0, 56
  %v57 = vld [vmem:[%s56] sm:$0xff]
  %58 = xla_tuple %v57
  %59 = xla_tuple %58
  %v60 = vxor.u32 %v57, 2147483648
  %61 = xla_tuple %v60
  %s62 = scalar_lea.vmem %s1, 56
  %63 = vst [vmem:[%s62] sm:$0xff] %v60

// kernel: point_transformer_cls_forward.4
$region0: #{point_transformer_cls_forward.4}
  #allocation0 [shape = 'u32[]', space=smem, size = 0x4, offset = 0x4, fixed_abs, tag = 'smem constant byte address 0x4 - core index']
  #allocation1 [shape = 'u32[144,128]{1,0:T(1,128)}', space=vmem, size = 0x12000, scoped, tag = 'internal scratch']
  #allocation2 [shape = 'f32[2048,16]{1,0:T(8,128)}', space=vmem, size = 0x100000, scoped, tag = 'scratch operand']
  %s0 = inlined_call_operand.vmem [shape: bf16[2048,16], index: 0, kind: input, shape index: {}]
  %s1 = inlined_call_operand.vmem [shape: bf16[128,16], index: 1, kind: input, shape index: {}]
  %s2 = inlined_call_operand.vmem [shape: bf16[16,16], index: 2, kind: input, shape index: {}]
  %s3 = inlined_call_operand.vmem [shape: f32[1,16], index: 3, kind: input, shape index: {}]
  %s4 = inlined_call_operand.vmem [shape: bf16[128,16], index: 4, kind: output, shape index: {}]
  %s5 = sld [smem:[#allocation0]]
  $region26: #{point_transformer_cls_forward.4} parent=0
    _
  %s7 = ssub.s32 1, %s5
  %s8 = scalar_select 0, %s7, %s5
  // Predicated region
  $region2: #{point_transformer_cls_forward.4} parent=0 // pred_check
    _
  $region3: #{point_transformer_cls_forward.4} parent=0 // pred_check_branch
    %10 = sbr.rel (0) target = $region5
  $region4: #{point_transformer_cls_forward.4} parent=0 // pred_region
    _
  $region5: #{point_transformer_cls_forward.4} parent=0 // pred_fallthru
    _
  // Predicated region
  $region6: #{point_transformer_cls_forward.4} parent=0 // pred_check
    _
  $region7: #{point_transformer_cls_forward.4} parent=0 // pred_check_branch
    %12 = sbr.rel (0) target = $region9
  $region8: #{point_transformer_cls_forward.4} parent=0 // pred_region
    _
  $region9: #{point_transformer_cls_forward.4} parent=0 // pred_fallthru
    _
  // Predicated region
  $region10: #{point_transformer_cls_forward.4} parent=0 // pred_check
    _
  $region11: #{point_transformer_cls_forward.4} parent=0 // pred_check_branch
    %14 = sbr.rel (0) target = $region13
  $region12: #{point_transformer_cls_forward.4} parent=0 // pred_region
    _
  $region13: #{point_transformer_cls_forward.4} parent=0 // pred_fallthru
    _
  // Predicated region
  $region14: #{point_transformer_cls_forward.4} parent=0 // pred_check
    _
  $region15: #{point_transformer_cls_forward.4} parent=0 // pred_check_branch
    %16 = sbr.rel (0) target = $region17
  $region16: #{point_transformer_cls_forward.4} parent=0 // pred_region
    _
  $region17: #{point_transformer_cls_forward.4} parent=0 // pred_fallthru
    _
  %v18 = vld [vmem:[%s2] sm:$0xf]
  %v19 = vld [vmem:[%s2 + $0x4] sm:$0xf]
  %v20 = vld [vmem:[%s0] sm:$0xf]
  %v21 = vld [vmem:[%s0 + $0x4] sm:$0xf]
  %v22 = vld [vmem:[%s0 + $0x8] sm:$0xf]
  %v23 = vld [vmem:[%s0 + $0xc] sm:$0xf]
  %v24 = vld [vmem:[%s0 + $0x10] sm:$0xf]
  %v25 = vld [vmem:[%s0 + $0x14] sm:$0xf]
  %v26 = vld [vmem:[%s0 + $0x18] sm:$0xf]
  %v27 = vld [vmem:[%s0 + $0x1c] sm:$0xf]
  %v28 = vld [vmem:[%s0 + $0x20] sm:$0xf]
  %v29 = vld [vmem:[%s0 + $0x24] sm:$0xf]
  %v30 = vld [vmem:[%s0 + $0x28] sm:$0xf]
  %v31 = vld [vmem:[%s0 + $0x2c] sm:$0xf]
  %v32 = vld [vmem:[%s0 + $0x30] sm:$0xf]
  %v33 = vld [vmem:[%s0 + $0x34] sm:$0xf]
  %v34 = vld [vmem:[%s0 + $0x38] sm:$0xf]
  %v35 = vld [vmem:[%s0 + $0x3c] sm:$0xf]
  %v36 = vld [vmem:[%s0 + $0x40] sm:$0xf]
  %v37 = vld [vmem:[%s0 + $0x44] sm:$0xf]
  %v38 = vld [vmem:[%s0 + $0x48] sm:$0xf]
  %v39 = vld [vmem:[%s0 + $0x4c] sm:$0xf]
  %v40 = vld [vmem:[%s0 + $0x50] sm:$0xf]
  %v41 = vld [vmem:[%s0 + $0x54] sm:$0xf]
  %v42 = vld [vmem:[%s0 + $0x58] sm:$0xf]
  %v43 = vld [vmem:[%s0 + $0x5c] sm:$0xf]
  %v44 = vld [vmem:[%s0 + $0x60] sm:$0xf]
  %v45 = vld [vmem:[%s0 + $0x64] sm:$0xf]
  %v46 = vld [vmem:[%s0 + $0x68] sm:$0xf]
  %v47 = vld [vmem:[%s0 + $0x6c] sm:$0xf]
  %v48 = vld [vmem:[%s0 + $0x70] sm:$0xf]
  %v49 = vld [vmem:[%s0 + $0x74] sm:$0xf]
  %v50 = vld [vmem:[%s0 + $0x78] sm:$0xf]
  %v51 = vld [vmem:[%s0 + $0x7c] sm:$0xf]
  %v52 = vld [vmem:[%s0 + $0x80] sm:$0xf]
  %v53 = vld [vmem:[%s0 + $0x84] sm:$0xf]
  %v54 = vld [vmem:[%s0 + $0x88] sm:$0xf]
  %v55 = vld [vmem:[%s0 + $0x8c] sm:$0xf]
  %v56 = vld [vmem:[%s0 + $0x90] sm:$0xf]
  %v57 = vld [vmem:[%s0 + $0x94] sm:$0xf]
  %v58 = vld [vmem:[%s0 + $0x98] sm:$0xf]
  %v59 = vld [vmem:[%s0 + $0x9c] sm:$0xf]
  %v60 = vld [vmem:[%s0 + $0xa0] sm:$0xf]
  %v61 = vld [vmem:[%s0 + $0xa4] sm:$0xf]
  %v62 = vld [vmem:[%s0 + $0xa8] sm:$0xf]
  %v63 = vld [vmem:[%s0 + $0xac] sm:$0xf]
  %v64 = vld [vmem:[%s0 + $0xb0] sm:$0xf]
  %v65 = vld [vmem:[%s0 + $0xb4] sm:$0xf]
  %v66 = vld [vmem:[%s0 + $0xb8] sm:$0xf]
  %v67 = vld [vmem:[%s0 + $0xbc] sm:$0xf]
  %v68 = vld [vmem:[%s0 + $0xc0] sm:$0xf]
  %v69 = vld [vmem:[%s0 + $0xc4] sm:$0xf]
  %v70 = vld [vmem:[%s0 + $0xc8] sm:$0xf]
  %v71 = vld [vmem:[%s0 + $0xcc] sm:$0xf]
  %v72 = vld [vmem:[%s0 + $0xd0] sm:$0xf]
  %v73 = vld [vmem:[%s0 + $0xd4] sm:$0xf]
  %v74 = vld [vmem:[%s0 + $0xd8] sm:$0xf]
  %v75 = vld [vmem:[%s0 + $0xdc] sm:$0xf]
  %v76 = vld [vmem:[%s0 + $0xe0] sm:$0xf]
  %v77 = vld [vmem:[%s0 + $0xe4] sm:$0xf]
  %v78 = vld [vmem:[%s0 + $0xe8] sm:$0xf]
  %v79 = vld [vmem:[%s0 + $0xec] sm:$0xf]
  %v80 = vld [vmem:[%s0 + $0xf0] sm:$0xf]
  %v81 = vld [vmem:[%s0 + $0xf4] sm:$0xf]
  %v82 = vld [vmem:[%s0 + $0xf8] sm:$0xf]
  %v83 = vld [vmem:[%s0 + $0xfc] sm:$0xf]
  %v84 = vld [vmem:[%s0 + $0x100] sm:$0xf]
  %v85 = vld [vmem:[%s0 + $0x104] sm:$0xf]
  %v86 = vld [vmem:[%s0 + $0x108] sm:$0xf]
  %v87 = vld [vmem:[%s0 + $0x10c] sm:$0xf]
  %v88 = vld [vmem:[%s0 + $0x110] sm:$0xf]
  %v89 = vld [vmem:[%s0 + $0x114] sm:$0xf]
  %v90 = vld [vmem:[%s0 + $0x118] sm:$0xf]
  %v91 = vld [vmem:[%s0 + $0x11c] sm:$0xf]
  %v92 = vld [vmem:[%s0 + $0x120] sm:$0xf]
  %v93 = vld [vmem:[%s0 + $0x124] sm:$0xf]
  %v94 = vld [vmem:[%s0 + $0x128] sm:$0xf]
  %v95 = vld [vmem:[%s0 + $0x12c] sm:$0xf]
  %v96 = vld [vmem:[%s0 + $0x130] sm:$0xf]
  %v97 = vld [vmem:[%s0 + $0x134] sm:$0xf]
  %v98 = vld [vmem:[%s0 + $0x138] sm:$0xf]
  %v99 = vld [vmem:[%s0 + $0x13c] sm:$0xf]
  %v100 = vld [vmem:[%s0 + $0x140] sm:$0xf]
  %v101 = vld [vmem:[%s0 + $0x144] sm:$0xf]
  %v102 = vld [vmem:[%s0 + $0x148] sm:$0xf]
  %v103 = vld [vmem:[%s0 + $0x14c] sm:$0xf]
  %v104 = vld [vmem:[%s0 + $0x150] sm:$0xf]
  %v105 = vld [vmem:[%s0 + $0x154] sm:$0xf]
  %v106 = vld [vmem:[%s0 + $0x158] sm:$0xf]
  %v107 = vld [vmem:[%s0 + $0x15c] sm:$0xf]
  %v108 = vld [vmem:[%s0 + $0x160] sm:$0xf]
  %v109 = vld [vmem:[%s0 + $0x164] sm:$0xf]
  %v110 = vld [vmem:[%s0 + $0x168] sm:$0xf]
  %v111 = vld [vmem:[%s0 + $0x16c] sm:$0xf]
  %v112 = vld [vmem:[%s0 + $0x170] sm:$0xf]
  %v113 = vld [vmem:[%s0 + $0x174] sm:$0xf]
  %v114 = vld [vmem:[%s0 + $0x178] sm:$0xf]
  %v115 = vld [vmem:[%s0 + $0x17c] sm:$0xf]
  %v116 = vld [vmem:[%s0 + $0x180] sm:$0xf]
  %v117 = vld [vmem:[%s0 + $0x184] sm:$0xf]
  %v118 = vld [vmem:[%s0 + $0x188] sm:$0xf]
  %v119 = vld [vmem:[%s0 + $0x18c] sm:$0xf]
  %v120 = vld [vmem:[%s0 + $0x190] sm:$0xf]
  %v121 = vld [vmem:[%s0 + $0x194] sm:$0xf]
  %v122 = vld [vmem:[%s0 + $0x198] sm:$0xf]
  %v123 = vld [vmem:[%s0 + $0x19c] sm:$0xf]
  %v124 = vld [vmem:[%s0 + $0x1a0] sm:$0xf]
  %v125 = vld [vmem:[%s0 + $0x1a4] sm:$0xf]
  %v126 = vld [vmem:[%s0 + $0x1a8] sm:$0xf]
  %v127 = vld [vmem:[%s0 + $0x1ac] sm:$0xf]
  %v128 = vld [vmem:[%s0 + $0x1b0] sm:$0xf]
  %v129 = vld [vmem:[%s0 + $0x1b4] sm:$0xf]
  %v130 = vld [vmem:[%s0 + $0x1b8] sm:$0xf]
  %v131 = vld [vmem:[%s0 + $0x1bc] sm:$0xf]
  %v132 = vld [vmem:[%s0 + $0x1c0] sm:$0xf]
  %v133 = vld [vmem:[%s0 + $0x1c4] sm:$0xf]
  %v134 = vld [vmem:[%s0 + $0x1c8] sm:$0xf]
  %v135 = vld [vmem:[%s0 + $0x1cc] sm:$0xf]
  %v136 = vld [vmem:[%s0 + $0x1d0] sm:$0xf]
  %v137 = vld [vmem:[%s0 + $0x1d4] sm:$0xf]
  %v138 = vld [vmem:[%s0 + $0x1d8] sm:$0xf]
  %v139 = vld [vmem:[%s0 + $0x1dc] sm:$0xf]
  %v140 = vld [vmem:[%s0 + $0x1e0] sm:$0xf]
  %v141 = vld [vmem:[%s0 + $0x1e4] sm:$0xf]
  %v142 = vld [vmem:[%s0 + $0x1e8] sm:$0xf]
  %v143 = vld [vmem:[%s0 + $0x1ec] sm:$0xf]
  %v144 = vld [vmem:[%s0 + $0x1f0] sm:$0xf]
  %v145 = vld [vmem:[%s0 + $0x1f4] sm:$0xf]
  %v146 = vld [vmem:[%s0 + $0x1f8] sm:$0xf]
  %v147 = vld [vmem:[%s0 + $0x1fc] sm:$0xf]
  %v148 = vld [vmem:[%s0 + $0x200] sm:$0xf]
  %v149 = vld [vmem:[%s0 + $0x204] sm:$0xf]
  %v150 = vld [vmem:[%s0 + $0x208] sm:$0xf]
  %v151 = vld [vmem:[%s0 + $0x20c] sm:$0xf]
  %v152 = vld [vmem:[%s0 + $0x210] sm:$0xf]
  %v153 = vld [vmem:[%s0 + $0x214] sm:$0xf]
  %v154 = vld [vmem:[%s0 + $0x218] sm:$0xf]
  %v155 = vld [vmem:[%s0 + $0x21c] sm:$0xf]
  %v156 = vld [vmem:[%s0 + $0x220] sm:$0xf]
  %v157 = vld [vmem:[%s0 + $0x224] sm:$0xf]
  %v158 = vld [vmem:[%s0 + $0x228] sm:$0xf]
  %v159 = vld [vmem:[%s0 + $0x22c] sm:$0xf]
  %v160 = vld [vmem:[%s0 + $0x230] sm:$0xf]
  %v161 = vld [vmem:[%s0 + $0x234] sm:$0xf]
  %v162 = vld [vmem:[%s0 + $0x238] sm:$0xf]
  %v163 = vld [vmem:[%s0 + $0x23c] sm:$0xf]
  %v164 = vld [vmem:[%s0 + $0x240] sm:$0xf]
  %v165 = vld [vmem:[%s0 + $0x244] sm:$0xf]
  %v166 = vld [vmem:[%s0 + $0x248] sm:$0xf]
  %v167 = vld [vmem:[%s0 + $0x24c] sm:$0xf]
  %v168 = vld [vmem:[%s0 + $0x250] sm:$0xf]
  %v169 = vld [vmem:[%s0 + $0x254] sm:$0xf]
  %v170 = vld [vmem:[%s0 + $0x258] sm:$0xf]
  %v171 = vld [vmem:[%s0 + $0x25c] sm:$0xf]
  %v172 = vld [vmem:[%s0 + $0x260] sm:$0xf]
  %v173 = vld [vmem:[%s0 + $0x264] sm:$0xf]
  %v174 = vld [vmem:[%s0 + $0x268] sm:$0xf]
  %v175 = vld [vmem:[%s0 + $0x26c] sm:$0xf]
  %v176 = vld [vmem:[%s0 + $0x270] sm:$0xf]
  %v177 = vld [vmem:[%s0 + $0x274] sm:$0xf]
  %v178 = vld [vmem:[%s0 + $0x278] sm:$0xf]
  %v179 = vld [vmem:[%s0 + $0x27c] sm:$0xf]
  %v180 = vld [vmem:[%s0 + $0x280] sm:$0xf]
  %v181 = vld [vmem:[%s0 + $0x284] sm:$0xf]
  %v182 = vld [vmem:[%s0 + $0x288] sm:$0xf]
  %v183 = vld [vmem:[%s0 + $0x28c] sm:$0xf]
  %v184 = vld [vmem:[%s0 + $0x290] sm:$0xf]
  %v185 = vld [vmem:[%s0 + $0x294] sm:$0xf]
  %v186 = vld [vmem:[%s0 + $0x298] sm:$0xf]
  %v187 = vld [vmem:[%s0 + $0x29c] sm:$0xf]
  %v188 = vld [vmem:[%s0 + $0x2a0] sm:$0xf]
  %v189 = vld [vmem:[%s0 + $0x2a4] sm:$0xf]
  %v190 = vld [vmem:[%s0 + $0x2a8] sm:$0xf]
  %v191 = vld [vmem:[%s0 + $0x2ac] sm:$0xf]
  %v192 = vld [vmem:[%s0 + $0x2b0] sm:$0xf]
  %v193 = vld [vmem:[%s0 + $0x2b4] sm:$0xf]
  %v194 = vld [vmem:[%s0 + $0x2b8] sm:$0xf]
  %v195 = vld [vmem:[%s0 + $0x2bc] sm:$0xf]
  %v196 = vld [vmem:[%s0 + $0x2c0] sm:$0xf]
  %v197 = vld [vmem:[%s0 + $0x2c4] sm:$0xf]
  %v198 = vld [vmem:[%s0 + $0x2c8] sm:$0xf]
  %v199 = vld [vmem:[%s0 + $0x2cc] sm:$0xf]
  %v200 = vld [vmem:[%s0 + $0x2d0] sm:$0xf]
  %v201 = vld [vmem:[%s0 + $0x2d4] sm:$0xf]
  %v202 = vld [vmem:[%s0 + $0x2d8] sm:$0xf]
  %v203 = vld [vmem:[%s0 + $0x2dc] sm:$0xf]
  %v204 = vld [vmem:[%s0 + $0x2e0] sm:$0xf]
  %v205 = vld [vmem:[%s0 + $0x2e4] sm:$0xf]
  %v206 = vld [vmem:[%s0 + $0x2e8] sm:$0xf]
  %v207 = vld [vmem:[%s0 + $0x2ec] sm:$0xf]
  %v208 = vld [vmem:[%s0 + $0x2f0] sm:$0xf]
  %v209 = vld [vmem:[%s0 + $0x2f4] sm:$0xf]
  %v210 = vld [vmem:[%s0 + $0x2f8] sm:$0xf]
  %v211 = vld [vmem:[%s0 + $0x2fc] sm:$0xf]
  %v212 = vld [vmem:[%s0 + $0x300] sm:$0xf]
  %v213 = vld [vmem:[%s0 + $0x304] sm:$0xf]
  %v214 = vld [vmem:[%s0 + $0x308] sm:$0xf]
  %v215 = vld [vmem:[%s0 + $0x30c] sm:$0xf]
  %v216 = vld [vmem:[%s0 + $0x310] sm:$0xf]
  %v217 = vld [vmem:[%s0 + $0x314] sm:$0xf]
  %v218 = vld [vmem:[%s0 + $0x318] sm:$0xf]
  %v219 = vld [vmem:[%s0 + $0x31c] sm:$0xf]
  %v220 = vld [vmem:[%s0 + $0x320] sm:$0xf]
  %v221 = vld [vmem:[%s0 + $0x324] sm:$0xf]
  %v222 = vld [vmem:[%s0 + $0x328] sm:$0xf]
  %v223 = vld [vmem:[%s0 + $0x32c] sm:$0xf]
  %v224 = vld [vmem:[%s0 + $0x330] sm:$0xf]
  %v225 = vld [vmem:[%s0 + $0x334] sm:$0xf]
  %v226 = vld [vmem:[%s0 + $0x338] sm:$0xf]
  %v227 = vld [vmem:[%s0 + $0x33c] sm:$0xf]
  %v228 = vld [vmem:[%s0 + $0x340] sm:$0xf]
  %v229 = vld [vmem:[%s0 + $0x344] sm:$0xf]
  %v230 = vld [vmem:[%s0 + $0x348] sm:$0xf]
  %v231 = vld [vmem:[%s0 + $0x34c] sm:$0xf]
  %v232 = vld [vmem:[%s0 + $0x350] sm:$0xf]
  %v233 = vld [vmem:[%s0 + $0x354] sm:$0xf]
  %v234 = vld [vmem:[%s0 + $0x358] sm:$0xf]
  %v235 = vld [vmem:[%s0 + $0x35c] sm:$0xf]
  %v236 = vld [vmem:[%s0 + $0x360] sm:$0xf]
  %v237 = vld [vmem:[%s0 + $0x364] sm:$0xf]
  %v238 = vld [vmem:[%s0 + $0x368] sm:$0xf]
  %v239 = vld [vmem:[%s0 + $0x36c] sm:$0xf]
  %v240 = vld [vmem:[%s0 + $0x370] sm:$0xf]
  %v241 = vld [vmem:[%s0 + $0x374] sm:$0xf]
  %v242 = vld [vmem:[%s0 + $0x378] sm:$0xf]
  %v243 = vld [vmem:[%s0 + $0x37c] sm:$0xf]
  %v244 = vld [vmem:[%s0 + $0x380] sm:$0xf]
  %v245 = vld [vmem:[%s0 + $0x384] sm:$0xf]
  %v246 = vld [vmem:[%s0 + $0x388] sm:$0xf]
  %v247 = vld [vmem:[%s0 + $0x38c] sm:$0xf]
  %v248 = vld [vmem:[%s0 + $0x390] sm:$0xf]
  %v249 = vld [vmem:[%s0 + $0x394] sm:$0xf]
  %v250 = vld [vmem:[%s0 + $0x398] sm:$0xf]
  %v251 = vld [vmem:[%s0 + $0x39c] sm:$0xf]
  %v252 = vld [vmem:[%s0 + $0x3a0] sm:$0xf]
  %v253 = vld [vmem:[%s0 + $0x3a4] sm:$0xf]
  %v254 = vld [vmem:[%s0 + $0x3a8] sm:$0xf]
  %v255 = vld [vmem:[%s0 + $0x3ac] sm:$0xf]
  %v256 = vld [vmem:[%s0 + $0x3b0] sm:$0xf]
  %v257 = vld [vmem:[%s0 + $0x3b4] sm:$0xf]
  %v258 = vld [vmem:[%s0 + $0x3b8] sm:$0xf]
  %v259 = vld [vmem:[%s0 + $0x3bc] sm:$0xf]
  %v260 = vld [vmem:[%s0 + $0x3c0] sm:$0xf]
  %v261 = vld [vmem:[%s0 + $0x3c4] sm:$0xf]
  %v262 = vld [vmem:[%s0 + $0x3c8] sm:$0xf]
  %v263 = vld [vmem:[%s0 + $0x3cc] sm:$0xf]
  %v264 = vld [vmem:[%s0 + $0x3d0] sm:$0xf]
  %v265 = vld [vmem:[%s0 + $0x3d4] sm:$0xf]
  %v266 = vld [vmem:[%s0 + $0x3d8] sm:$0xf]
  %v267 = vld [vmem:[%s0 + $0x3dc] sm:$0xf]
  %v268 = vld [vmem:[%s0 + $0x3e0] sm:$0xf]
  %v269 = vld [vmem:[%s0 + $0x3e4] sm:$0xf]
  %v270 = vld [vmem:[%s0 + $0x3e8] sm:$0xf]
  %v271 = vld [vmem:[%s0 + $0x3ec] sm:$0xf]
  %v272 = vld [vmem:[%s0 + $0x3f0] sm:$0xf]
  %v273 = vld [vmem:[%s0 + $0x3f4] sm:$0xf]
  %v274 = vld [vmem:[%s0 + $0x3f8] sm:$0xf]
  %v275 = vld [vmem:[%s0 + $0x3fc] sm:$0xf]
  %v532 = vunpack.c.l.b16 %v20
  %v533 = vunpack.c.l.b16 %v21
  %v534 = vunpack.c.l.b16 %v22
  %v535 = vunpack.c.l.b16 %v23
  %v536 = vunpack.c.l.b16 %v24
  %v537 = vunpack.c.l.b16 %v25
  %v538 = vunpack.c.l.b16 %v26
  %v539 = vunpack.c.l.b16 %v27
  %v540 = vunpack.c.l.b16 %v28
  %v541 = vunpack.c.l.b16 %v29
  %v542 = vunpack.c.l.b16 %v30
  %v543 = vunpack.c.l.b16 %v31
  %v544 = vunpack.c.l.b16 %v32
  %v545 = vunpack.c.l.b16 %v33
  %v546 = vunpack.c.l.b16 %v34
  %v547 = vunpack.c.l.b16 %v35
  %v548 = vunpack.c.l.b16 %v36
  %v549 = vunpack.c.l.b16 %v37
  %v550 = vunpack.c.l.b16 %v38
  %v551 = vunpack.c.l.b16 %v39
  %v552 = vunpack.c.l.b16 %v40
  %v553 = vunpack.c.l.b16 %v41
  %v554 = vunpack.c.l.b16 %v42
  %v555 = vunpack.c.l.b16 %v43
  %v556 = vunpack.c.l.b16 %v44
  %v557 = vunpack.c.l.b16 %v45
  %v558 = vunpack.c.l.b16 %v46
  %v559 = vunpack.c.l.b16 %v47
  %v560 = vunpack.c.l.b16 %v48
  %v561 = vunpack.c.l.b16 %v49
  %v562 = vunpack.c.l.b16 %v50
  %v563 = vunpack.c.l.b16 %v51
  %v564 = vunpack.c.l.b16 %v52
  %v565 = vunpack.c.l.b16 %v53
  %v566 = vunpack.c.l.b16 %v54
  %v567 = vunpack.c.l.b16 %v55
  %v568 = vunpack.c.l.b16 %v56
  %v569 = vunpack.c.l.b16 %v57
  %v570 = vunpack.c.l.b16 %v58
  %v571 = vunpack.c.l.b16 %v59
  %v572 = vunpack.c.l.b16 %v60
  %v573 = vunpack.c.l.b16 %v61
  %v574 = vunpack.c.l.b16 %v62
  %v575 = vunpack.c.l.b16 %v63
  %v576 = vunpack.c.l.b16 %v64
  %v577 = vunpack.c.l.b16 %v65
  %v578 = vunpack.c.l.b16 %v66
  %v579 = vunpack.c.l.b16 %v67
  %v580 = vunpack.c.l.b16 %v68
  %v581 = vunpack.c.l.b16 %v69
  %v582 = vunpack.c.l.b16 %v70
  %v583 = vunpack.c.l.b16 %v71
  %v584 = vunpack.c.l.b16 %v72
  %v585 = vunpack.c.l.b16 %v73
  %v586 = vunpack.c.l.b16 %v74
  %v587 = vunpack.c.l.b16 %v75
  %v588 = vunpack.c.l.b16 %v76
  %v589 = vunpack.c.l.b16 %v77
  %v590 = vunpack.c.l.b16 %v78
  %v591 = vunpack.c.l.b16 %v79
  %v592 = vunpack.c.l.b16 %v80
  %v593 = vunpack.c.l.b16 %v81
  %v594 = vunpack.c.l.b16 %v82
  %v595 = vunpack.c.l.b16 %v83
  %v596 = vunpack.c.l.b16 %v84
  %v597 = vunpack.c.l.b16 %v85
  %v598 = vunpack.c.l.b16 %v86
  %v599 = vunpack.c.l.b16 %v87
  %v600 = vunpack.c.l.b16 %v88
  %v601 = vunpack.c.l.b16 %v89
  %v602 = vunpack.c.l.b16 %v90
  %v603 = vunpack.c.l.b16 %v91
  %v604 = vunpack.c.l.b16 %v92
  %v605 = vunpack.c.l.b16 %v93
  %v606 = vunpack.c.l.b16 %v94
  %v607 = vunpack.c.l.b16 %v95
  %v608 = vunpack.c.l.b16 %v96
  %v609 = vunpack.c.l.b16 %v97
  %v610 = vunpack.c.l.b16 %v98
  %v611 = vunpack.c.l.b16 %v99
  %v612 = vunpack.c.l.b16 %v100
  %v613 = vunpack.c.l.b16 %v101
  %v614 = vunpack.c.l.b16 %v102
  %v615 = vunpack.c.l.b16 %v103
  %v616 = vunpack.c.l.b16 %v104
  %v617 = vunpack.c.l.b16 %v105
  %v618 = vunpack.c.l.b16 %v106
  %v619 = vunpack.c.l.b16 %v107
  %v620 = vunpack.c.l.b16 %v108
  %v621 = vunpack.c.l.b16 %v109
  %v622 = vunpack.c.l.b16 %v110
  %v623 = vunpack.c.l.b16 %v111
  %v624 = vunpack.c.l.b16 %v112
  %v625 = vunpack.c.l.b16 %v113
  %v626 = vunpack.c.l.b16 %v114
  %v627 = vunpack.c.l.b16 %v115
  %v628 = vunpack.c.l.b16 %v116
  %v629 = vunpack.c.l.b16 %v117
  %v630 = vunpack.c.l.b16 %v118
  %v631 = vunpack.c.l.b16 %v119
  %v632 = vunpack.c.l.b16 %v120
  %v633 = vunpack.c.l.b16 %v121
  %v634 = vunpack.c.l.b16 %v122
  %v635 = vunpack.c.l.b16 %v123
  %v636 = vunpack.c.l.b16 %v124
  %v637 = vunpack.c.l.b16 %v125
  %v638 = vunpack.c.l.b16 %v126
  %v639 = vunpack.c.l.b16 %v127
  %v640 = vunpack.c.l.b16 %v128
  %v641 = vunpack.c.l.b16 %v129
  %v642 = vunpack.c.l.b16 %v130
  %v643 = vunpack.c.l.b16 %v131
  %v644 = vunpack.c.l.b16 %v132
  %v645 = vunpack.c.l.b16 %v133
  %v646 = vunpack.c.l.b16 %v134
  %v647 = vunpack.c.l.b16 %v135
  %v648 = vunpack.c.l.b16 %v136
  %v649 = vunpack.c.l.b16 %v137
  %v650 = vunpack.c.l.b16 %v138
  %v651 = vunpack.c.l.b16 %v139
  %v652 = vunpack.c.l.b16 %v140
  %v653 = vunpack.c.l.b16 %v141
  %v654 = vunpack.c.l.b16 %v142
  %v655 = vunpack.c.l.b16 %v143
  %v656 = vunpack.c.l.b16 %v144
  %v657 = vunpack.c.l.b16 %v145
  %v658 = vunpack.c.l.b16 %v146
  %v659 = vunpack.c.l.b16 %v147
  %v660 = vunpack.c.l.b16 %v148
  %v661 = vunpack.c.l.b16 %v149
  %v662 = vunpack.c.l.b16 %v150
  %v663 = vunpack.c.l.b16 %v151
  %v664 = vunpack.c.l.b16 %v152
  %v665 = vunpack.c.l.b16 %v153
  %v666 = vunpack.c.l.b16 %v154
  %v667 = vunpack.c.l.b16 %v155
  %v668 = vunpack.c.l.b16 %v156
  %v669 = vunpack.c.l.b16 %v157
  %v670 = vunpack.c.l.b16 %v158
  %v671 = vunpack.c.l.b16 %v159
  %v672 = vunpack.c.l.b16 %v160
  %v673 = vunpack.c.l.b16 %v161
  %v674 = vunpack.c.l.b16 %v162
  %v675 = vunpack.c.l.b16 %v163
  %v676 = vunpack.c.l.b16 %v164
  %v677 = vunpack.c.l.b16 %v165
  %v678 = vunpack.c.l.b16 %v166
  %v679 = vunpack.c.l.b16 %v167
  %v680 = vunpack.c.l.b16 %v168
  %v681 = vunpack.c.l.b16 %v169
  %v682 = vunpack.c.l.b16 %v170
  %v683 = vunpack.c.l.b16 %v171
  %v684 = vunpack.c.l.b16 %v172
  %v685 = vunpack.c.l.b16 %v173
  %v686 = vunpack.c.l.b16 %v174
  %v687 = vunpack.c.l.b16 %v175
  %v688 = vunpack.c.l.b16 %v176
  %v689 = vunpack.c.l.b16 %v177
  %v690 = vunpack.c.l.b16 %v178
  %v691 = vunpack.c.l.b16 %v179
  %v692 = vunpack.c.l.b16 %v180
  %v693 = vunpack.c.l.b16 %v181
  %v694 = vunpack.c.l.b16 %v182
  %v695 = vunpack.c.l.b16 %v183
  %v696 = vunpack.c.l.b16 %v184
  %v697 = vunpack.c.l.b16 %v185
  %v698 = vunpack.c.l.b16 %v186
  %v699 = vunpack.c.l.b16 %v187
  %v700 = vunpack.c.l.b16 %v188
  %v701 = vunpack.c.l.b16 %v189
  %v702 = vunpack.c.l.b16 %v190
  %v703 = vunpack.c.l.b16 %v191
  %v704 = vunpack.c.l.b16 %v192
  %v705 = vunpack.c.l.b16 %v193
  %v706 = vunpack.c.l.b16 %v194
  %v707 = vunpack.c.l.b16 %v195
  %v708 = vunpack.c.l.b16 %v196
  %v709 = vunpack.c.l.b16 %v197
  %v710 = vunpack.c.l.b16 %v198
  %v711 = vunpack.c.l.b16 %v199
  %v712 = vunpack.c.l.b16 %v200
  %v713 = vunpack.c.l.b16 %v201
  %v714 = vunpack.c.l.b16 %v202
  %v715 = vunpack.c.l.b16 %v203
  %v716 = vunpack.c.l.b16 %v204
  %v717 = vunpack.c.l.b16 %v205
  %v718 = vunpack.c.l.b16 %v206
  %v719 = vunpack.c.l.b16 %v207
  %v720 = vunpack.c.l.b16 %v208
  %v721 = vunpack.c.l.b16 %v209
  %v722 = vunpack.c.l.b16 %v210
  %v723 = vunpack.c.l.b16 %v211
  %v724 = vunpack.c.l.b16 %v212
  %v725 = vunpack.c.l.b16 %v213
  %v726 = vunpack.c.l.b16 %v214
  %v727 = vunpack.c.l.b16 %v215
  %v728 = vunpack.c.l.b16 %v216
  %v729 = vunpack.c.l.b16 %v217
  %v730 = vunpack.c.l.b16 %v218
  %v731 = vunpack.c.l.b16 %v219
  %v732 = vunpack.c.l.b16 %v220
  %v733 = vunpack.c.l.b16 %v221
  %v734 = vunpack.c.l.b16 %v222
  %v735 = vunpack.c.l.b16 %v223
  %v736 = vunpack.c.l.b16 %v224
  %v737 = vunpack.c.l.b16 %v225
  %v738 = vunpack.c.l.b16 %v226
  %v739 = vunpack.c.l.b16 %v227
  %v740 = vunpack.c.l.b16 %v228
  %v741 = vunpack.c.l.b16 %v229
  %v742 = vunpack.c.l.b16 %v230
  %v743 = vunpack.c.l.b16 %v231
  %v744 = vunpack.c.l.b16 %v232
  %v745 = vunpack.c.l.b16 %v233
  %v746 = vunpack.c.l.b16 %v234
  %v747 = vunpack.c.l.b16 %v235
  %v748 = vunpack.c.l.b16 %v236
  %v749 = vunpack.c.l.b16 %v237
  %v750 = vunpack.c.l.b16 %v238
  %v751 = vunpack.c.l.b16 %v239
  %v752 = vunpack.c.l.b16 %v240
  %v753 = vunpack.c.l.b16 %v241
  %v754 = vunpack.c.l.b16 %v242
  %v755 = vunpack.c.l.b16 %v243
  %v756 = vunpack.c.l.b16 %v244
  %v757 = vunpack.c.l.b16 %v245
  %v758 = vunpack.c.l.b16 %v246
  %v759 = vunpack.c.l.b16 %v247
  %v760 = vunpack.c.l.b16 %v248
  %v761 = vunpack.c.l.b16 %v249
  %v762 = vunpack.c.l.b16 %v250
  %v763 = vunpack.c.l.b16 %v251
  %v764 = vunpack.c.l.b16 %v252
  %v765 = vunpack.c.l.b16 %v253
  %v766 = vunpack.c.l.b16 %v254
  %v767 = vunpack.c.l.b16 %v255
  %v768 = vunpack.c.l.b16 %v256
  %v769 = vunpack.c.l.b16 %v257
  %v770 = vunpack.c.l.b16 %v258
  %v771 = vunpack.c.l.b16 %v259
  %v772 = vunpack.c.l.b16 %v260
  %v773 = vunpack.c.l.b16 %v261
  %v774 = vunpack.c.l.b16 %v262
  %v775 = vunpack.c.l.b16 %v263
  %v776 = vunpack.c.l.b16 %v264
  %v777 = vunpack.c.l.b16 %v265
  %v778 = vunpack.c.l.b16 %v266
  %v779 = vunpack.c.l.b16 %v267
  %v780 = vunpack.c.l.b16 %v268
  %v781 = vunpack.c.l.b16 %v269
  %v782 = vunpack.c.l.b16 %v270
  %v783 = vunpack.c.l.b16 %v271
  %v784 = vunpack.c.l.b16 %v272
  %v785 = vunpack.c.l.b16 %v273
  %v786 = vunpack.c.l.b16 %v274
  %v787 = vunpack.c.l.b16 %v275
  %v788 = vpack.c.b16 %v533, %v532
  %v789 = vpack.c.b16 %v535, %v534
  %v790 = vpack.c.b16 %v537, %v536
  %v791 = vpack.c.b16 %v539, %v538
  %v792 = vpack.c.b16 %v541, %v540
  %v793 = vpack.c.b16 %v543, %v542
  %v794 = vpack.c.b16 %v545, %v544
  %v795 = vpack.c.b16 %v547, %v546
  %v796 = vpack.c.b16 %v549, %v548
  %v797 = vpack.c.b16 %v551, %v550
  %v798 = vpack.c.b16 %v553, %v552
  %v799 = vpack.c.b16 %v555, %v554
  %v800 = vpack.c.b16 %v557, %v556
  %v801 = vpack.c.b16 %v559, %v558
  %v802 = vpack.c.b16 %v561, %v560
  %v803 = vpack.c.b16 %v563, %v562
  %v804 = vpack.c.b16 %v565, %v564
  %v805 = vpack.c.b16 %v567, %v566
  %v806 = vpack.c.b16 %v569, %v568
  %v807 = vpack.c.b16 %v571, %v570
  %v808 = vpack.c.b16 %v573, %v572
  %v809 = vpack.c.b16 %v575, %v574
  %v810 = vpack.c.b16 %v577, %v576
  %v811 = vpack.c.b16 %v579, %v578
  %v812 = vpack.c.b16 %v581, %v580
  %v813 = vpack.c.b16 %v583, %v582
  %v814 = vpack.c.b16 %v585, %v584
  %v815 = vpack.c.b16 %v587, %v586
  %v816 = vpack.c.b16 %v589, %v588
  %v817 = vpack.c.b16 %v591, %v590
  %v818 = vpack.c.b16 %v593, %v592
  %v819 = vpack.c.b16 %v595, %v594
  %v820 = vpack.c.b16 %v597, %v596
  %v821 = vpack.c.b16 %v599, %v598
  %v822 = vpack.c.b16 %v601, %v600
  %v823 = vpack.c.b16 %v603, %v602
  %v824 = vpack.c.b16 %v605, %v604
  %v825 = vpack.c.b16 %v607, %v606
  %v826 = vpack.c.b16 %v609, %v608
  %v827 = vpack.c.b16 %v611, %v610
  %v828 = vpack.c.b16 %v613, %v612
  %v829 = vpack.c.b16 %v615, %v614
  %v830 = vpack.c.b16 %v617, %v616
  %v831 = vpack.c.b16 %v619, %v618
  %v832 = vpack.c.b16 %v621, %v620
  %v833 = vpack.c.b16 %v623, %v622
  %v834 = vpack.c.b16 %v625, %v624
  %v835 = vpack.c.b16 %v627, %v626
  %v836 = vpack.c.b16 %v629, %v628
  %v837 = vpack.c.b16 %v631, %v630
  %v838 = vpack.c.b16 %v633, %v632
  %v839 = vpack.c.b16 %v635, %v634
  %v840 = vpack.c.b16 %v637, %v636
  %v841 = vpack.c.b16 %v639, %v638
  %v842 = vpack.c.b16 %v641, %v640
  %v843 = vpack.c.b16 %v643, %v642
  %v844 = vpack.c.b16 %v645, %v644
  %v845 = vpack.c.b16 %v647, %v646
  %v846 = vpack.c.b16 %v649, %v648
  %v847 = vpack.c.b16 %v651, %v650
  %v848 = vpack.c.b16 %v653, %v652
  %v849 = vpack.c.b16 %v655, %v654
  %v850 = vpack.c.b16 %v657, %v656
  %v851 = vpack.c.b16 %v659, %v658
  %v852 = vpack.c.b16 %v661, %v660
  %v853 = vpack.c.b16 %v663, %v662
  %v854 = vpack.c.b16 %v665, %v664
  %v855 = vpack.c.b16 %v667, %v666
  %v856 = vpack.c.b16 %v669, %v668
  %v857 = vpack.c.b16 %v671, %v670
  %v858 = vpack.c.b16 %v673, %v672
  %v859 = vpack.c.b16 %v675, %v674
  %v860 = vpack.c.b16 %v677, %v676
  %v861 = vpack.c.b16 %v679, %v678
  %v862 = vpack.c.b16 %v681, %v680
  %v863 = vpack.c.b16 %v683, %v682
  %v864 = vpack.c.b16 %v685, %v684
  %v865 = vpack.c.b16 %v687, %v686
  %v866 = vpack.c.b16 %v689, %v688
  %v867 = vpack.c.b16 %v691, %v690
  %v868 = vpack.c.b16 %v693, %v692
  %v869 = vpack.c.b16 %v695, %v694
  %v870 = vpack.c.b16 %v697, %v696
  %v871 = vpack.c.b16 %v699, %v698
  %v872 = vpack.c.b16 %v701, %v700
  %v873 = vpack.c.b16 %v703, %v702
  %v874 = vpack.c.b16 %v705, %v704
  %v875 = vpack.c.b16 %v707, %v706
  %v876 = vpack.c.b16 %v709, %v708
  %v877 = vpack.c.b16 %v711, %v710
  %v878 = vpack.c.b16 %v713, %v712
  %v879 = vpack.c.b16 %v715, %v714
  %v880 = vpack.c.b16 %v717, %v716
  %v881 = vpack.c.b16 %v719, %v718
  %v882 = vpack.c.b16 %v721, %v720
  %v883 = vpack.c.b16 %v723, %v722
  %v884 = vpack.c.b16 %v725, %v724
  %v885 = vpack.c.b16 %v727, %v726
  %v886 = vpack.c.b16 %v729, %v728
  %v887 = vpack.c.b16 %v731, %v730
  %v888 = vpack.c.b16 %v733, %v732
  %v889 = vpack.c.b16 %v735, %v734
  %v890 = vpack.c.b16 %v737, %v736
  %v891 = vpack.c.b16 %v739, %v738
  %v892 = vpack.c.b16 %v741, %v740
  %v893 = vpack.c.b16 %v743, %v742
  %v894 = vpack.c.b16 %v745, %v744
  %v895 = vpack.c.b16 %v747, %v746
  %v896 = vpack.c.b16 %v749, %v748
  %v897 = vpack.c.b16 %v751, %v750
  %v898 = vpack.c.b16 %v753, %v752
  %v899 = vpack.c.b16 %v755, %v754
  %v900 = vpack.c.b16 %v757, %v756
  %v901 = vpack.c.b16 %v759, %v758
  %v902 = vpack.c.b16 %v761, %v760
  %v903 = vpack.c.b16 %v763, %v762
  %v904 = vpack.c.b16 %v765, %v764
  %v905 = vpack.c.b16 %v767, %v766
  %v906 = vpack.c.b16 %v769, %v768
  %v907 = vpack.c.b16 %v771, %v770
  %v908 = vpack.c.b16 %v773, %v772
  %v909 = vpack.c.b16 %v775, %v774
  %v910 = vpack.c.b16 %v777, %v776
  %v911 = vpack.c.b16 %v779, %v778
  %v912 = vpack.c.b16 %v781, %v780
  %v913 = vpack.c.b16 %v783, %v782
  %v914 = vpack.c.b16 %v785, %v784
  %v915 = vpack.c.b16 %v787, %v786
  %v918 = vunpack.c.l.b16 %v18
  %v919 = vunpack.c.l.b16 %v19
  %v920 = vpack.c.b16 %v919, %v918
  %vm922 = vcmask 130048
  %v924 = vsel %vm922, %v788, 0
  %v927 = vsel %vm922, %v789, 0
  %v930 = vsel %vm922, %v790, 0
  %v933 = vsel %vm922, %v791, 0
  %v936 = vsel %vm922, %v792, 0
  %v939 = vsel %vm922, %v793, 0
  %v942 = vsel %vm922, %v794, 0
  %v945 = vsel %vm922, %v795, 0
  %v948 = vsel %vm922, %v796, 0
  %v951 = vsel %vm922, %v797, 0
  %v954 = vsel %vm922, %v798, 0
  %v957 = vsel %vm922, %v799, 0
  %v960 = vsel %vm922, %v800, 0
  %v963 = vsel %vm922, %v801, 0
  %v966 = vsel %vm922, %v802, 0
  %v969 = vsel %vm922, %v803, 0
  %v972 = vsel %vm922, %v804, 0
  %v975 = vsel %vm922, %v805, 0
  %v978 = vsel %vm922, %v806, 0
  %v981 = vsel %vm922, %v807, 0
  %v984 = vsel %vm922, %v808, 0
  %v987 = vsel %vm922, %v809, 0
  %v990 = vsel %vm922, %v810, 0
  %v993 = vsel %vm922, %v811, 0
  %v996 = vsel %vm922, %v812, 0
  %v999 = vsel %vm922, %v813, 0
  %v1002 = vsel %vm922, %v814, 0
  %v1005 = vsel %vm922, %v815, 0
  %v1008 = vsel %vm922, %v816, 0
  %v1011 = vsel %vm922, %v817, 0
  %v1014 = vsel %vm922, %v818, 0
  %v1017 = vsel %vm922, %v819, 0
  %v1020 = vsel %vm922, %v820, 0
  %v1023 = vsel %vm922, %v821, 0
  %v1026 = vsel %vm922, %v822, 0
  %v1029 = vsel %vm922, %v823, 0
  %v1032 = vsel %vm922, %v824, 0
  %v1035 = vsel %vm922, %v825, 0
  %v1038 = vsel %vm922, %v826, 0
  %v1041 = vsel %vm922, %v827, 0
  %v1044 = vsel %vm922, %v828, 0
  %v1047 = vsel %vm922, %v829, 0
  %v1050 = vsel %vm922, %v830, 0
  %v1053 = vsel %vm922, %v831, 0
  %v1056 = vsel %vm922, %v832, 0
  %v1059 = vsel %vm922, %v833, 0
  %v1062 = vsel %vm922, %v834, 0
  %v1065 = vsel %vm922, %v835, 0
  %v1068 = vsel %vm922, %v836, 0
  %v1071 = vsel %vm922, %v837, 0
  %v1074 = vsel %vm922, %v838, 0
  %v1077 = vsel %vm922, %v839, 0
  %v1080 = vsel %vm922, %v840, 0
  %v1083 = vsel %vm922, %v841, 0
  %v1086 = vsel %vm922, %v842, 0
  %v1089 = vsel %vm922, %v843, 0
  %v1092 = vsel %vm922, %v844, 0
  %v1095 = vsel %vm922, %v845, 0
  %v1098 = vsel %vm922, %v846, 0
  %v1101 = vsel %vm922, %v847, 0
  %v1104 = vsel %vm922, %v848, 0
  %v1107 = vsel %vm922, %v849, 0
  %v1110 = vsel %vm922, %v850, 0
  %v1113 = vsel %vm922, %v851, 0
  %v1116 = vsel %vm922, %v852, 0
  %v1119 = vsel %vm922, %v853, 0
  %v1122 = vsel %vm922, %v854, 0
  %v1125 = vsel %vm922, %v855, 0
  %v1128 = vsel %vm922, %v856, 0
  %v1131 = vsel %vm922, %v857, 0
  %v1134 = vsel %vm922, %v858, 0
  %v1137 = vsel %vm922, %v859, 0
  %v1140 = vsel %vm922, %v860, 0
  %v1143 = vsel %vm922, %v861, 0
  %v1146 = vsel %vm922, %v862, 0
  %v1149 = vsel %vm922, %v863, 0
  %v1152 = vsel %vm922, %v864, 0
  %v1155 = vsel %vm922, %v865, 0
  %v1158 = vsel %vm922, %v866, 0
  %v1161 = vsel %vm922, %v867, 0
  %v1164 = vsel %vm922, %v868, 0
  %v1167 = vsel %vm922, %v869, 0
  %v1170 = vsel %vm922, %v870, 0
  %v1173 = vsel %vm922, %v871, 0
  %v1176 = vsel %vm922, %v872, 0
  %v1179 = vsel %vm922, %v873, 0
  %v1182 = vsel %vm922, %v874, 0
  %v1185 = vsel %vm922, %v875, 0
  %v1188 = vsel %vm922, %v876, 0
  %v1191 = vsel %vm922, %v877, 0
  %v1194 = vsel %vm922, %v878, 0
  %v1197 = vsel %vm922, %v879, 0
  %v1200 = vsel %vm922, %v880, 0
  %v1203 = vsel %vm922, %v881, 0
  %v1206 = vsel %vm922, %v882, 0
  %v1209 = vsel %vm922, %v883, 0
  %v1212 = vsel %vm922, %v884, 0
  %v1215 = vsel %vm922, %v885, 0
  %v1218 = vsel %vm922, %v886, 0
  %v1221 = vsel %vm922, %v887, 0
  %v1224 = vsel %vm922, %v888, 0
  %v1227 = vsel %vm922, %v889, 0
  %v1230 = vsel %vm922, %v890, 0
  %v1233 = vsel %vm922, %v891, 0
  %v1236 = vsel %vm922, %v892, 0
  %v1239 = vsel %vm922, %v893, 0
  %v1242 = vsel %vm922, %v894, 0
  %v1245 = vsel %vm922, %v895, 0
  %v1248 = vsel %vm922, %v896, 0
  %v1251 = vsel %vm922, %v897, 0
  %v1254 = vsel %vm922, %v898, 0
  %v1257 = vsel %vm922, %v899, 0
  %v1260 = vsel %vm922, %v900, 0
  %v1263 = vsel %vm922, %v901, 0
  %v1266 = vsel %vm922, %v902, 0
  %v1269 = vsel %vm922, %v903, 0
  %v1272 = vsel %vm922, %v904, 0
  %v1275 = vsel %vm922, %v905, 0
  %v1278 = vsel %vm922, %v906, 0
  %v1281 = vsel %vm922, %v907, 0
  %v1284 = vsel %vm922, %v908, 0
  %v1287 = vsel %vm922, %v909, 0
  %v1290 = vsel %vm922, %v910, 0
  %v1293 = vsel %vm922, %v911, 0
  %v1296 = vsel %vm922, %v912, 0
  %v1299 = vsel %vm922, %v913, 0
  %v1302 = vsel %vm922, %v914, 0
  %v1305 = vsel %vm922, %v915, 0
  %1307 = vmatprep.subr.bf16.mxu0 0
  %1308 = vmatpush1.bf16.msra.mxu0 %v920
  %1309 = vmatprep.subr.bf16.mxu0 0
  %1310 = vmatpush1.bf16.msra.mxu0 0
  %1311 = vmatprep.subr.bf16.mxu0 0
  %1312 = vmatpush1.bf16.msra.mxu0 0
  %1313 = vmatprep.subr.bf16.mxu0 0
  %1314 = vmatpush1.bf16.msra.mxu0 0
  %1315 = vmatprep.subr.bf16.mxu0 0
  %1316 = vmatpush1.bf16.msra.mxu0 0
  %1317 = vmatprep.subr.bf16.mxu0 0
  %1318 = vmatpush1.bf16.msra.mxu0 0
  %1319 = vmatprep.subr.bf16.mxu0 0
  %1320 = vmatpush1.bf16.msra.mxu0 0
  %1321 = vmatprep.subr.bf16.mxu0 0
  %1322 = vmatpush1.bf16.msra.mxu0 0
  %1323 = vmatprep.subr.bf16.mxu0 0
  %1324 = vmatpush1.bf16.msra.mxu0 0
  %1325 = vmatprep.subr.bf16.mxu0 0
  %1326 = vmatpush1.bf16.msra.mxu0 0
  %1327 = vmatprep.subr.bf16.mxu0 0
  %1328 = vmatpush1.bf16.msra.mxu0 0
  %1329 = vmatprep.subr.bf16.mxu0 0
  %1330 = vmatpush1.bf16.msra.mxu0 0
  %1331 = vmatprep.subr.bf16.mxu0 0
  %1332 = vmatpush1.bf16.msra.mxu0 0
  %1333 = vmatprep.subr.bf16.mxu0 0
  %1334 = vmatpush1.bf16.msra.mxu0 0
  %1335 = vmatprep.subr.bf16.mxu0 0
  %1336 = vmatpush1.bf16.msra.mxu0 0
  %1337 = vmatprep.subr.bf16.mxu0 0
  %1338 = vmatpush1.bf16.msra.mxu0 0
  %1339 = vmatprep.mubr.bf16.mxu0 0
  %1340 = vmatmul.mubr.bf16.gmra.mrb[0].mxu0 %v924
  %v1341 = vpop.f32.mrb[0].mxu0
  %v1342 = vadd.f32 0.0, %v1341
  %v1343 = vpop.f32.mrb[0].mxu0
  %v1344 = vpop.f32.mrb[0].mxu0
  %v1345 = vadd.f32 0.0, %v1344
  %v1346 = vpop.f32.mrb[0].mxu0
  %1347 = vmatprep.mubr.bf16.mxu0 0
  %1348 = vmatmul.mubr.bf16.gmra.mrb[0].mxu0 %v927
  %v1349 = vpop.f32.mrb[0].mxu0
  %v1350 = vadd.f32 0.0, %v1349
  %v1351 = vpop.f32.mrb[0].mxu0
  %v1352 = vpop.f32.mrb[0].mxu0
  %v1353 = vadd.f32 0.0, %v1352
  %v1354 = vpop.f32.mrb[0].mxu0
  %1355 = vmatprep.mubr.bf16.mxu0 0
  %1356 = vmatmul.mubr.bf16.gmra.mrb[0].mxu0 %v930
  %v1357 = vpop.f32.mrb[0].mxu0
  %v1358 = vadd.f32 0.0, %v1357
  %v1359 = vpop.f32.mrb[0].mxu0
  %v1360 = vpop.f32.mrb[0].mxu0
  %v1361 = vadd.f32 0.0, %v1360
  %v1362 = vpop.f32.mrb[0].mxu0
  %1363 = vmatprep.mubr.bf16.mxu0 0
  %1364 = vmatmul.mubr.bf16.gmra.mrb[0].mxu0 %v933
  %v1365 = vpop.f32.mrb[0].mxu0
  %v1366 = vadd.f32 0.0, %v1365
  %v1367 = vpop.f32.mrb[0].mxu0
  %v1368 = vpop.f32.mrb[0].mxu0
  %v1369 = vadd.f32 0.0, %v1368
  %v1370 = vpop.f32.mrb[0].mxu0
  %1371 = vmatprep.mubr.bf16.mxu0 0
  %1372 = vmatmul.mubr.bf16.gmra.mrb[0].mxu0 %v936
  %v1373 = vpop.f32.mrb[0].mxu0
  %v1374 = vadd.f32 0.0, %v1373
  %v1375 = vpop.f32.mrb[0].mxu0
  %v1376 = vpop.f32.mrb[0].mxu0
  %v1377 = vadd.f32 0.0, %v1376
  %v1378 = vpop.f32.mrb[0].mxu0
  %1379 = vmatprep.mubr.bf16.mxu0 0
  %1380 = vmatmul.mubr.bf16.gmra.mrb[0].mxu0 %v939
  %v1381 = vpop.f32.mrb[0].mxu0
  %v1382 = vadd.f32 0.0, %v1381
  %v1383 = vpop.f32.mrb[0].mxu0
  %v1384 = vpop.f32.mrb[0].mxu0
  %v1385 = vadd.f32 0.0, %v1384
  %v1386 = vpop.f32.mrb[0].mxu0
  %1387 = vmatprep.mubr.bf16.mxu0 0
  %1388 = vmatmul.mubr.bf16.gmra.mrb[0].mxu0 %v942
  %v1389 = vpop.f32.mrb[0].mxu0
  %v1390 = vadd.f32 0.0, %v1389
  %v1391 = vpop.f32.mrb[0].mxu0
  %v1392 = vpop.f32.mrb[0].mxu0
  %v1393 = vadd.f32 0.0, %v1392
  %v1394 = vpop.f32.mrb[0].mxu0
  %1395 = vmatprep.mubr.bf16.mxu0 0
  %1396 = vmatmul.mubr.bf16.gmra.mrb[0].mxu0 %v945
  %v1397 = vpop.f32.mrb[0].mxu0
  %v1398 = vadd.f32 0.0, %v1397
  %v1399 = vpop.f32.mrb[0].mxu0
  %v1400 = vpop.f32.mrb[0].mxu0
  %v1401 = vadd.f32 0.0, %v1400
  %v1402 = vpop.f32.mrb[0].mxu0
  %1403 = vmatprep.mubr.bf16.mxu0 0
  %1404 = vmatmul.mubr.bf16.gmra.mrb[0].mxu0 %v948
  %v1405 = vpop.f32.mrb[0].mxu0
  %v1406 = vadd.f32 0.0, %v1405
  %v1407 = vpop.f32.mrb[0].mxu0
  %v1408 = vpop.f32.mrb[0].mxu0
  %v1409 = vadd.f32 0.0, %v1408
  %v1410 = vpop.f32.mrb[0].mxu0
  %1411 = vmatprep.mubr.bf16.mxu0 0
  %1412 = vmatmul.mubr.bf16.gmra.mrb[0].mxu0 %v951
  %v1413 = vpop.f32.mrb[0].mxu0
  %v1414 = vadd.f32 0.0, %v1413
  %v1415 = vpop.f32.mrb[0].mxu0
  %v1416 = vpop.f32.mrb[0].mxu0
  %v1417 = vadd.f32 0.0, %v1416
  %v1418 = vpop.f32.mrb[0].mxu0
  %1419 = vmatprep.mubr.bf16.mxu0 0
  %1420 = vmatmul.mubr.bf16.gmra.mrb[0].mxu0 %v954
  %v1421 = vpop.f32.mrb[0].mxu0
  %v1422 = vadd.f32 0.0, %v1421
  %v1423 = vpop.f32.mrb[0].mxu0
  %v1424 = vpop.f32.mrb[0].mxu0
  %v1425 = vadd.f32 0.0, %v1424
  %v1426 = vpop.f32.mrb[0].mxu0
  %1427 = vmatprep.mubr.bf16.mxu0 0
  %1428 = vmatmul.mubr.bf16.gmra.mrb[0].mxu0 %v957
  %v1429 = vpop.f32.mrb[0].mxu0
  %v1430 = vadd.f32 0.0, %v1429
  %v1431 = vpop.f32.mrb[0].mxu0
  %v1432 = vpop.f32.mrb[0].mxu0
  %v1433 = vadd.f32 0.0, %v1432
  %v1434 = vpop.f32.mrb[0].mxu0
  %1435 = vmatprep.mubr.bf16.mxu0 0
  %1436 = vmatmul.mubr.bf16.gmra.mrb[0].mxu0 %v960
  %v1437 = vpop.f32.mrb[0].mxu0
  %v1438 = vadd.f32 0.0, %v1437
  %v1439 = vpop.f32.mrb[0].mxu0
  %v1440 = vpop.f32.mrb[0].mxu0
  %v1441 = vadd.f32 0.0, %v1440
  %v1442 = vpop.f32.mrb[0].mxu0
  %1443 = vmatprep.mubr.bf16.mxu0 0
  %1444 = vmatmul.mubr.bf16.gmra.mrb[0].mxu0 %v963
  %v1445 = vpop.f32.mrb[0].mxu0
  %v1446 = vadd.f32 0.0, %v1445
  %v1447 = vpop.f32.mrb[0].mxu0
  %v1448 = vpop.f32.mrb[0].mxu0
  %v1449 = vadd.f32 0.0, %v1448
  %v1450 = vpop.f32.mrb[0].mxu0
  %1451 = vmatprep.mubr.bf16.mxu0 0
  %1452 = vmatmul.mubr.bf16.gmra.mrb[0].mxu0 %v966
  %v1453 = vpop.f32.mrb[0].mxu0
  %v1454 = vadd.f32 0.0, %v1453
  %v1455 = vpop.f32.mrb[0].mxu0
  %v1456 = vpop.f32.mrb[0].mxu0
  %v1457 = vadd.f32 0.0, %v1456
  %v1458 = vpop.f32.mrb[0].mxu0
  %1459 = vmatprep.mubr.bf16.mxu0 0
  %1460 = vmatmul.mubr.bf16.gmra.mrb[0].mxu0 %v969
  %v1461 = vpop.f32.mrb[0].mxu0
  %v1462 = vadd.f32 0.0, %v1461
  %v1463 = vpop.f32.mrb[0].mxu0
  %v1464 = vpop.f32.mrb[0].mxu0
  %v1465 = vadd.f32 0.0, %v1464
  %v1466 = vpop.f32.mrb[0].mxu0
  %1467 = vmatprep.mubr.bf16.mxu0 0
  %1468 = vmatmul.mubr.bf16.gmra.mrb[0].mxu0 %v972
  %v1469 = vpop.f32.mrb[0].mxu0
  %v1470 = vadd.f32 0.0, %v1469
  %v1471 = vpop.f32.mrb[0].mxu0
  %v1472 = vpop.f32.mrb[0].mxu0
  %v1473 = vadd.f32 0.0, %v1472
  %v1474 = vpop.f32.mrb[0].mxu0
  %1475 = vmatprep.mubr.bf16.mxu0 0
  %1476 = vmatmul.mubr.bf16.gmra.mrb[0].mxu0 %v975
  %v1477 = vpop.f32.mrb[0].mxu0
  %v1478 = vadd.f32 0.0, %v1477
  %v1479 = vpop.f32.mrb[0].mxu0
  %v1480 = vpop.f32.mrb[0].mxu0
  %v1481 = vadd.f32 0.0, %v1480
  %v1482 = vpop.f32.mrb[0].mxu0
  %1483 = vmatprep.mubr.bf16.mxu0 0
  %1484 = vmatmul.mubr.bf16.gmra.mrb[0].mxu0 %v978
  %v1485 = vpop.f32.mrb[0].mxu0
  %v1486 = vadd.f32 0.0, %v1485
  %v1487 = vpop.f32.mrb[0].mxu0
  %v1488 = vpop.f32.mrb[0].mxu0
  %v1489 = vadd.f32 0.0, %v1488
  %v1490 = vpop.f32.mrb[0].mxu0
  %1491 = vmatprep.mubr.bf16.mxu0 0
  %1492 = vmatmul.mubr.bf16.gmra.mrb[0].mxu0 %v981
  %v1493 = vpop.f32.mrb[0].mxu0
  %v1494 = vadd.f32 0.0, %v1493
  %v1495 = vpop.f32.mrb[0].mxu0
  %v1496 = vpop.f32.mrb[0].mxu0
  %v1497 = vadd.f32 0.0, %v1496
  %v1498 = vpop.f32.mrb[0].mxu0
  %1499 = vmatprep.mubr.bf16.mxu0 0
  %1500 = vmatmul.mubr.bf16.gmra.mrb[0].mxu0 %v984
  %v1501 = vpop.f32.mrb[0].mxu0
  %v1502 = vadd.f32 0.0, %v1501
  %v1503 = vpop.f32.mrb[0].mxu0
  %v1504 = vpop.f32.mrb[0].mxu0
  %v1505 = vadd.f32 0.0, %v1504
  %v1506 = vpop.f32.mrb[0].mxu0
  %1507 = vmatprep.mubr.bf16.mxu0 0
  %1508 = vmatmul.mubr.bf16.gmra.mrb[0].mxu0 %v987
  %v1509 = vpop.f32.mrb[0].mxu0
  %v1510 = vadd.f32 0.0, %v1509
  %v1511 = vpop.f32.mrb[0].mxu0
  %v1512 = vpop.f32.mrb[0].mxu0
  %v1513 = vadd.f32 0.0, %v1512
  %v1514 = vpop.f32.mrb[0].mxu0
  %1515 = vmatprep.mubr.bf16.mxu0 0
  %1516 = vmatmul.mubr.bf16.gmra.mrb[0].mxu0 %v990
  %v1517 = vpop.f32.mrb[0].mxu0
  %v1518 = vadd.f32 0.0, %v1517
  %v1519 = vpop.f32.mrb[0].mxu0
  %v1520 = vpop.f32.mrb[0].mxu0
  %v1521 = vadd.f32 0.0, %v1520
  %v1522 = vpop.f32.mrb[0].mxu0
  %1523 = vmatprep.mubr.bf16.mxu0 0
  %1524 = vmatmul.mubr.bf16.gmra.mrb[0].mxu0 %v993
  %v1525 = vpop.f32.mrb[0].mxu0
  %v1526 = vadd.f32 0.0, %v1525
  %v1527 = vpop.f32.mrb[0].mxu0
  %v1528 = vpop.f32.mrb[0].mxu0
  %v1529 = vadd.f32 0.0, %v1528
  %v1530 = vpop.f32.mrb[0].mxu0
  %1531 = vmatprep.mubr.bf16.mxu0 0
  %1532 = vmatmul.mubr.bf16.gmra.mrb[0].mxu0 %v996
  %v1533 = vpop.f32.mrb[0].mxu0
  %v1534 = vadd.f32 0.0, %v1533
  %v1535 = vpop.f32.mrb[0].mxu0
  %v1536 = vpop.f32.mrb[0].mxu0
  %v1537 = vadd.f32 0.0, %v1536
  %v1538 = vpop.f32.mrb[0].mxu0
  %1539 = vmatprep.mubr.bf16.mxu0 0
  %1540 = vmatmul.mubr.bf16.gmra.mrb[0].mxu0 %v999
  %v1541 = vpop.f32.mrb[0].mxu0
  %v1542 = vadd.f32 0.0, %v1541
  %v1543 = vpop.f32.mrb[0].mxu0
  %v1544 = vpop.f32.mrb[0].mxu0
  %v1545 = vadd.f32 0.0, %v1544
  %v1546 = vpop.f32.mrb[0].mxu0
  %1547 = vmatprep.mubr.bf16.mxu0 0
  %1548 = vmatmul.mubr.bf16.gmra.mrb[0].mxu0 %v1002
  %v1549 = vpop.f32.mrb[0].mxu0
  %v1550 = vadd.f32 0.0, %v1549
  %v1551 = vpop.f32.mrb[0].mxu0
  %v1552 = vpop.f32.mrb[0].mxu0
  %v1553 = vadd.f32 0.0, %v1552
  %v1554 = vpop.f32.mrb[0].mxu0
  %1555 = vmatprep.mubr.bf16.mxu0 0
  %1556 = vmatmul.mubr.bf16.gmra.mrb[0].mxu0 %v1005
  %v1557 = vpop.f32.mrb[0].mxu0
  %v1558 = vadd.f32 0.0, %v1557
  %v1559 = vpop.f32.mrb[0].mxu0
  %v1560 = vpop.f32.mrb[0].mxu0
  %v1561 = vadd.f32 0.0, %v1560
  %v1562 = vpop.f32.mrb[0].mxu0
  %1563 = vmatprep.mubr.bf16.mxu0 0
  %1564 = vmatmul.mubr.bf16.gmra.mrb[0].mxu0 %v1008
  %v1565 = vpop.f32.mrb[0].mxu0
  %v1566 = vadd.f32 0.0, %v1565
  %v1567 = vpop.f32.mrb[0].mxu0
  %v1568 = vpop.f32.mrb[0].mxu0
  %v1569 = vadd.f32 0.0, %v1568
  %v1570 = vpop.f32.mrb[0].mxu0
  %1571 = vmatprep.mubr.bf16.mxu0 0
  %1572 = vmatmul.mubr.bf16.gmra.mrb[0].mxu0 %v1011
  %v1573 = vpop.f32.mrb[0].mxu0
  %v1574 = vadd.f32 0.0, %v1573
  %v1575 = vpop.f32.mrb[0].mxu0
  %v1576 = vpop.f32.mrb[0].mxu0
  %v1577 = vadd.f32 0.0, %v1576
  %v1578 = vpop.f32.mrb[0].mxu0
  %1579 = vmatprep.mubr.bf16.mxu0 0
  %1580 = vmatmul.mubr.bf16.gmra.mrb[0].mxu0 %v1014
  %v1581 = vpop.f32.mrb[0].mxu0
  %v1582 = vadd.f32 0.0, %v1581
  %v1583 = vpop.f32.mrb[0].mxu0
  %v1584 = vpop.f32.mrb[0].mxu0
  %v1585 = vadd.f32 0.0, %v1584
  %v1586 = vpop.f32.mrb[0].mxu0
  %1587 = vmatprep.mubr.bf16.mxu0 0
  %1588 = vmatmul.mubr.bf16.gmra.mrb[0].mxu0 %v1017
  %v1589 = vpop.f32.mrb[0].mxu0
  %v1590 = vadd.f32 0.0, %v1589
  %v1591 = vpop.f32.mrb[0].mxu0
  %v1592 = vpop.f32.mrb[0].mxu0
  %v1593 = vadd.f32 0.0, %v1592
  %v1594 = vpop.f32.mrb[0].mxu0
  %1595 = vmatprep.mubr.bf16.mxu0 0
  %1596 = vmatmul.mubr.bf16.gmra.mrb[0].mxu0 %v1020
  %v1597 = vpop.f32.mrb[0].mxu0
  %v1598 = vadd.f32 0.0, %v1597
  %v1599 = vpop.f32.mrb[0].mxu0
  %v1600 = vpop.f32.mrb[0].mxu0
  %v1601 = vadd.f32 0.0, %v1600
  %v1602 = vpop.f32.mrb[0].mxu0
  %1603 = vmatprep.mubr.bf16.mxu0 0
  %1604 = vmatmul.mubr.bf16.gmra.mrb[0].mxu0 %v1023
  %v1605 = vpop.f32.mrb[0].mxu0
  %v1606 = vadd.f32 0.0, %v1605
  %v1607 = vpop.f32.mrb[0].mxu0
  %v1608 = vpop.f32.mrb[0].mxu0
  %v1609 = vadd.f32 0.0, %v1608
  %v1610 = vpop.f32.mrb[0].mxu0
  %1611 = vmatprep.mubr.bf16.mxu0 0
  %1612 = vmatmul.mubr.bf16.gmra.mrb[0].mxu0 %v1026
  %v1613 = vpop.f32.mrb[0].mxu0
  %v1614 = vadd.f32 0.0, %v1613
  %v1615 = vpop.f32.mrb[0].mxu0
  %v1616 = vpop.f32.mrb[0].mxu0
  %v1617 = vadd.f32 0.0, %v1616
  %v1618 = vpop.f32.mrb[0].mxu0
  %1619 = vmatprep.mubr.bf16.mxu0 0
  %1620 = vmatmul.mubr.bf16.gmra.mrb[0].mxu0 %v1029
  %v1621 = vpop.f32.mrb[0].mxu0
  %v1622 = vadd.f32 0.0, %v1621
  %v1623 = vpop.f32.mrb[0].mxu0
  %v1624 = vpop.f32.mrb[0].mxu0
  %v1625 = vadd.f32 0.0, %v1624
  %v1626 = vpop.f32.mrb[0].mxu0
  %1627 = vmatprep.mubr.bf16.mxu0 0
  %1628 = vmatmul.mubr.bf16.gmra.mrb[0].mxu0 %v1032
  %v1629 = vpop.f32.mrb[0].mxu0
  %v1630 = vadd.f32 0.0, %v1629
  %v1631 = vpop.f32.mrb[0].mxu0
  %v1632 = vpop.f32.mrb[0].mxu0
  %v1633 = vadd.f32 0.0, %v1632
  %v1634 = vpop.f32.mrb[0].mxu0
  %1635 = vmatprep.mubr.bf16.mxu0 0
  %1636 = vmatmul.mubr.bf16.gmra.mrb[0].mxu0 %v1035
  %v1637 = vpop.f32.mrb[0].mxu0
  %v1638 = vadd.f32 0.0, %v1637
  %v1639 = vpop.f32.mrb[0].mxu0
  %v1640 = vpop.f32.mrb[0].mxu0
  %v1641 = vadd.f32 0.0, %v1640
  %v1642 = vpop.f32.mrb[0].mxu0
  %1643 = vmatprep.mubr.bf16.mxu0 0
  %1644 = vmatmul.mubr.bf16.gmra.mrb[0].mxu0 %v1038
  %v1645 = vpop.f32.mrb[0].mxu0
  %v1646 = vadd.f32 0.0, %v1645
  %v1647 = vpop.f32.mrb[0].mxu0
  %v1648 = vpop.f32.mrb[0].mxu0
  %v1649 = vadd.f32 0.0, %v1648
  %v1650 = vpop.f32.mrb[0].mxu0
  %1651 = vmatprep.mubr.bf16.mxu0 0
  %1652 = vmatmul.mubr.bf16.gmra.mrb[0].mxu0 %v1041
  %v1653 = vpop.f32.mrb[0].mxu0
  %v1654 = vadd.f32 0.0, %v1653
  %v1655 = vpop.f32.mrb[0].mxu0
  %v1656 = vpop.f32.mrb[0].mxu0
  %v1657 = vadd.f32 0.0, %v1656
  %v1658 = vpop.f32.mrb[0].mxu0
  %1659 = vmatprep.mubr.bf16.mxu0 0
  %1660 = vmatmul.mubr.bf16.gmra.mrb[0].mxu0 %v1044
  %v1661 = vpop.f32.mrb[0].mxu0
  %v1662 = vadd.f32 0.0, %v1661
  %v1663 = vpop.f32.mrb[0].mxu0
  %v1664 = vpop.f32.mrb[0].mxu0
  %v1665 = vadd.f32 0.0, %v1664
  %v1666 = vpop.f32.mrb[0].mxu0
  %1667 = vmatprep.mubr.bf16.mxu0 0
  %1668 = vmatmul.mubr.bf16.gmra.mrb[0].mxu0 %v1047
  %v1669 = vpop.f32.mrb[0].mxu0
  %v1670 = vadd.f32 0.0, %v1669
  %v1671 = vpop.f32.mrb[0].mxu0
  %v1672 = vpop.f32.mrb[0].mxu0
  %v1673 = vadd.f32 0.0, %v1672
  %v1674 = vpop.f32.mrb[0].mxu0
  %1675 = vmatprep.mubr.bf16.mxu0 0
  %1676 = vmatmul.mubr.bf16.gmra.mrb[0].mxu0 %v1050
  %v1677 = vpop.f32.mrb[0].mxu0
  %v1678 = vadd.f32 0.0, %v1677
  %v1679 = vpop.f32.mrb[0].mxu0
  %v1680 = vpop.f32.mrb[0].mxu0
  %v1681 = vadd.f32 0.0, %v1680
  %v1682 = vpop.f32.mrb[0].mxu0
  %1683 = vmatprep.mubr.bf16.mxu0 0
  %1684 = vmatmul.mubr.bf16.gmra.mrb[0].mxu0 %v1053
  %v1685 = vpop.f32.mrb[0].mxu0
  %v1686 = vadd.f32 0.0, %v1685
  %v1687 = vpop.f32.mrb[0].mxu0
  %v1688 = vpop.f32.mrb[0].mxu0
  %v1689 = vadd.f32 0.0, %v1688
  %v1690 = vpop.f32.mrb[0].mxu0
  %1691 = vmatprep.mubr.bf16.mxu0 0
  %1692 = vmatmul.mubr.bf16.gmra.mrb[0].mxu0 %v1056
  %v1693 = vpop.f32.mrb[0].mxu0
  %v1694 = vadd.f32 0.0, %v1693
  %v1695 = vpop.f32.mrb[0].mxu0
  %v1696 = vpop.f32.mrb[0].mxu0
  %v1697 = vadd.f32 0.0, %v1696
  %v1698 = vpop.f32.mrb[0].mxu0
  %1699 = vmatprep.mubr.bf16.mxu0 0
  %1700 = vmatmul.mubr.bf16.gmra.mrb[0].mxu0 %v1059
  %v1701 = vpop.f32.mrb[0].mxu0
  %v1702 = vadd.f32 0.0, %v1701
  %v1703 = vpop.f32.mrb[0].mxu0
  %v1704 = vpop.f32.mrb[0].mxu0
  %v1705 = vadd.f32 0.0, %v1704
  %v1706 = vpop.f32.mrb[0].mxu0
  %1707 = vmatprep.mubr.bf16.mxu0 0
  %1708 = vmatmul.mubr.bf16.gmra.mrb[0].mxu0 %v1062
  %v1709 = vpop.f32.mrb[0].mxu0
  %v1710 = vadd.f32 0.0, %v1709
  %v1711 = vpop.f32.mrb[0].mxu0
  %v1712 = vpop.f32.mrb[0].mxu0
  %v1713 = vadd.f32 0.0, %v1712
  %v1714 = vpop.f32.mrb[0].mxu0
  %1715 = vmatprep.mubr.bf16.mxu0 0
  %1716 = vmatmul.mubr.bf16.gmra.mrb[0].mxu0 %v1065
  %v1717 = vpop.f32.mrb[0].mxu0
  %v1718 = vadd.f32 0.0, %v1717
  %v1719 = vpop.f32.mrb[0].mxu0
  %v1720 = vpop.f32.mrb[0].mxu0
  %v1721 = vadd.f32 0.0, %v1720
  %v1722 = vpop.f32.mrb[0].mxu0
  %1723 = vmatprep.mubr.bf16.mxu0 0
  %1724 = vmatmul.mubr.bf16.gmra.mrb[0].mxu0 %v1068
  %v1725 = vpop.f32.mrb[0].mxu0
  %v1726 = vadd.f32 0.0, %v1725
  %v1727 = vpop.f32.mrb[0].mxu0
  %v1728 = vpop.f32.mrb[0].mxu0
  %v1729 = vadd.f32 0.0, %v1728
  %v1730 = vpop.f32.mrb[0].mxu0
  %1731 = vmatprep.mubr.bf16.mxu0 0
  %1732 = vmatmul.mubr.bf16.gmra.mrb[0].mxu0 %v1071
  %v1733 = vpop.f32.mrb[0].mxu0
  %v1734 = vadd.f32 0.0, %v1733
  %v1735 = vpop.f32.mrb[0].mxu0
  %v1736 = vpop.f32.mrb[0].mxu0
  %v1737 = vadd.f32 0.0, %v1736
  %v1738 = vpop.f32.mrb[0].mxu0
  %1739 = vmatprep.mubr.bf16.mxu0 0
  %1740 = vmatmul.mubr.bf16.gmra.mrb[0].mxu0 %v1074
  %v1741 = vpop.f32.mrb[0].mxu0
  %v1742 = vadd.f32 0.0, %v1741
  %v1743 = vpop.f32.mrb[0].mxu0
  %v1744 = vpop.f32.mrb[0].mxu0
  %v1745 = vadd.f32 0.0, %v1744
  %v1746 = vpop.f32.mrb[0].mxu0
  %1747 = vmatprep.mubr.bf16.mxu0 0
  %1748 = vmatmul.mubr.bf16.gmra.mrb[0].mxu0 %v1077
  %v1749 = vpop.f32.mrb[0].mxu0
  %v1750 = vadd.f32 0.0, %v1749
  %v1751 = vpop.f32.mrb[0].mxu0
  %v1752 = vpop.f32.mrb[0].mxu0
  %v1753 = vadd.f32 0.0, %v1752
  %v1754 = vpop.f32.mrb[0].mxu0
  %1755 = vmatprep.mubr.bf16.mxu0 0
  %1756 = vmatmul.mubr.bf16.gmra.mrb[0].mxu0 %v1080
  %v1757 = vpop.f32.mrb[0].mxu0
  %v1758 = vadd.f32 0.0, %v1757
  %v1759 = vpop.f32.mrb[0].mxu0
  %v1760 = vpop.f32.mrb[0].mxu0
  %v1761 = vadd.f32 0.0, %v1760
  %v1762 = vpop.f32.mrb[0].mxu0
  %1763 = vmatprep.mubr.bf16.mxu0 0
  %1764 = vmatmul.mubr.bf16.gmra.mrb[0].mxu0 %v1083
  %v1765 = vpop.f32.mrb[0].mxu0
  %v1766 = vadd.f32 0.0, %v1765
  %v1767 = vpop.f32.mrb[0].mxu0
  %v1768 = vpop.f32.mrb[0].mxu0
  %v1769 = vadd.f32 0.0, %v1768
  %v1770 = vpop.f32.mrb[0].mxu0
  %1771 = vmatprep.mubr.bf16.mxu0 0
  %1772 = vmatmul.mubr.bf16.gmra.mrb[0].mxu0 %v1086
  %v1773 = vpop.f32.mrb[0].mxu0
  %v1774 = vadd.f32 0.0, %v1773
  %v1775 = vpop.f32.mrb[0].mxu0
  %v1776 = vpop.f32.mrb[0].mxu0
  %v1777 = vadd.f32 0.0, %v1776
  %v1778 = vpop.f32.mrb[0].mxu0
  %1779 = vmatprep.mubr.bf16.mxu0 0
  %1780 = vmatmul.mubr.bf16.gmra.mrb[0].mxu0 %v1089
  %v1781 = vpop.f32.mrb[0].mxu0
  %v1782 = vadd.f32 0.0, %v1781
  %v1783 = vpop.f32.mrb[0].mxu0
  %v1784 = vpop.f32.mrb[0].mxu0
  %v1785 = vadd.f32 0.0, %v1784
  %v1786 = vpop.f32.mrb[0].mxu0
  %1787 = vmatprep.mubr.bf16.mxu0 0
  %1788 = vmatmul.mubr.bf16.gmra.mrb[0].mxu0 %v1092
  %v1789 = vpop.f32.mrb[0].mxu0
  %v1790 = vadd.f32 0.0, %v1789
  %v1791 = vpop.f32.mrb[0].mxu0
  %v1792 = vpop.f32.mrb[0].mxu0
  %v1793 = vadd.f32 0.0, %v1792
  %v1794 = vpop.f32.mrb[0].mxu0
  %1795 = vmatprep.mubr.bf16.mxu0 0
  %1796 = vmatmul.mubr.bf16.gmra.mrb[0].mxu0 %v1095
  %v1797 = vpop.f32.mrb[0].mxu0
  %v1798 = vadd.f32 0.0, %v1797
  %v1799 = vpop.f32.mrb[0].mxu0
  %v1800 = vpop.f32.mrb[0].mxu0
  %v1801 = vadd.f32 0.0, %v1800
  %v1802 = vpop.f32.mrb[0].mxu0
  %1803 = vmatprep.mubr.bf16.mxu0 0
  %1804 = vmatmul.mubr.bf16.gmra.mrb[0].mxu0 %v1098
  %v1805 = vpop.f32.mrb[0].mxu0
  %v1806 = vadd.f32 0.0, %v1805
  %v1807 = vpop.f32.mrb[0].mxu0
  %v1808 = vpop.f32.mrb[0].mxu0
  %v1809 = vadd.f32 0.0, %v1808
  %v1810 = vpop.f32.mrb[0].mxu0
  %1811 = vmatprep.mubr.bf16.mxu0 0
  %1812 = vmatmul.mubr.bf16.gmra.mrb[0].mxu0 %v1101
  %v1813 = vpop.f32.mrb[0].mxu0
  %v1814 = vadd.f32 0.0, %v1813
  %v1815 = vpop.f32.mrb[0].mxu0
  %v1816 = vpop.f32.mrb[0].mxu0
  %v1817 = vadd.f32 0.0, %v1816
  %v1818 = vpop.f32.mrb[0].mxu0
  %1819 = vmatprep.mubr.bf16.mxu0 0
  %1820 = vmatmul.mubr.bf16.gmra.mrb[0].mxu0 %v1104
  %v1821 = vpop.f32.mrb[0].mxu0
  %v1822 = vadd.f32 0.0, %v1821
  %v1823 = vpop.f32.mrb[0].mxu0
  %v1824 = vpop.f32.mrb[0].mxu0
  %v1825 = vadd.f32 0.0, %v1824
  %v1826 = vpop.f32.mrb[0].mxu0
  %1827 = vmatprep.mubr.bf16.mxu0 0
  %1828 = vmatmul.mubr.bf16.gmra.mrb[0].mxu0 %v1107
  %v1829 = vpop.f32.mrb[0].mxu0
  %v1830 = vadd.f32 0.0, %v1829
  %v1831 = vpop.f32.mrb[0].mxu0
  %v1832 = vpop.f32.mrb[0].mxu0
  %v1833 = vadd.f32 0.0, %v1832
  %v1834 = vpop.f32.mrb[0].mxu0
  %1835 = vmatprep.mubr.bf16.mxu0 0
  %1836 = vmatmul.mubr.bf16.gmra.mrb[0].mxu0 %v1110
  %v1837 = vpop.f32.mrb[0].mxu0
  %v1838 = vadd.f32 0.0, %v1837
  %v1839 = vpop.f32.mrb[0].mxu0
  %v1840 = vpop.f32.mrb[0].mxu0
  %v1841 = vadd.f32 0.0, %v1840
  %v1842 = vpop.f32.mrb[0].mxu0
  %1843 = vmatprep.mubr.bf16.mxu0 0
  %1844 = vmatmul.mubr.bf16.gmra.mrb[0].mxu0 %v1113
  %v1845 = vpop.f32.mrb[0].mxu0
  %v1846 = vadd.f32 0.0, %v1845
  %v1847 = vpop.f32.mrb[0].mxu0
  %v1848 = vpop.f32.mrb[0].mxu0
  %v1849 = vadd.f32 0.0, %v1848
  %v1850 = vpop.f32.mrb[0].mxu0
  %1851 = vmatprep.mubr.bf16.mxu0 0
  %1852 = vmatmul.mubr.bf16.gmra.mrb[0].mxu0 %v1116
  %v1853 = vpop.f32.mrb[0].mxu0
  %v1854 = vadd.f32 0.0, %v1853
  %v1855 = vpop.f32.mrb[0].mxu0
  %v1856 = vpop.f32.mrb[0].mxu0
  %v1857 = vadd.f32 0.0, %v1856
  %v1858 = vpop.f32.mrb[0].mxu0
  %1859 = vmatprep.mubr.bf16.mxu0 0
  %1860 = vmatmul.mubr.bf16.gmra.mrb[0].mxu0 %v1119
  %v1861 = vpop.f32.mrb[0].mxu0
  %v1862 = vadd.f32 0.0, %v1861
  %v1863 = vpop.f32.mrb[0].mxu0
  %v1864 = vpop.f32.mrb[0].mxu0
  %v1865 = vadd.f32 0.0, %v1864
  %v1866 = vpop.f32.mrb[0].mxu0
  %1867 = vmatprep.mubr.bf16.mxu0 0
  %1868 = vmatmul.mubr.bf16.gmra.mrb[0].mxu0 %v1122
  %v1869 = vpop.f32.mrb[0].mxu0
  %v1870 = vadd.f32 0.0, %v1869
  %v1871 = vpop.f32.mrb[0].mxu0
  %v1872 = vpop.f32.mrb[0].mxu0
  %v1873 = vadd.f32 0.0, %v1872
  %v1874 = vpop.f32.mrb[0].mxu0
  %1875 = vmatprep.mubr.bf16.mxu0 0
  %1876 = vmatmul.mubr.bf16.gmra.mrb[0].mxu0 %v1125
  %v1877 = vpop.f32.mrb[0].mxu0
  %v1878 = vadd.f32 0.0, %v1877
  %v1879 = vpop.f32.mrb[0].mxu0
  %v1880 = vpop.f32.mrb[0].mxu0
  %v1881 = vadd.f32 0.0, %v1880
  %v1882 = vpop.f32.mrb[0].mxu0
  %1883 = vmatprep.mubr.bf16.mxu0 0
  %1884 = vmatmul.mubr.bf16.gmra.mrb[0].mxu0 %v1128
  %v1885 = vpop.f32.mrb[0].mxu0
  %v1886 = vadd.f32 0.0, %v1885
  %v1887 = vpop.f32.mrb[0].mxu0
  %v1888 = vpop.f32.mrb[0].mxu0
  %v1889 = vadd.f32 0.0, %v1888
  %v1890 = vpop.f32.mrb[0].mxu0
  %1891 = vmatprep.mubr.bf16.mxu0 0
  %1892 = vmatmul.mubr.bf16.gmra.mrb[0].mxu0 %v1131
  %v1893 = vpop.f32.mrb[0].mxu0
  %v1894 = vadd.f32 0.0, %v1893
  %v1895 = vpop.f32.mrb[0].mxu0
  %v1896 = vpop.f32.mrb[0].mxu0
  %v1897 = vadd.f32 0.0, %v1896
  %v1898 = vpop.f32.mrb[0].mxu0
  %1899 = vmatprep.mubr.bf16.mxu0 0
  %1900 = vmatmul.mubr.bf16.gmra.mrb[0].mxu0 %v1134
  %v1901 = vpop.f32.mrb[0].mxu0
  %v1902 = vadd.f32 0.0, %v1901
  %v1903 = vpop.f32.mrb[0].mxu0
  %v1904 = vpop.f32.mrb[0].mxu0
  %v1905 = vadd.f32 0.0, %v1904
  %v1906 = vpop.f32.mrb[0].mxu0
  %1907 = vmatprep.mubr.bf16.mxu0 0
  %1908 = vmatmul.mubr.bf16.gmra.mrb[0].mxu0 %v1137
  %v1909 = vpop.f32.mrb[0].mxu0
  %v1910 = vadd.f32 0.0, %v1909
  %v1911 = vpop.f32.mrb[0].mxu0
  %v1912 = vpop.f32.mrb[0].mxu0
  %v1913 = vadd.f32 0.0, %v1912
  %v1914 = vpop.f32.mrb[0].mxu0
  %1915 = vmatprep.mubr.bf16.mxu0 0
  %1916 = vmatmul.mubr.bf16.gmra.mrb[0].mxu0 %v1140
  %v1917 = vpop.f32.mrb[0].mxu0
  %v1918 = vadd.f32 0.0, %v1917
  %v1919 = vpop.f32.mrb[0].mxu0
  %v1920 = vpop.f32.mrb[0].mxu0
  %v1921 = vadd.f32 0.0, %v1920
  %v1922 = vpop.f32.mrb[0].mxu0
  %1923 = vmatprep.mubr.bf16.mxu0 0
  %1924 = vmatmul.mubr.bf16.gmra.mrb[0].mxu0 %v1143
  %v1925 = vpop.f32.mrb[0].mxu0
  %v1926 = vadd.f32 0.0, %v1925
  %v1927 = vpop.f32.mrb[0].mxu0
  %v1928 = vpop.f32.mrb[0].mxu0
  %v1929 = vadd.f32 0.0, %v1928
  %v1930 = vpop.f32.mrb[0].mxu0
  %1931 = vmatprep.mubr.bf16.mxu0 0
  %1932 = vmatmul.mubr.bf16.gmra.mrb[0].mxu0 %v1146
  %v1933 = vpop.f32.mrb[0].mxu0
  %v1934 = vadd.f32 0.0, %v1933
  %v1935 = vpop.f32.mrb[0].mxu0
  %v1936 = vpop.f32.mrb[0].mxu0
  %v1937 = vadd.f32 0.0, %v1936
  %v1938 = vpop.f32.mrb[0].mxu0
  %1939 = vmatprep.mubr.bf16.mxu0 0
  %1940 = vmatmul.mubr.bf16.gmra.mrb[0].mxu0 %v1149
  %v1941 = vpop.f32.mrb[0].mxu0
  %v1942 = vadd.f32 0.0, %v1941
  %v1943 = vpop.f32.mrb[0].mxu0
  %v1944 = vpop.f32.mrb[0].mxu0
  %v1945 = vadd.f32 0.0, %v1944
  %v1946 = vpop.f32.mrb[0].mxu0
  %1947 = vmatprep.mubr.bf16.mxu0 0
  %1948 = vmatmul.mubr.bf16.gmra.mrb[0].mxu0 %v1152
  %v1949 = vpop.f32.mrb[0].mxu0
  %v1950 = vadd.f32 0.0, %v1949
  %v1951 = vpop.f32.mrb[0].mxu0
  %v1952 = vpop.f32.mrb[0].mxu0
  %v1953 = vadd.f32 0.0, %v1952
  %v1954 = vpop.f32.mrb[0].mxu0
  %1955 = vmatprep.mubr.bf16.mxu0 0
  %1956 = vmatmul.mubr.bf16.gmra.mrb[0].mxu0 %v1155
  %v1957 = vpop.f32.mrb[0].mxu0
  %v1958 = vadd.f32 0.0, %v1957
  %v1959 = vpop.f32.mrb[0].mxu0
  %v1960 = vpop.f32.mrb[0].mxu0
  %v1961 = vadd.f32 0.0, %v1960
  %v1962 = vpop.f32.mrb[0].mxu0
  %1963 = vmatprep.mubr.bf16.mxu0 0
  %1964 = vmatmul.mubr.bf16.gmra.mrb[0].mxu0 %v1158
  %v1965 = vpop.f32.mrb[0].mxu0
  %v1966 = vadd.f32 0.0, %v1965
  %v1967 = vpop.f32.mrb[0].mxu0
  %v1968 = vpop.f32.mrb[0].mxu0
  %v1969 = vadd.f32 0.0, %v1968
  %v1970 = vpop.f32.mrb[0].mxu0
  %1971 = vmatprep.mubr.bf16.mxu0 0
  %1972 = vmatmul.mubr.bf16.gmra.mrb[0].mxu0 %v1161
  %v1973 = vpop.f32.mrb[0].mxu0
  %v1974 = vadd.f32 0.0, %v1973
  %v1975 = vpop.f32.mrb[0].mxu0
  %v1976 = vpop.f32.mrb[0].mxu0
  %v1977 = vadd.f32 0.0, %v1976
  %v1978 = vpop.f32.mrb[0].mxu0
  %1979 = vmatprep.mubr.bf16.mxu0 0
  %1980 = vmatmul.mubr.bf16.gmra.mrb[0].mxu0 %v1164
  %v1981 = vpop.f32.mrb[0].mxu0
  %v1982 = vadd.f32 0.0, %v1981
  %v1983 = vpop.f32.mrb[0].mxu0
  %v1984 = vpop.f32.mrb[0].mxu0
  %v1985 = vadd.f32 0.0, %v1984
  %v1986 = vpop.f32.mrb[0].mxu0
  %1987 = vmatprep.mubr.bf16.mxu0 0
  %1988 = vmatmul.mubr.bf16.gmra.mrb[0].mxu0 %v1167
  %v1989 = vpop.f32.mrb[0].mxu0
  %v1990 = vadd.f32 0.0, %v1989
  %v1991 = vpop.f32.mrb[0].mxu0
  %v1992 = vpop.f32.mrb[0].mxu0
  %v1993 = vadd.f32 0.0, %v1992
  %v1994 = vpop.f32.mrb[0].mxu0
  %1995 = vmatprep.mubr.bf16.mxu0 0
  %1996 = vmatmul.mubr.bf16.gmra.mrb[0].mxu0 %v1170
  %v1997 = vpop.f32.mrb[0].mxu0
  %v1998 = vadd.f32 0.0, %v1997
  %v1999 = vpop.f32.mrb[0].mxu0
  %v2000 = vpop.f32.mrb[0].mxu0
  %v2001 = vadd.f32 0.0, %v2000
  %v2002 = vpop.f32.mrb[0].mxu0
  %2003 = vmatprep.mubr.bf16.mxu0 0
  %2004 = vmatmul.mubr.bf16.gmra.mrb[0].mxu0 %v1173
  %v2005 = vpop.f32.mrb[0].mxu0
  %v2006 = vadd.f32 0.0, %v2005
  %v2007 = vpop.f32.mrb[0].mxu0
  %v2008 = vpop.f32.mrb[0].mxu0
  %v2009 = vadd.f32 0.0, %v2008
  %v2010 = vpop.f32.mrb[0].mxu0
  %2011 = vmatprep.mubr.bf16.mxu0 0
  %2012 = vmatmul.mubr.bf16.gmra.mrb[0].mxu0 %v1176
  %v2013 = vpop.f32.mrb[0].mxu0
  %v2014 = vadd.f32 0.0, %v2013
  %v2015 = vpop.f32.mrb[0].mxu0
  %v2016 = vpop.f32.mrb[0].mxu0
  %v2017 = vadd.f32 0.0, %v2016
  %v2018 = vpop.f32.mrb[0].mxu0
  %2019 = vmatprep.mubr.bf16.mxu0 0
  %2020 = vmatmul.mubr.bf16.gmra.mrb[0].mxu0 %v1179
  %v2021 = vpop.f32.mrb[0].mxu0
  %v2022 = vadd.f32 0.0, %v2021
  %v2023 = vpop.f32.mrb[0].mxu0
  %v2024 = vpop.f32.mrb[0].mxu0
  %v2025 = vadd.f32 0.0, %v2024
  %v2026 = vpop.f32.mrb[0].mxu0
  %2027 = vmatprep.mubr.bf16.mxu0 0
  %2028 = vmatmul.mubr.bf16.gmra.mrb[0].mxu0 %v1182
  %v2029 = vpop.f32.mrb[0].mxu0
  %v2030 = vadd.f32 0.0, %v2029
  %v2031 = vpop.f32.mrb[0].mxu0
  %v2032 = vpop.f32.mrb[0].mxu0
  %v2033 = vadd.f32 0.0, %v2032
  %v2034 = vpop.f32.mrb[0].mxu0
  %2035 = vmatprep.mubr.bf16.mxu0 0
  %2036 = vmatmul.mubr.bf16.gmra.mrb[0].mxu0 %v1185
  %v2037 = vpop.f32.mrb[0].mxu0
  %v2038 = vadd.f32 0.0, %v2037
  %v2039 = vpop.f32.mrb[0].mxu0
  %v2040 = vpop.f32.mrb[0].mxu0
  %v2041 = vadd.f32 0.0, %v2040
  %v2042 = vpop.f32.mrb[0].mxu0
  %2043 = vmatprep.mubr.bf16.mxu0 0
  %2044 = vmatmul.mubr.bf16.gmra.mrb[0].mxu0 %v1188
  %v2045 = vpop.f32.mrb[0].mxu0
  %v2046 = vadd.f32 0.0, %v2045
  %v2047 = vpop.f32.mrb[0].mxu0
  %v2048 = vpop.f32.mrb[0].mxu0
  %v2049 = vadd.f32 0.0, %v2048
  %v2050 = vpop.f32.mrb[0].mxu0
  %2051 = vmatprep.mubr.bf16.mxu0 0
  %2052 = vmatmul.mubr.bf16.gmra.mrb[0].mxu0 %v1191
  %v2053 = vpop.f32.mrb[0].mxu0
  %v2054 = vadd.f32 0.0, %v2053
  %v2055 = vpop.f32.mrb[0].mxu0
  %v2056 = vpop.f32.mrb[0].mxu0
  %v2057 = vadd.f32 0.0, %v2056
  %v2058 = vpop.f32.mrb[0].mxu0
  %2059 = vmatprep.mubr.bf16.mxu0 0
  %2060 = vmatmul.mubr.bf16.gmra.mrb[0].mxu0 %v1194
  %v2061 = vpop.f32.mrb[0].mxu0
  %v2062 = vadd.f32 0.0, %v2061
  %v2063 = vpop.f32.mrb[0].mxu0
  %v2064 = vpop.f32.mrb[0].mxu0
  %v2065 = vadd.f32 0.0, %v2064
  %v2066 = vpop.f32.mrb[0].mxu0
  %2067 = vmatprep.mubr.bf16.mxu0 0
  %2068 = vmatmul.mubr.bf16.gmra.mrb[0].mxu0 %v1197
  %v2069 = vpop.f32.mrb[0].mxu0
  %v2070 = vadd.f32 0.0, %v2069
  %v2071 = vpop.f32.mrb[0].mxu0
  %v2072 = vpop.f32.mrb[0].mxu0
  %v2073 = vadd.f32 0.0, %v2072
  %v2074 = vpop.f32.mrb[0].mxu0
  %2075 = vmatprep.mubr.bf16.mxu0 0
  %2076 = vmatmul.mubr.bf16.gmra.mrb[0].mxu0 %v1200
  %v2077 = vpop.f32.mrb[0].mxu0
  %v2078 = vadd.f32 0.0, %v2077
  %v2079 = vpop.f32.mrb[0].mxu0
  %v2080 = vpop.f32.mrb[0].mxu0
  %v2081 = vadd.f32 0.0, %v2080
  %v2082 = vpop.f32.mrb[0].mxu0
  %2083 = vmatprep.mubr.bf16.mxu0 0
  %2084 = vmatmul.mubr.bf16.gmra.mrb[0].mxu0 %v1203
  %v2085 = vpop.f32.mrb[0].mxu0
  %v2086 = vadd.f32 0.0, %v2085
  %v2087 = vpop.f32.mrb[0].mxu0
  %v2088 = vpop.f32.mrb[0].mxu0
  %v2089 = vadd.f32 0.0, %v2088
  %v2090 = vpop.f32.mrb[0].mxu0
  %2091 = vmatprep.mubr.bf16.mxu0 0
  %2092 = vmatmul.mubr.bf16.gmra.mrb[0].mxu0 %v1206
  %v2093 = vpop.f32.mrb[0].mxu0
  %v2094 = vadd.f32 0.0, %v2093
  %v2095 = vpop.f32.mrb[0].mxu0
  %v2096 = vpop.f32.mrb[0].mxu0
  %v2097 = vadd.f32 0.0, %v2096
  %v2098 = vpop.f32.mrb[0].mxu0
  %2099 = vmatprep.mubr.bf16.mxu0 0
  %2100 = vmatmul.mubr.bf16.gmra.mrb[0].mxu0 %v1209
  %v2101 = vpop.f32.mrb[0].mxu0
  %v2102 = vadd.f32 0.0, %v2101
  %v2103 = vpop.f32.mrb[0].mxu0
  %v2104 = vpop.f32.mrb[0].mxu0
  %v2105 = vadd.f32 0.0, %v2104
  %v2106 = vpop.f32.mrb[0].mxu0
  %2107 = vmatprep.mubr.bf16.mxu0 0
  %2108 = vmatmul.mubr.bf16.gmra.mrb[0].mxu0 %v1212
  %v2109 = vpop.f32.mrb[0].mxu0
  %v2110 = vadd.f32 0.0, %v2109
  %v2111 = vpop.f32.mrb[0].mxu0
  %v2112 = vpop.f32.mrb[0].mxu0
  %v2113 = vadd.f32 0.0, %v2112
  %v2114 = vpop.f32.mrb[0].mxu0
  %2115 = vmatprep.mubr.bf16.mxu0 0
  %2116 = vmatmul.mubr.bf16.gmra.mrb[0].mxu0 %v1215
  %v2117 = vpop.f32.mrb[0].mxu0
  %v2118 = vadd.f32 0.0, %v2117
  %v2119 = vpop.f32.mrb[0].mxu0
  %v2120 = vpop.f32.mrb[0].mxu0
  %v2121 = vadd.f32 0.0, %v2120
  %v2122 = vpop.f32.mrb[0].mxu0
  %2123 = vmatprep.mubr.bf16.mxu0 0
  %2124 = vmatmul.mubr.bf16.gmra.mrb[0].mxu0 %v1218
  %v2125 = vpop.f32.mrb[0].mxu0
  %v2126 = vadd.f32 0.0, %v2125
  %v2127 = vpop.f32.mrb[0].mxu0
  %v2128 = vpop.f32.mrb[0].mxu0
  %v2129 = vadd.f32 0.0, %v2128
  %v2130 = vpop.f32.mrb[0].mxu0
  %2131 = vmatprep.mubr.bf16.mxu0 0
  %2132 = vmatmul.mubr.bf16.gmra.mrb[0].mxu0 %v1221
  %v2133 = vpop.f32.mrb[0].mxu0
  %v2134 = vadd.f32 0.0, %v2133
  %v2135 = vpop.f32.mrb[0].mxu0
  %v2136 = vpop.f32.mrb[0].mxu0
  %v2137 = vadd.f32 0.0, %v2136
  %v2138 = vpop.f32.mrb[0].mxu0
  %2139 = vmatprep.mubr.bf16.mxu0 0
  %2140 = vmatmul.mubr.bf16.gmra.mrb[0].mxu0 %v1224
  %v2141 = vpop.f32.mrb[0].mxu0
  %v2142 = vadd.f32 0.0, %v2141
  %v2143 = vpop.f32.mrb[0].mxu0
  %v2144 = vpop.f32.mrb[0].mxu0
  %v2145 = vadd.f32 0.0, %v2144
  %v2146 = vpop.f32.mrb[0].mxu0
  %2147 = vmatprep.mubr.bf16.mxu0 0
  %2148 = vmatmul.mubr.bf16.gmra.mrb[0].mxu0 %v1227
  %v2149 = vpop.f32.mrb[0].mxu0
  %v2150 = vadd.f32 0.0, %v2149
  %v2151 = vpop.f32.mrb[0].mxu0
  %v2152 = vpop.f32.mrb[0].mxu0
  %v2153 = vadd.f32 0.0, %v2152
  %v2154 = vpop.f32.mrb[0].mxu0
  %2155 = vmatprep.mubr.bf16.mxu0 0
  %2156 = vmatmul.mubr.bf16.gmra.mrb[0].mxu0 %v1230
  %v2157 = vpop.f32.mrb[0].mxu0
  %v2158 = vadd.f32 0.0, %v2157
  %v2159 = vpop.f32.mrb[0].mxu0
  %v2160 = vpop.f32.mrb[0].mxu0
  %v2161 = vadd.f32 0.0, %v2160
  %v2162 = vpop.f32.mrb[0].mxu0
  %2163 = vmatprep.mubr.bf16.mxu0 0
  %2164 = vmatmul.mubr.bf16.gmra.mrb[0].mxu0 %v1233
  %v2165 = vpop.f32.mrb[0].mxu0
  %v2166 = vadd.f32 0.0, %v2165
  %v2167 = vpop.f32.mrb[0].mxu0
  %v2168 = vpop.f32.mrb[0].mxu0
  %v2169 = vadd.f32 0.0, %v2168
  %v2170 = vpop.f32.mrb[0].mxu0
  %2171 = vmatprep.mubr.bf16.mxu0 0
  %2172 = vmatmul.mubr.bf16.gmra.mrb[0].mxu0 %v1236
  %v2173 = vpop.f32.mrb[0].mxu0
  %v2174 = vadd.f32 0.0, %v2173
  %v2175 = vpop.f32.mrb[0].mxu0
  %v2176 = vpop.f32.mrb[0].mxu0
  %v2177 = vadd.f32 0.0, %v2176
  %v2178 = vpop.f32.mrb[0].mxu0
  %2179 = vmatprep.mubr.bf16.mxu0 0
  %2180 = vmatmul.mubr.bf16.gmra.mrb[0].mxu0 %v1239
  %v2181 = vpop.f32.mrb[0].mxu0
  %v2182 = vadd.f32 0.0, %v2181
  %v2183 = vpop.f32.mrb[0].mxu0
  %v2184 = vpop.f32.mrb[0].mxu0
  %v2185 = vadd.f32 0.0, %v2184
  %v2186 = vpop.f32.mrb[0].mxu0
  %2187 = vmatprep.mubr.bf16.mxu0 0
  %2188 = vmatmul.mubr.bf16.gmra.mrb[0].mxu0 %v1242
  %v2189 = vpop.f32.mrb[0].mxu0
  %v2190 = vadd.f32 0.0, %v2189
  %v2191 = vpop.f32.mrb[0].mxu0
  %v2192 = vpop.f32.mrb[0].mxu0
  %v2193 = vadd.f32 0.0, %v2192
  %v2194 = vpop.f32.mrb[0].mxu0
  %2195 = vmatprep.mubr.bf16.mxu0 0
  %2196 = vmatmul.mubr.bf16.gmra.mrb[0].mxu0 %v1245
  %v2197 = vpop.f32.mrb[0].mxu0
  %v2198 = vadd.f32 0.0, %v2197
  %v2199 = vpop.f32.mrb[0].mxu0
  %v2200 = vpop.f32.mrb[0].mxu0
  %v2201 = vadd.f32 0.0, %v2200
  %v2202 = vpop.f32.mrb[0].mxu0
  %2203 = vmatprep.mubr.bf16.mxu0 0
  %2204 = vmatmul.mubr.bf16.gmra.mrb[0].mxu0 %v1248
  %v2205 = vpop.f32.mrb[0].mxu0
  %v2206 = vadd.f32 0.0, %v2205
  %v2207 = vpop.f32.mrb[0].mxu0
  %v2208 = vpop.f32.mrb[0].mxu0
  %v2209 = vadd.f32 0.0, %v2208
  %v2210 = vpop.f32.mrb[0].mxu0
  %2211 = vmatprep.mubr.bf16.mxu0 0
  %2212 = vmatmul.mubr.bf16.gmra.mrb[0].mxu0 %v1251
  %v2213 = vpop.f32.mrb[0].mxu0
  %v2214 = vadd.f32 0.0, %v2213
  %v2215 = vpop.f32.mrb[0].mxu0
  %v2216 = vpop.f32.mrb[0].mxu0
  %v2217 = vadd.f32 0.0, %v2216
  %v2218 = vpop.f32.mrb[0].mxu0
  %2219 = vmatprep.mubr.bf16.mxu0 0
  %2220 = vmatmul.mubr.bf16.gmra.mrb[0].mxu0 %v1254
  %v2221 = vpop.f32.mrb[0].mxu0
  %v2222 = vadd.f32 0.0, %v2221
  %v2223 = vpop.f32.mrb[0].mxu0
  %v2224 = vpop.f32.mrb[0].mxu0
  %v2225 = vadd.f32 0.0, %v2224
  %v2226 = vpop.f32.mrb[0].mxu0
  %2227 = vmatprep.mubr.bf16.mxu0 0
  %2228 = vmatmul.mubr.bf16.gmra.mrb[0].mxu0 %v1257
  %v2229 = vpop.f32.mrb[0].mxu0
  %v2230 = vadd.f32 0.0, %v2229
  %v2231 = vpop.f32.mrb[0].mxu0
  %v2232 = vpop.f32.mrb[0].mxu0
  %v2233 = vadd.f32 0.0, %v2232
  %v2234 = vpop.f32.mrb[0].mxu0
  %2235 = vmatprep.mubr.bf16.mxu0 0
  %2236 = vmatmul.mubr.bf16.gmra.mrb[0].mxu0 %v1260
  %v2237 = vpop.f32.mrb[0].mxu0
  %v2238 = vadd.f32 0.0, %v2237
  %v2239 = vpop.f32.mrb[0].mxu0
  %v2240 = vpop.f32.mrb[0].mxu0
  %v2241 = vadd.f32 0.0, %v2240
  %v2242 = vpop.f32.mrb[0].mxu0
  %2243 = vmatprep.mubr.bf16.mxu0 0
  %2244 = vmatmul.mubr.bf16.gmra.mrb[0].mxu0 %v1263
  %v2245 = vpop.f32.mrb[0].mxu0
  %v2246 = vadd.f32 0.0, %v2245
  %v2247 = vpop.f32.mrb[0].mxu0
  %v2248 = vpop.f32.mrb[0].mxu0
  %v2249 = vadd.f32 0.0, %v2248
  %v2250 = vpop.f32.mrb[0].mxu0
  %2251 = vmatprep.mubr.bf16.mxu0 0
  %2252 = vmatmul.mubr.bf16.gmra.mrb[0].mxu0 %v1266
  %v2253 = vpop.f32.mrb[0].mxu0
  %v2254 = vadd.f32 0.0, %v2253
  %v2255 = vpop.f32.mrb[0].mxu0
  %v2256 = vpop.f32.mrb[0].mxu0
  %v2257 = vadd.f32 0.0, %v2256
  %v2258 = vpop.f32.mrb[0].mxu0
  %2259 = vmatprep.mubr.bf16.mxu0 0
  %2260 = vmatmul.mubr.bf16.gmra.mrb[0].mxu0 %v1269
  %v2261 = vpop.f32.mrb[0].mxu0
  %v2262 = vadd.f32 0.0, %v2261
  %v2263 = vpop.f32.mrb[0].mxu0
  %v2264 = vpop.f32.mrb[0].mxu0
  %v2265 = vadd.f32 0.0, %v2264
  %v2266 = vpop.f32.mrb[0].mxu0
  %2267 = vmatprep.mubr.bf16.mxu0 0
  %2268 = vmatmul.mubr.bf16.gmra.mrb[0].mxu0 %v1272
  %v2269 = vpop.f32.mrb[0].mxu0
  %v2270 = vadd.f32 0.0, %v2269
  %v2271 = vpop.f32.mrb[0].mxu0
  %v2272 = vpop.f32.mrb[0].mxu0
  %v2273 = vadd.f32 0.0, %v2272
  %v2274 = vpop.f32.mrb[0].mxu0
  %2275 = vmatprep.mubr.bf16.mxu0 0
  %2276 = vmatmul.mubr.bf16.gmra.mrb[0].mxu0 %v1275
  %v2277 = vpop.f32.mrb[0].mxu0
  %v2278 = vadd.f32 0.0, %v2277
  %v2279 = vpop.f32.mrb[0].mxu0
  %v2280 = vpop.f32.mrb[0].mxu0
  %v2281 = vadd.f32 0.0, %v2280
  %v2282 = vpop.f32.mrb[0].mxu0
  %2283 = vmatprep.mubr.bf16.mxu0 0
  %2284 = vmatmul.mubr.bf16.gmra.mrb[0].mxu0 %v1278
  %v2285 = vpop.f32.mrb[0].mxu0
  %v2286 = vadd.f32 0.0, %v2285
  %v2287 = vpop.f32.mrb[0].mxu0
  %v2288 = vpop.f32.mrb[0].mxu0
  %v2289 = vadd.f32 0.0, %v2288
  %v2290 = vpop.f32.mrb[0].mxu0
  %2291 = vmatprep.mubr.bf16.mxu0 0
  %2292 = vmatmul.mubr.bf16.gmra.mrb[0].mxu0 %v1281
  %v2293 = vpop.f32.mrb[0].mxu0
  %v2294 = vadd.f32 0.0, %v2293
  %v2295 = vpop.f32.mrb[0].mxu0
  %v2296 = vpop.f32.mrb[0].mxu0
  %v2297 = vadd.f32 0.0, %v2296
  %v2298 = vpop.f32.mrb[0].mxu0
  %2299 = vmatprep.mubr.bf16.mxu0 0
  %2300 = vmatmul.mubr.bf16.gmra.mrb[0].mxu0 %v1284
  %v2301 = vpop.f32.mrb[0].mxu0
  %v2302 = vadd.f32 0.0, %v2301
  %v2303 = vpop.f32.mrb[0].mxu0
  %v2304 = vpop.f32.mrb[0].mxu0
  %v2305 = vadd.f32 0.0, %v2304
  %v2306 = vpop.f32.mrb[0].mxu0
  %2307 = vmatprep.mubr.bf16.mxu0 0
  %2308 = vmatmul.mubr.bf16.gmra.mrb[0].mxu0 %v1287
  %v2309 = vpop.f32.mrb[0].mxu0
  %v2310 = vadd.f32 0.0, %v2309
  %v2311 = vpop.f32.mrb[0].mxu0
  %v2312 = vpop.f32.mrb[0].mxu0
  %v2313 = vadd.f32 0.0, %v2312
  %v2314 = vpop.f32.mrb[0].mxu0
  %2315 = vmatprep.mubr.bf16.mxu0 0
  %2316 = vmatmul.mubr.bf16.gmra.mrb[0].mxu0 %v1290
  %v2317 = vpop.f32.mrb[0].mxu0
  %v2318 = vadd.f32 0.0, %v2317
  %v2319 = vpop.f32.mrb[0].mxu0
  %v2320 = vpop.f32.mrb[0].mxu0
  %v2321 = vadd.f32 0.0, %v2320
  %v2322 = vpop.f32.mrb[0].mxu0
  %2323 = vmatprep.mubr.bf16.mxu0 0
  %2324 = vmatmul.mubr.bf16.gmra.mrb[0].mxu0 %v1293
  %v2325 = vpop.f32.mrb[0].mxu0
  %v2326 = vadd.f32 0.0, %v2325
  %v2327 = vpop.f32.mrb[0].mxu0
  %v2328 = vpop.f32.mrb[0].mxu0
  %v2329 = vadd.f32 0.0, %v2328
  %v2330 = vpop.f32.mrb[0].mxu0
  %2331 = vmatprep.mubr.bf16.mxu0 0
  %2332 = vmatmul.mubr.bf16.gmra.mrb[0].mxu0 %v1296
  %v2333 = vpop.f32.mrb[0].mxu0
  %v2334 = vadd.f32 0.0, %v2333
  %v2335 = vpop.f32.mrb[0].mxu0
  %v2336 = vpop.f32.mrb[0].mxu0
  %v2337 = vadd.f32 0.0, %v2336
  %v2338 = vpop.f32.mrb[0].mxu0
  %2339 = vmatprep.mubr.bf16.mxu0 0
  %2340 = vmatmul.mubr.bf16.gmra.mrb[0].mxu0 %v1299
  %v2341 = vpop.f32.mrb[0].mxu0
  %v2342 = vadd.f32 0.0, %v2341
  %v2343 = vpop.f32.mrb[0].mxu0
  %v2344 = vpop.f32.mrb[0].mxu0
  %v2345 = vadd.f32 0.0, %v2344
  %v2346 = vpop.f32.mrb[0].mxu0
  %2347 = vmatprep.mubr.bf16.mxu0 0
  %2348 = vmatmul.mubr.bf16.gmra.mrb[0].mxu0 %v1302
  %v2349 = vpop.f32.mrb[0].mxu0
  %v2350 = vadd.f32 0.0, %v2349
  %v2351 = vpop.f32.mrb[0].mxu0
  %v2352 = vpop.f32.mrb[0].mxu0
  %v2353 = vadd.f32 0.0, %v2352
  %v2354 = vpop.f32.mrb[0].mxu0
  %2355 = vmatprep.mubr.bf16.mxu0 0
  %2356 = vmatmul.mubr.bf16.gmra.mrb[0].mxu0 %v1305
  %v2357 = vpop.f32.mrb[0].mxu0
  %v2358 = vadd.f32 0.0, %v2357
  %v2359 = vpop.f32.mrb[0].mxu0
  %v2360 = vpop.f32.mrb[0].mxu0
  %v2361 = vadd.f32 0.0, %v2360
  %v2362 = vpop.f32.mrb[0].mxu0
  %2363 = vdwg.mxu0
  %2364 = vst.msk [vmem:[#allocation2] sm:$0xff] %vm922, %v1342
  %2365 = vst.msk [vmem:[#allocation2 + $0x8] sm:$0xff] %vm922, %v1345
  %2366 = vst.msk [vmem:[#allocation2 + $0x10] sm:$0xff] %vm922, %v1350
  %2367 = vst.msk [vmem:[#allocation2 + $0x18] sm:$0xff] %vm922, %v1353
  %2368 = vst.msk [vmem:[#allocation2 + $0x20] sm:$0xff] %vm922, %v1358
  %2369 = vst.msk [vmem:[#allocation2 + $0x28] sm:$0xff] %vm922, %v1361
  %2370 = vst.msk [vmem:[#allocation2 + $0x30] sm:$0xff] %vm922, %v1366
  %2371 = vst.msk [vmem:[#allocation2 + $0x38] sm:$0xff] %vm922, %v1369
  %2372 = vst.msk [vmem:[#allocation2 + $0x40] sm:$0xff] %vm922, %v1374
  %2373 = vst.msk [vmem:[#allocation2 + $0x48] sm:$0xff] %vm922, %v1377
  %2374 = vst.msk [vmem:[#allocation2 + $0x50] sm:$0xff] %vm922, %v1382
  %2375 = vst.msk [vmem:[#allocation2 + $0x58] sm:$0xff] %vm922, %v1385
  %2376 = vst.msk [vmem:[#allocation2 + $0x60] sm:$0xff] %vm922, %v1390
  %2377 = vst.msk [vmem:[#allocation2 + $0x68] sm:$0xff] %vm922, %v1393
  %2378 = vst.msk [vmem:[#allocation2 + $0x70] sm:$0xff] %vm922, %v1398
  %2379 = vst.msk [vmem:[#allocation2 + $0x78] sm:$0xff] %vm922, %v1401
  %2380 = vst.msk [vmem:[#allocation2 + $0x80] sm:$0xff] %vm922, %v1406
  %2381 = vst.msk [vmem:[#allocation2 + $0x88] sm:$0xff] %vm922, %v1409
  %2382 = vst.msk [vmem:[#allocation2 + $0x90] sm:$0xff] %vm922, %v1414
  %2383 = vst.msk [vmem:[#allocation2 + $0x98] sm:$0xff] %vm922, %v1417
  %2384 = vst.msk [vmem:[#allocation2 + $0xa0] sm:$0xff] %vm922, %v1422
  %2385 = vst.msk [vmem:[#allocation2 + $0xa8] sm:$0xff] %vm922, %v1425
  %2386 = vst.msk [vmem:[#allocation2 + $0xb0] sm:$0xff] %vm922, %v1430
  %2387 = vst.msk [vmem:[#allocation2 + $0xb8] sm:$0xff] %vm922, %v1433
  %2388 = vst.msk [vmem:[#allocation2 + $0xc0] sm:$0xff] %vm922, %v1438
  %2389 = vst.msk [vmem:[#allocation2 + $0xc8] sm:$0xff] %vm922, %v1441
  %2390 = vst.msk [vmem:[#allocation2 + $0xd0] sm:$0xff] %vm922, %v1446
  %2391 = vst.msk [vmem:[#allocation2 + $0xd8] sm:$0xff] %vm922, %v1449
  %2392 = vst.msk [vmem:[#allocation2 + $0xe0] sm:$0xff] %vm922, %v1454
  %2393 = vst.msk [vmem:[#allocation2 + $0xe8] sm:$0xff] %vm922, %v1457
  %2394 = vst.msk [vmem:[#allocation2 + $0xf0] sm:$0xff] %vm922, %v1462
  %2395 = vst.msk [vmem:[#allocation2 + $0xf8] sm:$0xff] %vm922, %v1465
  %2396 = vst.msk [vmem:[#allocation2 + $0x100] sm:$0xff] %vm922, %v1470
  %2397 = vst.msk [vmem:[#allocation2 + $0x108] sm:$0xff] %vm922, %v1473
  %2398 = vst.msk [vmem:[#allocation2 + $0x110] sm:$0xff] %vm922, %v1478
  %2399 = vst.msk [vmem:[#allocation2 + $0x118] sm:$0xff] %vm922, %v1481
  %2400 = vst.msk [vmem:[#allocation2 + $0x120] sm:$0xff] %vm922, %v1486
  %2401 = vst.msk [vmem:[#allocation2 + $0x128] sm:$0xff] %vm922, %v1489
  %2402 = vst.msk [vmem:[#allocation2 + $0x130] sm:$0xff] %vm922, %v1494
  %2403 = vst.msk [vmem:[#allocation2 + $0x138] sm:$0xff] %vm922, %v1497
  %2404 = vst.msk [vmem:[#allocation2 + $0x140] sm:$0xff] %vm922, %v1502
  %2405 = vst.msk [vmem:[#allocation2 + $0x148] sm:$0xff] %vm922, %v1505
  %2406 = vst.msk [vmem:[#allocation2 + $0x150] sm:$0xff] %vm922, %v1510
  %2407 = vst.msk [vmem:[#allocation2 + $0x158] sm:$0xff] %vm922, %v1513
  %2408 = vst.msk [vmem:[#allocation2 + $0x160] sm:$0xff] %vm922, %v1518
  %2409 = vst.msk [vmem:[#allocation2 + $0x168] sm:$0xff] %vm922, %v1521
  %2410 = vst.msk [vmem:[#allocation2 + $0x170] sm:$0xff] %vm922, %v1526
  %2411 = vst.msk [vmem:[#allocation2 + $0x178] sm:$0xff] %vm922, %v1529
  %2412 = vst.msk [vmem:[#allocation2 + $0x180] sm:$0xff] %vm922, %v1534
  %2413 = vst.msk [vmem:[#allocation2 + $0x188] sm:$0xff] %vm922, %v1537
  %2414 = vst.msk [vmem:[#allocation2 + $0x190] sm:$0xff] %vm922, %v1542
  %2415 = vst.msk [vmem:[#allocation2 + $0x198] sm:$0xff] %vm922, %v1545
  %2416 = vst.msk [vmem:[#allocation2 + $0x1a0] sm:$0xff] %vm922, %v1550
  %2417 = vst.msk [vmem:[#allocation2 + $0x1a8] sm:$0xff] %vm922, %v1553
  %2418 = vst.msk [vmem:[#allocation2 + $0x1b0] sm:$0xff] %vm922, %v1558
  %2419 = vst.msk [vmem:[#allocation2 + $0x1b8] sm:$0xff] %vm922, %v1561
  %2420 = vst.msk [vmem:[#allocation2 + $0x1c0] sm:$0xff] %vm922, %v1566
  %2421 = vst.msk [vmem:[#allocation2 + $0x1c8] sm:$0xff] %vm922, %v1569
  %2422 = vst.msk [vmem:[#allocation2 + $0x1d0] sm:$0xff] %vm922, %v1574
  %2423 = vst.msk [vmem:[#allocation2 + $0x1d8] sm:$0xff] %vm922, %v1577
  %2424 = vst.msk [vmem:[#allocation2 + $0x1e0] sm:$0xff] %vm922, %v1582
  %2425 = vst.msk [vmem:[#allocation2 + $0x1e8] sm:$0xff] %vm922, %v1585
  %2426 = vst.msk [vmem:[#allocation2 + $0x1f0] sm:$0xff] %vm922, %v1590
  %2427 = vst.msk [vmem:[#allocation2 + $0x1f8] sm:$0xff] %vm922, %v1593
  %2428 = vst.msk [vmem:[#allocation2 + $0x200] sm:$0xff] %vm922, %v1598
  %2429 = vst.msk [vmem:[#allocation2 + $0x208] sm:$0xff] %vm922, %v1601
  %2430 = vst.msk [vmem:[#allocation2 + $0x210] sm:$0xff] %vm922, %v1606
  %2431 = vst.msk [vmem:[#allocation2 + $0x218] sm:$0xff] %vm922, %v1609
  %2432 = vst.msk [vmem:[#allocation2 + $0x220] sm:$0xff] %vm922, %v1614
  %2433 = vst.msk [vmem:[#allocation2 + $0x228] sm:$0xff] %vm922, %v1617
  %2434 = vst.msk [vmem:[#allocation2 + $0x230] sm:$0xff] %vm922, %v1622
  %2435 = vst.msk [vmem:[#allocation2 + $0x238] sm:$0xff] %vm922, %v1625
  %2436 = vst.msk [vmem:[#allocation2 + $0x240] sm:$0xff] %vm922, %v1630
  %2437 = vst.msk [vmem:[#allocation2 + $0x248] sm:$0xff] %vm922, %v1633
  %2438 = vst.msk [vmem:[#allocation2 + $0x250] sm:$0xff] %vm922, %v1638
  %2439 = vst.msk [vmem:[#allocation2 + $0x258] sm:$0xff] %vm922, %v1641
  %2440 = vst.msk [vmem:[#allocation2 + $0x260] sm:$0xff] %vm922, %v1646
  %2441 = vst.msk [vmem:[#allocation2 + $0x268] sm:$0xff] %vm922, %v1649
  %2442 = vst.msk [vmem:[#allocation2 + $0x270] sm:$0xff] %vm922, %v1654
  %2443 = vst.msk [vmem:[#allocation2 + $0x278] sm:$0xff] %vm922, %v1657
  %2444 = vst.msk [vmem:[#allocation2 + $0x280] sm:$0xff] %vm922, %v1662
  %2445 = vst.msk [vmem:[#allocation2 + $0x288] sm:$0xff] %vm922, %v1665
  %2446 = vst.msk [vmem:[#allocation2 + $0x290] sm:$0xff] %vm922, %v1670
  %2447 = vst.msk [vmem:[#allocation2 + $0x298] sm:$0xff] %vm922, %v1673
  %2448 = vst.msk [vmem:[#allocation2 + $0x2a0] sm:$0xff] %vm922, %v1678
  %2449 = vst.msk [vmem:[#allocation2 + $0x2a8] sm:$0xff] %vm922, %v1681
  %2450 = vst.msk [vmem:[#allocation2 + $0x2b0] sm:$0xff] %vm922, %v1686
  %2451 = vst.msk [vmem:[#allocation2 + $0x2b8] sm:$0xff] %vm922, %v1689
  %2452 = vst.msk [vmem:[#allocation2 + $0x2c0] sm:$0xff] %vm922, %v1694
  %2453 = vst.msk [vmem:[#allocation2 + $0x2c8] sm:$0xff] %vm922, %v1697
  %2454 = vst.msk [vmem:[#allocation2 + $0x2d0] sm:$0xff] %vm922, %v1702
  %2455 = vst.msk [vmem:[#allocation2 + $0x2d8] sm:$0xff] %vm922, %v1705
  %2456 = vst.msk [vmem:[#allocation2 + $0x2e0] sm:$0xff] %vm922, %v1710
  %2457 = vst.msk [vmem:[#allocation2 + $0x2e8] sm:$0xff] %vm922, %v1713
  %2458 = vst.msk [vmem:[#allocation2 + $0x2f0] sm:$0xff] %vm922, %v1718
  %2459 = vst.msk [vmem:[#allocation2 + $0x2f8] sm:$0xff] %vm922, %v1721
  %2460 = vst.msk [vmem:[#allocation2 + $0x300] sm:$0xff] %vm922, %v1726
  %2461 = vst.msk [vmem:[#allocation2 + $0x308] sm:$0xff] %vm922, %v1729
  %2462 = vst.msk [vmem:[#allocation2 + $0x310] sm:$0xff] %vm922, %v1734
  %2463 = vst.msk [vmem:[#allocation2 + $0x318] sm:$0xff] %vm922, %v1737
  %2464 = vst.msk [vmem:[#allocation2 + $0x320] sm:$0xff] %vm922, %v1742
  %2465 = vst.msk [vmem:[#allocation2 + $0x328] sm:$0xff] %vm922, %v1745
  %2466 = vst.msk [vmem:[#allocation2 + $0x330] sm:$0xff] %vm922, %v1750
  %2467 = vst.msk [vmem:[#allocation2 + $0x338] sm:$0xff] %vm922, %v1753
  %2468 = vst.msk [vmem:[#allocation2 + $0x340] sm:$0xff] %vm922, %v1758
  %2469 = vst.msk [vmem:[#allocation2 + $0x348] sm:$0xff] %vm922, %v1761
  %2470 = vst.msk [vmem:[#allocation2 + $0x350] sm:$0xff] %vm922, %v1766
  %2471 = vst.msk [vmem:[#allocation2 + $0x358] sm:$0xff] %vm922, %v1769
  %2472 = vst.msk [vmem:[#allocation2 + $0x360] sm:$0xff] %vm922, %v1774
  %2473 = vst.msk [vmem:[#allocation2 + $0x368] sm:$0xff] %vm922, %v1777
  %2474 = vst.msk [vmem:[#allocation2 + $0x370] sm:$0xff] %vm922, %v1782
  %2475 = vst.msk [vmem:[#allocation2 + $0x378] sm:$0xff] %vm922, %v1785
  %2476 = vst.msk [vmem:[#allocation2 + $0x380] sm:$0xff] %vm922, %v1790
  %2477 = vst.msk [vmem:[#allocation2 + $0x388] sm:$0xff] %vm922, %v1793
  %2478 = vst.msk [vmem:[#allocation2 + $0x390] sm:$0xff] %vm922, %v1798
  %2479 = vst.msk [vmem:[#allocation2 + $0x398] sm:$0xff] %vm922, %v1801
  %2480 = vst.msk [vmem:[#allocation2 + $0x3a0] sm:$0xff] %vm922, %v1806
  %2481 = vst.msk [vmem:[#allocation2 + $0x3a8] sm:$0xff] %vm922, %v1809
  %2482 = vst.msk [vmem:[#allocation2 + $0x3b0] sm:$0xff] %vm922, %v1814
  %2483 = vst.msk [vmem:[#allocation2 + $0x3b8] sm:$0xff] %vm922, %v1817
  %2484 = vst.msk [vmem:[#allocation2 + $0x3c0] sm:$0xff] %vm922, %v1822
  %2485 = vst.msk [vmem:[#allocation2 + $0x3c8] sm:$0xff] %vm922, %v1825
  %2486 = vst.msk [vmem:[#allocation2 + $0x3d0] sm:$0xff] %vm922, %v1830
  %2487 = vst.msk [vmem:[#allocation2 + $0x3d8] sm:$0xff] %vm922, %v1833
  %2488 = vst.msk [vmem:[#allocation2 + $0x3e0] sm:$0xff] %vm922, %v1838
  %2489 = vst.msk [vmem:[#allocation2 + $0x3e8] sm:$0xff] %vm922, %v1841
  %2490 = vst.msk [vmem:[#allocation2 + $0x3f0] sm:$0xff] %vm922, %v1846
  %2491 = vst.msk [vmem:[#allocation2 + $0x3f8] sm:$0xff] %vm922, %v1849
  %2492 = vst.msk [vmem:[#allocation2 + $0x400] sm:$0xff] %vm922, %v1854
  %2493 = vst.msk [vmem:[#allocation2 + $0x408] sm:$0xff] %vm922, %v1857
  %2494 = vst.msk [vmem:[#allocation2 + $0x410] sm:$0xff] %vm922, %v1862
  %2495 = vst.msk [vmem:[#allocation2 + $0x418] sm:$0xff] %vm922, %v1865
  %2496 = vst.msk [vmem:[#allocation2 + $0x420] sm:$0xff] %vm922, %v1870
  %2497 = vst.msk [vmem:[#allocation2 + $0x428] sm:$0xff] %vm922, %v1873
  %2498 = vst.msk [vmem:[#allocation2 + $0x430] sm:$0xff] %vm922, %v1878
  %2499 = vst.msk [vmem:[#allocation2 + $0x438] sm:$0xff] %vm922, %v1881
  %2500 = vst.msk [vmem:[#allocation2 + $0x440] sm:$0xff] %vm922, %v1886
  %2501 = vst.msk [vmem:[#allocation2 + $0x448] sm:$0xff] %vm922, %v1889
  %2502 = vst.msk [vmem:[#allocation2 + $0x450] sm:$0xff] %vm922, %v1894
  %2503 = vst.msk [vmem:[#allocation2 + $0x458] sm:$0xff] %vm922, %v1897
  %2504 = vst.msk [vmem:[#allocation2 + $0x460] sm:$0xff] %vm922, %v1902
  %2505 = vst.msk [vmem:[#allocation2 + $0x468] sm:$0xff] %vm922, %v1905
  %2506 = vst.msk [vmem:[#allocation2 + $0x470] sm:$0xff] %vm922, %v1910
  %2507 = vst.msk [vmem:[#allocation2 + $0x478] sm:$0xff] %vm922, %v1913
  %2508 = vst.msk [vmem:[#allocation2 + $0x480] sm:$0xff] %vm922, %v1918
  %2509 = vst.msk [vmem:[#allocation2 + $0x488] sm:$0xff] %vm922, %v1921
  %2510 = vst.msk [vmem:[#allocation2 + $0x490] sm:$0xff] %vm922, %v1926
  %2511 = vst.msk [vmem:[#allocation2 + $0x498] sm:$0xff] %vm922, %v1929
  %2512 = vst.msk [vmem:[#allocation2 + $0x4a0] sm:$0xff] %vm922, %v1934
  %2513 = vst.msk [vmem:[#allocation2 + $0x4a8] sm:$0xff] %vm922, %v1937
  %2514 = vst.msk [vmem:[#allocation2 + $0x4b0] sm:$0xff] %vm922, %v1942
  %2515 = vst.msk [vmem:[#allocation2 + $0x4b8] sm:$0xff] %vm922, %v1945
  %2516 = vst.msk [vmem:[#allocation2 + $0x4c0] sm:$0xff] %vm922, %v1950
  %2517 = vst.msk [vmem:[#allocation2 + $0x4c8] sm:$0xff] %vm922, %v1953
  %2518 = vst.msk [vmem:[#allocation2 + $0x4d0] sm:$0xff] %vm922, %v1958
  %2519 = vst.msk [vmem:[#allocation2 + $0x4d8] sm:$0xff] %vm922, %v1961
  %2520 = vst.msk [vmem:[#allocation2 + $0x4e0] sm:$0xff] %vm922, %v1966
  %2521 = vst.msk [vmem:[#allocation2 + $0x4e8] sm:$0xff] %vm922, %v1969
  %2522 = vst.msk [vmem:[#allocation2 + $0x4f0] sm:$0xff] %vm922, %v1974
  %2523 = vst.msk [vmem:[#allocation2 + $0x4f8] sm:$0xff] %vm922, %v1977
  %2524 = vst.msk [vmem:[#allocation2 + $0x500] sm:$0xff] %vm922, %v1982
  %2525 = vst.msk [vmem:[#allocation2 + $0x508] sm:$0xff] %vm922, %v1985
  %2526 = vst.msk [vmem:[#allocation2 + $0x510] sm:$0xff] %vm922, %v1990
  %2527 = vst.msk [vmem:[#allocation2 + $0x518] sm:$0xff] %vm922, %v1993
  %2528 = vst.msk [vmem:[#allocation2 + $0x520] sm:$0xff] %vm922, %v1998
  %2529 = vst.msk [vmem:[#allocation2 + $0x528] sm:$0xff] %vm922, %v2001
  %2530 = vst.msk [vmem:[#allocation2 + $0x530] sm:$0xff] %vm922, %v2006
  %2531 = vst.msk [vmem:[#allocation2 + $0x538] sm:$0xff] %vm922, %v2009
  %2532 = vst.msk [vmem:[#allocation2 + $0x540] sm:$0xff] %vm922, %v2014
  %2533 = vst.msk [vmem:[#allocation2 + $0x548] sm:$0xff] %vm922, %v2017
  %2534 = vst.msk [vmem:[#allocation2 + $0x550] sm:$0xff] %vm922, %v2022
  %2535 = vst.msk [vmem:[#allocation2 + $0x558] sm:$0xff] %vm922, %v2025
  %2536 = vst.msk [vmem:[#allocation2 + $0x560] sm:$0xff] %vm922, %v2030
  %2537 = vst.msk [vmem:[#allocation2 + $0x568] sm:$0xff] %vm922, %v2033
  %2538 = vst.msk [vmem:[#allocation2 + $0x570] sm:$0xff] %vm922, %v2038
  %2539 = vst.msk [vmem:[#allocation2 + $0x578] sm:$0xff] %vm922, %v2041
  %2540 = vst.msk [vmem:[#allocation2 + $0x580] sm:$0xff] %vm922, %v2046
  %2541 = vst.msk [vmem:[#allocation2 + $0x588] sm:$0xff] %vm922, %v2049
  %2542 = vst.msk [vmem:[#allocation2 + $0x590] sm:$0xff] %vm922, %v2054
  %2543 = vst.msk [vmem:[#allocation2 + $0x598] sm:$0xff] %vm922, %v2057
  %2544 = vst.msk [vmem:[#allocation2 + $0x5a0] sm:$0xff] %vm922, %v2062
  %2545 = vst.msk [vmem:[#allocation2 + $0x5a8] sm:$0xff] %vm922, %v2065
  %2546 = vst.msk [vmem:[#allocation2 + $0x5b0] sm:$0xff] %vm922, %v2070
  %2547 = vst.msk [vmem:[#allocation2 + $0x5b8] sm:$0xff] %vm922, %v2073
  %2548 = vst.msk [vmem:[#allocation2 + $0x5c0] sm:$0xff] %vm922, %v2078
  %2549 = vst.msk [vmem:[#allocation2 + $0x5c8] sm:$0xff] %vm922, %v2081
  %2550 = vst.msk [vmem:[#allocation2 + $0x5d0] sm:$0xff] %vm922, %v2086
  %2551 = vst.msk [vmem:[#allocation2 + $0x5d8] sm:$0xff] %vm922, %v2089
  %2552 = vst.msk [vmem:[#allocation2 + $0x5e0] sm:$0xff] %vm922, %v2094
  %2553 = vst.msk [vmem:[#allocation2 + $0x5e8] sm:$0xff] %vm922, %v2097
  %2554 = vst.msk [vmem:[#allocation2 + $0x5f0] sm:$0xff] %vm922, %v2102
  %2555 = vst.msk [vmem:[#allocation2 + $0x5f8] sm:$0xff] %vm922, %v2105
  %2556 = vst.msk [vmem:[#allocation2 + $0x600] sm:$0xff] %vm922, %v2110
  %2557 = vst.msk [vmem:[#allocation2 + $0x608] sm:$0xff] %vm922, %v2113
  %2558 = vst.msk [vmem:[#allocation2 + $0x610] sm:$0xff] %vm922, %v2118
  %2559 = vst.msk [vmem:[#allocation2 + $0x618] sm:$0xff] %vm922, %v2121
  %2560 = vst.msk [vmem:[#allocation2 + $0x620] sm:$0xff] %vm922, %v2126
  %2561 = vst.msk [vmem:[#allocation2 + $0x628] sm:$0xff] %vm922, %v2129
  %2562 = vst.msk [vmem:[#allocation2 + $0x630] sm:$0xff] %vm922, %v2134
  %2563 = vst.msk [vmem:[#allocation2 + $0x638] sm:$0xff] %vm922, %v2137
  %2564 = vst.msk [vmem:[#allocation2 + $0x640] sm:$0xff] %vm922, %v2142
  %2565 = vst.msk [vmem:[#allocation2 + $0x648] sm:$0xff] %vm922, %v2145
  %2566 = vst.msk [vmem:[#allocation2 + $0x650] sm:$0xff] %vm922, %v2150
  %2567 = vst.msk [vmem:[#allocation2 + $0x658] sm:$0xff] %vm922, %v2153
  %2568 = vst.msk [vmem:[#allocation2 + $0x660] sm:$0xff] %vm922, %v2158
  %2569 = vst.msk [vmem:[#allocation2 + $0x668] sm:$0xff] %vm922, %v2161
  %2570 = vst.msk [vmem:[#allocation2 + $0x670] sm:$0xff] %vm922, %v2166
  %2571 = vst.msk [vmem:[#allocation2 + $0x678] sm:$0xff] %vm922, %v2169
  %2572 = vst.msk [vmem:[#allocation2 + $0x680] sm:$0xff] %vm922, %v2174
  %2573 = vst.msk [vmem:[#allocation2 + $0x688] sm:$0xff] %vm922, %v2177
  %2574 = vst.msk [vmem:[#allocation2 + $0x690] sm:$0xff] %vm922, %v2182
  %2575 = vst.msk [vmem:[#allocation2 + $0x698] sm:$0xff] %vm922, %v2185
  %2576 = vst.msk [vmem:[#allocation2 + $0x6a0] sm:$0xff] %vm922, %v2190
  %2577 = vst.msk [vmem:[#allocation2 + $0x6a8] sm:$0xff] %vm922, %v2193
  %2578 = vst.msk [vmem:[#allocation2 + $0x6b0] sm:$0xff] %vm922, %v2198
  %2579 = vst.msk [vmem:[#allocation2 + $0x6b8] sm:$0xff] %vm922, %v2201
  %2580 = vst.msk [vmem:[#allocation2 + $0x6c0] sm:$0xff] %vm922, %v2206
  %2581 = vst.msk [vmem:[#allocation2 + $0x6c8] sm:$0xff] %vm922, %v2209
  %2582 = vst.msk [vmem:[#allocation2 + $0x6d0] sm:$0xff] %vm922, %v2214
  %2583 = vst.msk [vmem:[#allocation2 + $0x6d8] sm:$0xff] %vm922, %v2217
  %2584 = vst.msk [vmem:[#allocation2 + $0x6e0] sm:$0xff] %vm922, %v2222
  %2585 = vst.msk [vmem:[#allocation2 + $0x6e8] sm:$0xff] %vm922, %v2225
  %2586 = vst.msk [vmem:[#allocation2 + $0x6f0] sm:$0xff] %vm922, %v2230
  %2587 = vst.msk [vmem:[#allocation2 + $0x6f8] sm:$0xff] %vm922, %v2233
  %2588 = vst.msk [vmem:[#allocation2 + $0x700] sm:$0xff] %vm922, %v2238
  %2589 = vst.msk [vmem:[#allocation2 + $0x708] sm:$0xff] %vm922, %v2241
  %2590 = vst.msk [vmem:[#allocation2 + $0x710] sm:$0xff] %vm922, %v2246
  %2591 = vst.msk [vmem:[#allocation2 + $0x718] sm:$0xff] %vm922, %v2249
  %2592 = vst.msk [vmem:[#allocation2 + $0x720] sm:$0xff] %vm922, %v2254
  %2593 = vst.msk [vmem:[#allocation2 + $0x728] sm:$0xff] %vm922, %v2257
  %2594 = vst.msk [vmem:[#allocation2 + $0x730] sm:$0xff] %vm922, %v2262
  %2595 = vst.msk [vmem:[#allocation2 + $0x738] sm:$0xff] %vm922, %v2265
  %2596 = vst.msk [vmem:[#allocation2 + $0x740] sm:$0xff] %vm922, %v2270
  %2597 = vst.msk [vmem:[#allocation2 + $0x748] sm:$0xff] %vm922, %v2273
  %2598 = vst.msk [vmem:[#allocation2 + $0x750] sm:$0xff] %vm922, %v2278
  %2599 = vst.msk [vmem:[#allocation2 + $0x758] sm:$0xff] %vm922, %v2281
  %2600 = vst.msk [vmem:[#allocation2 + $0x760] sm:$0xff] %vm922, %v2286
  %2601 = vst.msk [vmem:[#allocation2 + $0x768] sm:$0xff] %vm922, %v2289
  %2602 = vst.msk [vmem:[#allocation2 + $0x770] sm:$0xff] %vm922, %v2294
  %2603 = vst.msk [vmem:[#allocation2 + $0x778] sm:$0xff] %vm922, %v2297
  %2604 = vst.msk [vmem:[#allocation2 + $0x780] sm:$0xff] %vm922, %v2302
  %2605 = vst.msk [vmem:[#allocation2 + $0x788] sm:$0xff] %vm922, %v2305
  %2606 = vst.msk [vmem:[#allocation2 + $0x790] sm:$0xff] %vm922, %v2310
  %2607 = vst.msk [vmem:[#allocation2 + $0x798] sm:$0xff] %vm922, %v2313
  %2608 = vst.msk [vmem:[#allocation2 + $0x7a0] sm:$0xff] %vm922, %v2318
  %2609 = vst.msk [vmem:[#allocation2 + $0x7a8] sm:$0xff] %vm922, %v2321
  %2610 = vst.msk [vmem:[#allocation2 + $0x7b0] sm:$0xff] %vm922, %v2326
  %2611 = vst.msk [vmem:[#allocation2 + $0x7b8] sm:$0xff] %vm922, %v2329
  %2612 = vst.msk [vmem:[#allocation2 + $0x7c0] sm:$0xff] %vm922, %v2334
  %2613 = vst.msk [vmem:[#allocation2 + $0x7c8] sm:$0xff] %vm922, %v2337
  %2614 = vst.msk [vmem:[#allocation2 + $0x7d0] sm:$0xff] %vm922, %v2342
  %2615 = vst.msk [vmem:[#allocation2 + $0x7d8] sm:$0xff] %vm922, %v2345
  %2616 = vst.msk [vmem:[#allocation2 + $0x7e0] sm:$0xff] %vm922, %v2350
  %2617 = vst.msk [vmem:[#allocation2 + $0x7e8] sm:$0xff] %vm922, %v2353
  %2618 = vst.msk [vmem:[#allocation2 + $0x7f0] sm:$0xff] %vm922, %v2358
  %2619 = vst.msk [vmem:[#allocation2 + $0x7f8] sm:$0xff] %vm922, %v2361
  %v2620 = vld [vmem:[%s3] sm:$0x1]
  %v2621 = vld [vmem:[%s1] sm:$0xf]
  %v2622 = vld [vmem:[%s1 + $0x4] sm:$0xf]
  %v2623 = vld [vmem:[%s1 + $0x8] sm:$0xf]
  %v2624 = vld [vmem:[%s1 + $0xc] sm:$0xf]
  %v2625 = vld [vmem:[%s1 + $0x10] sm:$0xf]
  %v2626 = vld [vmem:[%s1 + $0x14] sm:$0xf]
  %v2627 = vld [vmem:[%s1 + $0x18] sm:$0xf]
  %v2628 = vld [vmem:[%s1 + $0x1c] sm:$0xf]
  %v2629 = vld [vmem:[%s1 + $0x20] sm:$0xf]
  %v2630 = vld [vmem:[%s1 + $0x24] sm:$0xf]
  %v2631 = vld [vmem:[%s1 + $0x28] sm:$0xf]
  %v2632 = vld [vmem:[%s1 + $0x2c] sm:$0xf]
  %v2633 = vld [vmem:[%s1 + $0x30] sm:$0xf]
  %v2634 = vld [vmem:[%s1 + $0x34] sm:$0xf]
  %v2635 = vld [vmem:[%s1 + $0x38] sm:$0xf]
  %v2636 = vld [vmem:[%s1 + $0x3c] sm:$0xf]
  %v2653 = vunpack.c.l.b16 %v2621
  %v2654 = vunpack.c.l.b16 %v2622
  %v2655 = vunpack.c.l.b16 %v2623
  %v2656 = vunpack.c.l.b16 %v2624
  %v2657 = vunpack.c.l.b16 %v2625
  %v2658 = vunpack.c.l.b16 %v2626
  %v2659 = vunpack.c.l.b16 %v2627
  %v2660 = vunpack.c.l.b16 %v2628
  %v2661 = vunpack.c.l.b16 %v2629
  %v2662 = vunpack.c.l.b16 %v2630
  %v2663 = vunpack.c.l.b16 %v2631
  %v2664 = vunpack.c.l.b16 %v2632
  %v2665 = vunpack.c.l.b16 %v2633
  %v2666 = vunpack.c.l.b16 %v2634
  %v2667 = vunpack.c.l.b16 %v2635
  %v2668 = vunpack.c.l.b16 %v2636
  %v2669 = vpack.c.b16 %v2654, %v2653
  %v2670 = vpack.c.b16 %v2656, %v2655
  %v2671 = vpack.c.b16 %v2658, %v2657
  %v2672 = vpack.c.b16 %v2660, %v2659
  %v2673 = vpack.c.b16 %v2662, %v2661
  %v2674 = vpack.c.b16 %v2664, %v2663
  %v2675 = vpack.c.b16 %v2666, %v2665
  %v2676 = vpack.c.b16 %v2668, %v2667
  %v2678 = vsel %vm922, %v2669, 0
  %v2681 = vsel %vm922, %v2670, 0
  %v2684 = vsel %vm922, %v2671, 0
  %v2687 = vsel %vm922, %v2672, 0
  %v2690 = vsel %vm922, %v2673, 0
  %v2693 = vsel %vm922, %v2674, 0
  %v2696 = vsel %vm922, %v2675, 0
  %v2699 = vsel %vm922, %v2676, 0
  %2701 = vmatprep.subr.bf16.mxu0 0
  %2702 = vmatpush1.bf16.msra.mxu0 %v920
  %2703 = vmatprep.subr.bf16.mxu0 0
  %2704 = vmatpush1.bf16.msra.mxu0 0
  %2705 = vmatprep.subr.bf16.mxu0 0
  %2706 = vmatpush1.bf16.msra.mxu0 0
  %2707 = vmatprep.subr.bf16.mxu0 0
  %2708 = vmatpush1.bf16.msra.mxu0 0
  %2709 = vmatprep.subr.bf16.mxu0 0
  %2710 = vmatpush1.bf16.msra.mxu0 0
  %2711 = vmatprep.subr.bf16.mxu0 0
  %2712 = vmatpush1.bf16.msra.mxu0 0
  %2713 = vmatprep.subr.bf16.mxu0 0
  %2714 = vmatpush1.bf16.msra.mxu0 0
  %2715 = vmatprep.subr.bf16.mxu0 0
  %2716 = vmatpush1.bf16.msra.mxu0 0
  %2717 = vmatprep.subr.bf16.mxu0 0
  %2718 = vmatpush1.bf16.msra.mxu0 0
  %2719 = vmatprep.subr.bf16.mxu0 0
  %2720 = vmatpush1.bf16.msra.mxu0 0
  %2721 = vmatprep.subr.bf16.mxu0 0
  %2722 = vmatpush1.bf16.msra.mxu0 0
  %2723 = vmatprep.subr.bf16.mxu0 0
  %2724 = vmatpush1.bf16.msra.mxu0 0
  %2725 = vmatprep.subr.bf16.mxu0 0
  %2726 = vmatpush1.bf16.msra.mxu0 0
  %2727 = vmatprep.subr.bf16.mxu0 0
  %2728 = vmatpush1.bf16.msra.mxu0 0
  %2729 = vmatprep.subr.bf16.mxu0 0
  %2730 = vmatpush1.bf16.msra.mxu0 0
  %2731 = vmatprep.subr.bf16.mxu0 0
  %2732 = vmatpush1.bf16.msra.mxu0 0
  %2733 = vmatprep.mubr.bf16.mxu0 0
  %2734 = vmatmul.mubr.bf16.gmra.mrb[0].mxu0 %v2678
  %v2735 = vpop.f32.mrb[0].mxu0
  %v2736 = vadd.f32 0.0, %v2735
  %v2737 = vpop.f32.mrb[0].mxu0
  %v2738 = vpop.f32.mrb[0].mxu0
  %v2739 = vadd.f32 0.0, %v2738
  %v2740 = vpop.f32.mrb[0].mxu0
  %2741 = vmatprep.mubr.bf16.mxu0 0
  %2742 = vmatmul.mubr.bf16.gmra.mrb[0].mxu0 %v2681
  %v2743 = vpop.f32.mrb[0].mxu0
  %v2744 = vadd.f32 0.0, %v2743
  %v2745 = vpop.f32.mrb[0].mxu0
  %v2746 = vpop.f32.mrb[0].mxu0
  %v2747 = vadd.f32 0.0, %v2746
  %v2748 = vpop.f32.mrb[0].mxu0
  %2749 = vmatprep.mubr.bf16.mxu0 0
  %2750 = vmatmul.mubr.bf16.gmra.mrb[0].mxu0 %v2684
  %v2751 = vpop.f32.mrb[0].mxu0
  %v2752 = vadd.f32 0.0, %v2751
  %v2753 = vpop.f32.mrb[0].mxu0
  %v2754 = vpop.f32.mrb[0].mxu0
  %v2755 = vadd.f32 0.0, %v2754
  %v2756 = vpop.f32.mrb[0].mxu0
  %2757 = vmatprep.mubr.bf16.mxu0 0
  %2758 = vmatmul.mubr.bf16.gmra.mrb[0].mxu0 %v2687
  %v2759 = vpop.f32.mrb[0].mxu0
  %v2760 = vadd.f32 0.0, %v2759
  %v2761 = vpop.f32.mrb[0].mxu0
  %v2762 = vpop.f32.mrb[0].mxu0
  %v2763 = vadd.f32 0.0, %v2762
  %v2764 = vpop.f32.mrb[0].mxu0
  %2765 = vmatprep.mubr.bf16.mxu0 0
  %2766 = vmatmul.mubr.bf16.gmra.mrb[0].mxu0 %v2690
  %v2767 = vpop.f32.mrb[0].mxu0
  %v2768 = vadd.f32 0.0, %v2767
  %v2769 = vpop.f32.mrb[0].mxu0
  %v2770 = vpop.f32.mrb[0].mxu0
  %v2771 = vadd.f32 0.0, %v2770
  %v2772 = vpop.f32.mrb[0].mxu0
  %2773 = vmatprep.mubr.bf16.mxu0 0
  %2774 = vmatmul.mubr.bf16.gmra.mrb[0].mxu0 %v2693
  %v2775 = vpop.f32.mrb[0].mxu0
  %v2776 = vadd.f32 0.0, %v2775
  %v2777 = vpop.f32.mrb[0].mxu0
  %v2778 = vpop.f32.mrb[0].mxu0
  %v2779 = vadd.f32 0.0, %v2778
  %v2780 = vpop.f32.mrb[0].mxu0
  %2781 = vmatprep.mubr.bf16.mxu0 0
  %2782 = vmatmul.mubr.bf16.gmra.mrb[0].mxu0 %v2696
  %v2783 = vpop.f32.mrb[0].mxu0
  %v2784 = vadd.f32 0.0, %v2783
  %v2785 = vpop.f32.mrb[0].mxu0
  %v2786 = vpop.f32.mrb[0].mxu0
  %v2787 = vadd.f32 0.0, %v2786
  %v2788 = vpop.f32.mrb[0].mxu0
  %2789 = vmatprep.mubr.bf16.mxu0 0
  %2790 = vmatmul.mubr.bf16.gmra.mrb[0].mxu0 %v2699
  %v2791 = vpop.f32.mrb[0].mxu0
  %v2792 = vadd.f32 0.0, %v2791
  %v2793 = vpop.f32.mrb[0].mxu0
  %v2794 = vpop.f32.mrb[0].mxu0
  %v2795 = vadd.f32 0.0, %v2794
  %v2796 = vpop.f32.mrb[0].mxu0
  %2797 = vdwg.mxu0
  %v2799 = vlaneseq
  %v2800 = vshrl.u32 %v2799, 7
  %v2801 = vsub.s32 0, %v2800
  %v2802 = vrot.slane %v2620, %v2801
  %v2804 = vsub.f32 %v2802, %v2736
  %v2805 = vsub.f32 %v2802, %v2739
  %v2806 = vsub.f32 %v2802, %v2744
  %v2807 = vsub.f32 %v2802, %v2747
  %v2808 = vsub.f32 %v2802, %v2752
  %v2809 = vsub.f32 %v2802, %v2755
  %v2810 = vsub.f32 %v2802, %v2760
  %v2811 = vsub.f32 %v2802, %v2763
  %v2812 = vsub.f32 %v2802, %v2768
  %v2813 = vsub.f32 %v2802, %v2771
  %v2814 = vsub.f32 %v2802, %v2776
  %v2815 = vsub.f32 %v2802, %v2779
  %v2816 = vsub.f32 %v2802, %v2784
  %v2817 = vsub.f32 %v2802, %v2787
  %v2818 = vsub.f32 %v2802, %v2792
  %v2819 = vsub.f32 %v2802, %v2795
  %v2820 = vld [vmem:[#allocation2] sm:$0xff]
  %v2821 = vld [vmem:[#allocation2 + $0x8] sm:$0xff]
  %v2822 = vld [vmem:[#allocation2 + $0x10] sm:$0xff]
  %v2823 = vld [vmem:[#allocation2 + $0x18] sm:$0xff]
  %v2824 = vld [vmem:[#allocation2 + $0x20] sm:$0xff]
  %v2825 = vld [vmem:[#allocation2 + $0x28] sm:$0xff]
  %v2826 = vld [vmem:[#allocation2 + $0x30] sm:$0xff]
  %v2827 = vld [vmem:[#allocation2 + $0x38] sm:$0xff]
  %v2828 = vld [vmem:[#allocation2 + $0x40] sm:$0xff]
  %v2829 = vld [vmem:[#allocation2 + $0x48] sm:$0xff]
  %v2830 = vld [vmem:[#allocation2 + $0x50] sm:$0xff]
  %v2831 = vld [vmem:[#allocation2 + $0x58] sm:$0xff]
  %v2832 = vld [vmem:[#allocation2 + $0x60] sm:$0xff]
  %v2833 = vld [vmem:[#allocation2 + $0x68] sm:$0xff]
  %v2834 = vld [vmem:[#allocation2 + $0x70] sm:$0xff]
  %v2835 = vld [vmem:[#allocation2 + $0x78] sm:$0xff]
  %v2836 = vld [vmem:[#allocation2 + $0x80] sm:$0xff]
  %v2837 = vld [vmem:[#allocation2 + $0x88] sm:$0xff]
  %v2838 = vld [vmem:[#allocation2 + $0x90] sm:$0xff]
  %v2839 = vld [vmem:[#allocation2 + $0x98] sm:$0xff]
  %v2840 = vld [vmem:[#allocation2 + $0xa0] sm:$0xff]
  %v2841 = vld [vmem:[#allocation2 + $0xa8] sm:$0xff]
  %v2842 = vld [vmem:[#allocation2 + $0xb0] sm:$0xff]
  %v2843 = vld [vmem:[#allocation2 + $0xb8] sm:$0xff]
  %v2844 = vld [vmem:[#allocation2 + $0xc0] sm:$0xff]
  %v2845 = vld [vmem:[#allocation2 + $0xc8] sm:$0xff]
  %v2846 = vld [vmem:[#allocation2 + $0xd0] sm:$0xff]
  %v2847 = vld [vmem:[#allocation2 + $0xd8] sm:$0xff]
  %v2848 = vld [vmem:[#allocation2 + $0xe0] sm:$0xff]
  %v2849 = vld [vmem:[#allocation2 + $0xe8] sm:$0xff]
  %v2850 = vld [vmem:[#allocation2 + $0xf0] sm:$0xff]
  %v2851 = vld [vmem:[#allocation2 + $0xf8] sm:$0xff]
  %v2852 = vmax.f32 %v2820, %v2836
  %v2853 = vmax.f32 %v2821, %v2837
  %v2854 = vmax.f32 %v2822, %v2838
  %v2855 = vmax.f32 %v2823, %v2839
  %v2856 = vmax.f32 %v2824, %v2840
  %v2857 = vmax.f32 %v2825, %v2841
  %v2858 = vmax.f32 %v2826, %v2842
  %v2859 = vmax.f32 %v2827, %v2843
  %v2860 = vmax.f32 %v2828, %v2844
  %v2861 = vmax.f32 %v2829, %v2845
  %v2862 = vmax.f32 %v2830, %v2846
  %v2863 = vmax.f32 %v2831, %v2847
  %v2864 = vmax.f32 %v2832, %v2848
  %v2865 = vmax.f32 %v2833, %v2849
  %v2866 = vmax.f32 %v2834, %v2850
  %v2867 = vmax.f32 %v2835, %v2851
  %v2868 = vld [vmem:[#allocation2 + $0x100] sm:$0xff]
  %v2869 = vld [vmem:[#allocation2 + $0x108] sm:$0xff]
  %v2870 = vld [vmem:[#allocation2 + $0x110] sm:$0xff]
  %v2871 = vld [vmem:[#allocation2 + $0x118] sm:$0xff]
  %v2872 = vld [vmem:[#allocation2 + $0x120] sm:$0xff]
  %v2873 = vld [vmem:[#allocation2 + $0x128] sm:$0xff]
  %v2874 = vld [vmem:[#allocation2 + $0x130] sm:$0xff]
  %v2875 = vld [vmem:[#allocation2 + $0x138] sm:$0xff]
  %v2876 = vld [vmem:[#allocation2 + $0x140] sm:$0xff]
  %v2877 = vld [vmem:[#allocation2 + $0x148] sm:$0xff]
  %v2878 = vld [vmem:[#allocation2 + $0x150] sm:$0xff]
  %v2879 = vld [vmem:[#allocation2 + $0x158] sm:$0xff]
  %v2880 = vld [vmem:[#allocation2 + $0x160] sm:$0xff]
  %v2881 = vld [vmem:[#allocation2 + $0x168] sm:$0xff]
  %v2882 = vld [vmem:[#allocation2 + $0x170] sm:$0xff]
  %v2883 = vld [vmem:[#allocation2 + $0x178] sm:$0xff]
  %v2884 = vmax.f32 %v2852, %v2868
  %v2885 = vmax.f32 %v2853, %v2869
  %v2886 = vmax.f32 %v2854, %v2870
  %v2887 = vmax.f32 %v2855, %v2871
  %v2888 = vmax.f32 %v2856, %v2872
  %v2889 = vmax.f32 %v2857, %v2873
  %v2890 = vmax.f32 %v2858, %v2874
  %v2891 = vmax.f32 %v2859, %v2875
  %v2892 = vmax.f32 %v2860, %v2876
  %v2893 = vmax.f32 %v2861, %v2877
  %v2894 = vmax.f32 %v2862, %v2878
  %v2895 = vmax.f32 %v2863, %v2879
  %v2896 = vmax.f32 %v2864, %v2880
  %v2897 = vmax.f32 %v2865, %v2881
  %v2898 = vmax.f32 %v2866, %v2882
  %v2899 = vmax.f32 %v2867, %v2883
  %v2900 = vld [vmem:[#allocation2 + $0x180] sm:$0xff]
  %v2901 = vld [vmem:[#allocation2 + $0x188] sm:$0xff]
  %v2902 = vld [vmem:[#allocation2 + $0x190] sm:$0xff]
  %v2903 = vld [vmem:[#allocation2 + $0x198] sm:$0xff]
  %v2904 = vld [vmem:[#allocation2 + $0x1a0] sm:$0xff]
  %v2905 = vld [vmem:[#allocation2 + $0x1a8] sm:$0xff]
  %v2906 = vld [vmem:[#allocation2 + $0x1b0] sm:$0xff]
  %v2907 = vld [vmem:[#allocation2 + $0x1b8] sm:$0xff]
  %v2908 = vld [vmem:[#allocation2 + $0x1c0] sm:$0xff]
  %v2909 = vld [vmem:[#allocation2 + $0x1c8] sm:$0xff]
  %v2910 = vld [vmem:[#allocation2 + $0x1d0] sm:$0xff]
  %v2911 = vld [vmem:[#allocation2 + $0x1d8] sm:$0xff]
  %v2912 = vld [vmem:[#allocation2 + $0x1e0] sm:$0xff]
  %v2913 = vld [vmem:[#allocation2 + $0x1e8] sm:$0xff]
  %v2914 = vld [vmem:[#allocation2 + $0x1f0] sm:$0xff]
  %v2915 = vld [vmem:[#allocation2 + $0x1f8] sm:$0xff]
  %v2916 = vmax.f32 %v2884, %v2900
  %v2917 = vmax.f32 %v2885, %v2901
  %v2918 = vmax.f32 %v2886, %v2902
  %v2919 = vmax.f32 %v2887, %v2903
  %v2920 = vmax.f32 %v2888, %v2904
  %v2921 = vmax.f32 %v2889, %v2905
  %v2922 = vmax.f32 %v2890, %v2906
  %v2923 = vmax.f32 %v2891, %v2907
  %v2924 = vmax.f32 %v2892, %v2908
  %v2925 = vmax.f32 %v2893, %v2909
  %v2926 = vmax.f32 %v2894, %v2910
  %v2927 = vmax.f32 %v2895, %v2911
  %v2928 = vmax.f32 %v2896, %v2912
  %v2929 = vmax.f32 %v2897, %v2913
  %v2930 = vmax.f32 %v2898, %v2914
  %v2931 = vmax.f32 %v2899, %v2915
  %v2932 = vld [vmem:[#allocation2 + $0x200] sm:$0xff]
  %v2933 = vld [vmem:[#allocation2 + $0x208] sm:$0xff]
  %v2934 = vld [vmem:[#allocation2 + $0x210] sm:$0xff]
  %v2935 = vld [vmem:[#allocation2 + $0x218] sm:$0xff]
  %v2936 = vld [vmem:[#allocation2 + $0x220] sm:$0xff]
  %v2937 = vld [vmem:[#allocation2 + $0x228] sm:$0xff]
  %v2938 = vld [vmem:[#allocation2 + $0x230] sm:$0xff]
  %v2939 = vld [vmem:[#allocation2 + $0x238] sm:$0xff]
  %v2940 = vld [vmem:[#allocation2 + $0x240] sm:$0xff]
  %v2941 = vld [vmem:[#allocation2 + $0x248] sm:$0xff]
  %v2942 = vld [vmem:[#allocation2 + $0x250] sm:$0xff]
  %v2943 = vld [vmem:[#allocation2 + $0x258] sm:$0xff]
  %v2944 = vld [vmem:[#allocation2 + $0x260] sm:$0xff]
  %v2945 = vld [vmem:[#allocation2 + $0x268] sm:$0xff]
  %v2946 = vld [vmem:[#allocation2 + $0x270] sm:$0xff]
  %v2947 = vld [vmem:[#allocation2 + $0x278] sm:$0xff]
  %v2948 = vmax.f32 %v2916, %v2932
  %v2949 = vmax.f32 %v2917, %v2933
  %v2950 = vmax.f32 %v2918, %v2934
  %v2951 = vmax.f32 %v2919, %v2935
  %v2952 = vmax.f32 %v2920, %v2936
  %v2953 = vmax.f32 %v2921, %v2937
  %v2954 = vmax.f32 %v2922, %v2938
  %v2955 = vmax.f32 %v2923, %v2939
  %v2956 = vmax.f32 %v2924, %v2940
  %v2957 = vmax.f32 %v2925, %v2941
  %v2958 = vmax.f32 %v2926, %v2942
  %v2959 = vmax.f32 %v2927, %v2943
  %v2960 = vmax.f32 %v2928, %v2944
  %v2961 = vmax.f32 %v2929, %v2945
  %v2962 = vmax.f32 %v2930, %v2946
  %v2963 = vmax.f32 %v2931, %v2947
  %v2964 = vld [vmem:[#allocation2 + $0x280] sm:$0xff]
  %v2965 = vld [vmem:[#allocation2 + $0x288] sm:$0xff]
  %v2966 = vld [vmem:[#allocation2 + $0x290] sm:$0xff]
  %v2967 = vld [vmem:[#allocation2 + $0x298] sm:$0xff]
  %v2968 = vld [vmem:[#allocation2 + $0x2a0] sm:$0xff]
  %v2969 = vld [vmem:[#allocation2 + $0x2a8] sm:$0xff]
  %v2970 = vld [vmem:[#allocation2 + $0x2b0] sm:$0xff]
  %v2971 = vld [vmem:[#allocation2 + $0x2b8] sm:$0xff]
  %v2972 = vld [vmem:[#allocation2 + $0x2c0] sm:$0xff]
  %v2973 = vld [vmem:[#allocation2 + $0x2c8] sm:$0xff]
  %v2974 = vld [vmem:[#allocation2 + $0x2d0] sm:$0xff]
  %v2975 = vld [vmem:[#allocation2 + $0x2d8] sm:$0xff]
  %v2976 = vld [vmem:[#allocation2 + $0x2e0] sm:$0xff]
  %v2977 = vld [vmem:[#allocation2 + $0x2e8] sm:$0xff]
  %v2978 = vld [vmem:[#allocation2 + $0x2f0] sm:$0xff]
  %v2979 = vld [vmem:[#allocation2 + $0x2f8] sm:$0xff]
  %v2980 = vmax.f32 %v2948, %v2964
  %v2981 = vmax.f32 %v2949, %v2965
  %v2982 = vmax.f32 %v2950, %v2966
  %v2983 = vmax.f32 %v2951, %v2967
  %v2984 = vmax.f32 %v2952, %v2968
  %v2985 = vmax.f32 %v2953, %v2969
  %v2986 = vmax.f32 %v2954, %v2970
  %v2987 = vmax.f32 %v2955, %v2971
  %v2988 = vmax.f32 %v2956, %v2972
  %v2989 = vmax.f32 %v2957, %v2973
  %v2990 = vmax.f32 %v2958, %v2974
  %v2991 = vmax.f32 %v2959, %v2975
  %v2992 = vmax.f32 %v2960, %v2976
  %v2993 = vmax.f32 %v2961, %v2977
  %v2994 = vmax.f32 %v2962, %v2978
  %v2995 = vmax.f32 %v2963, %v2979
  %v2996 = vld [vmem:[#allocation2 + $0x300] sm:$0xff]
  %v2997 = vld [vmem:[#allocation2 + $0x308] sm:$0xff]
  %v2998 = vld [vmem:[#allocation2 + $0x310] sm:$0xff]
  %v2999 = vld [vmem:[#allocation2 + $0x318] sm:$0xff]
  %v3000 = vld [vmem:[#allocation2 + $0x320] sm:$0xff]
  %v3001 = vld [vmem:[#allocation2 + $0x328] sm:$0xff]
  %v3002 = vld [vmem:[#allocation2 + $0x330] sm:$0xff]
  %v3003 = vld [vmem:[#allocation2 + $0x338] sm:$0xff]
  %v3004 = vld [vmem:[#allocation2 + $0x340] sm:$0xff]
  %v3005 = vld [vmem:[#allocation2 + $0x348] sm:$0xff]
  %v3006 = vld [vmem:[#allocation2 + $0x350] sm:$0xff]
  %v3007 = vld [vmem:[#allocation2 + $0x358] sm:$0xff]
  %v3008 = vld [vmem:[#allocation2 + $0x360] sm:$0xff]
  %v3009 = vld [vmem:[#allocation2 + $0x368] sm:$0xff]
  %v3010 = vld [vmem:[#allocation2 + $0x370] sm:$0xff]
  %v3011 = vld [vmem:[#allocation2 + $0x378] sm:$0xff]
  %v3012 = vmax.f32 %v2980, %v2996
  %v3013 = vmax.f32 %v2981, %v2997
  %v3014 = vmax.f32 %v2982, %v2998
  %v3015 = vmax.f32 %v2983, %v2999
  %v3016 = vmax.f32 %v2984, %v3000
  %v3017 = vmax.f32 %v2985, %v3001
  %v3018 = vmax.f32 %v2986, %v3002
  %v3019 = vmax.f32 %v2987, %v3003
  %v3020 = vmax.f32 %v2988, %v3004
  %v3021 = vmax.f32 %v2989, %v3005
  %v3022 = vmax.f32 %v2990, %v3006
  %v3023 = vmax.f32 %v2991, %v3007
  %v3024 = vmax.f32 %v2992, %v3008
  %v3025 = vmax.f32 %v2993, %v3009
  %v3026 = vmax.f32 %v2994, %v3010
  %v3027 = vmax.f32 %v2995, %v3011
  %v3028 = vld [vmem:[#allocation2 + $0x380] sm:$0xff]
  %v3029 = vld [vmem:[#allocation2 + $0x388] sm:$0xff]
  %v3030 = vld [vmem:[#allocation2 + $0x390] sm:$0xff]
  %v3031 = vld [vmem:[#allocation2 + $0x398] sm:$0xff]
  %v3032 = vld [vmem:[#allocation2 + $0x3a0] sm:$0xff]
  %v3033 = vld [vmem:[#allocation2 + $0x3a8] sm:$0xff]
  %v3034 = vld [vmem:[#allocation2 + $0x3b0] sm:$0xff]
  %v3035 = vld [vmem:[#allocation2 + $0x3b8] sm:$0xff]
  %v3036 = vld [vmem:[#allocation2 + $0x3c0] sm:$0xff]
  %v3037 = vld [vmem:[#allocation2 + $0x3c8] sm:$0xff]
  %v3038 = vld [vmem:[#allocation2 + $0x3d0] sm:$0xff]
  %v3039 = vld [vmem:[#allocation2 + $0x3d8] sm:$0xff]
  %v3040 = vld [vmem:[#allocation2 + $0x3e0] sm:$0xff]
  %v3041 = vld [vmem:[#allocation2 + $0x3e8] sm:$0xff]
  %v3042 = vld [vmem:[#allocation2 + $0x3f0] sm:$0xff]
  %v3043 = vld [vmem:[#allocation2 + $0x3f8] sm:$0xff]
  %v3044 = vmax.f32 %v3012, %v3028
  %v3045 = vmax.f32 %v3013, %v3029
  %v3046 = vmax.f32 %v3014, %v3030
  %v3047 = vmax.f32 %v3015, %v3031
  %v3048 = vmax.f32 %v3016, %v3032
  %v3049 = vmax.f32 %v3017, %v3033
  %v3050 = vmax.f32 %v3018, %v3034
  %v3051 = vmax.f32 %v3019, %v3035
  %v3052 = vmax.f32 %v3020, %v3036
  %v3053 = vmax.f32 %v3021, %v3037
  %v3054 = vmax.f32 %v3022, %v3038
  %v3055 = vmax.f32 %v3023, %v3039
  %v3056 = vmax.f32 %v3024, %v3040
  %v3057 = vmax.f32 %v3025, %v3041
  %v3058 = vmax.f32 %v3026, %v3042
  %v3059 = vmax.f32 %v3027, %v3043
  %v3060 = vld [vmem:[#allocation2 + $0x400] sm:$0xff]
  %v3061 = vld [vmem:[#allocation2 + $0x408] sm:$0xff]
  %v3062 = vld [vmem:[#allocation2 + $0x410] sm:$0xff]
  %v3063 = vld [vmem:[#allocation2 + $0x418] sm:$0xff]
  %v3064 = vld [vmem:[#allocation2 + $0x420] sm:$0xff]
  %v3065 = vld [vmem:[#allocation2 + $0x428] sm:$0xff]
  %v3066 = vld [vmem:[#allocation2 + $0x430] sm:$0xff]
  %v3067 = vld [vmem:[#allocation2 + $0x438] sm:$0xff]
  %v3068 = vld [vmem:[#allocation2 + $0x440] sm:$0xff]
  %v3069 = vld [vmem:[#allocation2 + $0x448] sm:$0xff]
  %v3070 = vld [vmem:[#allocation2 + $0x450] sm:$0xff]
  %v3071 = vld [vmem:[#allocation2 + $0x458] sm:$0xff]
  %v3072 = vld [vmem:[#allocation2 + $0x460] sm:$0xff]
  %v3073 = vld [vmem:[#allocation2 + $0x468] sm:$0xff]
  %v3074 = vld [vmem:[#allocation2 + $0x470] sm:$0xff]
  %v3075 = vld [vmem:[#allocation2 + $0x478] sm:$0xff]
  %v3076 = vmax.f32 %v3044, %v3060
  %v3077 = vmax.f32 %v3045, %v3061
  %v3078 = vmax.f32 %v3046, %v3062
  %v3079 = vmax.f32 %v3047, %v3063
  %v3080 = vmax.f32 %v3048, %v3064
  %v3081 = vmax.f32 %v3049, %v3065
  %v3082 = vmax.f32 %v3050, %v3066
  %v3083 = vmax.f32 %v3051, %v3067
  %v3084 = vmax.f32 %v3052, %v3068
  %v3085 = vmax.f32 %v3053, %v3069
  %v3086 = vmax.f32 %v3054, %v3070
  %v3087 = vmax.f32 %v3055, %v3071
  %v3088 = vmax.f32 %v3056, %v3072
  %v3089 = vmax.f32 %v3057, %v3073
  %v3090 = vmax.f32 %v3058, %v3074
  %v3091 = vmax.f32 %v3059, %v3075
  %v3092 = vld [vmem:[#allocation2 + $0x480] sm:$0xff]
  %v3093 = vld [vmem:[#allocation2 + $0x488] sm:$0xff]
  %v3094 = vld [vmem:[#allocation2 + $0x490] sm:$0xff]
  %v3095 = vld [vmem:[#allocation2 + $0x498] sm:$0xff]
  %v3096 = vld [vmem:[#allocation2 + $0x4a0] sm:$0xff]
  %v3097 = vld [vmem:[#allocation2 + $0x4a8] sm:$0xff]
  %v3098 = vld [vmem:[#allocation2 + $0x4b0] sm:$0xff]
  %v3099 = vld [vmem:[#allocation2 + $0x4b8] sm:$0xff]
  %v3100 = vld [vmem:[#allocation2 + $0x4c0] sm:$0xff]
  %v3101 = vld [vmem:[#allocation2 + $0x4c8] sm:$0xff]
  %v3102 = vld [vmem:[#allocation2 + $0x4d0] sm:$0xff]
  %v3103 = vld [vmem:[#allocation2 + $0x4d8] sm:$0xff]
  %v3104 = vld [vmem:[#allocation2 + $0x4e0] sm:$0xff]
  %v3105 = vld [vmem:[#allocation2 + $0x4e8] sm:$0xff]
  %v3106 = vld [vmem:[#allocation2 + $0x4f0] sm:$0xff]
  %v3107 = vld [vmem:[#allocation2 + $0x4f8] sm:$0xff]
  %v3108 = vmax.f32 %v3076, %v3092
  %v3109 = vmax.f32 %v3077, %v3093
  %v3110 = vmax.f32 %v3078, %v3094
  %v3111 = vmax.f32 %v3079, %v3095
  %v3112 = vmax.f32 %v3080, %v3096
  %v3113 = vmax.f32 %v3081, %v3097
  %v3114 = vmax.f32 %v3082, %v3098
  %v3115 = vmax.f32 %v3083, %v3099
  %v3116 = vmax.f32 %v3084, %v3100
  %v3117 = vmax.f32 %v3085, %v3101
  %v3118 = vmax.f32 %v3086, %v3102
  %v3119 = vmax.f32 %v3087, %v3103
  %v3120 = vmax.f32 %v3088, %v3104
  %v3121 = vmax.f32 %v3089, %v3105
  %v3122 = vmax.f32 %v3090, %v3106
  %v3123 = vmax.f32 %v3091, %v3107
  %v3124 = vld [vmem:[#allocation2 + $0x500] sm:$0xff]
  %v3125 = vld [vmem:[#allocation2 + $0x508] sm:$0xff]
  %v3126 = vld [vmem:[#allocation2 + $0x510] sm:$0xff]
  %v3127 = vld [vmem:[#allocation2 + $0x518] sm:$0xff]
  %v3128 = vld [vmem:[#allocation2 + $0x520] sm:$0xff]
  %v3129 = vld [vmem:[#allocation2 + $0x528] sm:$0xff]
  %v3130 = vld [vmem:[#allocation2 + $0x530] sm:$0xff]
  %v3131 = vld [vmem:[#allocation2 + $0x538] sm:$0xff]
  %v3132 = vld [vmem:[#allocation2 + $0x540] sm:$0xff]
  %v3133 = vld [vmem:[#allocation2 + $0x548] sm:$0xff]
  %v3134 = vld [vmem:[#allocation2 + $0x550] sm:$0xff]
  %v3135 = vld [vmem:[#allocation2 + $0x558] sm:$0xff]
  %v3136 = vld [vmem:[#allocation2 + $0x560] sm:$0xff]
  %v3137 = vld [vmem:[#allocation2 + $0x568] sm:$0xff]
  %v3138 = vld [vmem:[#allocation2 + $0x570] sm:$0xff]
  %v3139 = vld [vmem:[#allocation2 + $0x578] sm:$0xff]
  %v3140 = vmax.f32 %v3108, %v3124
  %v3141 = vmax.f32 %v3109, %v3125
  %v3142 = vmax.f32 %v3110, %v3126
  %v3143 = vmax.f32 %v3111, %v3127
  %v3144 = vmax.f32 %v3112, %v3128
  %v3145 = vmax.f32 %v3113, %v3129
  %v3146 = vmax.f32 %v3114, %v3130
  %v3147 = vmax.f32 %v3115, %v3131
  %v3148 = vmax.f32 %v3116, %v3132
  %v3149 = vmax.f32 %v3117, %v3133
  %v3150 = vmax.f32 %v3118, %v3134
  %v3151 = vmax.f32 %v3119, %v3135
  %v3152 = vmax.f32 %v3120, %v3136
  %v3153 = vmax.f32 %v3121, %v3137
  %v3154 = vmax.f32 %v3122, %v3138
  %v3155 = vmax.f32 %v3123, %v3139
  %v3156 = vld [vmem:[#allocation2 + $0x580] sm:$0xff]
  %v3157 = vld [vmem:[#allocation2 + $0x588] sm:$0xff]
  %v3158 = vld [vmem:[#allocation2 + $0x590] sm:$0xff]
  %v3159 = vld [vmem:[#allocation2 + $0x598] sm:$0xff]
  %v3160 = vld [vmem:[#allocation2 + $0x5a0] sm:$0xff]
  %v3161 = vld [vmem:[#allocation2 + $0x5a8] sm:$0xff]
  %v3162 = vld [vmem:[#allocation2 + $0x5b0] sm:$0xff]
  %v3163 = vld [vmem:[#allocation2 + $0x5b8] sm:$0xff]
  %v3164 = vld [vmem:[#allocation2 + $0x5c0] sm:$0xff]
  %v3165 = vld [vmem:[#allocation2 + $0x5c8] sm:$0xff]
  %v3166 = vld [vmem:[#allocation2 + $0x5d0] sm:$0xff]
  %v3167 = vld [vmem:[#allocation2 + $0x5d8] sm:$0xff]
  %v3168 = vld [vmem:[#allocation2 + $0x5e0] sm:$0xff]
  %v3169 = vld [vmem:[#allocation2 + $0x5e8] sm:$0xff]
  %v3170 = vld [vmem:[#allocation2 + $0x5f0] sm:$0xff]
  %v3171 = vld [vmem:[#allocation2 + $0x5f8] sm:$0xff]
  %v3172 = vmax.f32 %v3140, %v3156
  %v3173 = vmax.f32 %v3141, %v3157
  %v3174 = vmax.f32 %v3142, %v3158
  %v3175 = vmax.f32 %v3143, %v3159
  %v3176 = vmax.f32 %v3144, %v3160
  %v3177 = vmax.f32 %v3145, %v3161
  %v3178 = vmax.f32 %v3146, %v3162
  %v3179 = vmax.f32 %v3147, %v3163
  %v3180 = vmax.f32 %v3148, %v3164
  %v3181 = vmax.f32 %v3149, %v3165
  %v3182 = vmax.f32 %v3150, %v3166
  %v3183 = vmax.f32 %v3151, %v3167
  %v3184 = vmax.f32 %v3152, %v3168
  %v3185 = vmax.f32 %v3153, %v3169
  %v3186 = vmax.f32 %v3154, %v3170
  %v3187 = vmax.f32 %v3155, %v3171
  %v3188 = vld [vmem:[#allocation2 + $0x600] sm:$0xff]
  %v3189 = vld [vmem:[#allocation2 + $0x608] sm:$0xff]
  %v3190 = vld [vmem:[#allocation2 + $0x610] sm:$0xff]
  %v3191 = vld [vmem:[#allocation2 + $0x618] sm:$0xff]
  %v3192 = vld [vmem:[#allocation2 + $0x620] sm:$0xff]
  %v3193 = vld [vmem:[#allocation2 + $0x628] sm:$0xff]
  %v3194 = vld [vmem:[#allocation2 + $0x630] sm:$0xff]
  %v3195 = vld [vmem:[#allocation2 + $0x638] sm:$0xff]
  %v3196 = vld [vmem:[#allocation2 + $0x640] sm:$0xff]
  %v3197 = vld [vmem:[#allocation2 + $0x648] sm:$0xff]
  %v3198 = vld [vmem:[#allocation2 + $0x650] sm:$0xff]
  %v3199 = vld [vmem:[#allocation2 + $0x658] sm:$0xff]
  %v3200 = vld [vmem:[#allocation2 + $0x660] sm:$0xff]
  %v3201 = vld [vmem:[#allocation2 + $0x668] sm:$0xff]
  %v3202 = vld [vmem:[#allocation2 + $0x670] sm:$0xff]
  %v3203 = vld [vmem:[#allocation2 + $0x678] sm:$0xff]
  %v3204 = vmax.f32 %v3172, %v3188
  %v3205 = vmax.f32 %v3173, %v3189
  %v3206 = vmax.f32 %v3174, %v3190
  %v3207 = vmax.f32 %v3175, %v3191
  %v3208 = vmax.f32 %v3176, %v3192
  %v3209 = vmax.f32 %v3177, %v3193
  %v3210 = vmax.f32 %v3178, %v3194
  %v3211 = vmax.f32 %v3179, %v3195
  %v3212 = vmax.f32 %v3180, %v3196
  %v3213 = vmax.f32 %v3181, %v3197
  %v3214 = vmax.f32 %v3182, %v3198
  %v3215 = vmax.f32 %v3183, %v3199
  %v3216 = vmax.f32 %v3184, %v3200
  %v3217 = vmax.f32 %v3185, %v3201
  %v3218 = vmax.f32 %v3186, %v3202
  %v3219 = vmax.f32 %v3187, %v3203
  %v3220 = vld [vmem:[#allocation2 + $0x680] sm:$0xff]
  %v3221 = vld [vmem:[#allocation2 + $0x688] sm:$0xff]
  %v3222 = vld [vmem:[#allocation2 + $0x690] sm:$0xff]
  %v3223 = vld [vmem:[#allocation2 + $0x698] sm:$0xff]
  %v3224 = vld [vmem:[#allocation2 + $0x6a0] sm:$0xff]
  %v3225 = vld [vmem:[#allocation2 + $0x6a8] sm:$0xff]
  %v3226 = vld [vmem:[#allocation2 + $0x6b0] sm:$0xff]
  %v3227 = vld [vmem:[#allocation2 + $0x6b8] sm:$0xff]
  %v3228 = vld [vmem:[#allocation2 + $0x6c0] sm:$0xff]
  %v3229 = vld [vmem:[#allocation2 + $0x6c8] sm:$0xff]
  %v3230 = vld [vmem:[#allocation2 + $0x6d0] sm:$0xff]
  %v3231 = vld [vmem:[#allocation2 + $0x6d8] sm:$0xff]
  %v3232 = vld [vmem:[#allocation2 + $0x6e0] sm:$0xff]
  %v3233 = vld [vmem:[#allocation2 + $0x6e8] sm:$0xff]
  %v3234 = vld [vmem:[#allocation2 + $0x6f0] sm:$0xff]
  %v3235 = vld [vmem:[#allocation2 + $0x6f8] sm:$0xff]
  %v3236 = vmax.f32 %v3204, %v3220
  %v3237 = vmax.f32 %v3205, %v3221
  %v3238 = vmax.f32 %v3206, %v3222
  %v3239 = vmax.f32 %v3207, %v3223
  %v3240 = vmax.f32 %v3208, %v3224
  %v3241 = vmax.f32 %v3209, %v3225
  %v3242 = vmax.f32 %v3210, %v3226
  %v3243 = vmax.f32 %v3211, %v3227
  %v3244 = vmax.f32 %v3212, %v3228
  %v3245 = vmax.f32 %v3213, %v3229
  %v3246 = vmax.f32 %v3214, %v3230
  %v3247 = vmax.f32 %v3215, %v3231
  %v3248 = vmax.f32 %v3216, %v3232
  %v3249 = vmax.f32 %v3217, %v3233
  %v3250 = vmax.f32 %v3218, %v3234
  %v3251 = vmax.f32 %v3219, %v3235
  %v3252 = vld [vmem:[#allocation2 + $0x700] sm:$0xff]
  %v3253 = vld [vmem:[#allocation2 + $0x708] sm:$0xff]
  %v3254 = vld [vmem:[#allocation2 + $0x710] sm:$0xff]
  %v3255 = vld [vmem:[#allocation2 + $0x718] sm:$0xff]
  %v3256 = vld [vmem:[#allocation2 + $0x720] sm:$0xff]
  %v3257 = vld [vmem:[#allocation2 + $0x728] sm:$0xff]
  %v3258 = vld [vmem:[#allocation2 + $0x730] sm:$0xff]
  %v3259 = vld [vmem:[#allocation2 + $0x738] sm:$0xff]
  %v3260 = vld [vmem:[#allocation2 + $0x740] sm:$0xff]
  %v3261 = vld [vmem:[#allocation2 + $0x748] sm:$0xff]
  %v3262 = vld [vmem:[#allocation2 + $0x750] sm:$0xff]
  %v3263 = vld [vmem:[#allocation2 + $0x758] sm:$0xff]
  %v3264 = vld [vmem:[#allocation2 + $0x760] sm:$0xff]
  %v3265 = vld [vmem:[#allocation2 + $0x768] sm:$0xff]
  %v3266 = vld [vmem:[#allocation2 + $0x770] sm:$0xff]
  %v3267 = vld [vmem:[#allocation2 + $0x778] sm:$0xff]
  %v3268 = vmax.f32 %v3236, %v3252
  %v3269 = vmax.f32 %v3237, %v3253
  %v3270 = vmax.f32 %v3238, %v3254
  %v3271 = vmax.f32 %v3239, %v3255
  %v3272 = vmax.f32 %v3240, %v3256
  %v3273 = vmax.f32 %v3241, %v3257
  %v3274 = vmax.f32 %v3242, %v3258
  %v3275 = vmax.f32 %v3243, %v3259
  %v3276 = vmax.f32 %v3244, %v3260
  %v3277 = vmax.f32 %v3245, %v3261
  %v3278 = vmax.f32 %v3246, %v3262
  %v3279 = vmax.f32 %v3247, %v3263
  %v3280 = vmax.f32 %v3248, %v3264
  %v3281 = vmax.f32 %v3249, %v3265
  %v3282 = vmax.f32 %v3250, %v3266
  %v3283 = vmax.f32 %v3251, %v3267
  %v3284 = vld [vmem:[#allocation2 + $0x780] sm:$0xff]
  %v3285 = vld [vmem:[#allocation2 + $0x788] sm:$0xff]
  %v3286 = vld [vmem:[#allocation2 + $0x790] sm:$0xff]
  %v3287 = vld [vmem:[#allocation2 + $0x798] sm:$0xff]
  %v3288 = vld [vmem:[#allocation2 + $0x7a0] sm:$0xff]
  %v3289 = vld [vmem:[#allocation2 + $0x7a8] sm:$0xff]
  %v3290 = vld [vmem:[#allocation2 + $0x7b0] sm:$0xff]
  %v3291 = vld [vmem:[#allocation2 + $0x7b8] sm:$0xff]
  %v3292 = vld [vmem:[#allocation2 + $0x7c0] sm:$0xff]
  %v3293 = vld [vmem:[#allocation2 + $0x7c8] sm:$0xff]
  %v3294 = vld [vmem:[#allocation2 + $0x7d0] sm:$0xff]
  %v3295 = vld [vmem:[#allocation2 + $0x7d8] sm:$0xff]
  %v3296 = vld [vmem:[#allocation2 + $0x7e0] sm:$0xff]
  %v3297 = vld [vmem:[#allocation2 + $0x7e8] sm:$0xff]
  %v3298 = vld [vmem:[#allocation2 + $0x7f0] sm:$0xff]
  %v3299 = vld [vmem:[#allocation2 + $0x7f8] sm:$0xff]
  %v3300 = vmax.f32 %v3268, %v3284
  %v3301 = vmax.f32 %v3269, %v3285
  %v3302 = vmax.f32 %v3270, %v3286
  %v3303 = vmax.f32 %v3271, %v3287
  %v3304 = vmax.f32 %v3272, %v3288
  %v3305 = vmax.f32 %v3273, %v3289
  %v3306 = vmax.f32 %v3274, %v3290
  %v3307 = vmax.f32 %v3275, %v3291
  %v3308 = vmax.f32 %v3276, %v3292
  %v3309 = vmax.f32 %v3277, %v3293
  %v3310 = vmax.f32 %v3278, %v3294
  %v3311 = vmax.f32 %v3279, %v3295
  %v3312 = vmax.f32 %v3280, %v3296
  %v3313 = vmax.f32 %v3281, %v3297
  %v3314 = vmax.f32 %v3282, %v3298
  %v3315 = vmax.f32 %v3283, %v3299
  %v3316 = vadd.f32 %v3300, %v2804
  %v3317 = vadd.f32 %v3301, %v2805
  %v3318 = vadd.f32 %v3302, %v2806
  %v3319 = vadd.f32 %v3303, %v2807
  %v3320 = vadd.f32 %v3304, %v2808
  %v3321 = vadd.f32 %v3305, %v2809
  %v3322 = vadd.f32 %v3306, %v2810
  %v3323 = vadd.f32 %v3307, %v2811
  %v3324 = vadd.f32 %v3308, %v2812
  %v3325 = vadd.f32 %v3309, %v2813
  %v3326 = vadd.f32 %v3310, %v2814
  %v3327 = vadd.f32 %v3311, %v2815
  %v3328 = vadd.f32 %v3312, %v2816
  %v3329 = vadd.f32 %v3313, %v2817
  %v3330 = vadd.f32 %v3314, %v2818
  %v3331 = vadd.f32 %v3315, %v2819
  %v3332 = vmax.f32 %v3316, 0.0
  %v3333 = vmax.f32 %v3317, 0.0
  %v3334 = vmax.f32 %v3318, 0.0
  %v3335 = vmax.f32 %v3319, 0.0
  %v3336 = vmax.f32 %v3320, 0.0
  %v3337 = vmax.f32 %v3321, 0.0
  %v3338 = vmax.f32 %v3322, 0.0
  %v3339 = vmax.f32 %v3323, 0.0
  %v3340 = vmax.f32 %v3324, 0.0
  %v3341 = vmax.f32 %v3325, 0.0
  %v3342 = vmax.f32 %v3326, 0.0
  %v3343 = vmax.f32 %v3327, 0.0
  %v3344 = vmax.f32 %v3328, 0.0
  %v3345 = vmax.f32 %v3329, 0.0
  %v3346 = vmax.f32 %v3330, 0.0
  %v3347 = vmax.f32 %v3331, 0.0
  %v3348 = vpack.c.bf16 %v3333, %v3332
  %v3349 = vpack.c.bf16 %v3335, %v3334
  %v3350 = vpack.c.bf16 %v3337, %v3336
  %v3351 = vpack.c.bf16 %v3339, %v3338
  %v3352 = vpack.c.bf16 %v3341, %v3340
  %v3353 = vpack.c.bf16 %v3343, %v3342
  %v3354 = vpack.c.bf16 %v3345, %v3344
  %v3355 = vpack.c.bf16 %v3347, %v3346
  %v3364 = vunpack.c.l.b16 %v3348
  %v3365 = vunpack.c.h.b16 %v3348
  %v3366 = vunpack.c.l.b16 %v3349
  %v3367 = vunpack.c.h.b16 %v3349
  %v3368 = vunpack.c.l.b16 %v3350
  %v3369 = vunpack.c.h.b16 %v3350
  %v3370 = vunpack.c.l.b16 %v3351
  %v3371 = vunpack.c.h.b16 %v3351
  %v3372 = vunpack.c.l.b16 %v3352
  %v3373 = vunpack.c.h.b16 %v3352
  %v3374 = vunpack.c.l.b16 %v3353
  %v3375 = vunpack.c.h.b16 %v3353
  %v3376 = vunpack.c.l.b16 %v3354
  %v3377 = vunpack.c.h.b16 %v3354
  %v3378 = vunpack.c.l.b16 %v3355
  %v3379 = vunpack.c.h.b16 %v3355
  %v3380 = vpack.c.b16 %v3364, %v3364
  %v3381 = vpack.c.b16 %v3365, %v3365
  %v3382 = vpack.c.b16 %v3366, %v3366
  %v3383 = vpack.c.b16 %v3367, %v3367
  %v3384 = vpack.c.b16 %v3368, %v3368
  %v3385 = vpack.c.b16 %v3369, %v3369
  %v3386 = vpack.c.b16 %v3370, %v3370
  %v3387 = vpack.c.b16 %v3371, %v3371
  %v3388 = vpack.c.b16 %v3372, %v3372
  %v3389 = vpack.c.b16 %v3373, %v3373
  %v3390 = vpack.c.b16 %v3374, %v3374
  %v3391 = vpack.c.b16 %v3375, %v3375
  %v3392 = vpack.c.b16 %v3376, %v3376
  %v3393 = vpack.c.b16 %v3377, %v3377
  %v3394 = vpack.c.b16 %v3378, %v3378
  %v3395 = vpack.c.b16 %v3379, %v3379
  %vm3412 = vcmask 125952
  %3413 = vst.msk [vmem:[%s4] sm:$0xf] %vm3412, %v3380
  %3414 = vst.msk [vmem:[%s4 + $0x4] sm:$0xf] %vm3412, %v3381
  %3415 = vst.msk [vmem:[%s4 + $0x8] sm:$0xf] %vm3412, %v3382
  %3416 = vst.msk [vmem:[%s4 + $0xc] sm:$0xf] %vm3412, %v3383
  %3417 = vst.msk [vmem:[%s4 + $0x10] sm:$0xf] %vm3412, %v3384
  %3418 = vst.msk [vmem:[%s4 + $0x14] sm:$0xf] %vm3412, %v3385
  %3419 = vst.msk [vmem:[%s4 + $0x18] sm:$0xf] %vm3412, %v3386
  %3420 = vst.msk [vmem:[%s4 + $0x1c] sm:$0xf] %vm3412, %v3387
  %3421 = vst.msk [vmem:[%s4 + $0x20] sm:$0xf] %vm3412, %v3388
  %3422 = vst.msk [vmem:[%s4 + $0x24] sm:$0xf] %vm3412, %v3389
  %3423 = vst.msk [vmem:[%s4 + $0x28] sm:$0xf] %vm3412, %v3390
  %3424 = vst.msk [vmem:[%s4 + $0x2c] sm:$0xf] %vm3412, %v3391
  %3425 = vst.msk [vmem:[%s4 + $0x30] sm:$0xf] %vm3412, %v3392
  %3426 = vst.msk [vmem:[%s4 + $0x34] sm:$0xf] %vm3412, %v3393
  %3427 = vst.msk [vmem:[%s4 + $0x38] sm:$0xf] %vm3412, %v3394
  %3428 = vst.msk [vmem:[%s4 + $0x3c] sm:$0xf] %vm3412, %v3395
  // Predicated region
  $region18: #{point_transformer_cls_forward.4} parent=0 // pred_check
    _
  $region19: #{point_transformer_cls_forward.4} parent=0 // pred_check_branch
    %3430 = sbr.rel (0) target = $region21
  $region20: #{point_transformer_cls_forward.4} parent=0 // pred_region
    _
  $region21: #{point_transformer_cls_forward.4} parent=0 // pred_fallthru
    _
  // Predicated region
  $region22: #{point_transformer_cls_forward.4} parent=0 // pred_check
    _
  $region23: #{point_transformer_cls_forward.4} parent=0 // pred_check_branch
    %3432 = sbr.rel (0) target = $region25
  $region24: #{point_transformer_cls_forward.4} parent=0 // pred_region
    _
  $region25: #{point_transformer_cls_forward.4} parent=0 // pred_fallthru
    _

// kernel: custom-call.34
$region0: #{custom-call.34}
  %s0 = inlined_call_operand.vmem [shape: f32[2,32], index: 0, kind: output, shape index: {}]

// kernel: neg.2
$region0: #{neg.2}
  #allocation0 [shape = 's32[1]{0}', space=sflag, size = 0x4, scoped, tag = 'scoped memory for neg.2']
  %s0 = inlined_call_operand.vmem [shape: f32[32,32], index: 0, kind: input, shape index: {}]
  %s1 = inlined_call_operand.vmem [shape: f32[32,32], index: 1, kind: output, shape index: {}]
  %v2 = vld [vmem:[%s0] sm:$0xff]
  %3 = xla_tuple %v2
  %4 = xla_tuple %3
  %v5 = vxor.u32 %v2, 2147483648
  %6 = xla_tuple %v5
  %7 = vst [vmem:[%s1] sm:$0xff] %v5
  %s8 = scalar_lea.vmem %s0, 8
  %v9 = vld [vmem:[%s8] sm:$0xff]
  %10 = xla_tuple %v9
  %11 = xla_tuple %10
  %v12 = vxor.u32 %v9, 2147483648
  %13 = xla_tuple %v12
  %s14 = scalar_lea.vmem %s1, 8
  %15 = vst [vmem:[%s14] sm:$0xff] %v12
  %s16 = scalar_lea.vmem %s0, 16
  %v17 = vld [vmem:[%s16] sm:$0xff]
  %18 = xla_tuple %v17
  %19 = xla_tuple %18
  %v20 = vxor.u32 %v17, 2147483648
  %21 = xla_tuple %v20
  %s22 = scalar_lea.vmem %s1, 16
  %23 = vst [vmem:[%s22] sm:$0xff] %v20
  %s24 = scalar_lea.vmem %s0, 24
  %v25 = vld [vmem:[%s24] sm:$0xff]
  %26 = xla_tuple %v25
  %27 = xla_tuple %26
  %v28 = vxor.u32 %v25, 2147483648
  %29 = xla_tuple %v28
  %s30 = scalar_lea.vmem %s1, 24
  %31 = vst [vmem:[%s30] sm:$0xff] %v28

// kernel: point_transformer_cls_forward.5
$region0: #{point_transformer_cls_forward.5}
  #allocation0 [shape = 'u32[]', space=smem, size = 0x4, offset = 0x4, fixed_abs, tag = 'smem constant byte address 0x4 - core index']
  #allocation1 [shape = 'u32[144,128]{1,0:T(1,128)}', space=vmem, size = 0x12000, scoped, tag = 'internal scratch']
  #allocation2 [shape = 'f32[1024,32]{1,0:T(8,128)}', space=vmem, size = 0x80000, scoped, tag = 'scratch operand']
  %s0 = inlined_call_operand.vmem [shape: bf16[1024,32], index: 0, kind: input, shape index: {}]
  %s1 = inlined_call_operand.vmem [shape: bf16[64,32], index: 1, kind: input, shape index: {}]
  %s2 = inlined_call_operand.vmem [shape: bf16[32,32], index: 2, kind: input, shape index: {}]
  %s3 = inlined_call_operand.vmem [shape: f32[1,32], index: 3, kind: input, shape index: {}]
  %s4 = inlined_call_operand.vmem [shape: bf16[64,32], index: 4, kind: output, shape index: {}]
  %s5 = sld [smem:[#allocation0]]
  $region26: #{point_transformer_cls_forward.5} parent=0
    _
  %s7 = ssub.s32 1, %s5
  %s8 = scalar_select 0, %s7, %s5
  // Predicated region
  $region2: #{point_transformer_cls_forward.5} parent=0 // pred_check
    _
  $region3: #{point_transformer_cls_forward.5} parent=0 // pred_check_branch
    %10 = sbr.rel (0) target = $region5
  $region4: #{point_transformer_cls_forward.5} parent=0 // pred_region
    _
  $region5: #{point_transformer_cls_forward.5} parent=0 // pred_fallthru
    _
  // Predicated region
  $region6: #{point_transformer_cls_forward.5} parent=0 // pred_check
    _
  $region7: #{point_transformer_cls_forward.5} parent=0 // pred_check_branch
    %12 = sbr.rel (0) target = $region9
  $region8: #{point_transformer_cls_forward.5} parent=0 // pred_region
    _
  $region9: #{point_transformer_cls_forward.5} parent=0 // pred_fallthru
    _
  // Predicated region
  $region10: #{point_transformer_cls_forward.5} parent=0 // pred_check
    _
  $region11: #{point_transformer_cls_forward.5} parent=0 // pred_check_branch
    %14 = sbr.rel (0) target = $region13
  $region12: #{point_transformer_cls_forward.5} parent=0 // pred_region
    _
  $region13: #{point_transformer_cls_forward.5} parent=0 // pred_fallthru
    _
  // Predicated region
  $region14: #{point_transformer_cls_forward.5} parent=0 // pred_check
    _
  $region15: #{point_transformer_cls_forward.5} parent=0 // pred_check_branch
    %16 = sbr.rel (0) target = $region17
  $region16: #{point_transformer_cls_forward.5} parent=0 // pred_region
    _
  $region17: #{point_transformer_cls_forward.5} parent=0 // pred_fallthru
    _
  %v18 = vld [vmem:[%s2] sm:$0xf]
  %v19 = vld [vmem:[%s2 + $0x4] sm:$0xf]
  %v20 = vld [vmem:[%s2 + $0x8] sm:$0xf]
  %v21 = vld [vmem:[%s2 + $0xc] sm:$0xf]
  %v22 = vld [vmem:[%s0] sm:$0xf]
  %v23 = vld [vmem:[%s0 + $0x4] sm:$0xf]
  %v24 = vld [vmem:[%s0 + $0x8] sm:$0xf]
  %v25 = vld [vmem:[%s0 + $0xc] sm:$0xf]
  %v26 = vld [vmem:[%s0 + $0x10] sm:$0xf]
  %v27 = vld [vmem:[%s0 + $0x14] sm:$0xf]
  %v28 = vld [vmem:[%s0 + $0x18] sm:$0xf]
  %v29 = vld [vmem:[%s0 + $0x1c] sm:$0xf]
  %v30 = vld [vmem:[%s0 + $0x20] sm:$0xf]
  %v31 = vld [vmem:[%s0 + $0x24] sm:$0xf]
  %v32 = vld [vmem:[%s0 + $0x28] sm:$0xf]
  %v33 = vld [vmem:[%s0 + $0x2c] sm:$0xf]
  %v34 = vld [vmem:[%s0 + $0x30] sm:$0xf]
  %v35 = vld [vmem:[%s0 + $0x34] sm:$0xf]
  %v36 = vld [vmem:[%s0 + $0x38] sm:$0xf]
  %v37 = vld [vmem:[%s0 + $0x3c] sm:$0xf]
  %v38 = vld [vmem:[%s0 + $0x40] sm:$0xf]
  %v39 = vld [vmem:[%s0 + $0x44] sm:$0xf]
  %v40 = vld [vmem:[%s0 + $0x48] sm:$0xf]
  %v41 = vld [vmem:[%s0 + $0x4c] sm:$0xf]
  %v42 = vld [vmem:[%s0 + $0x50] sm:$0xf]
  %v43 = vld [vmem:[%s0 + $0x54] sm:$0xf]
  %v44 = vld [vmem:[%s0 + $0x58] sm:$0xf]
  %v45 = vld [vmem:[%s0 + $0x5c] sm:$0xf]
  %v46 = vld [vmem:[%s0 + $0x60] sm:$0xf]
  %v47 = vld [vmem:[%s0 + $0x64] sm:$0xf]
  %v48 = vld [vmem:[%s0 + $0x68] sm:$0xf]
  %v49 = vld [vmem:[%s0 + $0x6c] sm:$0xf]
  %v50 = vld [vmem:[%s0 + $0x70] sm:$0xf]
  %v51 = vld [vmem:[%s0 + $0x74] sm:$0xf]
  %v52 = vld [vmem:[%s0 + $0x78] sm:$0xf]
  %v53 = vld [vmem:[%s0 + $0x7c] sm:$0xf]
  %v54 = vld [vmem:[%s0 + $0x80] sm:$0xf]
  %v55 = vld [vmem:[%s0 + $0x84] sm:$0xf]
  %v56 = vld [vmem:[%s0 + $0x88] sm:$0xf]
  %v57 = vld [vmem:[%s0 + $0x8c] sm:$0xf]
  %v58 = vld [vmem:[%s0 + $0x90] sm:$0xf]
  %v59 = vld [vmem:[%s0 + $0x94] sm:$0xf]
  %v60 = vld [vmem:[%s0 + $0x98] sm:$0xf]
  %v61 = vld [vmem:[%s0 + $0x9c] sm:$0xf]
  %v62 = vld [vmem:[%s0 + $0xa0] sm:$0xf]
  %v63 = vld [vmem:[%s0 + $0xa4] sm:$0xf]
  %v64 = vld [vmem:[%s0 + $0xa8] sm:$0xf]
  %v65 = vld [vmem:[%s0 + $0xac] sm:$0xf]
  %v66 = vld [vmem:[%s0 + $0xb0] sm:$0xf]
  %v67 = vld [vmem:[%s0 + $0xb4] sm:$0xf]
  %v68 = vld [vmem:[%s0 + $0xb8] sm:$0xf]
  %v69 = vld [vmem:[%s0 + $0xbc] sm:$0xf]
  %v70 = vld [vmem:[%s0 + $0xc0] sm:$0xf]
  %v71 = vld [vmem:[%s0 + $0xc4] sm:$0xf]
  %v72 = vld [vmem:[%s0 + $0xc8] sm:$0xf]
  %v73 = vld [vmem:[%s0 + $0xcc] sm:$0xf]
  %v74 = vld [vmem:[%s0 + $0xd0] sm:$0xf]
  %v75 = vld [vmem:[%s0 + $0xd4] sm:$0xf]
  %v76 = vld [vmem:[%s0 + $0xd8] sm:$0xf]
  %v77 = vld [vmem:[%s0 + $0xdc] sm:$0xf]
  %v78 = vld [vmem:[%s0 + $0xe0] sm:$0xf]
  %v79 = vld [vmem:[%s0 + $0xe4] sm:$0xf]
  %v80 = vld [vmem:[%s0 + $0xe8] sm:$0xf]
  %v81 = vld [vmem:[%s0 + $0xec] sm:$0xf]
  %v82 = vld [vmem:[%s0 + $0xf0] sm:$0xf]
  %v83 = vld [vmem:[%s0 + $0xf4] sm:$0xf]
  %v84 = vld [vmem:[%s0 + $0xf8] sm:$0xf]
  %v85 = vld [vmem:[%s0 + $0xfc] sm:$0xf]
  %v86 = vld [vmem:[%s0 + $0x100] sm:$0xf]
  %v87 = vld [vmem:[%s0 + $0x104] sm:$0xf]
  %v88 = vld [vmem:[%s0 + $0x108] sm:$0xf]
  %v89 = vld [vmem:[%s0 + $0x10c] sm:$0xf]
  %v90 = vld [vmem:[%s0 + $0x110] sm:$0xf]
  %v91 = vld [vmem:[%s0 + $0x114] sm:$0xf]
  %v92 = vld [vmem:[%s0 + $0x118] sm:$0xf]
  %v93 = vld [vmem:[%s0 + $0x11c] sm:$0xf]
  %v94 = vld [vmem:[%s0 + $0x120] sm:$0xf]
  %v95 = vld [vmem:[%s0 + $0x124] sm:$0xf]
  %v96 = vld [vmem:[%s0 + $0x128] sm:$0xf]
  %v97 = vld [vmem:[%s0 + $0x12c] sm:$0xf]
  %v98 = vld [vmem:[%s0 + $0x130] sm:$0xf]
  %v99 = vld [vmem:[%s0 + $0x134] sm:$0xf]
  %v100 = vld [vmem:[%s0 + $0x138] sm:$0xf]
  %v101 = vld [vmem:[%s0 + $0x13c] sm:$0xf]
  %v102 = vld [vmem:[%s0 + $0x140] sm:$0xf]
  %v103 = vld [vmem:[%s0 + $0x144] sm:$0xf]
  %v104 = vld [vmem:[%s0 + $0x148] sm:$0xf]
  %v105 = vld [vmem:[%s0 + $0x14c] sm:$0xf]
  %v106 = vld [vmem:[%s0 + $0x150] sm:$0xf]
  %v107 = vld [vmem:[%s0 + $0x154] sm:$0xf]
  %v108 = vld [vmem:[%s0 + $0x158] sm:$0xf]
  %v109 = vld [vmem:[%s0 + $0x15c] sm:$0xf]
  %v110 = vld [vmem:[%s0 + $0x160] sm:$0xf]
  %v111 = vld [vmem:[%s0 + $0x164] sm:$0xf]
  %v112 = vld [vmem:[%s0 + $0x168] sm:$0xf]
  %v113 = vld [vmem:[%s0 + $0x16c] sm:$0xf]
  %v114 = vld [vmem:[%s0 + $0x170] sm:$0xf]
  %v115 = vld [vmem:[%s0 + $0x174] sm:$0xf]
  %v116 = vld [vmem:[%s0 + $0x178] sm:$0xf]
  %v117 = vld [vmem:[%s0 + $0x17c] sm:$0xf]
  %v118 = vld [vmem:[%s0 + $0x180] sm:$0xf]
  %v119 = vld [vmem:[%s0 + $0x184] sm:$0xf]
  %v120 = vld [vmem:[%s0 + $0x188] sm:$0xf]
  %v121 = vld [vmem:[%s0 + $0x18c] sm:$0xf]
  %v122 = vld [vmem:[%s0 + $0x190] sm:$0xf]
  %v123 = vld [vmem:[%s0 + $0x194] sm:$0xf]
  %v124 = vld [vmem:[%s0 + $0x198] sm:$0xf]
  %v125 = vld [vmem:[%s0 + $0x19c] sm:$0xf]
  %v126 = vld [vmem:[%s0 + $0x1a0] sm:$0xf]
  %v127 = vld [vmem:[%s0 + $0x1a4] sm:$0xf]
  %v128 = vld [vmem:[%s0 + $0x1a8] sm:$0xf]
  %v129 = vld [vmem:[%s0 + $0x1ac] sm:$0xf]
  %v130 = vld [vmem:[%s0 + $0x1b0] sm:$0xf]
  %v131 = vld [vmem:[%s0 + $0x1b4] sm:$0xf]
  %v132 = vld [vmem:[%s0 + $0x1b8] sm:$0xf]
  %v133 = vld [vmem:[%s0 + $0x1bc] sm:$0xf]
  %v134 = vld [vmem:[%s0 + $0x1c0] sm:$0xf]
  %v135 = vld [vmem:[%s0 + $0x1c4] sm:$0xf]
  %v136 = vld [vmem:[%s0 + $0x1c8] sm:$0xf]
  %v137 = vld [vmem:[%s0 + $0x1cc] sm:$0xf]
  %v138 = vld [vmem:[%s0 + $0x1d0] sm:$0xf]
  %v139 = vld [vmem:[%s0 + $0x1d4] sm:$0xf]
  %v140 = vld [vmem:[%s0 + $0x1d8] sm:$0xf]
  %v141 = vld [vmem:[%s0 + $0x1dc] sm:$0xf]
  %v142 = vld [vmem:[%s0 + $0x1e0] sm:$0xf]
  %v143 = vld [vmem:[%s0 + $0x1e4] sm:$0xf]
  %v144 = vld [vmem:[%s0 + $0x1e8] sm:$0xf]
  %v145 = vld [vmem:[%s0 + $0x1ec] sm:$0xf]
  %v146 = vld [vmem:[%s0 + $0x1f0] sm:$0xf]
  %v147 = vld [vmem:[%s0 + $0x1f4] sm:$0xf]
  %v148 = vld [vmem:[%s0 + $0x1f8] sm:$0xf]
  %v149 = vld [vmem:[%s0 + $0x1fc] sm:$0xf]
  %v278 = vunpack.c.l.b16 %v22
  %v279 = vunpack.c.l.b16 %v23
  %v280 = vunpack.c.l.b16 %v24
  %v281 = vunpack.c.l.b16 %v25
  %v282 = vunpack.c.l.b16 %v26
  %v283 = vunpack.c.l.b16 %v27
  %v284 = vunpack.c.l.b16 %v28
  %v285 = vunpack.c.l.b16 %v29
  %v286 = vunpack.c.l.b16 %v30
  %v287 = vunpack.c.l.b16 %v31
  %v288 = vunpack.c.l.b16 %v32
  %v289 = vunpack.c.l.b16 %v33
  %v290 = vunpack.c.l.b16 %v34
  %v291 = vunpack.c.l.b16 %v35
  %v292 = vunpack.c.l.b16 %v36
  %v293 = vunpack.c.l.b16 %v37
  %v294 = vunpack.c.l.b16 %v38
  %v295 = vunpack.c.l.b16 %v39
  %v296 = vunpack.c.l.b16 %v40
  %v297 = vunpack.c.l.b16 %v41
  %v298 = vunpack.c.l.b16 %v42
  %v299 = vunpack.c.l.b16 %v43
  %v300 = vunpack.c.l.b16 %v44
  %v301 = vunpack.c.l.b16 %v45
  %v302 = vunpack.c.l.b16 %v46
  %v303 = vunpack.c.l.b16 %v47
  %v304 = vunpack.c.l.b16 %v48
  %v305 = vunpack.c.l.b16 %v49
  %v306 = vunpack.c.l.b16 %v50
  %v307 = vunpack.c.l.b16 %v51
  %v308 = vunpack.c.l.b16 %v52
  %v309 = vunpack.c.l.b16 %v53
  %v310 = vunpack.c.l.b16 %v54
  %v311 = vunpack.c.l.b16 %v55
  %v312 = vunpack.c.l.b16 %v56
  %v313 = vunpack.c.l.b16 %v57
  %v314 = vunpack.c.l.b16 %v58
  %v315 = vunpack.c.l.b16 %v59
  %v316 = vunpack.c.l.b16 %v60
  %v317 = vunpack.c.l.b16 %v61
  %v318 = vunpack.c.l.b16 %v62
  %v319 = vunpack.c.l.b16 %v63
  %v320 = vunpack.c.l.b16 %v64
  %v321 = vunpack.c.l.b16 %v65
  %v322 = vunpack.c.l.b16 %v66
  %v323 = vunpack.c.l.b16 %v67
  %v324 = vunpack.c.l.b16 %v68
  %v325 = vunpack.c.l.b16 %v69
  %v326 = vunpack.c.l.b16 %v70
  %v327 = vunpack.c.l.b16 %v71
  %v328 = vunpack.c.l.b16 %v72
  %v329 = vunpack.c.l.b16 %v73
  %v330 = vunpack.c.l.b16 %v74
  %v331 = vunpack.c.l.b16 %v75
  %v332 = vunpack.c.l.b16 %v76
  %v333 = vunpack.c.l.b16 %v77
  %v334 = vunpack.c.l.b16 %v78
  %v335 = vunpack.c.l.b16 %v79
  %v336 = vunpack.c.l.b16 %v80
  %v337 = vunpack.c.l.b16 %v81
  %v338 = vunpack.c.l.b16 %v82
  %v339 = vunpack.c.l.b16 %v83
  %v340 = vunpack.c.l.b16 %v84
  %v341 = vunpack.c.l.b16 %v85
  %v342 = vunpack.c.l.b16 %v86
  %v343 = vunpack.c.l.b16 %v87
  %v344 = vunpack.c.l.b16 %v88
  %v345 = vunpack.c.l.b16 %v89
  %v346 = vunpack.c.l.b16 %v90
  %v347 = vunpack.c.l.b16 %v91
  %v348 = vunpack.c.l.b16 %v92
  %v349 = vunpack.c.l.b16 %v93
  %v350 = vunpack.c.l.b16 %v94
  %v351 = vunpack.c.l.b16 %v95
  %v352 = vunpack.c.l.b16 %v96
  %v353 = vunpack.c.l.b16 %v97
  %v354 = vunpack.c.l.b16 %v98
  %v355 = vunpack.c.l.b16 %v99
  %v356 = vunpack.c.l.b16 %v100
  %v357 = vunpack.c.l.b16 %v101
  %v358 = vunpack.c.l.b16 %v102
  %v359 = vunpack.c.l.b16 %v103
  %v360 = vunpack.c.l.b16 %v104
  %v361 = vunpack.c.l.b16 %v105
  %v362 = vunpack.c.l.b16 %v106
  %v363 = vunpack.c.l.b16 %v107
  %v364 = vunpack.c.l.b16 %v108
  %v365 = vunpack.c.l.b16 %v109
  %v366 = vunpack.c.l.b16 %v110
  %v367 = vunpack.c.l.b16 %v111
  %v368 = vunpack.c.l.b16 %v112
  %v369 = vunpack.c.l.b16 %v113
  %v370 = vunpack.c.l.b16 %v114
  %v371 = vunpack.c.l.b16 %v115
  %v372 = vunpack.c.l.b16 %v116
  %v373 = vunpack.c.l.b16 %v117
  %v374 = vunpack.c.l.b16 %v118
  %v375 = vunpack.c.l.b16 %v119
  %v376 = vunpack.c.l.b16 %v120
  %v377 = vunpack.c.l.b16 %v121
  %v378 = vunpack.c.l.b16 %v122
  %v379 = vunpack.c.l.b16 %v123
  %v380 = vunpack.c.l.b16 %v124
  %v381 = vunpack.c.l.b16 %v125
  %v382 = vunpack.c.l.b16 %v126
  %v383 = vunpack.c.l.b16 %v127
  %v384 = vunpack.c.l.b16 %v128
  %v385 = vunpack.c.l.b16 %v129
  %v386 = vunpack.c.l.b16 %v130
  %v387 = vunpack.c.l.b16 %v131
  %v388 = vunpack.c.l.b16 %v132
  %v389 = vunpack.c.l.b16 %v133
  %v390 = vunpack.c.l.b16 %v134
  %v391 = vunpack.c.l.b16 %v135
  %v392 = vunpack.c.l.b16 %v136
  %v393 = vunpack.c.l.b16 %v137
  %v394 = vunpack.c.l.b16 %v138
  %v395 = vunpack.c.l.b16 %v139
  %v396 = vunpack.c.l.b16 %v140
  %v397 = vunpack.c.l.b16 %v141
  %v398 = vunpack.c.l.b16 %v142
  %v399 = vunpack.c.l.b16 %v143
  %v400 = vunpack.c.l.b16 %v144
  %v401 = vunpack.c.l.b16 %v145
  %v402 = vunpack.c.l.b16 %v146
  %v403 = vunpack.c.l.b16 %v147
  %v404 = vunpack.c.l.b16 %v148
  %v405 = vunpack.c.l.b16 %v149
  %v406 = vpack.c.b16 %v279, %v278
  %v407 = vpack.c.b16 %v281, %v280
  %v408 = vpack.c.b16 %v283, %v282
  %v409 = vpack.c.b16 %v285, %v284
  %v410 = vpack.c.b16 %v287, %v286
  %v411 = vpack.c.b16 %v289, %v288
  %v412 = vpack.c.b16 %v291, %v290
  %v413 = vpack.c.b16 %v293, %v292
  %v414 = vpack.c.b16 %v295, %v294
  %v415 = vpack.c.b16 %v297, %v296
  %v416 = vpack.c.b16 %v299, %v298
  %v417 = vpack.c.b16 %v301, %v300
  %v418 = vpack.c.b16 %v303, %v302
  %v419 = vpack.c.b16 %v305, %v304
  %v420 = vpack.c.b16 %v307, %v306
  %v421 = vpack.c.b16 %v309, %v308
  %v422 = vpack.c.b16 %v311, %v310
  %v423 = vpack.c.b16 %v313, %v312
  %v424 = vpack.c.b16 %v315, %v314
  %v425 = vpack.c.b16 %v317, %v316
  %v426 = vpack.c.b16 %v319, %v318
  %v427 = vpack.c.b16 %v321, %v320
  %v428 = vpack.c.b16 %v323, %v322
  %v429 = vpack.c.b16 %v325, %v324
  %v430 = vpack.c.b16 %v327, %v326
  %v431 = vpack.c.b16 %v329, %v328
  %v432 = vpack.c.b16 %v331, %v330
  %v433 = vpack.c.b16 %v333, %v332
  %v434 = vpack.c.b16 %v335, %v334
  %v435 = vpack.c.b16 %v337, %v336
  %v436 = vpack.c.b16 %v339, %v338
  %v437 = vpack.c.b16 %v341, %v340
  %v438 = vpack.c.b16 %v343, %v342
  %v439 = vpack.c.b16 %v345, %v344
  %v440 = vpack.c.b16 %v347, %v346
  %v441 = vpack.c.b16 %v349, %v348
  %v442 = vpack.c.b16 %v351, %v350
  %v443 = vpack.c.b16 %v353, %v352
  %v444 = vpack.c.b16 %v355, %v354
  %v445 = vpack.c.b16 %v357, %v356
  %v446 = vpack.c.b16 %v359, %v358
  %v447 = vpack.c.b16 %v361, %v360
  %v448 = vpack.c.b16 %v363, %v362
  %v449 = vpack.c.b16 %v365, %v364
  %v450 = vpack.c.b16 %v367, %v366
  %v451 = vpack.c.b16 %v369, %v368
  %v452 = vpack.c.b16 %v371, %v370
  %v453 = vpack.c.b16 %v373, %v372
  %v454 = vpack.c.b16 %v375, %v374
  %v455 = vpack.c.b16 %v377, %v376
  %v456 = vpack.c.b16 %v379, %v378
  %v457 = vpack.c.b16 %v381, %v380
  %v458 = vpack.c.b16 %v383, %v382
  %v459 = vpack.c.b16 %v385, %v384
  %v460 = vpack.c.b16 %v387, %v386
  %v461 = vpack.c.b16 %v389, %v388
  %v462 = vpack.c.b16 %v391, %v390
  %v463 = vpack.c.b16 %v393, %v392
  %v464 = vpack.c.b16 %v395, %v394
  %v465 = vpack.c.b16 %v397, %v396
  %v466 = vpack.c.b16 %v399, %v398
  %v467 = vpack.c.b16 %v401, %v400
  %v468 = vpack.c.b16 %v403, %v402
  %v469 = vpack.c.b16 %v405, %v404
  %v474 = vunpack.c.l.b16 %v18
  %v475 = vunpack.c.l.b16 %v19
  %v476 = vunpack.c.l.b16 %v20
  %v477 = vunpack.c.l.b16 %v21
  %v478 = vpack.c.b16 %v475, %v474
  %v479 = vpack.c.b16 %v477, %v476
  %vm482 = vcmask 261120
  %v484 = vsel %vm482, %v406, 0
  %v487 = vsel %vm482, %v407, 0
  %v490 = vsel %vm482, %v408, 0
  %v493 = vsel %vm482, %v409, 0
  %v496 = vsel %vm482, %v410, 0
  %v499 = vsel %vm482, %v411, 0
  %v502 = vsel %vm482, %v412, 0
  %v505 = vsel %vm482, %v413, 0
  %v508 = vsel %vm482, %v414, 0
  %v511 = vsel %vm482, %v415, 0
  %v514 = vsel %vm482, %v416, 0
  %v517 = vsel %vm482, %v417, 0
  %v520 = vsel %vm482, %v418, 0
  %v523 = vsel %vm482, %v419, 0
  %v526 = vsel %vm482, %v420, 0
  %v529 = vsel %vm482, %v421, 0
  %v532 = vsel %vm482, %v422, 0
  %v535 = vsel %vm482, %v423, 0
  %v538 = vsel %vm482, %v424, 0
  %v541 = vsel %vm482, %v425, 0
  %v544 = vsel %vm482, %v426, 0
  %v547 = vsel %vm482, %v427, 0
  %v550 = vsel %vm482, %v428, 0
  %v553 = vsel %vm482, %v429, 0
  %v556 = vsel %vm482, %v430, 0
  %v559 = vsel %vm482, %v431, 0
  %v562 = vsel %vm482, %v432, 0
  %v565 = vsel %vm482, %v433, 0
  %v568 = vsel %vm482, %v434, 0
  %v571 = vsel %vm482, %v435, 0
  %v574 = vsel %vm482, %v436, 0
  %v577 = vsel %vm482, %v437, 0
  %v580 = vsel %vm482, %v438, 0
  %v583 = vsel %vm482, %v439, 0
  %v586 = vsel %vm482, %v440, 0
  %v589 = vsel %vm482, %v441, 0
  %v592 = vsel %vm482, %v442, 0
  %v595 = vsel %vm482, %v443, 0
  %v598 = vsel %vm482, %v444, 0
  %v601 = vsel %vm482, %v445, 0
  %v604 = vsel %vm482, %v446, 0
  %v607 = vsel %vm482, %v447, 0
  %v610 = vsel %vm482, %v448, 0
  %v613 = vsel %vm482, %v449, 0
  %v616 = vsel %vm482, %v450, 0
  %v619 = vsel %vm482, %v451, 0
  %v622 = vsel %vm482, %v452, 0
  %v625 = vsel %vm482, %v453, 0
  %v628 = vsel %vm482, %v454, 0
  %v631 = vsel %vm482, %v455, 0
  %v634 = vsel %vm482, %v456, 0
  %v637 = vsel %vm482, %v457, 0
  %v640 = vsel %vm482, %v458, 0
  %v643 = vsel %vm482, %v459, 0
  %v646 = vsel %vm482, %v460, 0
  %v649 = vsel %vm482, %v461, 0
  %v652 = vsel %vm482, %v462, 0
  %v655 = vsel %vm482, %v463, 0
  %v658 = vsel %vm482, %v464, 0
  %v661 = vsel %vm482, %v465, 0
  %v664 = vsel %vm482, %v466, 0
  %v667 = vsel %vm482, %v467, 0
  %v670 = vsel %vm482, %v468, 0
  %v673 = vsel %vm482, %v469, 0
  %675 = vmatprep.subr.bf16.mxu0 0
  %676 = vmatpush1.bf16.msra.mxu0 %v478
  %677 = vmatprep.subr.bf16.mxu0 0
  %678 = vmatpush1.bf16.msra.mxu0 %v479
  %679 = vmatprep.subr.bf16.mxu0 0
  %680 = vmatpush1.bf16.msra.mxu0 0
  %681 = vmatprep.subr.bf16.mxu0 0
  %682 = vmatpush1.bf16.msra.mxu0 0
  %683 = vmatprep.subr.bf16.mxu0 0
  %684 = vmatpush1.bf16.msra.mxu0 0
  %685 = vmatprep.subr.bf16.mxu0 0
  %686 = vmatpush1.bf16.msra.mxu0 0
  %687 = vmatprep.subr.bf16.mxu0 0
  %688 = vmatpush1.bf16.msra.mxu0 0
  %689 = vmatprep.subr.bf16.mxu0 0
  %690 = vmatpush1.bf16.msra.mxu0 0
  %691 = vmatprep.subr.bf16.mxu0 0
  %692 = vmatpush1.bf16.msra.mxu0 0
  %693 = vmatprep.subr.bf16.mxu0 0
  %694 = vmatpush1.bf16.msra.mxu0 0
  %695 = vmatprep.subr.bf16.mxu0 0
  %696 = vmatpush1.bf16.msra.mxu0 0
  %697 = vmatprep.subr.bf16.mxu0 0
  %698 = vmatpush1.bf16.msra.mxu0 0
  %699 = vmatprep.subr.bf16.mxu0 0
  %700 = vmatpush1.bf16.msra.mxu0 0
  %701 = vmatprep.subr.bf16.mxu0 0
  %702 = vmatpush1.bf16.msra.mxu0 0
  %703 = vmatprep.subr.bf16.mxu0 0
  %704 = vmatpush1.bf16.msra.mxu0 0
  %705 = vmatprep.subr.bf16.mxu0 0
  %706 = vmatpush1.bf16.msra.mxu0 0
  %707 = vmatprep.mubr.bf16.mxu0 0
  %708 = vmatmul.mubr.bf16.gmra.mrb[0].mxu0 %v484
  %v709 = vpop.f32.mrb[0].mxu0
  %v710 = vadd.f32 0.0, %v709
  %v711 = vpop.f32.mrb[0].mxu0
  %v712 = vpop.f32.mrb[0].mxu0
  %v713 = vadd.f32 0.0, %v712
  %v714 = vpop.f32.mrb[0].mxu0
  %715 = vmatprep.mubr.bf16.mxu0 0
  %716 = vmatmul.mubr.bf16.gmra.mrb[0].mxu0 %v487
  %v717 = vpop.f32.mrb[0].mxu0
  %v718 = vadd.f32 0.0, %v717
  %v719 = vpop.f32.mrb[0].mxu0
  %v720 = vpop.f32.mrb[0].mxu0
  %v721 = vadd.f32 0.0, %v720
  %v722 = vpop.f32.mrb[0].mxu0
  %723 = vmatprep.mubr.bf16.mxu0 0
  %724 = vmatmul.mubr.bf16.gmra.mrb[0].mxu0 %v490
  %v725 = vpop.f32.mrb[0].mxu0
  %v726 = vadd.f32 0.0, %v725
  %v727 = vpop.f32.mrb[0].mxu0
  %v728 = vpop.f32.mrb[0].mxu0
  %v729 = vadd.f32 0.0, %v728
  %v730 = vpop.f32.mrb[0].mxu0
  %731 = vmatprep.mubr.bf16.mxu0 0
  %732 = vmatmul.mubr.bf16.gmra.mrb[0].mxu0 %v493
  %v733 = vpop.f32.mrb[0].mxu0
  %v734 = vadd.f32 0.0, %v733
  %v735 = vpop.f32.mrb[0].mxu0
  %v736 = vpop.f32.mrb[0].mxu0
  %v737 = vadd.f32 0.0, %v736
  %v738 = vpop.f32.mrb[0].mxu0
  %739 = vmatprep.mubr.bf16.mxu0 0
  %740 = vmatmul.mubr.bf16.gmra.mrb[0].mxu0 %v496
  %v741 = vpop.f32.mrb[0].mxu0
  %v742 = vadd.f32 0.0, %v741
  %v743 = vpop.f32.mrb[0].mxu0
  %v744 = vpop.f32.mrb[0].mxu0
  %v745 = vadd.f32 0.0, %v744
  %v746 = vpop.f32.mrb[0].mxu0
  %747 = vmatprep.mubr.bf16.mxu0 0
  %748 = vmatmul.mubr.bf16.gmra.mrb[0].mxu0 %v499
  %v749 = vpop.f32.mrb[0].mxu0
  %v750 = vadd.f32 0.0, %v749
  %v751 = vpop.f32.mrb[0].mxu0
  %v752 = vpop.f32.mrb[0].mxu0
  %v753 = vadd.f32 0.0, %v752
  %v754 = vpop.f32.mrb[0].mxu0
  %755 = vmatprep.mubr.bf16.mxu0 0
  %756 = vmatmul.mubr.bf16.gmra.mrb[0].mxu0 %v502
  %v757 = vpop.f32.mrb[0].mxu0
  %v758 = vadd.f32 0.0, %v757
  %v759 = vpop.f32.mrb[0].mxu0
  %v760 = vpop.f32.mrb[0].mxu0
  %v761 = vadd.f32 0.0, %v760
  %v762 = vpop.f32.mrb[0].mxu0
  %763 = vmatprep.mubr.bf16.mxu0 0
  %764 = vmatmul.mubr.bf16.gmra.mrb[0].mxu0 %v505
  %v765 = vpop.f32.mrb[0].mxu0
  %v766 = vadd.f32 0.0, %v765
  %v767 = vpop.f32.mrb[0].mxu0
  %v768 = vpop.f32.mrb[0].mxu0
  %v769 = vadd.f32 0.0, %v768
  %v770 = vpop.f32.mrb[0].mxu0
  %771 = vmatprep.mubr.bf16.mxu0 0
  %772 = vmatmul.mubr.bf16.gmra.mrb[0].mxu0 %v508
  %v773 = vpop.f32.mrb[0].mxu0
  %v774 = vadd.f32 0.0, %v773
  %v775 = vpop.f32.mrb[0].mxu0
  %v776 = vpop.f32.mrb[0].mxu0
  %v777 = vadd.f32 0.0, %v776
  %v778 = vpop.f32.mrb[0].mxu0
  %779 = vmatprep.mubr.bf16.mxu0 0
  %780 = vmatmul.mubr.bf16.gmra.mrb[0].mxu0 %v511
  %v781 = vpop.f32.mrb[0].mxu0
  %v782 = vadd.f32 0.0, %v781
  %v783 = vpop.f32.mrb[0].mxu0
  %v784 = vpop.f32.mrb[0].mxu0
  %v785 = vadd.f32 0.0, %v784
  %v786 = vpop.f32.mrb[0].mxu0
  %787 = vmatprep.mubr.bf16.mxu0 0
  %788 = vmatmul.mubr.bf16.gmra.mrb[0].mxu0 %v514
  %v789 = vpop.f32.mrb[0].mxu0
  %v790 = vadd.f32 0.0, %v789
  %v791 = vpop.f32.mrb[0].mxu0
  %v792 = vpop.f32.mrb[0].mxu0
  %v793 = vadd.f32 0.0, %v792
  %v794 = vpop.f32.mrb[0].mxu0
  %795 = vmatprep.mubr.bf16.mxu0 0
  %796 = vmatmul.mubr.bf16.gmra.mrb[0].mxu0 %v517
  %v797 = vpop.f32.mrb[0].mxu0
  %v798 = vadd.f32 0.0, %v797
  %v799 = vpop.f32.mrb[0].mxu0
  %v800 = vpop.f32.mrb[0].mxu0
  %v801 = vadd.f32 0.0, %v800
  %v802 = vpop.f32.mrb[0].mxu0
  %803 = vmatprep.mubr.bf16.mxu0 0
  %804 = vmatmul.mubr.bf16.gmra.mrb[0].mxu0 %v520
  %v805 = vpop.f32.mrb[0].mxu0
  %v806 = vadd.f32 0.0, %v805
  %v807 = vpop.f32.mrb[0].mxu0
  %v808 = vpop.f32.mrb[0].mxu0
  %v809 = vadd.f32 0.0, %v808
  %v810 = vpop.f32.mrb[0].mxu0
  %811 = vmatprep.mubr.bf16.mxu0 0
  %812 = vmatmul.mubr.bf16.gmra.mrb[0].mxu0 %v523
  %v813 = vpop.f32.mrb[0].mxu0
  %v814 = vadd.f32 0.0, %v813
  %v815 = vpop.f32.mrb[0].mxu0
  %v816 = vpop.f32.mrb[0].mxu0
  %v817 = vadd.f32 0.0, %v816
  %v818 = vpop.f32.mrb[0].mxu0
  %819 = vmatprep.mubr.bf16.mxu0 0
  %820 = vmatmul.mubr.bf16.gmra.mrb[0].mxu0 %v526
  %v821 = vpop.f32.mrb[0].mxu0
  %v822 = vadd.f32 0.0, %v821
  %v823 = vpop.f32.mrb[0].mxu0
  %v824 = vpop.f32.mrb[0].mxu0
  %v825 = vadd.f32 0.0, %v824
  %v826 = vpop.f32.mrb[0].mxu0
  %827 = vmatprep.mubr.bf16.mxu0 0
  %828 = vmatmul.mubr.bf16.gmra.mrb[0].mxu0 %v529
  %v829 = vpop.f32.mrb[0].mxu0
  %v830 = vadd.f32 0.0, %v829
  %v831 = vpop.f32.mrb[0].mxu0
  %v832 = vpop.f32.mrb[0].mxu0
  %v833 = vadd.f32 0.0, %v832
  %v834 = vpop.f32.mrb[0].mxu0
  %835 = vmatprep.mubr.bf16.mxu0 0
  %836 = vmatmul.mubr.bf16.gmra.mrb[0].mxu0 %v532
  %v837 = vpop.f32.mrb[0].mxu0
  %v838 = vadd.f32 0.0, %v837
  %v839 = vpop.f32.mrb[0].mxu0
  %v840 = vpop.f32.mrb[0].mxu0
  %v841 = vadd.f32 0.0, %v840
  %v842 = vpop.f32.mrb[0].mxu0
  %843 = vmatprep.mubr.bf16.mxu0 0
  %844 = vmatmul.mubr.bf16.gmra.mrb[0].mxu0 %v535
  %v845 = vpop.f32.mrb[0].mxu0
  %v846 = vadd.f32 0.0, %v845
  %v847 = vpop.f32.mrb[0].mxu0
  %v848 = vpop.f32.mrb[0].mxu0
  %v849 = vadd.f32 0.0, %v848
  %v850 = vpop.f32.mrb[0].mxu0
  %851 = vmatprep.mubr.bf16.mxu0 0
  %852 = vmatmul.mubr.bf16.gmra.mrb[0].mxu0 %v538
  %v853 = vpop.f32.mrb[0].mxu0
  %v854 = vadd.f32 0.0, %v853
  %v855 = vpop.f32.mrb[0].mxu0
  %v856 = vpop.f32.mrb[0].mxu0
  %v857 = vadd.f32 0.0, %v856
  %v858 = vpop.f32.mrb[0].mxu0
  %859 = vmatprep.mubr.bf16.mxu0 0
  %860 = vmatmul.mubr.bf16.gmra.mrb[0].mxu0 %v541
  %v861 = vpop.f32.mrb[0].mxu0
  %v862 = vadd.f32 0.0, %v861
  %v863 = vpop.f32.mrb[0].mxu0
  %v864 = vpop.f32.mrb[0].mxu0
  %v865 = vadd.f32 0.0, %v864
  %v866 = vpop.f32.mrb[0].mxu0
  %867 = vmatprep.mubr.bf16.mxu0 0
  %868 = vmatmul.mubr.bf16.gmra.mrb[0].mxu0 %v544
  %v869 = vpop.f32.mrb[0].mxu0
  %v870 = vadd.f32 0.0, %v869
  %v871 = vpop.f32.mrb[0].mxu0
  %v872 = vpop.f32.mrb[0].mxu0
  %v873 = vadd.f32 0.0, %v872
  %v874 = vpop.f32.mrb[0].mxu0
  %875 = vmatprep.mubr.bf16.mxu0 0
  %876 = vmatmul.mubr.bf16.gmra.mrb[0].mxu0 %v547
  %v877 = vpop.f32.mrb[0].mxu0
  %v878 = vadd.f32 0.0, %v877
  %v879 = vpop.f32.mrb[0].mxu0
  %v880 = vpop.f32.mrb[0].mxu0
  %v881 = vadd.f32 0.0, %v880
  %v882 = vpop.f32.mrb[0].mxu0
  %883 = vmatprep.mubr.bf16.mxu0 0
  %884 = vmatmul.mubr.bf16.gmra.mrb[0].mxu0 %v550
  %v885 = vpop.f32.mrb[0].mxu0
  %v886 = vadd.f32 0.0, %v885
  %v887 = vpop.f32.mrb[0].mxu0
  %v888 = vpop.f32.mrb[0].mxu0
  %v889 = vadd.f32 0.0, %v888
  %v890 = vpop.f32.mrb[0].mxu0
  %891 = vmatprep.mubr.bf16.mxu0 0
  %892 = vmatmul.mubr.bf16.gmra.mrb[0].mxu0 %v553
  %v893 = vpop.f32.mrb[0].mxu0
  %v894 = vadd.f32 0.0, %v893
  %v895 = vpop.f32.mrb[0].mxu0
  %v896 = vpop.f32.mrb[0].mxu0
  %v897 = vadd.f32 0.0, %v896
  %v898 = vpop.f32.mrb[0].mxu0
  %899 = vmatprep.mubr.bf16.mxu0 0
  %900 = vmatmul.mubr.bf16.gmra.mrb[0].mxu0 %v556
  %v901 = vpop.f32.mrb[0].mxu0
  %v902 = vadd.f32 0.0, %v901
  %v903 = vpop.f32.mrb[0].mxu0
  %v904 = vpop.f32.mrb[0].mxu0
  %v905 = vadd.f32 0.0, %v904
  %v906 = vpop.f32.mrb[0].mxu0
  %907 = vmatprep.mubr.bf16.mxu0 0
  %908 = vmatmul.mubr.bf16.gmra.mrb[0].mxu0 %v559
  %v909 = vpop.f32.mrb[0].mxu0
  %v910 = vadd.f32 0.0, %v909
  %v911 = vpop.f32.mrb[0].mxu0
  %v912 = vpop.f32.mrb[0].mxu0
  %v913 = vadd.f32 0.0, %v912
  %v914 = vpop.f32.mrb[0].mxu0
  %915 = vmatprep.mubr.bf16.mxu0 0
  %916 = vmatmul.mubr.bf16.gmra.mrb[0].mxu0 %v562
  %v917 = vpop.f32.mrb[0].mxu0
  %v918 = vadd.f32 0.0, %v917
  %v919 = vpop.f32.mrb[0].mxu0
  %v920 = vpop.f32.mrb[0].mxu0
  %v921 = vadd.f32 0.0, %v920
  %v922 = vpop.f32.mrb[0].mxu0
  %923 = vmatprep.mubr.bf16.mxu0 0
  %924 = vmatmul.mubr.bf16.gmra.mrb[0].mxu0 %v565
  %v925 = vpop.f32.mrb[0].mxu0
  %v926 = vadd.f32 0.0, %v925
  %v927 = vpop.f32.mrb[0].mxu0
  %v928 = vpop.f32.mrb[0].mxu0
  %v929 = vadd.f32 0.0, %v928
  %v930 = vpop.f32.mrb[0].mxu0
  %931 = vmatprep.mubr.bf16.mxu0 0
  %932 = vmatmul.mubr.bf16.gmra.mrb[0].mxu0 %v568
  %v933 = vpop.f32.mrb[0].mxu0
  %v934 = vadd.f32 0.0, %v933
  %v935 = vpop.f32.mrb[0].mxu0
  %v936 = vpop.f32.mrb[0].mxu0
  %v937 = vadd.f32 0.0, %v936
  %v938 = vpop.f32.mrb[0].mxu0
  %939 = vmatprep.mubr.bf16.mxu0 0
  %940 = vmatmul.mubr.bf16.gmra.mrb[0].mxu0 %v571
  %v941 = vpop.f32.mrb[0].mxu0
  %v942 = vadd.f32 0.0, %v941
  %v943 = vpop.f32.mrb[0].mxu0
  %v944 = vpop.f32.mrb[0].mxu0
  %v945 = vadd.f32 0.0, %v944
  %v946 = vpop.f32.mrb[0].mxu0
  %947 = vmatprep.mubr.bf16.mxu0 0
  %948 = vmatmul.mubr.bf16.gmra.mrb[0].mxu0 %v574
  %v949 = vpop.f32.mrb[0].mxu0
  %v950 = vadd.f32 0.0, %v949
  %v951 = vpop.f32.mrb[0].mxu0
  %v952 = vpop.f32.mrb[0].mxu0
  %v953 = vadd.f32 0.0, %v952
  %v954 = vpop.f32.mrb[0].mxu0
  %955 = vmatprep.mubr.bf16.mxu0 0
  %956 = vmatmul.mubr.bf16.gmra.mrb[0].mxu0 %v577
  %v957 = vpop.f32.mrb[0].mxu0
  %v958 = vadd.f32 0.0, %v957
  %v959 = vpop.f32.mrb[0].mxu0
  %v960 = vpop.f32.mrb[0].mxu0
  %v961 = vadd.f32 0.0, %v960
  %v962 = vpop.f32.mrb[0].mxu0
  %963 = vmatprep.mubr.bf16.mxu0 0
  %964 = vmatmul.mubr.bf16.gmra.mrb[0].mxu0 %v580
  %v965 = vpop.f32.mrb[0].mxu0
  %v966 = vadd.f32 0.0, %v965
  %v967 = vpop.f32.mrb[0].mxu0
  %v968 = vpop.f32.mrb[0].mxu0
  %v969 = vadd.f32 0.0, %v968
  %v970 = vpop.f32.mrb[0].mxu0
  %971 = vmatprep.mubr.bf16.mxu0 0
  %972 = vmatmul.mubr.bf16.gmra.mrb[0].mxu0 %v583
  %v973 = vpop.f32.mrb[0].mxu0
  %v974 = vadd.f32 0.0, %v973
  %v975 = vpop.f32.mrb[0].mxu0
  %v976 = vpop.f32.mrb[0].mxu0
  %v977 = vadd.f32 0.0, %v976
  %v978 = vpop.f32.mrb[0].mxu0
  %979 = vmatprep.mubr.bf16.mxu0 0
  %980 = vmatmul.mubr.bf16.gmra.mrb[0].mxu0 %v586
  %v981 = vpop.f32.mrb[0].mxu0
  %v982 = vadd.f32 0.0, %v981
  %v983 = vpop.f32.mrb[0].mxu0
  %v984 = vpop.f32.mrb[0].mxu0
  %v985 = vadd.f32 0.0, %v984
  %v986 = vpop.f32.mrb[0].mxu0
  %987 = vmatprep.mubr.bf16.mxu0 0
  %988 = vmatmul.mubr.bf16.gmra.mrb[0].mxu0 %v589
  %v989 = vpop.f32.mrb[0].mxu0
  %v990 = vadd.f32 0.0, %v989
  %v991 = vpop.f32.mrb[0].mxu0
  %v992 = vpop.f32.mrb[0].mxu0
  %v993 = vadd.f32 0.0, %v992
  %v994 = vpop.f32.mrb[0].mxu0
  %995 = vmatprep.mubr.bf16.mxu0 0
  %996 = vmatmul.mubr.bf16.gmra.mrb[0].mxu0 %v592
  %v997 = vpop.f32.mrb[0].mxu0
  %v998 = vadd.f32 0.0, %v997
  %v999 = vpop.f32.mrb[0].mxu0
  %v1000 = vpop.f32.mrb[0].mxu0
  %v1001 = vadd.f32 0.0, %v1000
  %v1002 = vpop.f32.mrb[0].mxu0
  %1003 = vmatprep.mubr.bf16.mxu0 0
  %1004 = vmatmul.mubr.bf16.gmra.mrb[0].mxu0 %v595
  %v1005 = vpop.f32.mrb[0].mxu0
  %v1006 = vadd.f32 0.0, %v1005
  %v1007 = vpop.f32.mrb[0].mxu0
  %v1008 = vpop.f32.mrb[0].mxu0
  %v1009 = vadd.f32 0.0, %v1008
  %v1010 = vpop.f32.mrb[0].mxu0
  %1011 = vmatprep.mubr.bf16.mxu0 0
  %1012 = vmatmul.mubr.bf16.gmra.mrb[0].mxu0 %v598
  %v1013 = vpop.f32.mrb[0].mxu0
  %v1014 = vadd.f32 0.0, %v1013
  %v1015 = vpop.f32.mrb[0].mxu0
  %v1016 = vpop.f32.mrb[0].mxu0
  %v1017 = vadd.f32 0.0, %v1016
  %v1018 = vpop.f32.mrb[0].mxu0
  %1019 = vmatprep.mubr.bf16.mxu0 0
  %1020 = vmatmul.mubr.bf16.gmra.mrb[0].mxu0 %v601
  %v1021 = vpop.f32.mrb[0].mxu0
  %v1022 = vadd.f32 0.0, %v1021
  %v1023 = vpop.f32.mrb[0].mxu0
  %v1024 = vpop.f32.mrb[0].mxu0
  %v1025 = vadd.f32 0.0, %v1024
  %v1026 = vpop.f32.mrb[0].mxu0
  %1027 = vmatprep.mubr.bf16.mxu0 0
  %1028 = vmatmul.mubr.bf16.gmra.mrb[0].mxu0 %v604
  %v1029 = vpop.f32.mrb[0].mxu0
  %v1030 = vadd.f32 0.0, %v1029
  %v1031 = vpop.f32.mrb[0].mxu0
  %v1032 = vpop.f32.mrb[0].mxu0
  %v1033 = vadd.f32 0.0, %v1032
  %v1034 = vpop.f32.mrb[0].mxu0
  %1035 = vmatprep.mubr.bf16.mxu0 0
  %1036 = vmatmul.mubr.bf16.gmra.mrb[0].mxu0 %v607
  %v1037 = vpop.f32.mrb[0].mxu0
  %v1038 = vadd.f32 0.0, %v1037
  %v1039 = vpop.f32.mrb[0].mxu0
  %v1040 = vpop.f32.mrb[0].mxu0
  %v1041 = vadd.f32 0.0, %v1040
  %v1042 = vpop.f32.mrb[0].mxu0
  %1043 = vmatprep.mubr.bf16.mxu0 0
  %1044 = vmatmul.mubr.bf16.gmra.mrb[0].mxu0 %v610
  %v1045 = vpop.f32.mrb[0].mxu0
  %v1046 = vadd.f32 0.0, %v1045
  %v1047 = vpop.f32.mrb[0].mxu0
  %v1048 = vpop.f32.mrb[0].mxu0
  %v1049 = vadd.f32 0.0, %v1048
  %v1050 = vpop.f32.mrb[0].mxu0
  %1051 = vmatprep.mubr.bf16.mxu0 0
  %1052 = vmatmul.mubr.bf16.gmra.mrb[0].mxu0 %v613
  %v1053 = vpop.f32.mrb[0].mxu0
  %v1054 = vadd.f32 0.0, %v1053
  %v1055 = vpop.f32.mrb[0].mxu0
  %v1056 = vpop.f32.mrb[0].mxu0
  %v1057 = vadd.f32 0.0, %v1056
  %v1058 = vpop.f32.mrb[0].mxu0
  %1059 = vmatprep.mubr.bf16.mxu0 0
  %1060 = vmatmul.mubr.bf16.gmra.mrb[0].mxu0 %v616
  %v1061 = vpop.f32.mrb[0].mxu0
  %v1062 = vadd.f32 0.0, %v1061
  %v1063 = vpop.f32.mrb[0].mxu0
  %v1064 = vpop.f32.mrb[0].mxu0
  %v1065 = vadd.f32 0.0, %v1064
  %v1066 = vpop.f32.mrb[0].mxu0
  %1067 = vmatprep.mubr.bf16.mxu0 0
  %1068 = vmatmul.mubr.bf16.gmra.mrb[0].mxu0 %v619
  %v1069 = vpop.f32.mrb[0].mxu0
  %v1070 = vadd.f32 0.0, %v1069
  %v1071 = vpop.f32.mrb[0].mxu0
  %v1072 = vpop.f32.mrb[0].mxu0
  %v1073 = vadd.f32 0.0, %v1072
  %v1074 = vpop.f32.mrb[0].mxu0
  %1075 = vmatprep.mubr.bf16.mxu0 0
  %1076 = vmatmul.mubr.bf16.gmra.mrb[0].mxu0 %v622
  %v1077 = vpop.f32.mrb[0].mxu0
  %v1078 = vadd.f32 0.0, %v1077
  %v1079 = vpop.f32.mrb[0].mxu0
  %v1080 = vpop.f32.mrb[0].mxu0
  %v1081 = vadd.f32 0.0, %v1080
  %v1082 = vpop.f32.mrb[0].mxu0
  %1083 = vmatprep.mubr.bf16.mxu0 0
  %1084 = vmatmul.mubr.bf16.gmra.mrb[0].mxu0 %v625
  %v1085 = vpop.f32.mrb[0].mxu0
  %v1086 = vadd.f32 0.0, %v1085
  %v1087 = vpop.f32.mrb[0].mxu0
  %v1088 = vpop.f32.mrb[0].mxu0
  %v1089 = vadd.f32 0.0, %v1088
  %v1090 = vpop.f32.mrb[0].mxu0
  %1091 = vmatprep.mubr.bf16.mxu0 0
  %1092 = vmatmul.mubr.bf16.gmra.mrb[0].mxu0 %v628
  %v1093 = vpop.f32.mrb[0].mxu0
  %v1094 = vadd.f32 0.0, %v1093
  %v1095 = vpop.f32.mrb[0].mxu0
  %v1096 = vpop.f32.mrb[0].mxu0
  %v1097 = vadd.f32 0.0, %v1096
  %v1098 = vpop.f32.mrb[0].mxu0
  %1099 = vmatprep.mubr.bf16.mxu0 0
  %1100 = vmatmul.mubr.bf16.gmra.mrb[0].mxu0 %v631
  %v1101 = vpop.f32.mrb[0].mxu0
  %v1102 = vadd.f32 0.0, %v1101
  %v1103 = vpop.f32.mrb[0].mxu0
  %v1104 = vpop.f32.mrb[0].mxu0
  %v1105 = vadd.f32 0.0, %v1104
  %v1106 = vpop.f32.mrb[0].mxu0
  %1107 = vmatprep.mubr.bf16.mxu0 0
  %1108 = vmatmul.mubr.bf16.gmra.mrb[0].mxu0 %v634
  %v1109 = vpop.f32.mrb[0].mxu0
  %v1110 = vadd.f32 0.0, %v1109
  %v1111 = vpop.f32.mrb[0].mxu0
  %v1112 = vpop.f32.mrb[0].mxu0
  %v1113 = vadd.f32 0.0, %v1112
  %v1114 = vpop.f32.mrb[0].mxu0
  %1115 = vmatprep.mubr.bf16.mxu0 0
  %1116 = vmatmul.mubr.bf16.gmra.mrb[0].mxu0 %v637
  %v1117 = vpop.f32.mrb[0].mxu0
  %v1118 = vadd.f32 0.0, %v1117
  %v1119 = vpop.f32.mrb[0].mxu0
  %v1120 = vpop.f32.mrb[0].mxu0
  %v1121 = vadd.f32 0.0, %v1120
  %v1122 = vpop.f32.mrb[0].mxu0
  %1123 = vmatprep.mubr.bf16.mxu0 0
  %1124 = vmatmul.mubr.bf16.gmra.mrb[0].mxu0 %v640
  %v1125 = vpop.f32.mrb[0].mxu0
  %v1126 = vadd.f32 0.0, %v1125
  %v1127 = vpop.f32.mrb[0].mxu0
  %v1128 = vpop.f32.mrb[0].mxu0
  %v1129 = vadd.f32 0.0, %v1128
  %v1130 = vpop.f32.mrb[0].mxu0
  %1131 = vmatprep.mubr.bf16.mxu0 0
  %1132 = vmatmul.mubr.bf16.gmra.mrb[0].mxu0 %v643
  %v1133 = vpop.f32.mrb[0].mxu0
  %v1134 = vadd.f32 0.0, %v1133
  %v1135 = vpop.f32.mrb[0].mxu0
  %v1136 = vpop.f32.mrb[0].mxu0
  %v1137 = vadd.f32 0.0, %v1136
  %v1138 = vpop.f32.mrb[0].mxu0
  %1139 = vmatprep.mubr.bf16.mxu0 0
  %1140 = vmatmul.mubr.bf16.gmra.mrb[0].mxu0 %v646
  %v1141 = vpop.f32.mrb[0].mxu0
  %v1142 = vadd.f32 0.0, %v1141
  %v1143 = vpop.f32.mrb[0].mxu0
  %v1144 = vpop.f32.mrb[0].mxu0
  %v1145 = vadd.f32 0.0, %v1144
  %v1146 = vpop.f32.mrb[0].mxu0
  %1147 = vmatprep.mubr.bf16.mxu0 0
  %1148 = vmatmul.mubr.bf16.gmra.mrb[0].mxu0 %v649
  %v1149 = vpop.f32.mrb[0].mxu0
  %v1150 = vadd.f32 0.0, %v1149
  %v1151 = vpop.f32.mrb[0].mxu0
  %v1152 = vpop.f32.mrb[0].mxu0
  %v1153 = vadd.f32 0.0, %v1152
  %v1154 = vpop.f32.mrb[0].mxu0
  %1155 = vmatprep.mubr.bf16.mxu0 0
  %1156 = vmatmul.mubr.bf16.gmra.mrb[0].mxu0 %v652
  %v1157 = vpop.f32.mrb[0].mxu0
  %v1158 = vadd.f32 0.0, %v1157
  %v1159 = vpop.f32.mrb[0].mxu0
  %v1160 = vpop.f32.mrb[0].mxu0
  %v1161 = vadd.f32 0.0, %v1160
  %v1162 = vpop.f32.mrb[0].mxu0
  %1163 = vmatprep.mubr.bf16.mxu0 0
  %1164 = vmatmul.mubr.bf16.gmra.mrb[0].mxu0 %v655
  %v1165 = vpop.f32.mrb[0].mxu0
  %v1166 = vadd.f32 0.0, %v1165
  %v1167 = vpop.f32.mrb[0].mxu0
  %v1168 = vpop.f32.mrb[0].mxu0
  %v1169 = vadd.f32 0.0, %v1168
  %v1170 = vpop.f32.mrb[0].mxu0
  %1171 = vmatprep.mubr.bf16.mxu0 0
  %1172 = vmatmul.mubr.bf16.gmra.mrb[0].mxu0 %v658
  %v1173 = vpop.f32.mrb[0].mxu0
  %v1174 = vadd.f32 0.0, %v1173
  %v1175 = vpop.f32.mrb[0].mxu0
  %v1176 = vpop.f32.mrb[0].mxu0
  %v1177 = vadd.f32 0.0, %v1176
  %v1178 = vpop.f32.mrb[0].mxu0
  %1179 = vmatprep.mubr.bf16.mxu0 0
  %1180 = vmatmul.mubr.bf16.gmra.mrb[0].mxu0 %v661
  %v1181 = vpop.f32.mrb[0].mxu0
  %v1182 = vadd.f32 0.0, %v1181
  %v1183 = vpop.f32.mrb[0].mxu0
  %v1184 = vpop.f32.mrb[0].mxu0
  %v1185 = vadd.f32 0.0, %v1184
  %v1186 = vpop.f32.mrb[0].mxu0
  %1187 = vmatprep.mubr.bf16.mxu0 0
  %1188 = vmatmul.mubr.bf16.gmra.mrb[0].mxu0 %v664
  %v1189 = vpop.f32.mrb[0].mxu0
  %v1190 = vadd.f32 0.0, %v1189
  %v1191 = vpop.f32.mrb[0].mxu0
  %v1192 = vpop.f32.mrb[0].mxu0
  %v1193 = vadd.f32 0.0, %v1192
  %v1194 = vpop.f32.mrb[0].mxu0
  %1195 = vmatprep.mubr.bf16.mxu0 0
  %1196 = vmatmul.mubr.bf16.gmra.mrb[0].mxu0 %v667
  %v1197 = vpop.f32.mrb[0].mxu0
  %v1198 = vadd.f32 0.0, %v1197
  %v1199 = vpop.f32.mrb[0].mxu0
  %v1200 = vpop.f32.mrb[0].mxu0
  %v1201 = vadd.f32 0.0, %v1200
  %v1202 = vpop.f32.mrb[0].mxu0
  %1203 = vmatprep.mubr.bf16.mxu0 0
  %1204 = vmatmul.mubr.bf16.gmra.mrb[0].mxu0 %v670
  %v1205 = vpop.f32.mrb[0].mxu0
  %v1206 = vadd.f32 0.0, %v1205
  %v1207 = vpop.f32.mrb[0].mxu0
  %v1208 = vpop.f32.mrb[0].mxu0
  %v1209 = vadd.f32 0.0, %v1208
  %v1210 = vpop.f32.mrb[0].mxu0
  %1211 = vmatprep.mubr.bf16.mxu0 0
  %1212 = vmatmul.mubr.bf16.gmra.mrb[0].mxu0 %v673
  %v1213 = vpop.f32.mrb[0].mxu0
  %v1214 = vadd.f32 0.0, %v1213
  %v1215 = vpop.f32.mrb[0].mxu0
  %v1216 = vpop.f32.mrb[0].mxu0
  %v1217 = vadd.f32 0.0, %v1216
  %v1218 = vpop.f32.mrb[0].mxu0
  %1219 = vdwg.mxu0
  %1220 = vst.msk [vmem:[#allocation2] sm:$0xff] %vm482, %v710
  %1221 = vst.msk [vmem:[#allocation2 + $0x8] sm:$0xff] %vm482, %v713
  %1222 = vst.msk [vmem:[#allocation2 + $0x10] sm:$0xff] %vm482, %v718
  %1223 = vst.msk [vmem:[#allocation2 + $0x18] sm:$0xff] %vm482, %v721
  %1224 = vst.msk [vmem:[#allocation2 + $0x20] sm:$0xff] %vm482, %v726
  %1225 = vst.msk [vmem:[#allocation2 + $0x28] sm:$0xff] %vm482, %v729
  %1226 = vst.msk [vmem:[#allocation2 + $0x30] sm:$0xff] %vm482, %v734
  %1227 = vst.msk [vmem:[#allocation2 + $0x38] sm:$0xff] %vm482, %v737
  %1228 = vst.msk [vmem:[#allocation2 + $0x40] sm:$0xff] %vm482, %v742
  %1229 = vst.msk [vmem:[#allocation2 + $0x48] sm:$0xff] %vm482, %v745
  %1230 = vst.msk [vmem:[#allocation2 + $0x50] sm:$0xff] %vm482, %v750
  %1231 = vst.msk [vmem:[#allocation2 + $0x58] sm:$0xff] %vm482, %v753
  %1232 = vst.msk [vmem:[#allocation2 + $0x60] sm:$0xff] %vm482, %v758
  %1233 = vst.msk [vmem:[#allocation2 + $0x68] sm:$0xff] %vm482, %v761
  %1234 = vst.msk [vmem:[#allocation2 + $0x70] sm:$0xff] %vm482, %v766
  %1235 = vst.msk [vmem:[#allocation2 + $0x78] sm:$0xff] %vm482, %v769
  %1236 = vst.msk [vmem:[#allocation2 + $0x80] sm:$0xff] %vm482, %v774
  %1237 = vst.msk [vmem:[#allocation2 + $0x88] sm:$0xff] %vm482, %v777
  %1238 = vst.msk [vmem:[#allocation2 + $0x90] sm:$0xff] %vm482, %v782
  %1239 = vst.msk [vmem:[#allocation2 + $0x98] sm:$0xff] %vm482, %v785
  %1240 = vst.msk [vmem:[#allocation2 + $0xa0] sm:$0xff] %vm482, %v790
  %1241 = vst.msk [vmem:[#allocation2 + $0xa8] sm:$0xff] %vm482, %v793
  %1242 = vst.msk [vmem:[#allocation2 + $0xb0] sm:$0xff] %vm482, %v798
  %1243 = vst.msk [vmem:[#allocation2 + $0xb8] sm:$0xff] %vm482, %v801
  %1244 = vst.msk [vmem:[#allocation2 + $0xc0] sm:$0xff] %vm482, %v806
  %1245 = vst.msk [vmem:[#allocation2 + $0xc8] sm:$0xff] %vm482, %v809
  %1246 = vst.msk [vmem:[#allocation2 + $0xd0] sm:$0xff] %vm482, %v814
  %1247 = vst.msk [vmem:[#allocation2 + $0xd8] sm:$0xff] %vm482, %v817
  %1248 = vst.msk [vmem:[#allocation2 + $0xe0] sm:$0xff] %vm482, %v822
  %1249 = vst.msk [vmem:[#allocation2 + $0xe8] sm:$0xff] %vm482, %v825
  %1250 = vst.msk [vmem:[#allocation2 + $0xf0] sm:$0xff] %vm482, %v830
  %1251 = vst.msk [vmem:[#allocation2 + $0xf8] sm:$0xff] %vm482, %v833
  %1252 = vst.msk [vmem:[#allocation2 + $0x100] sm:$0xff] %vm482, %v838
  %1253 = vst.msk [vmem:[#allocation2 + $0x108] sm:$0xff] %vm482, %v841
  %1254 = vst.msk [vmem:[#allocation2 + $0x110] sm:$0xff] %vm482, %v846
  %1255 = vst.msk [vmem:[#allocation2 + $0x118] sm:$0xff] %vm482, %v849
  %1256 = vst.msk [vmem:[#allocation2 + $0x120] sm:$0xff] %vm482, %v854
  %1257 = vst.msk [vmem:[#allocation2 + $0x128] sm:$0xff] %vm482, %v857
  %1258 = vst.msk [vmem:[#allocation2 + $0x130] sm:$0xff] %vm482, %v862
  %1259 = vst.msk [vmem:[#allocation2 + $0x138] sm:$0xff] %vm482, %v865
  %1260 = vst.msk [vmem:[#allocation2 + $0x140] sm:$0xff] %vm482, %v870
  %1261 = vst.msk [vmem:[#allocation2 + $0x148] sm:$0xff] %vm482, %v873
  %1262 = vst.msk [vmem:[#allocation2 + $0x150] sm:$0xff] %vm482, %v878
  %1263 = vst.msk [vmem:[#allocation2 + $0x158] sm:$0xff] %vm482, %v881
  %1264 = vst.msk [vmem:[#allocation2 + $0x160] sm:$0xff] %vm482, %v886
  %1265 = vst.msk [vmem:[#allocation2 + $0x168] sm:$0xff] %vm482, %v889
  %1266 = vst.msk [vmem:[#allocation2 + $0x170] sm:$0xff] %vm482, %v894
  %1267 = vst.msk [vmem:[#allocation2 + $0x178] sm:$0xff] %vm482, %v897
  %1268 = vst.msk [vmem:[#allocation2 + $0x180] sm:$0xff] %vm482, %v902
  %1269 = vst.msk [vmem:[#allocation2 + $0x188] sm:$0xff] %vm482, %v905
  %1270 = vst.msk [vmem:[#allocation2 + $0x190] sm:$0xff] %vm482, %v910
  %1271 = vst.msk [vmem:[#allocation2 + $0x198] sm:$0xff] %vm482, %v913
  %1272 = vst.msk [vmem:[#allocation2 + $0x1a0] sm:$0xff] %vm482, %v918
  %1273 = vst.msk [vmem:[#allocation2 + $0x1a8] sm:$0xff] %vm482, %v921
  %1274 = vst.msk [vmem:[#allocation2 + $0x1b0] sm:$0xff] %vm482, %v926
  %1275 = vst.msk [vmem:[#allocation2 + $0x1b8] sm:$0xff] %vm482, %v929
  %1276 = vst.msk [vmem:[#allocation2 + $0x1c0] sm:$0xff] %vm482, %v934
  %1277 = vst.msk [vmem:[#allocation2 + $0x1c8] sm:$0xff] %vm482, %v937
  %1278 = vst.msk [vmem:[#allocation2 + $0x1d0] sm:$0xff] %vm482, %v942
  %1279 = vst.msk [vmem:[#allocation2 + $0x1d8] sm:$0xff] %vm482, %v945
  %1280 = vst.msk [vmem:[#allocation2 + $0x1e0] sm:$0xff] %vm482, %v950
  %1281 = vst.msk [vmem:[#allocation2 + $0x1e8] sm:$0xff] %vm482, %v953
  %1282 = vst.msk [vmem:[#allocation2 + $0x1f0] sm:$0xff] %vm482, %v958
  %1283 = vst.msk [vmem:[#allocation2 + $0x1f8] sm:$0xff] %vm482, %v961
  %1284 = vst.msk [vmem:[#allocation2 + $0x200] sm:$0xff] %vm482, %v966
  %1285 = vst.msk [vmem:[#allocation2 + $0x208] sm:$0xff] %vm482, %v969
  %1286 = vst.msk [vmem:[#allocation2 + $0x210] sm:$0xff] %vm482, %v974
  %1287 = vst.msk [vmem:[#allocation2 + $0x218] sm:$0xff] %vm482, %v977
  %1288 = vst.msk [vmem:[#allocation2 + $0x220] sm:$0xff] %vm482, %v982
  %1289 = vst.msk [vmem:[#allocation2 + $0x228] sm:$0xff] %vm482, %v985
  %1290 = vst.msk [vmem:[#allocation2 + $0x230] sm:$0xff] %vm482, %v990
  %1291 = vst.msk [vmem:[#allocation2 + $0x238] sm:$0xff] %vm482, %v993
  %1292 = vst.msk [vmem:[#allocation2 + $0x240] sm:$0xff] %vm482, %v998
  %1293 = vst.msk [vmem:[#allocation2 + $0x248] sm:$0xff] %vm482, %v1001
  %1294 = vst.msk [vmem:[#allocation2 + $0x250] sm:$0xff] %vm482, %v1006
  %1295 = vst.msk [vmem:[#allocation2 + $0x258] sm:$0xff] %vm482, %v1009
  %1296 = vst.msk [vmem:[#allocation2 + $0x260] sm:$0xff] %vm482, %v1014
  %1297 = vst.msk [vmem:[#allocation2 + $0x268] sm:$0xff] %vm482, %v1017
  %1298 = vst.msk [vmem:[#allocation2 + $0x270] sm:$0xff] %vm482, %v1022
  %1299 = vst.msk [vmem:[#allocation2 + $0x278] sm:$0xff] %vm482, %v1025
  %1300 = vst.msk [vmem:[#allocation2 + $0x280] sm:$0xff] %vm482, %v1030
  %1301 = vst.msk [vmem:[#allocation2 + $0x288] sm:$0xff] %vm482, %v1033
  %1302 = vst.msk [vmem:[#allocation2 + $0x290] sm:$0xff] %vm482, %v1038
  %1303 = vst.msk [vmem:[#allocation2 + $0x298] sm:$0xff] %vm482, %v1041
  %1304 = vst.msk [vmem:[#allocation2 + $0x2a0] sm:$0xff] %vm482, %v1046
  %1305 = vst.msk [vmem:[#allocation2 + $0x2a8] sm:$0xff] %vm482, %v1049
  %1306 = vst.msk [vmem:[#allocation2 + $0x2b0] sm:$0xff] %vm482, %v1054
  %1307 = vst.msk [vmem:[#allocation2 + $0x2b8] sm:$0xff] %vm482, %v1057
  %1308 = vst.msk [vmem:[#allocation2 + $0x2c0] sm:$0xff] %vm482, %v1062
  %1309 = vst.msk [vmem:[#allocation2 + $0x2c8] sm:$0xff] %vm482, %v1065
  %1310 = vst.msk [vmem:[#allocation2 + $0x2d0] sm:$0xff] %vm482, %v1070
  %1311 = vst.msk [vmem:[#allocation2 + $0x2d8] sm:$0xff] %vm482, %v1073
  %1312 = vst.msk [vmem:[#allocation2 + $0x2e0] sm:$0xff] %vm482, %v1078
  %1313 = vst.msk [vmem:[#allocation2 + $0x2e8] sm:$0xff] %vm482, %v1081
  %1314 = vst.msk [vmem:[#allocation2 + $0x2f0] sm:$0xff] %vm482, %v1086
  %1315 = vst.msk [vmem:[#allocation2 + $0x2f8] sm:$0xff] %vm482, %v1089
  %1316 = vst.msk [vmem:[#allocation2 + $0x300] sm:$0xff] %vm482, %v1094
  %1317 = vst.msk [vmem:[#allocation2 + $0x308] sm:$0xff] %vm482, %v1097
  %1318 = vst.msk [vmem:[#allocation2 + $0x310] sm:$0xff] %vm482, %v1102
  %1319 = vst.msk [vmem:[#allocation2 + $0x318] sm:$0xff] %vm482, %v1105
  %1320 = vst.msk [vmem:[#allocation2 + $0x320] sm:$0xff] %vm482, %v1110
  %1321 = vst.msk [vmem:[#allocation2 + $0x328] sm:$0xff] %vm482, %v1113
  %1322 = vst.msk [vmem:[#allocation2 + $0x330] sm:$0xff] %vm482, %v1118
  %1323 = vst.msk [vmem:[#allocation2 + $0x338] sm:$0xff] %vm482, %v1121
  %1324 = vst.msk [vmem:[#allocation2 + $0x340] sm:$0xff] %vm482, %v1126
  %1325 = vst.msk [vmem:[#allocation2 + $0x348] sm:$0xff] %vm482, %v1129
  %1326 = vst.msk [vmem:[#allocation2 + $0x350] sm:$0xff] %vm482, %v1134
  %1327 = vst.msk [vmem:[#allocation2 + $0x358] sm:$0xff] %vm482, %v1137
  %1328 = vst.msk [vmem:[#allocation2 + $0x360] sm:$0xff] %vm482, %v1142
  %1329 = vst.msk [vmem:[#allocation2 + $0x368] sm:$0xff] %vm482, %v1145
  %1330 = vst.msk [vmem:[#allocation2 + $0x370] sm:$0xff] %vm482, %v1150
  %1331 = vst.msk [vmem:[#allocation2 + $0x378] sm:$0xff] %vm482, %v1153
  %1332 = vst.msk [vmem:[#allocation2 + $0x380] sm:$0xff] %vm482, %v1158
  %1333 = vst.msk [vmem:[#allocation2 + $0x388] sm:$0xff] %vm482, %v1161
  %1334 = vst.msk [vmem:[#allocation2 + $0x390] sm:$0xff] %vm482, %v1166
  %1335 = vst.msk [vmem:[#allocation2 + $0x398] sm:$0xff] %vm482, %v1169
  %1336 = vst.msk [vmem:[#allocation2 + $0x3a0] sm:$0xff] %vm482, %v1174
  %1337 = vst.msk [vmem:[#allocation2 + $0x3a8] sm:$0xff] %vm482, %v1177
  %1338 = vst.msk [vmem:[#allocation2 + $0x3b0] sm:$0xff] %vm482, %v1182
  %1339 = vst.msk [vmem:[#allocation2 + $0x3b8] sm:$0xff] %vm482, %v1185
  %1340 = vst.msk [vmem:[#allocation2 + $0x3c0] sm:$0xff] %vm482, %v1190
  %1341 = vst.msk [vmem:[#allocation2 + $0x3c8] sm:$0xff] %vm482, %v1193
  %1342 = vst.msk [vmem:[#allocation2 + $0x3d0] sm:$0xff] %vm482, %v1198
  %1343 = vst.msk [vmem:[#allocation2 + $0x3d8] sm:$0xff] %vm482, %v1201
  %1344 = vst.msk [vmem:[#allocation2 + $0x3e0] sm:$0xff] %vm482, %v1206
  %1345 = vst.msk [vmem:[#allocation2 + $0x3e8] sm:$0xff] %vm482, %v1209
  %1346 = vst.msk [vmem:[#allocation2 + $0x3f0] sm:$0xff] %vm482, %v1214
  %1347 = vst.msk [vmem:[#allocation2 + $0x3f8] sm:$0xff] %vm482, %v1217
  %v1348 = vld [vmem:[%s3] sm:$0x1]
  %v1349 = vld [vmem:[%s1] sm:$0xf]
  %v1350 = vld [vmem:[%s1 + $0x4] sm:$0xf]
  %v1351 = vld [vmem:[%s1 + $0x8] sm:$0xf]
  %v1352 = vld [vmem:[%s1 + $0xc] sm:$0xf]
  %v1353 = vld [vmem:[%s1 + $0x10] sm:$0xf]
  %v1354 = vld [vmem:[%s1 + $0x14] sm:$0xf]
  %v1355 = vld [vmem:[%s1 + $0x18] sm:$0xf]
  %v1356 = vld [vmem:[%s1 + $0x1c] sm:$0xf]
  %v1365 = vunpack.c.l.b16 %v1349
  %v1366 = vunpack.c.l.b16 %v1350
  %v1367 = vunpack.c.l.b16 %v1351
  %v1368 = vunpack.c.l.b16 %v1352
  %v1369 = vunpack.c.l.b16 %v1353
  %v1370 = vunpack.c.l.b16 %v1354
  %v1371 = vunpack.c.l.b16 %v1355
  %v1372 = vunpack.c.l.b16 %v1356
  %v1373 = vpack.c.b16 %v1366, %v1365
  %v1374 = vpack.c.b16 %v1368, %v1367
  %v1375 = vpack.c.b16 %v1370, %v1369
  %v1376 = vpack.c.b16 %v1372, %v1371
  %v1378 = vsel %vm482, %v1373, 0
  %v1381 = vsel %vm482, %v1374, 0
  %v1384 = vsel %vm482, %v1375, 0
  %v1387 = vsel %vm482, %v1376, 0
  %1389 = vmatprep.subr.bf16.mxu0 0
  %1390 = vmatpush1.bf16.msra.mxu0 %v478
  %1391 = vmatprep.subr.bf16.mxu0 0
  %1392 = vmatpush1.bf16.msra.mxu0 %v479
  %1393 = vmatprep.subr.bf16.mxu0 0
  %1394 = vmatpush1.bf16.msra.mxu0 0
  %1395 = vmatprep.subr.bf16.mxu0 0
  %1396 = vmatpush1.bf16.msra.mxu0 0
  %1397 = vmatprep.subr.bf16.mxu0 0
  %1398 = vmatpush1.bf16.msra.mxu0 0
  %1399 = vmatprep.subr.bf16.mxu0 0
  %1400 = vmatpush1.bf16.msra.mxu0 0
  %1401 = vmatprep.subr.bf16.mxu0 0
  %1402 = vmatpush1.bf16.msra.mxu0 0
  %1403 = vmatprep.subr.bf16.mxu0 0
  %1404 = vmatpush1.bf16.msra.mxu0 0
  %1405 = vmatprep.subr.bf16.mxu0 0
  %1406 = vmatpush1.bf16.msra.mxu0 0
  %1407 = vmatprep.subr.bf16.mxu0 0
  %1408 = vmatpush1.bf16.msra.mxu0 0
  %1409 = vmatprep.subr.bf16.mxu0 0
  %1410 = vmatpush1.bf16.msra.mxu0 0
  %1411 = vmatprep.subr.bf16.mxu0 0
  %1412 = vmatpush1.bf16.msra.mxu0 0
  %1413 = vmatprep.subr.bf16.mxu0 0
  %1414 = vmatpush1.bf16.msra.mxu0 0
  %1415 = vmatprep.subr.bf16.mxu0 0
  %1416 = vmatpush1.bf16.msra.mxu0 0
  %1417 = vmatprep.subr.bf16.mxu0 0
  %1418 = vmatpush1.bf16.msra.mxu0 0
  %1419 = vmatprep.subr.bf16.mxu0 0
  %1420 = vmatpush1.bf16.msra.mxu0 0
  %1421 = vmatprep.mubr.bf16.mxu0 0
  %1422 = vmatmul.mubr.bf16.gmra.mrb[0].mxu0 %v1378
  %v1423 = vpop.f32.mrb[0].mxu0
  %v1424 = vadd.f32 0.0, %v1423
  %v1425 = vpop.f32.mrb[0].mxu0
  %v1426 = vpop.f32.mrb[0].mxu0
  %v1427 = vadd.f32 0.0, %v1426
  %v1428 = vpop.f32.mrb[0].mxu0
  %1429 = vmatprep.mubr.bf16.mxu0 0
  %1430 = vmatmul.mubr.bf16.gmra.mrb[0].mxu0 %v1381
  %v1431 = vpop.f32.mrb[0].mxu0
  %v1432 = vadd.f32 0.0, %v1431
  %v1433 = vpop.f32.mrb[0].mxu0
  %v1434 = vpop.f32.mrb[0].mxu0
  %v1435 = vadd.f32 0.0, %v1434
  %v1436 = vpop.f32.mrb[0].mxu0
  %1437 = vmatprep.mubr.bf16.mxu0 0
  %1438 = vmatmul.mubr.bf16.gmra.mrb[0].mxu0 %v1384
  %v1439 = vpop.f32.mrb[0].mxu0
  %v1440 = vadd.f32 0.0, %v1439
  %v1441 = vpop.f32.mrb[0].mxu0
  %v1442 = vpop.f32.mrb[0].mxu0
  %v1443 = vadd.f32 0.0, %v1442
  %v1444 = vpop.f32.mrb[0].mxu0
  %1445 = vmatprep.mubr.bf16.mxu0 0
  %1446 = vmatmul.mubr.bf16.gmra.mrb[0].mxu0 %v1387
  %v1447 = vpop.f32.mrb[0].mxu0
  %v1448 = vadd.f32 0.0, %v1447
  %v1449 = vpop.f32.mrb[0].mxu0
  %v1450 = vpop.f32.mrb[0].mxu0
  %v1451 = vadd.f32 0.0, %v1450
  %v1452 = vpop.f32.mrb[0].mxu0
  %1453 = vdwg.mxu0
  %v1455 = vlaneseq
  %v1456 = vshrl.u32 %v1455, 7
  %v1457 = vsub.s32 0, %v1456
  %v1458 = vrot.slane %v1348, %v1457
  %v1460 = vsub.f32 %v1458, %v1424
  %v1461 = vsub.f32 %v1458, %v1427
  %v1462 = vsub.f32 %v1458, %v1432
  %v1463 = vsub.f32 %v1458, %v1435
  %v1464 = vsub.f32 %v1458, %v1440
  %v1465 = vsub.f32 %v1458, %v1443
  %v1466 = vsub.f32 %v1458, %v1448
  %v1467 = vsub.f32 %v1458, %v1451
  %v1468 = vld [vmem:[#allocation2] sm:$0xff]
  %v1469 = vld [vmem:[#allocation2 + $0x8] sm:$0xff]
  %v1470 = vld [vmem:[#allocation2 + $0x10] sm:$0xff]
  %v1471 = vld [vmem:[#allocation2 + $0x18] sm:$0xff]
  %v1472 = vld [vmem:[#allocation2 + $0x20] sm:$0xff]
  %v1473 = vld [vmem:[#allocation2 + $0x28] sm:$0xff]
  %v1474 = vld [vmem:[#allocation2 + $0x30] sm:$0xff]
  %v1475 = vld [vmem:[#allocation2 + $0x38] sm:$0xff]
  %v1476 = vld [vmem:[#allocation2 + $0x40] sm:$0xff]
  %v1477 = vld [vmem:[#allocation2 + $0x48] sm:$0xff]
  %v1478 = vld [vmem:[#allocation2 + $0x50] sm:$0xff]
  %v1479 = vld [vmem:[#allocation2 + $0x58] sm:$0xff]
  %v1480 = vld [vmem:[#allocation2 + $0x60] sm:$0xff]
  %v1481 = vld [vmem:[#allocation2 + $0x68] sm:$0xff]
  %v1482 = vld [vmem:[#allocation2 + $0x70] sm:$0xff]
  %v1483 = vld [vmem:[#allocation2 + $0x78] sm:$0xff]
  %v1484 = vmax.f32 %v1468, %v1476
  %v1485 = vmax.f32 %v1469, %v1477
  %v1486 = vmax.f32 %v1470, %v1478
  %v1487 = vmax.f32 %v1471, %v1479
  %v1488 = vmax.f32 %v1472, %v1480
  %v1489 = vmax.f32 %v1473, %v1481
  %v1490 = vmax.f32 %v1474, %v1482
  %v1491 = vmax.f32 %v1475, %v1483
  %v1492 = vld [vmem:[#allocation2 + $0x80] sm:$0xff]
  %v1493 = vld [vmem:[#allocation2 + $0x88] sm:$0xff]
  %v1494 = vld [vmem:[#allocation2 + $0x90] sm:$0xff]
  %v1495 = vld [vmem:[#allocation2 + $0x98] sm:$0xff]
  %v1496 = vld [vmem:[#allocation2 + $0xa0] sm:$0xff]
  %v1497 = vld [vmem:[#allocation2 + $0xa8] sm:$0xff]
  %v1498 = vld [vmem:[#allocation2 + $0xb0] sm:$0xff]
  %v1499 = vld [vmem:[#allocation2 + $0xb8] sm:$0xff]
  %v1500 = vmax.f32 %v1484, %v1492
  %v1501 = vmax.f32 %v1485, %v1493
  %v1502 = vmax.f32 %v1486, %v1494
  %v1503 = vmax.f32 %v1487, %v1495
  %v1504 = vmax.f32 %v1488, %v1496
  %v1505 = vmax.f32 %v1489, %v1497
  %v1506 = vmax.f32 %v1490, %v1498
  %v1507 = vmax.f32 %v1491, %v1499
  %v1508 = vld [vmem:[#allocation2 + $0xc0] sm:$0xff]
  %v1509 = vld [vmem:[#allocation2 + $0xc8] sm:$0xff]
  %v1510 = vld [vmem:[#allocation2 + $0xd0] sm:$0xff]
  %v1511 = vld [vmem:[#allocation2 + $0xd8] sm:$0xff]
  %v1512 = vld [vmem:[#allocation2 + $0xe0] sm:$0xff]
  %v1513 = vld [vmem:[#allocation2 + $0xe8] sm:$0xff]
  %v1514 = vld [vmem:[#allocation2 + $0xf0] sm:$0xff]
  %v1515 = vld [vmem:[#allocation2 + $0xf8] sm:$0xff]
  %v1516 = vmax.f32 %v1500, %v1508
  %v1517 = vmax.f32 %v1501, %v1509
  %v1518 = vmax.f32 %v1502, %v1510
  %v1519 = vmax.f32 %v1503, %v1511
  %v1520 = vmax.f32 %v1504, %v1512
  %v1521 = vmax.f32 %v1505, %v1513
  %v1522 = vmax.f32 %v1506, %v1514
  %v1523 = vmax.f32 %v1507, %v1515
  %v1524 = vld [vmem:[#allocation2 + $0x100] sm:$0xff]
  %v1525 = vld [vmem:[#allocation2 + $0x108] sm:$0xff]
  %v1526 = vld [vmem:[#allocation2 + $0x110] sm:$0xff]
  %v1527 = vld [vmem:[#allocation2 + $0x118] sm:$0xff]
  %v1528 = vld [vmem:[#allocation2 + $0x120] sm:$0xff]
  %v1529 = vld [vmem:[#allocation2 + $0x128] sm:$0xff]
  %v1530 = vld [vmem:[#allocation2 + $0x130] sm:$0xff]
  %v1531 = vld [vmem:[#allocation2 + $0x138] sm:$0xff]
  %v1532 = vmax.f32 %v1516, %v1524
  %v1533 = vmax.f32 %v1517, %v1525
  %v1534 = vmax.f32 %v1518, %v1526
  %v1535 = vmax.f32 %v1519, %v1527
  %v1536 = vmax.f32 %v1520, %v1528
  %v1537 = vmax.f32 %v1521, %v1529
  %v1538 = vmax.f32 %v1522, %v1530
  %v1539 = vmax.f32 %v1523, %v1531
  %v1540 = vld [vmem:[#allocation2 + $0x140] sm:$0xff]
  %v1541 = vld [vmem:[#allocation2 + $0x148] sm:$0xff]
  %v1542 = vld [vmem:[#allocation2 + $0x150] sm:$0xff]
  %v1543 = vld [vmem:[#allocation2 + $0x158] sm:$0xff]
  %v1544 = vld [vmem:[#allocation2 + $0x160] sm:$0xff]
  %v1545 = vld [vmem:[#allocation2 + $0x168] sm:$0xff]
  %v1546 = vld [vmem:[#allocation2 + $0x170] sm:$0xff]
  %v1547 = vld [vmem:[#allocation2 + $0x178] sm:$0xff]
  %v1548 = vmax.f32 %v1532, %v1540
  %v1549 = vmax.f32 %v1533, %v1541
  %v1550 = vmax.f32 %v1534, %v1542
  %v1551 = vmax.f32 %v1535, %v1543
  %v1552 = vmax.f32 %v1536, %v1544
  %v1553 = vmax.f32 %v1537, %v1545
  %v1554 = vmax.f32 %v1538, %v1546
  %v1555 = vmax.f32 %v1539, %v1547
  %v1556 = vld [vmem:[#allocation2 + $0x180] sm:$0xff]
  %v1557 = vld [vmem:[#allocation2 + $0x188] sm:$0xff]
  %v1558 = vld [vmem:[#allocation2 + $0x190] sm:$0xff]
  %v1559 = vld [vmem:[#allocation2 + $0x198] sm:$0xff]
  %v1560 = vld [vmem:[#allocation2 + $0x1a0] sm:$0xff]
  %v1561 = vld [vmem:[#allocation2 + $0x1a8] sm:$0xff]
  %v1562 = vld [vmem:[#allocation2 + $0x1b0] sm:$0xff]
  %v1563 = vld [vmem:[#allocation2 + $0x1b8] sm:$0xff]
  %v1564 = vmax.f32 %v1548, %v1556
  %v1565 = vmax.f32 %v1549, %v1557
  %v1566 = vmax.f32 %v1550, %v1558
  %v1567 = vmax.f32 %v1551, %v1559
  %v1568 = vmax.f32 %v1552, %v1560
  %v1569 = vmax.f32 %v1553, %v1561
  %v1570 = vmax.f32 %v1554, %v1562
  %v1571 = vmax.f32 %v1555, %v1563
  %v1572 = vld [vmem:[#allocation2 + $0x1c0] sm:$0xff]
  %v1573 = vld [vmem:[#allocation2 + $0x1c8] sm:$0xff]
  %v1574 = vld [vmem:[#allocation2 + $0x1d0] sm:$0xff]
  %v1575 = vld [vmem:[#allocation2 + $0x1d8] sm:$0xff]
  %v1576 = vld [vmem:[#allocation2 + $0x1e0] sm:$0xff]
  %v1577 = vld [vmem:[#allocation2 + $0x1e8] sm:$0xff]
  %v1578 = vld [vmem:[#allocation2 + $0x1f0] sm:$0xff]
  %v1579 = vld [vmem:[#allocation2 + $0x1f8] sm:$0xff]
  %v1580 = vmax.f32 %v1564, %v1572
  %v1581 = vmax.f32 %v1565, %v1573
  %v1582 = vmax.f32 %v1566, %v1574
  %v1583 = vmax.f32 %v1567, %v1575
  %v1584 = vmax.f32 %v1568, %v1576
  %v1585 = vmax.f32 %v1569, %v1577
  %v1586 = vmax.f32 %v1570, %v1578
  %v1587 = vmax.f32 %v1571, %v1579
  %v1588 = vld [vmem:[#allocation2 + $0x200] sm:$0xff]
  %v1589 = vld [vmem:[#allocation2 + $0x208] sm:$0xff]
  %v1590 = vld [vmem:[#allocation2 + $0x210] sm:$0xff]
  %v1591 = vld [vmem:[#allocation2 + $0x218] sm:$0xff]
  %v1592 = vld [vmem:[#allocation2 + $0x220] sm:$0xff]
  %v1593 = vld [vmem:[#allocation2 + $0x228] sm:$0xff]
  %v1594 = vld [vmem:[#allocation2 + $0x230] sm:$0xff]
  %v1595 = vld [vmem:[#allocation2 + $0x238] sm:$0xff]
  %v1596 = vmax.f32 %v1580, %v1588
  %v1597 = vmax.f32 %v1581, %v1589
  %v1598 = vmax.f32 %v1582, %v1590
  %v1599 = vmax.f32 %v1583, %v1591
  %v1600 = vmax.f32 %v1584, %v1592
  %v1601 = vmax.f32 %v1585, %v1593
  %v1602 = vmax.f32 %v1586, %v1594
  %v1603 = vmax.f32 %v1587, %v1595
  %v1604 = vld [vmem:[#allocation2 + $0x240] sm:$0xff]
  %v1605 = vld [vmem:[#allocation2 + $0x248] sm:$0xff]
  %v1606 = vld [vmem:[#allocation2 + $0x250] sm:$0xff]
  %v1607 = vld [vmem:[#allocation2 + $0x258] sm:$0xff]
  %v1608 = vld [vmem:[#allocation2 + $0x260] sm:$0xff]
  %v1609 = vld [vmem:[#allocation2 + $0x268] sm:$0xff]
  %v1610 = vld [vmem:[#allocation2 + $0x270] sm:$0xff]
  %v1611 = vld [vmem:[#allocation2 + $0x278] sm:$0xff]
  %v1612 = vmax.f32 %v1596, %v1604
  %v1613 = vmax.f32 %v1597, %v1605
  %v1614 = vmax.f32 %v1598, %v1606
  %v1615 = vmax.f32 %v1599, %v1607
  %v1616 = vmax.f32 %v1600, %v1608
  %v1617 = vmax.f32 %v1601, %v1609
  %v1618 = vmax.f32 %v1602, %v1610
  %v1619 = vmax.f32 %v1603, %v1611
  %v1620 = vld [vmem:[#allocation2 + $0x280] sm:$0xff]
  %v1621 = vld [vmem:[#allocation2 + $0x288] sm:$0xff]
  %v1622 = vld [vmem:[#allocation2 + $0x290] sm:$0xff]
  %v1623 = vld [vmem:[#allocation2 + $0x298] sm:$0xff]
  %v1624 = vld [vmem:[#allocation2 + $0x2a0] sm:$0xff]
  %v1625 = vld [vmem:[#allocation2 + $0x2a8] sm:$0xff]
  %v1626 = vld [vmem:[#allocation2 + $0x2b0] sm:$0xff]
  %v1627 = vld [vmem:[#allocation2 + $0x2b8] sm:$0xff]
  %v1628 = vmax.f32 %v1612, %v1620
  %v1629 = vmax.f32 %v1613, %v1621
  %v1630 = vmax.f32 %v1614, %v1622
  %v1631 = vmax.f32 %v1615, %v1623
  %v1632 = vmax.f32 %v1616, %v1624
  %v1633 = vmax.f32 %v1617, %v1625
  %v1634 = vmax.f32 %v1618, %v1626
  %v1635 = vmax.f32 %v1619, %v1627
  %v1636 = vld [vmem:[#allocation2 + $0x2c0] sm:$0xff]
  %v1637 = vld [vmem:[#allocation2 + $0x2c8] sm:$0xff]
  %v1638 = vld [vmem:[#allocation2 + $0x2d0] sm:$0xff]
  %v1639 = vld [vmem:[#allocation2 + $0x2d8] sm:$0xff]
  %v1640 = vld [vmem:[#allocation2 + $0x2e0] sm:$0xff]
  %v1641 = vld [vmem:[#allocation2 + $0x2e8] sm:$0xff]
  %v1642 = vld [vmem:[#allocation2 + $0x2f0] sm:$0xff]
  %v1643 = vld [vmem:[#allocation2 + $0x2f8] sm:$0xff]
  %v1644 = vmax.f32 %v1628, %v1636
  %v1645 = vmax.f32 %v1629, %v1637
  %v1646 = vmax.f32 %v1630, %v1638
  %v1647 = vmax.f32 %v1631, %v1639
  %v1648 = vmax.f32 %v1632, %v1640
  %v1649 = vmax.f32 %v1633, %v1641
  %v1650 = vmax.f32 %v1634, %v1642
  %v1651 = vmax.f32 %v1635, %v1643
  %v1652 = vld [vmem:[#allocation2 + $0x300] sm:$0xff]
  %v1653 = vld [vmem:[#allocation2 + $0x308] sm:$0xff]
  %v1654 = vld [vmem:[#allocation2 + $0x310] sm:$0xff]
  %v1655 = vld [vmem:[#allocation2 + $0x318] sm:$0xff]
  %v1656 = vld [vmem:[#allocation2 + $0x320] sm:$0xff]
  %v1657 = vld [vmem:[#allocation2 + $0x328] sm:$0xff]
  %v1658 = vld [vmem:[#allocation2 + $0x330] sm:$0xff]
  %v1659 = vld [vmem:[#allocation2 + $0x338] sm:$0xff]
  %v1660 = vmax.f32 %v1644, %v1652
  %v1661 = vmax.f32 %v1645, %v1653
  %v1662 = vmax.f32 %v1646, %v1654
  %v1663 = vmax.f32 %v1647, %v1655
  %v1664 = vmax.f32 %v1648, %v1656
  %v1665 = vmax.f32 %v1649, %v1657
  %v1666 = vmax.f32 %v1650, %v1658
  %v1667 = vmax.f32 %v1651, %v1659
  %v1668 = vld [vmem:[#allocation2 + $0x340] sm:$0xff]
  %v1669 = vld [vmem:[#allocation2 + $0x348] sm:$0xff]
  %v1670 = vld [vmem:[#allocation2 + $0x350] sm:$0xff]
  %v1671 = vld [vmem:[#allocation2 + $0x358] sm:$0xff]
  %v1672 = vld [vmem:[#allocation2 + $0x360] sm:$0xff]
  %v1673 = vld [vmem:[#allocation2 + $0x368] sm:$0xff]
  %v1674 = vld [vmem:[#allocation2 + $0x370] sm:$0xff]
  %v1675 = vld [vmem:[#allocation2 + $0x378] sm:$0xff]
  %v1676 = vmax.f32 %v1660, %v1668
  %v1677 = vmax.f32 %v1661, %v1669
  %v1678 = vmax.f32 %v1662, %v1670
  %v1679 = vmax.f32 %v1663, %v1671
  %v1680 = vmax.f32 %v1664, %v1672
  %v1681 = vmax.f32 %v1665, %v1673
  %v1682 = vmax.f32 %v1666, %v1674
  %v1683 = vmax.f32 %v1667, %v1675
  %v1684 = vld [vmem:[#allocation2 + $0x380] sm:$0xff]
  %v1685 = vld [vmem:[#allocation2 + $0x388] sm:$0xff]
  %v1686 = vld [vmem:[#allocation2 + $0x390] sm:$0xff]
  %v1687 = vld [vmem:[#allocation2 + $0x398] sm:$0xff]
  %v1688 = vld [vmem:[#allocation2 + $0x3a0] sm:$0xff]
  %v1689 = vld [vmem:[#allocation2 + $0x3a8] sm:$0xff]
  %v1690 = vld [vmem:[#allocation2 + $0x3b0] sm:$0xff]
  %v1691 = vld [vmem:[#allocation2 + $0x3b8] sm:$0xff]
  %v1692 = vmax.f32 %v1676, %v1684
  %v1693 = vmax.f32 %v1677, %v1685
  %v1694 = vmax.f32 %v1678, %v1686
  %v1695 = vmax.f32 %v1679, %v1687
  %v1696 = vmax.f32 %v1680, %v1688
  %v1697 = vmax.f32 %v1681, %v1689
  %v1698 = vmax.f32 %v1682, %v1690
  %v1699 = vmax.f32 %v1683, %v1691
  %v1700 = vld [vmem:[#allocation2 + $0x3c0] sm:$0xff]
  %v1701 = vld [vmem:[#allocation2 + $0x3c8] sm:$0xff]
  %v1702 = vld [vmem:[#allocation2 + $0x3d0] sm:$0xff]
  %v1703 = vld [vmem:[#allocation2 + $0x3d8] sm:$0xff]
  %v1704 = vld [vmem:[#allocation2 + $0x3e0] sm:$0xff]
  %v1705 = vld [vmem:[#allocation2 + $0x3e8] sm:$0xff]
  %v1706 = vld [vmem:[#allocation2 + $0x3f0] sm:$0xff]
  %v1707 = vld [vmem:[#allocation2 + $0x3f8] sm:$0xff]
  %v1708 = vmax.f32 %v1692, %v1700
  %v1709 = vmax.f32 %v1693, %v1701
  %v1710 = vmax.f32 %v1694, %v1702
  %v1711 = vmax.f32 %v1695, %v1703
  %v1712 = vmax.f32 %v1696, %v1704
  %v1713 = vmax.f32 %v1697, %v1705
  %v1714 = vmax.f32 %v1698, %v1706
  %v1715 = vmax.f32 %v1699, %v1707
  %v1716 = vadd.f32 %v1708, %v1460
  %v1717 = vadd.f32 %v1709, %v1461
  %v1718 = vadd.f32 %v1710, %v1462
  %v1719 = vadd.f32 %v1711, %v1463
  %v1720 = vadd.f32 %v1712, %v1464
  %v1721 = vadd.f32 %v1713, %v1465
  %v1722 = vadd.f32 %v1714, %v1466
  %v1723 = vadd.f32 %v1715, %v1467
  %v1724 = vmax.f32 %v1716, 0.0
  %v1725 = vmax.f32 %v1717, 0.0
  %v1726 = vmax.f32 %v1718, 0.0
  %v1727 = vmax.f32 %v1719, 0.0
  %v1728 = vmax.f32 %v1720, 0.0
  %v1729 = vmax.f32 %v1721, 0.0
  %v1730 = vmax.f32 %v1722, 0.0
  %v1731 = vmax.f32 %v1723, 0.0
  %v1732 = vpack.c.bf16 %v1725, %v1724
  %v1733 = vpack.c.bf16 %v1727, %v1726
  %v1734 = vpack.c.bf16 %v1729, %v1728
  %v1735 = vpack.c.bf16 %v1731, %v1730
  %v1740 = vunpack.c.l.b16 %v1732
  %v1741 = vunpack.c.h.b16 %v1732
  %v1742 = vunpack.c.l.b16 %v1733
  %v1743 = vunpack.c.h.b16 %v1733
  %v1744 = vunpack.c.l.b16 %v1734
  %v1745 = vunpack.c.h.b16 %v1734
  %v1746 = vunpack.c.l.b16 %v1735
  %v1747 = vunpack.c.h.b16 %v1735
  %v1748 = vpack.c.b16 %v1740, %v1740
  %v1749 = vpack.c.b16 %v1741, %v1741
  %v1750 = vpack.c.b16 %v1742, %v1742
  %v1751 = vpack.c.b16 %v1743, %v1743
  %v1752 = vpack.c.b16 %v1744, %v1744
  %v1753 = vpack.c.b16 %v1745, %v1745
  %v1754 = vpack.c.b16 %v1746, %v1746
  %v1755 = vpack.c.b16 %v1747, %v1747
  %vm1764 = vcmask 257024
  %1765 = vst.msk [vmem:[%s4] sm:$0xf] %vm1764, %v1748
  %1766 = vst.msk [vmem:[%s4 + $0x4] sm:$0xf] %vm1764, %v1749
  %1767 = vst.msk [vmem:[%s4 + $0x8] sm:$0xf] %vm1764, %v1750
  %1768 = vst.msk [vmem:[%s4 + $0xc] sm:$0xf] %vm1764, %v1751
  %1769 = vst.msk [vmem:[%s4 + $0x10] sm:$0xf] %vm1764, %v1752
  %1770 = vst.msk [vmem:[%s4 + $0x14] sm:$0xf] %vm1764, %v1753
  %1771 = vst.msk [vmem:[%s4 + $0x18] sm:$0xf] %vm1764, %v1754
  %1772 = vst.msk [vmem:[%s4 + $0x1c] sm:$0xf] %vm1764, %v1755
  // Predicated region
  $region18: #{point_transformer_cls_forward.5} parent=0 // pred_check
    _
  $region19: #{point_transformer_cls_forward.5} parent=0 // pred_check_branch
    %1774 = sbr.rel (0) target = $region21
  $region20: #{point_transformer_cls_forward.5} parent=0 // pred_region
    _
  $region21: #{point_transformer_cls_forward.5} parent=0 // pred_fallthru
    _
  // Predicated region
  $region22: #{point_transformer_cls_forward.5} parent=0 // pred_check
    _
  $region23: #{point_transformer_cls_forward.5} parent=0 // pred_check_branch
    %1776 = sbr.rel (0) target = $region25
  $region24: #{point_transformer_cls_forward.5} parent=0 // pred_region
    _
  $region25: #{point_transformer_cls_forward.5} parent=0 // pred_fallthru
    _

// kernel: custom-call.35
$region0: #{custom-call.35}
  %s0 = inlined_call_operand.vmem [shape: f32[2,16], index: 0, kind: output, shape index: {}]

// kernel: point_transformer_cls_forward.6
$region0: #{point_transformer_cls_forward.6}
  #allocation0 [shape = 'u32[]', space=smem, size = 0x4, offset = 0x4, fixed_abs, tag = 'smem constant byte address 0x4 - core index']
  #allocation1 [shape = 'u32[144,128]{1,0:T(1,128)}', space=vmem, size = 0x12000, scoped, tag = 'internal scratch']
  #allocation2 [shape = 'f32[512,64]{1,0:T(8,128)}', space=vmem, size = 0x40000, scoped, tag = 'scratch operand']
  %s0 = inlined_call_operand.vmem [shape: bf16[512,48], index: 0, kind: input, shape index: {}]
  %s1 = inlined_call_operand.vmem [shape: bf16[32,48], index: 1, kind: input, shape index: {}]
  %s2 = inlined_call_operand.vmem [shape: bf16[48,64], index: 2, kind: input, shape index: {}]
  %s3 = inlined_call_operand.vmem [shape: f32[1,64], index: 3, kind: input, shape index: {}]
  %s4 = inlined_call_operand.vmem [shape: bf16[32,64], index: 4, kind: output, shape index: {}]
  %s5 = sld [smem:[#allocation0]]
  $region26: #{point_transformer_cls_forward.6} parent=0
    _
  %s7 = ssub.s32 1, %s5
  %s8 = scalar_select 0, %s7, %s5
  // Predicated region
  $region2: #{point_transformer_cls_forward.6} parent=0 // pred_check
    _
  $region3: #{point_transformer_cls_forward.6} parent=0 // pred_check_branch
    %10 = sbr.rel (0) target = $region5
  $region4: #{point_transformer_cls_forward.6} parent=0 // pred_region
    _
  $region5: #{point_transformer_cls_forward.6} parent=0 // pred_fallthru
    _
  // Predicated region
  $region6: #{point_transformer_cls_forward.6} parent=0 // pred_check
    _
  $region7: #{point_transformer_cls_forward.6} parent=0 // pred_check_branch
    %12 = sbr.rel (0) target = $region9
  $region8: #{point_transformer_cls_forward.6} parent=0 // pred_region
    _
  $region9: #{point_transformer_cls_forward.6} parent=0 // pred_fallthru
    _
  // Predicated region
  $region10: #{point_transformer_cls_forward.6} parent=0 // pred_check
    _
  $region11: #{point_transformer_cls_forward.6} parent=0 // pred_check_branch
    %14 = sbr.rel (0) target = $region13
  $region12: #{point_transformer_cls_forward.6} parent=0 // pred_region
    _
  $region13: #{point_transformer_cls_forward.6} parent=0 // pred_fallthru
    _
  // Predicated region
  $region14: #{point_transformer_cls_forward.6} parent=0 // pred_check
    _
  $region15: #{point_transformer_cls_forward.6} parent=0 // pred_check_branch
    %16 = sbr.rel (0) target = $region17
  $region16: #{point_transformer_cls_forward.6} parent=0 // pred_region
    _
  $region17: #{point_transformer_cls_forward.6} parent=0 // pred_fallthru
    _
  %v18 = vld [vmem:[%s2] sm:$0xf]
  %v19 = vld [vmem:[%s2 + $0x4] sm:$0xf]
  %v20 = vld [vmem:[%s2 + $0x8] sm:$0xf]
  %v21 = vld [vmem:[%s2 + $0xc] sm:$0xf]
  %v22 = vld [vmem:[%s2 + $0x10] sm:$0xf]
  %v23 = vld [vmem:[%s2 + $0x14] sm:$0xf]
  %v24 = vld [vmem:[%s0] sm:$0xf]
  %v25 = vld [vmem:[%s0 + $0x4] sm:$0xf]
  %v26 = vld [vmem:[%s0 + $0x8] sm:$0xf]
  %v27 = vld [vmem:[%s0 + $0xc] sm:$0xf]
  %v28 = vld [vmem:[%s0 + $0x10] sm:$0xf]
  %v29 = vld [vmem:[%s0 + $0x14] sm:$0xf]
  %v30 = vld [vmem:[%s0 + $0x18] sm:$0xf]
  %v31 = vld [vmem:[%s0 + $0x1c] sm:$0xf]
  %v32 = vld [vmem:[%s0 + $0x20] sm:$0xf]
  %v33 = vld [vmem:[%s0 + $0x24] sm:$0xf]
  %v34 = vld [vmem:[%s0 + $0x28] sm:$0xf]
  %v35 = vld [vmem:[%s0 + $0x2c] sm:$0xf]
  %v36 = vld [vmem:[%s0 + $0x30] sm:$0xf]
  %v37 = vld [vmem:[%s0 + $0x34] sm:$0xf]
  %v38 = vld [vmem:[%s0 + $0x38] sm:$0xf]
  %v39 = vld [vmem:[%s0 + $0x3c] sm:$0xf]
  %v40 = vld [vmem:[%s0 + $0x40] sm:$0xf]
  %v41 = vld [vmem:[%s0 + $0x44] sm:$0xf]
  %v42 = vld [vmem:[%s0 + $0x48] sm:$0xf]
  %v43 = vld [vmem:[%s0 + $0x4c] sm:$0xf]
  %v44 = vld [vmem:[%s0 + $0x50] sm:$0xf]
  %v45 = vld [vmem:[%s0 + $0x54] sm:$0xf]
  %v46 = vld [vmem:[%s0 + $0x58] sm:$0xf]
  %v47 = vld [vmem:[%s0 + $0x5c] sm:$0xf]
  %v48 = vld [vmem:[%s0 + $0x60] sm:$0xf]
  %v49 = vld [vmem:[%s0 + $0x64] sm:$0xf]
  %v50 = vld [vmem:[%s0 + $0x68] sm:$0xf]
  %v51 = vld [vmem:[%s0 + $0x6c] sm:$0xf]
  %v52 = vld [vmem:[%s0 + $0x70] sm:$0xf]
  %v53 = vld [vmem:[%s0 + $0x74] sm:$0xf]
  %v54 = vld [vmem:[%s0 + $0x78] sm:$0xf]
  %v55 = vld [vmem:[%s0 + $0x7c] sm:$0xf]
  %v56 = vld [vmem:[%s0 + $0x80] sm:$0xf]
  %v57 = vld [vmem:[%s0 + $0x84] sm:$0xf]
  %v58 = vld [vmem:[%s0 + $0x88] sm:$0xf]
  %v59 = vld [vmem:[%s0 + $0x8c] sm:$0xf]
  %v60 = vld [vmem:[%s0 + $0x90] sm:$0xf]
  %v61 = vld [vmem:[%s0 + $0x94] sm:$0xf]
  %v62 = vld [vmem:[%s0 + $0x98] sm:$0xf]
  %v63 = vld [vmem:[%s0 + $0x9c] sm:$0xf]
  %v64 = vld [vmem:[%s0 + $0xa0] sm:$0xf]
  %v65 = vld [vmem:[%s0 + $0xa4] sm:$0xf]
  %v66 = vld [vmem:[%s0 + $0xa8] sm:$0xf]
  %v67 = vld [vmem:[%s0 + $0xac] sm:$0xf]
  %v68 = vld [vmem:[%s0 + $0xb0] sm:$0xf]
  %v69 = vld [vmem:[%s0 + $0xb4] sm:$0xf]
  %v70 = vld [vmem:[%s0 + $0xb8] sm:$0xf]
  %v71 = vld [vmem:[%s0 + $0xbc] sm:$0xf]
  %v72 = vld [vmem:[%s0 + $0xc0] sm:$0xf]
  %v73 = vld [vmem:[%s0 + $0xc4] sm:$0xf]
  %v74 = vld [vmem:[%s0 + $0xc8] sm:$0xf]
  %v75 = vld [vmem:[%s0 + $0xcc] sm:$0xf]
  %v76 = vld [vmem:[%s0 + $0xd0] sm:$0xf]
  %v77 = vld [vmem:[%s0 + $0xd4] sm:$0xf]
  %v78 = vld [vmem:[%s0 + $0xd8] sm:$0xf]
  %v79 = vld [vmem:[%s0 + $0xdc] sm:$0xf]
  %v80 = vld [vmem:[%s0 + $0xe0] sm:$0xf]
  %v81 = vld [vmem:[%s0 + $0xe4] sm:$0xf]
  %v82 = vld [vmem:[%s0 + $0xe8] sm:$0xf]
  %v83 = vld [vmem:[%s0 + $0xec] sm:$0xf]
  %v84 = vld [vmem:[%s0 + $0xf0] sm:$0xf]
  %v85 = vld [vmem:[%s0 + $0xf4] sm:$0xf]
  %v86 = vld [vmem:[%s0 + $0xf8] sm:$0xf]
  %v87 = vld [vmem:[%s0 + $0xfc] sm:$0xf]
  %v152 = vunpack.c.l.b16 %v24
  %v153 = vunpack.c.l.b16 %v25
  %v154 = vunpack.c.l.b16 %v26
  %v155 = vunpack.c.l.b16 %v27
  %v156 = vunpack.c.l.b16 %v28
  %v157 = vunpack.c.l.b16 %v29
  %v158 = vunpack.c.l.b16 %v30
  %v159 = vunpack.c.l.b16 %v31
  %v160 = vunpack.c.l.b16 %v32
  %v161 = vunpack.c.l.b16 %v33
  %v162 = vunpack.c.l.b16 %v34
  %v163 = vunpack.c.l.b16 %v35
  %v164 = vunpack.c.l.b16 %v36
  %v165 = vunpack.c.l.b16 %v37
  %v166 = vunpack.c.l.b16 %v38
  %v167 = vunpack.c.l.b16 %v39
  %v168 = vunpack.c.l.b16 %v40
  %v169 = vunpack.c.l.b16 %v41
  %v170 = vunpack.c.l.b16 %v42
  %v171 = vunpack.c.l.b16 %v43
  %v172 = vunpack.c.l.b16 %v44
  %v173 = vunpack.c.l.b16 %v45
  %v174 = vunpack.c.l.b16 %v46
  %v175 = vunpack.c.l.b16 %v47
  %v176 = vunpack.c.l.b16 %v48
  %v177 = vunpack.c.l.b16 %v49
  %v178 = vunpack.c.l.b16 %v50
  %v179 = vunpack.c.l.b16 %v51
  %v180 = vunpack.c.l.b16 %v52
  %v181 = vunpack.c.l.b16 %v53
  %v182 = vunpack.c.l.b16 %v54
  %v183 = vunpack.c.l.b16 %v55
  %v184 = vunpack.c.l.b16 %v56
  %v185 = vunpack.c.l.b16 %v57
  %v186 = vunpack.c.l.b16 %v58
  %v187 = vunpack.c.l.b16 %v59
  %v188 = vunpack.c.l.b16 %v60
  %v189 = vunpack.c.l.b16 %v61
  %v190 = vunpack.c.l.b16 %v62
  %v191 = vunpack.c.l.b16 %v63
  %v192 = vunpack.c.l.b16 %v64
  %v193 = vunpack.c.l.b16 %v65
  %v194 = vunpack.c.l.b16 %v66
  %v195 = vunpack.c.l.b16 %v67
  %v196 = vunpack.c.l.b16 %v68
  %v197 = vunpack.c.l.b16 %v69
  %v198 = vunpack.c.l.b16 %v70
  %v199 = vunpack.c.l.b16 %v71
  %v200 = vunpack.c.l.b16 %v72
  %v201 = vunpack.c.l.b16 %v73
  %v202 = vunpack.c.l.b16 %v74
  %v203 = vunpack.c.l.b16 %v75
  %v204 = vunpack.c.l.b16 %v76
  %v205 = vunpack.c.l.b16 %v77
  %v206 = vunpack.c.l.b16 %v78
  %v207 = vunpack.c.l.b16 %v79
  %v208 = vunpack.c.l.b16 %v80
  %v209 = vunpack.c.l.b16 %v81
  %v210 = vunpack.c.l.b16 %v82
  %v211 = vunpack.c.l.b16 %v83
  %v212 = vunpack.c.l.b16 %v84
  %v213 = vunpack.c.l.b16 %v85
  %v214 = vunpack.c.l.b16 %v86
  %v215 = vunpack.c.l.b16 %v87
  %v216 = vpack.c.b16 %v153, %v152
  %v217 = vpack.c.b16 %v155, %v154
  %v218 = vpack.c.b16 %v157, %v156
  %v219 = vpack.c.b16 %v159, %v158
  %v220 = vpack.c.b16 %v161, %v160
  %v221 = vpack.c.b16 %v163, %v162
  %v222 = vpack.c.b16 %v165, %v164
  %v223 = vpack.c.b16 %v167, %v166
  %v224 = vpack.c.b16 %v169, %v168
  %v225 = vpack.c.b16 %v171, %v170
  %v226 = vpack.c.b16 %v173, %v172
  %v227 = vpack.c.b16 %v175, %v174
  %v228 = vpack.c.b16 %v177, %v176
  %v229 = vpack.c.b16 %v179, %v178
  %v230 = vpack.c.b16 %v181, %v180
  %v231 = vpack.c.b16 %v183, %v182
  %v232 = vpack.c.b16 %v185, %v184
  %v233 = vpack.c.b16 %v187, %v186
  %v234 = vpack.c.b16 %v189, %v188
  %v235 = vpack.c.b16 %v191, %v190
  %v236 = vpack.c.b16 %v193, %v192
  %v237 = vpack.c.b16 %v195, %v194
  %v238 = vpack.c.b16 %v197, %v196
  %v239 = vpack.c.b16 %v199, %v198
  %v240 = vpack.c.b16 %v201, %v200
  %v241 = vpack.c.b16 %v203, %v202
  %v242 = vpack.c.b16 %v205, %v204
  %v243 = vpack.c.b16 %v207, %v206
  %v244 = vpack.c.b16 %v209, %v208
  %v245 = vpack.c.b16 %v211, %v210
  %v246 = vpack.c.b16 %v213, %v212
  %v247 = vpack.c.b16 %v215, %v214
  %v254 = vunpack.c.l.b16 %v18
  %v255 = vunpack.c.l.b16 %v19
  %v256 = vunpack.c.l.b16 %v20
  %v257 = vunpack.c.l.b16 %v21
  %v258 = vunpack.c.l.b16 %v22
  %v259 = vunpack.c.l.b16 %v23
  %v260 = vpack.c.b16 %v255, %v254
  %v261 = vpack.c.b16 %v257, %v256
  %v262 = vpack.c.b16 %v259, %v258
  %vm266 = vcmask 392192
  %v268 = vsel %vm266, %v216, 0
  %v271 = vsel %vm266, %v217, 0
  %v274 = vsel %vm266, %v218, 0
  %v277 = vsel %vm266, %v219, 0
  %v280 = vsel %vm266, %v220, 0
  %v283 = vsel %vm266, %v221, 0
  %v286 = vsel %vm266, %v222, 0
  %v289 = vsel %vm266, %v223, 0
  %v292 = vsel %vm266, %v224, 0
  %v295 = vsel %vm266, %v225, 0
  %v298 = vsel %vm266, %v226, 0
  %v301 = vsel %vm266, %v227, 0
  %v304 = vsel %vm266, %v228, 0
  %v307 = vsel %vm266, %v229, 0
  %v310 = vsel %vm266, %v230, 0
  %v313 = vsel %vm266, %v231, 0
  %v316 = vsel %vm266, %v232, 0
  %v319 = vsel %vm266, %v233, 0
  %v322 = vsel %vm266, %v234, 0
  %v325 = vsel %vm266, %v235, 0
  %v328 = vsel %vm266, %v236, 0
  %v331 = vsel %vm266, %v237, 0
  %v334 = vsel %vm266, %v238, 0
  %v337 = vsel %vm266, %v239, 0
  %v340 = vsel %vm266, %v240, 0
  %v343 = vsel %vm266, %v241, 0
  %v346 = vsel %vm266, %v242, 0
  %v349 = vsel %vm266, %v243, 0
  %v352 = vsel %vm266, %v244, 0
  %v355 = vsel %vm266, %v245, 0
  %v358 = vsel %vm266, %v246, 0
  %v361 = vsel %vm266, %v247, 0
  %363 = vmatprep.subr.bf16.mxu0 0
  %364 = vmatpush1.bf16.msra.mxu0 %v260
  %365 = vmatprep.subr.bf16.mxu0 0
  %366 = vmatpush1.bf16.msra.mxu0 %v261
  %367 = vmatprep.subr.bf16.mxu0 0
  %368 = vmatpush1.bf16.msra.mxu0 %v262
  %369 = vmatprep.subr.bf16.mxu0 0
  %370 = vmatpush1.bf16.msra.mxu0 0
  %371 = vmatprep.subr.bf16.mxu0 0
  %372 = vmatpush1.bf16.msra.mxu0 0
  %373 = vmatprep.subr.bf16.mxu0 0
  %374 = vmatpush1.bf16.msra.mxu0 0
  %375 = vmatprep.subr.bf16.mxu0 0
  %376 = vmatpush1.bf16.msra.mxu0 0
  %377 = vmatprep.subr.bf16.mxu0 0
  %378 = vmatpush1.bf16.msra.mxu0 0
  %379 = vmatprep.subr.bf16.mxu0 0
  %380 = vmatpush1.bf16.msra.mxu0 0
  %381 = vmatprep.subr.bf16.mxu0 0
  %382 = vmatpush1.bf16.msra.mxu0 0
  %383 = vmatprep.subr.bf16.mxu0 0
  %384 = vmatpush1.bf16.msra.mxu0 0
  %385 = vmatprep.subr.bf16.mxu0 0
  %386 = vmatpush1.bf16.msra.mxu0 0
  %387 = vmatprep.subr.bf16.mxu0 0
  %388 = vmatpush1.bf16.msra.mxu0 0
  %389 = vmatprep.subr.bf16.mxu0 0
  %390 = vmatpush1.bf16.msra.mxu0 0
  %391 = vmatprep.subr.bf16.mxu0 0
  %392 = vmatpush1.bf16.msra.mxu0 0
  %393 = vmatprep.subr.bf16.mxu0 0
  %394 = vmatpush1.bf16.msra.mxu0 0
  %395 = vmatprep.mubr.bf16.mxu0 0
  %396 = vmatmul.mubr.bf16.gmra.mrb[0].mxu0 %v268
  %v397 = vpop.f32.mrb[0].mxu0
  %v398 = vadd.f32 0.0, %v397
  %v399 = vpop.f32.mrb[0].mxu0
  %v400 = vpop.f32.mrb[0].mxu0
  %v401 = vadd.f32 0.0, %v400
  %v402 = vpop.f32.mrb[0].mxu0
  %403 = vmatprep.mubr.bf16.mxu0 0
  %404 = vmatmul.mubr.bf16.gmra.mrb[0].mxu0 %v271
  %v405 = vpop.f32.mrb[0].mxu0
  %v406 = vadd.f32 0.0, %v405
  %v407 = vpop.f32.mrb[0].mxu0
  %v408 = vpop.f32.mrb[0].mxu0
  %v409 = vadd.f32 0.0, %v408
  %v410 = vpop.f32.mrb[0].mxu0
  %411 = vmatprep.mubr.bf16.mxu0 0
  %412 = vmatmul.mubr.bf16.gmra.mrb[0].mxu0 %v274
  %v413 = vpop.f32.mrb[0].mxu0
  %v414 = vadd.f32 0.0, %v413
  %v415 = vpop.f32.mrb[0].mxu0
  %v416 = vpop.f32.mrb[0].mxu0
  %v417 = vadd.f32 0.0, %v416
  %v418 = vpop.f32.mrb[0].mxu0
  %419 = vmatprep.mubr.bf16.mxu0 0
  %420 = vmatmul.mubr.bf16.gmra.mrb[0].mxu0 %v277
  %v421 = vpop.f32.mrb[0].mxu0
  %v422 = vadd.f32 0.0, %v421
  %v423 = vpop.f32.mrb[0].mxu0
  %v424 = vpop.f32.mrb[0].mxu0
  %v425 = vadd.f32 0.0, %v424
  %v426 = vpop.f32.mrb[0].mxu0
  %427 = vmatprep.mubr.bf16.mxu0 0
  %428 = vmatmul.mubr.bf16.gmra.mrb[0].mxu0 %v280
  %v429 = vpop.f32.mrb[0].mxu0
  %v430 = vadd.f32 0.0, %v429
  %v431 = vpop.f32.mrb[0].mxu0
  %v432 = vpop.f32.mrb[0].mxu0
  %v433 = vadd.f32 0.0, %v432
  %v434 = vpop.f32.mrb[0].mxu0
  %435 = vmatprep.mubr.bf16.mxu0 0
  %436 = vmatmul.mubr.bf16.gmra.mrb[0].mxu0 %v283
  %v437 = vpop.f32.mrb[0].mxu0
  %v438 = vadd.f32 0.0, %v437
  %v439 = vpop.f32.mrb[0].mxu0
  %v440 = vpop.f32.mrb[0].mxu0
  %v441 = vadd.f32 0.0, %v440
  %v442 = vpop.f32.mrb[0].mxu0
  %443 = vmatprep.mubr.bf16.mxu0 0
  %444 = vmatmul.mubr.bf16.gmra.mrb[0].mxu0 %v286
  %v445 = vpop.f32.mrb[0].mxu0
  %v446 = vadd.f32 0.0, %v445
  %v447 = vpop.f32.mrb[0].mxu0
  %v448 = vpop.f32.mrb[0].mxu0
  %v449 = vadd.f32 0.0, %v448
  %v450 = vpop.f32.mrb[0].mxu0
  %451 = vmatprep.mubr.bf16.mxu0 0
  %452 = vmatmul.mubr.bf16.gmra.mrb[0].mxu0 %v289
  %v453 = vpop.f32.mrb[0].mxu0
  %v454 = vadd.f32 0.0, %v453
  %v455 = vpop.f32.mrb[0].mxu0
  %v456 = vpop.f32.mrb[0].mxu0
  %v457 = vadd.f32 0.0, %v456
  %v458 = vpop.f32.mrb[0].mxu0
  %459 = vmatprep.mubr.bf16.mxu0 0
  %460 = vmatmul.mubr.bf16.gmra.mrb[0].mxu0 %v292
  %v461 = vpop.f32.mrb[0].mxu0
  %v462 = vadd.f32 0.0, %v461
  %v463 = vpop.f32.mrb[0].mxu0
  %v464 = vpop.f32.mrb[0].mxu0
  %v465 = vadd.f32 0.0, %v464
  %v466 = vpop.f32.mrb[0].mxu0
  %467 = vmatprep.mubr.bf16.mxu0 0
  %468 = vmatmul.mubr.bf16.gmra.mrb[0].mxu0 %v295
  %v469 = vpop.f32.mrb[0].mxu0
  %v470 = vadd.f32 0.0, %v469
  %v471 = vpop.f32.mrb[0].mxu0
  %v472 = vpop.f32.mrb[0].mxu0
  %v473 = vadd.f32 0.0, %v472
  %v474 = vpop.f32.mrb[0].mxu0
  %475 = vmatprep.mubr.bf16.mxu0 0
  %476 = vmatmul.mubr.bf16.gmra.mrb[0].mxu0 %v298
  %v477 = vpop.f32.mrb[0].mxu0
  %v478 = vadd.f32 0.0, %v477
  %v479 = vpop.f32.mrb[0].mxu0
  %v480 = vpop.f32.mrb[0].mxu0
  %v481 = vadd.f32 0.0, %v480
  %v482 = vpop.f32.mrb[0].mxu0
  %483 = vmatprep.mubr.bf16.mxu0 0
  %484 = vmatmul.mubr.bf16.gmra.mrb[0].mxu0 %v301
  %v485 = vpop.f32.mrb[0].mxu0
  %v486 = vadd.f32 0.0, %v485
  %v487 = vpop.f32.mrb[0].mxu0
  %v488 = vpop.f32.mrb[0].mxu0
  %v489 = vadd.f32 0.0, %v488
  %v490 = vpop.f32.mrb[0].mxu0
  %491 = vmatprep.mubr.bf16.mxu0 0
  %492 = vmatmul.mubr.bf16.gmra.mrb[0].mxu0 %v304
  %v493 = vpop.f32.mrb[0].mxu0
  %v494 = vadd.f32 0.0, %v493
  %v495 = vpop.f32.mrb[0].mxu0
  %v496 = vpop.f32.mrb[0].mxu0
  %v497 = vadd.f32 0.0, %v496
  %v498 = vpop.f32.mrb[0].mxu0
  %499 = vmatprep.mubr.bf16.mxu0 0
  %500 = vmatmul.mubr.bf16.gmra.mrb[0].mxu0 %v307
  %v501 = vpop.f32.mrb[0].mxu0
  %v502 = vadd.f32 0.0, %v501
  %v503 = vpop.f32.mrb[0].mxu0
  %v504 = vpop.f32.mrb[0].mxu0
  %v505 = vadd.f32 0.0, %v504
  %v506 = vpop.f32.mrb[0].mxu0
  %507 = vmatprep.mubr.bf16.mxu0 0
  %508 = vmatmul.mubr.bf16.gmra.mrb[0].mxu0 %v310
  %v509 = vpop.f32.mrb[0].mxu0
  %v510 = vadd.f32 0.0, %v509
  %v511 = vpop.f32.mrb[0].mxu0
  %v512 = vpop.f32.mrb[0].mxu0
  %v513 = vadd.f32 0.0, %v512
  %v514 = vpop.f32.mrb[0].mxu0
  %515 = vmatprep.mubr.bf16.mxu0 0
  %516 = vmatmul.mubr.bf16.gmra.mrb[0].mxu0 %v313
  %v517 = vpop.f32.mrb[0].mxu0
  %v518 = vadd.f32 0.0, %v517
  %v519 = vpop.f32.mrb[0].mxu0
  %v520 = vpop.f32.mrb[0].mxu0
  %v521 = vadd.f32 0.0, %v520
  %v522 = vpop.f32.mrb[0].mxu0
  %523 = vmatprep.mubr.bf16.mxu0 0
  %524 = vmatmul.mubr.bf16.gmra.mrb[0].mxu0 %v316
  %v525 = vpop.f32.mrb[0].mxu0
  %v526 = vadd.f32 0.0, %v525
  %v527 = vpop.f32.mrb[0].mxu0
  %v528 = vpop.f32.mrb[0].mxu0
  %v529 = vadd.f32 0.0, %v528
  %v530 = vpop.f32.mrb[0].mxu0
  %531 = vmatprep.mubr.bf16.mxu0 0
  %532 = vmatmul.mubr.bf16.gmra.mrb[0].mxu0 %v319
  %v533 = vpop.f32.mrb[0].mxu0
  %v534 = vadd.f32 0.0, %v533
  %v535 = vpop.f32.mrb[0].mxu0
  %v536 = vpop.f32.mrb[0].mxu0
  %v537 = vadd.f32 0.0, %v536
  %v538 = vpop.f32.mrb[0].mxu0
  %539 = vmatprep.mubr.bf16.mxu0 0
  %540 = vmatmul.mubr.bf16.gmra.mrb[0].mxu0 %v322
  %v541 = vpop.f32.mrb[0].mxu0
  %v542 = vadd.f32 0.0, %v541
  %v543 = vpop.f32.mrb[0].mxu0
  %v544 = vpop.f32.mrb[0].mxu0
  %v545 = vadd.f32 0.0, %v544
  %v546 = vpop.f32.mrb[0].mxu0
  %547 = vmatprep.mubr.bf16.mxu0 0
  %548 = vmatmul.mubr.bf16.gmra.mrb[0].mxu0 %v325
  %v549 = vpop.f32.mrb[0].mxu0
  %v550 = vadd.f32 0.0, %v549
  %v551 = vpop.f32.mrb[0].mxu0
  %v552 = vpop.f32.mrb[0].mxu0
  %v553 = vadd.f32 0.0, %v552
  %v554 = vpop.f32.mrb[0].mxu0
  %555 = vmatprep.mubr.bf16.mxu0 0
  %556 = vmatmul.mubr.bf16.gmra.mrb[0].mxu0 %v328
  %v557 = vpop.f32.mrb[0].mxu0
  %v558 = vadd.f32 0.0, %v557
  %v559 = vpop.f32.mrb[0].mxu0
  %v560 = vpop.f32.mrb[0].mxu0
  %v561 = vadd.f32 0.0, %v560
  %v562 = vpop.f32.mrb[0].mxu0
  %563 = vmatprep.mubr.bf16.mxu0 0
  %564 = vmatmul.mubr.bf16.gmra.mrb[0].mxu0 %v331
  %v565 = vpop.f32.mrb[0].mxu0
  %v566 = vadd.f32 0.0, %v565
  %v567 = vpop.f32.mrb[0].mxu0
  %v568 = vpop.f32.mrb[0].mxu0
  %v569 = vadd.f32 0.0, %v568
  %v570 = vpop.f32.mrb[0].mxu0
  %571 = vmatprep.mubr.bf16.mxu0 0
  %572 = vmatmul.mubr.bf16.gmra.mrb[0].mxu0 %v334
  %v573 = vpop.f32.mrb[0].mxu0
  %v574 = vadd.f32 0.0, %v573
  %v575 = vpop.f32.mrb[0].mxu0
  %v576 = vpop.f32.mrb[0].mxu0
  %v577 = vadd.f32 0.0, %v576
  %v578 = vpop.f32.mrb[0].mxu0
  %579 = vmatprep.mubr.bf16.mxu0 0
  %580 = vmatmul.mubr.bf16.gmra.mrb[0].mxu0 %v337
  %v581 = vpop.f32.mrb[0].mxu0
  %v582 = vadd.f32 0.0, %v581
  %v583 = vpop.f32.mrb[0].mxu0
  %v584 = vpop.f32.mrb[0].mxu0
  %v585 = vadd.f32 0.0, %v584
  %v586 = vpop.f32.mrb[0].mxu0
  %587 = vmatprep.mubr.bf16.mxu0 0
  %588 = vmatmul.mubr.bf16.gmra.mrb[0].mxu0 %v340
  %v589 = vpop.f32.mrb[0].mxu0
  %v590 = vadd.f32 0.0, %v589
  %v591 = vpop.f32.mrb[0].mxu0
  %v592 = vpop.f32.mrb[0].mxu0
  %v593 = vadd.f32 0.0, %v592
  %v594 = vpop.f32.mrb[0].mxu0
  %595 = vmatprep.mubr.bf16.mxu0 0
  %596 = vmatmul.mubr.bf16.gmra.mrb[0].mxu0 %v343
  %v597 = vpop.f32.mrb[0].mxu0
  %v598 = vadd.f32 0.0, %v597
  %v599 = vpop.f32.mrb[0].mxu0
  %v600 = vpop.f32.mrb[0].mxu0
  %v601 = vadd.f32 0.0, %v600
  %v602 = vpop.f32.mrb[0].mxu0
  %603 = vmatprep.mubr.bf16.mxu0 0
  %604 = vmatmul.mubr.bf16.gmra.mrb[0].mxu0 %v346
  %v605 = vpop.f32.mrb[0].mxu0
  %v606 = vadd.f32 0.0, %v605
  %v607 = vpop.f32.mrb[0].mxu0
  %v608 = vpop.f32.mrb[0].mxu0
  %v609 = vadd.f32 0.0, %v608
  %v610 = vpop.f32.mrb[0].mxu0
  %611 = vmatprep.mubr.bf16.mxu0 0
  %612 = vmatmul.mubr.bf16.gmra.mrb[0].mxu0 %v349
  %v613 = vpop.f32.mrb[0].mxu0
  %v614 = vadd.f32 0.0, %v613
  %v615 = vpop.f32.mrb[0].mxu0
  %v616 = vpop.f32.mrb[0].mxu0
  %v617 = vadd.f32 0.0, %v616
  %v618 = vpop.f32.mrb[0].mxu0
  %619 = vmatprep.mubr.bf16.mxu0 0
  %620 = vmatmul.mubr.bf16.gmra.mrb[0].mxu0 %v352
  %v621 = vpop.f32.mrb[0].mxu0
  %v622 = vadd.f32 0.0, %v621
  %v623 = vpop.f32.mrb[0].mxu0
  %v624 = vpop.f32.mrb[0].mxu0
  %v625 = vadd.f32 0.0, %v624
  %v626 = vpop.f32.mrb[0].mxu0
  %627 = vmatprep.mubr.bf16.mxu0 0
  %628 = vmatmul.mubr.bf16.gmra.mrb[0].mxu0 %v355
  %v629 = vpop.f32.mrb[0].mxu0
  %v630 = vadd.f32 0.0, %v629
  %v631 = vpop.f32.mrb[0].mxu0
  %v632 = vpop.f32.mrb[0].mxu0
  %v633 = vadd.f32 0.0, %v632
  %v634 = vpop.f32.mrb[0].mxu0
  %635 = vmatprep.mubr.bf16.mxu0 0
  %636 = vmatmul.mubr.bf16.gmra.mrb[0].mxu0 %v358
  %v637 = vpop.f32.mrb[0].mxu0
  %v638 = vadd.f32 0.0, %v637
  %v639 = vpop.f32.mrb[0].mxu0
  %v640 = vpop.f32.mrb[0].mxu0
  %v641 = vadd.f32 0.0, %v640
  %v642 = vpop.f32.mrb[0].mxu0
  %643 = vmatprep.mubr.bf16.mxu0 0
  %644 = vmatmul.mubr.bf16.gmra.mrb[0].mxu0 %v361
  %v645 = vpop.f32.mrb[0].mxu0
  %v646 = vadd.f32 0.0, %v645
  %v647 = vpop.f32.mrb[0].mxu0
  %v648 = vpop.f32.mrb[0].mxu0
  %v649 = vadd.f32 0.0, %v648
  %v650 = vpop.f32.mrb[0].mxu0
  %651 = vdwg.mxu0
  %vm652 = vcmask 523264
  %653 = vst.msk [vmem:[#allocation2] sm:$0xff] %vm652, %v398
  %654 = vst.msk [vmem:[#allocation2 + $0x8] sm:$0xff] %vm652, %v401
  %655 = vst.msk [vmem:[#allocation2 + $0x10] sm:$0xff] %vm652, %v406
  %656 = vst.msk [vmem:[#allocation2 + $0x18] sm:$0xff] %vm652, %v409
  %657 = vst.msk [vmem:[#allocation2 + $0x20] sm:$0xff] %vm652, %v414
  %658 = vst.msk [vmem:[#allocation2 + $0x28] sm:$0xff] %vm652, %v417
  %659 = vst.msk [vmem:[#allocation2 + $0x30] sm:$0xff] %vm652, %v422
  %660 = vst.msk [vmem:[#allocation2 + $0x38] sm:$0xff] %vm652, %v425
  %661 = vst.msk [vmem:[#allocation2 + $0x40] sm:$0xff] %vm652, %v430
  %662 = vst.msk [vmem:[#allocation2 + $0x48] sm:$0xff] %vm652, %v433
  %663 = vst.msk [vmem:[#allocation2 + $0x50] sm:$0xff] %vm652, %v438
  %664 = vst.msk [vmem:[#allocation2 + $0x58] sm:$0xff] %vm652, %v441
  %665 = vst.msk [vmem:[#allocation2 + $0x60] sm:$0xff] %vm652, %v446
  %666 = vst.msk [vmem:[#allocation2 + $0x68] sm:$0xff] %vm652, %v449
  %667 = vst.msk [vmem:[#allocation2 + $0x70] sm:$0xff] %vm652, %v454
  %668 = vst.msk [vmem:[#allocation2 + $0x78] sm:$0xff] %vm652, %v457
  %669 = vst.msk [vmem:[#allocation2 + $0x80] sm:$0xff] %vm652, %v462
  %670 = vst.msk [vmem:[#allocation2 + $0x88] sm:$0xff] %vm652, %v465
  %671 = vst.msk [vmem:[#allocation2 + $0x90] sm:$0xff] %vm652, %v470
  %672 = vst.msk [vmem:[#allocation2 + $0x98] sm:$0xff] %vm652, %v473
  %673 = vst.msk [vmem:[#allocation2 + $0xa0] sm:$0xff] %vm652, %v478
  %674 = vst.msk [vmem:[#allocation2 + $0xa8] sm:$0xff] %vm652, %v481
  %675 = vst.msk [vmem:[#allocation2 + $0xb0] sm:$0xff] %vm652, %v486
  %676 = vst.msk [vmem:[#allocation2 + $0xb8] sm:$0xff] %vm652, %v489
  %677 = vst.msk [vmem:[#allocation2 + $0xc0] sm:$0xff] %vm652, %v494
  %678 = vst.msk [vmem:[#allocation2 + $0xc8] sm:$0xff] %vm652, %v497
  %679 = vst.msk [vmem:[#allocation2 + $0xd0] sm:$0xff] %vm652, %v502
  %680 = vst.msk [vmem:[#allocation2 + $0xd8] sm:$0xff] %vm652, %v505
  %681 = vst.msk [vmem:[#allocation2 + $0xe0] sm:$0xff] %vm652, %v510
  %682 = vst.msk [vmem:[#allocation2 + $0xe8] sm:$0xff] %vm652, %v513
  %683 = vst.msk [vmem:[#allocation2 + $0xf0] sm:$0xff] %vm652, %v518
  %684 = vst.msk [vmem:[#allocation2 + $0xf8] sm:$0xff] %vm652, %v521
  %685 = vst.msk [vmem:[#allocation2 + $0x100] sm:$0xff] %vm652, %v526
  %686 = vst.msk [vmem:[#allocation2 + $0x108] sm:$0xff] %vm652, %v529
  %687 = vst.msk [vmem:[#allocation2 + $0x110] sm:$0xff] %vm652, %v534
  %688 = vst.msk [vmem:[#allocation2 + $0x118] sm:$0xff] %vm652, %v537
  %689 = vst.msk [vmem:[#allocation2 + $0x120] sm:$0xff] %vm652, %v542
  %690 = vst.msk [vmem:[#allocation2 + $0x128] sm:$0xff] %vm652, %v545
  %691 = vst.msk [vmem:[#allocation2 + $0x130] sm:$0xff] %vm652, %v550
  %692 = vst.msk [vmem:[#allocation2 + $0x138] sm:$0xff] %vm652, %v553
  %693 = vst.msk [vmem:[#allocation2 + $0x140] sm:$0xff] %vm652, %v558
  %694 = vst.msk [vmem:[#allocation2 + $0x148] sm:$0xff] %vm652, %v561
  %695 = vst.msk [vmem:[#allocation2 + $0x150] sm:$0xff] %vm652, %v566
  %696 = vst.msk [vmem:[#allocation2 + $0x158] sm:$0xff] %vm652, %v569
  %697 = vst.msk [vmem:[#allocation2 + $0x160] sm:$0xff] %vm652, %v574
  %698 = vst.msk [vmem:[#allocation2 + $0x168] sm:$0xff] %vm652, %v577
  %699 = vst.msk [vmem:[#allocation2 + $0x170] sm:$0xff] %vm652, %v582
  %700 = vst.msk [vmem:[#allocation2 + $0x178] sm:$0xff] %vm652, %v585
  %701 = vst.msk [vmem:[#allocation2 + $0x180] sm:$0xff] %vm652, %v590
  %702 = vst.msk [vmem:[#allocation2 + $0x188] sm:$0xff] %vm652, %v593
  %703 = vst.msk [vmem:[#allocation2 + $0x190] sm:$0xff] %vm652, %v598
  %704 = vst.msk [vmem:[#allocation2 + $0x198] sm:$0xff] %vm652, %v601
  %705 = vst.msk [vmem:[#allocation2 + $0x1a0] sm:$0xff] %vm652, %v606
  %706 = vst.msk [vmem:[#allocation2 + $0x1a8] sm:$0xff] %vm652, %v609
  %707 = vst.msk [vmem:[#allocation2 + $0x1b0] sm:$0xff] %vm652, %v614
  %708 = vst.msk [vmem:[#allocation2 + $0x1b8] sm:$0xff] %vm652, %v617
  %709 = vst.msk [vmem:[#allocation2 + $0x1c0] sm:$0xff] %vm652, %v622
  %710 = vst.msk [vmem:[#allocation2 + $0x1c8] sm:$0xff] %vm652, %v625
  %711 = vst.msk [vmem:[#allocation2 + $0x1d0] sm:$0xff] %vm652, %v630
  %712 = vst.msk [vmem:[#allocation2 + $0x1d8] sm:$0xff] %vm652, %v633
  %713 = vst.msk [vmem:[#allocation2 + $0x1e0] sm:$0xff] %vm652, %v638
  %714 = vst.msk [vmem:[#allocation2 + $0x1e8] sm:$0xff] %vm652, %v641
  %715 = vst.msk [vmem:[#allocation2 + $0x1f0] sm:$0xff] %vm652, %v646
  %716 = vst.msk [vmem:[#allocation2 + $0x1f8] sm:$0xff] %vm652, %v649
  %v717 = vld [vmem:[%s3] sm:$0x1]
  %v718 = vld [vmem:[%s1] sm:$0xf]
  %v719 = vld [vmem:[%s1 + $0x4] sm:$0xf]
  %v720 = vld [vmem:[%s1 + $0x8] sm:$0xf]
  %v721 = vld [vmem:[%s1 + $0xc] sm:$0xf]
  %v726 = vunpack.c.l.b16 %v718
  %v727 = vunpack.c.l.b16 %v719
  %v728 = vunpack.c.l.b16 %v720
  %v729 = vunpack.c.l.b16 %v721
  %v730 = vpack.c.b16 %v727, %v726
  %v731 = vpack.c.b16 %v729, %v728
  %v733 = vsel %vm266, %v730, 0
  %v736 = vsel %vm266, %v731, 0
  %738 = vmatprep.subr.bf16.mxu0 0
  %739 = vmatpush1.bf16.msra.mxu0 %v260
  %740 = vmatprep.subr.bf16.mxu0 0
  %741 = vmatpush1.bf16.msra.mxu0 %v261
  %742 = vmatprep.subr.bf16.mxu0 0
  %743 = vmatpush1.bf16.msra.mxu0 %v262
  %744 = vmatprep.subr.bf16.mxu0 0
  %745 = vmatpush1.bf16.msra.mxu0 0
  %746 = vmatprep.subr.bf16.mxu0 0
  %747 = vmatpush1.bf16.msra.mxu0 0
  %748 = vmatprep.subr.bf16.mxu0 0
  %749 = vmatpush1.bf16.msra.mxu0 0
  %750 = vmatprep.subr.bf16.mxu0 0
  %751 = vmatpush1.bf16.msra.mxu0 0
  %752 = vmatprep.subr.bf16.mxu0 0
  %753 = vmatpush1.bf16.msra.mxu0 0
  %754 = vmatprep.subr.bf16.mxu0 0
  %755 = vmatpush1.bf16.msra.mxu0 0
  %756 = vmatprep.subr.bf16.mxu0 0
  %757 = vmatpush1.bf16.msra.mxu0 0
  %758 = vmatprep.subr.bf16.mxu0 0
  %759 = vmatpush1.bf16.msra.mxu0 0
  %760 = vmatprep.subr.bf16.mxu0 0
  %761 = vmatpush1.bf16.msra.mxu0 0
  %762 = vmatprep.subr.bf16.mxu0 0
  %763 = vmatpush1.bf16.msra.mxu0 0
  %764 = vmatprep.subr.bf16.mxu0 0
  %765 = vmatpush1.bf16.msra.mxu0 0
  %766 = vmatprep.subr.bf16.mxu0 0
  %767 = vmatpush1.bf16.msra.mxu0 0
  %768 = vmatprep.subr.bf16.mxu0 0
  %769 = vmatpush1.bf16.msra.mxu0 0
  %770 = vmatprep.mubr.bf16.mxu0 0
  %771 = vmatmul.mubr.bf16.gmra.mrb[0].mxu0 %v733
  %v772 = vpop.f32.mrb[0].mxu0
  %v773 = vadd.f32 0.0, %v772
  %v774 = vpop.f32.mrb[0].mxu0
  %v775 = vpop.f32.mrb[0].mxu0
  %v776 = vadd.f32 0.0, %v775
  %v777 = vpop.f32.mrb[0].mxu0
  %778 = vmatprep.mubr.bf16.mxu0 0
  %779 = vmatmul.mubr.bf16.gmra.mrb[0].mxu0 %v736
  %v780 = vpop.f32.mrb[0].mxu0
  %v781 = vadd.f32 0.0, %v780
  %v782 = vpop.f32.mrb[0].mxu0
  %v783 = vpop.f32.mrb[0].mxu0
  %v784 = vadd.f32 0.0, %v783
  %v785 = vpop.f32.mrb[0].mxu0
  %786 = vdwg.mxu0
  %v788 = vlaneseq
  %v789 = vshrl.u32 %v788, 7
  %v790 = vsub.s32 0, %v789
  %v791 = vrot.slane %v717, %v790
  %v793 = vsub.f32 %v791, %v773
  %v794 = vsub.f32 %v791, %v776
  %v795 = vsub.f32 %v791, %v781
  %v796 = vsub.f32 %v791, %v784
  %v797 = vld [vmem:[#allocation2] sm:$0xff]
  %v798 = vld [vmem:[#allocation2 + $0x8] sm:$0xff]
  %v799 = vld [vmem:[#allocation2 + $0x10] sm:$0xff]
  %v800 = vld [vmem:[#allocation2 + $0x18] sm:$0xff]
  %v801 = vld [vmem:[#allocation2 + $0x20] sm:$0xff]
  %v802 = vld [vmem:[#allocation2 + $0x28] sm:$0xff]
  %v803 = vld [vmem:[#allocation2 + $0x30] sm:$0xff]
  %v804 = vld [vmem:[#allocation2 + $0x38] sm:$0xff]
  %v805 = vmax.f32 %v797, %v801
  %v806 = vmax.f32 %v798, %v802
  %v807 = vmax.f32 %v799, %v803
  %v808 = vmax.f32 %v800, %v804
  %v809 = vld [vmem:[#allocation2 + $0x40] sm:$0xff]
  %v810 = vld [vmem:[#allocation2 + $0x48] sm:$0xff]
  %v811 = vld [vmem:[#allocation2 + $0x50] sm:$0xff]
  %v812 = vld [vmem:[#allocation2 + $0x58] sm:$0xff]
  %v813 = vmax.f32 %v805, %v809
  %v814 = vmax.f32 %v806, %v810
  %v815 = vmax.f32 %v807, %v811
  %v816 = vmax.f32 %v808, %v812
  %v817 = vld [vmem:[#allocation2 + $0x60] sm:$0xff]
  %v818 = vld [vmem:[#allocation2 + $0x68] sm:$0xff]
  %v819 = vld [vmem:[#allocation2 + $0x70] sm:$0xff]
  %v820 = vld [vmem:[#allocation2 + $0x78] sm:$0xff]
  %v821 = vmax.f32 %v813, %v817
  %v822 = vmax.f32 %v814, %v818
  %v823 = vmax.f32 %v815, %v819
  %v824 = vmax.f32 %v816, %v820
  %v825 = vld [vmem:[#allocation2 + $0x80] sm:$0xff]
  %v826 = vld [vmem:[#allocation2 + $0x88] sm:$0xff]
  %v827 = vld [vmem:[#allocation2 + $0x90] sm:$0xff]
  %v828 = vld [vmem:[#allocation2 + $0x98] sm:$0xff]
  %v829 = vmax.f32 %v821, %v825
  %v830 = vmax.f32 %v822, %v826
  %v831 = vmax.f32 %v823, %v827
  %v832 = vmax.f32 %v824, %v828
  %v833 = vld [vmem:[#allocation2 + $0xa0] sm:$0xff]
  %v834 = vld [vmem:[#allocation2 + $0xa8] sm:$0xff]
  %v835 = vld [vmem:[#allocation2 + $0xb0] sm:$0xff]
  %v836 = vld [vmem:[#allocation2 + $0xb8] sm:$0xff]
  %v837 = vmax.f32 %v829, %v833
  %v838 = vmax.f32 %v830, %v834
  %v839 = vmax.f32 %v831, %v835
  %v840 = vmax.f32 %v832, %v836
  %v841 = vld [vmem:[#allocation2 + $0xc0] sm:$0xff]
  %v842 = vld [vmem:[#allocation2 + $0xc8] sm:$0xff]
  %v843 = vld [vmem:[#allocation2 + $0xd0] sm:$0xff]
  %v844 = vld [vmem:[#allocation2 + $0xd8] sm:$0xff]
  %v845 = vmax.f32 %v837, %v841
  %v846 = vmax.f32 %v838, %v842
  %v847 = vmax.f32 %v839, %v843
  %v848 = vmax.f32 %v840, %v844
  %v849 = vld [vmem:[#allocation2 + $0xe0] sm:$0xff]
  %v850 = vld [vmem:[#allocation2 + $0xe8] sm:$0xff]
  %v851 = vld [vmem:[#allocation2 + $0xf0] sm:$0xff]
  %v852 = vld [vmem:[#allocation2 + $0xf8] sm:$0xff]
  %v853 = vmax.f32 %v845, %v849
  %v854 = vmax.f32 %v846, %v850
  %v855 = vmax.f32 %v847, %v851
  %v856 = vmax.f32 %v848, %v852
  %v857 = vld [vmem:[#allocation2 + $0x100] sm:$0xff]
  %v858 = vld [vmem:[#allocation2 + $0x108] sm:$0xff]
  %v859 = vld [vmem:[#allocation2 + $0x110] sm:$0xff]
  %v860 = vld [vmem:[#allocation2 + $0x118] sm:$0xff]
  %v861 = vmax.f32 %v853, %v857
  %v862 = vmax.f32 %v854, %v858
  %v863 = vmax.f32 %v855, %v859
  %v864 = vmax.f32 %v856, %v860
  %v865 = vld [vmem:[#allocation2 + $0x120] sm:$0xff]
  %v866 = vld [vmem:[#allocation2 + $0x128] sm:$0xff]
  %v867 = vld [vmem:[#allocation2 + $0x130] sm:$0xff]
  %v868 = vld [vmem:[#allocation2 + $0x138] sm:$0xff]
  %v869 = vmax.f32 %v861, %v865
  %v870 = vmax.f32 %v862, %v866
  %v871 = vmax.f32 %v863, %v867
  %v872 = vmax.f32 %v864, %v868
  %v873 = vld [vmem:[#allocation2 + $0x140] sm:$0xff]
  %v874 = vld [vmem:[#allocation2 + $0x148] sm:$0xff]
  %v875 = vld [vmem:[#allocation2 + $0x150] sm:$0xff]
  %v876 = vld [vmem:[#allocation2 + $0x158] sm:$0xff]
  %v877 = vmax.f32 %v869, %v873
  %v878 = vmax.f32 %v870, %v874
  %v879 = vmax.f32 %v871, %v875
  %v880 = vmax.f32 %v872, %v876
  %v881 = vld [vmem:[#allocation2 + $0x160] sm:$0xff]
  %v882 = vld [vmem:[#allocation2 + $0x168] sm:$0xff]
  %v883 = vld [vmem:[#allocation2 + $0x170] sm:$0xff]
  %v884 = vld [vmem:[#allocation2 + $0x178] sm:$0xff]
  %v885 = vmax.f32 %v877, %v881
  %v886 = vmax.f32 %v878, %v882
  %v887 = vmax.f32 %v879, %v883
  %v888 = vmax.f32 %v880, %v884
  %v889 = vld [vmem:[#allocation2 + $0x180] sm:$0xff]
  %v890 = vld [vmem:[#allocation2 + $0x188] sm:$0xff]
  %v891 = vld [vmem:[#allocation2 + $0x190] sm:$0xff]
  %v892 = vld [vmem:[#allocation2 + $0x198] sm:$0xff]
  %v893 = vmax.f32 %v885, %v889
  %v894 = vmax.f32 %v886, %v890
  %v895 = vmax.f32 %v887, %v891
  %v896 = vmax.f32 %v888, %v892
  %v897 = vld [vmem:[#allocation2 + $0x1a0] sm:$0xff]
  %v898 = vld [vmem:[#allocation2 + $0x1a8] sm:$0xff]
  %v899 = vld [vmem:[#allocation2 + $0x1b0] sm:$0xff]
  %v900 = vld [vmem:[#allocation2 + $0x1b8] sm:$0xff]
  %v901 = vmax.f32 %v893, %v897
  %v902 = vmax.f32 %v894, %v898
  %v903 = vmax.f32 %v895, %v899
  %v904 = vmax.f32 %v896, %v900
  %v905 = vld [vmem:[#allocation2 + $0x1c0] sm:$0xff]
  %v906 = vld [vmem:[#allocation2 + $0x1c8] sm:$0xff]
  %v907 = vld [vmem:[#allocation2 + $0x1d0] sm:$0xff]
  %v908 = vld [vmem:[#allocation2 + $0x1d8] sm:$0xff]
  %v909 = vmax.f32 %v901, %v905
  %v910 = vmax.f32 %v902, %v906
  %v911 = vmax.f32 %v903, %v907
  %v912 = vmax.f32 %v904, %v908
  %v913 = vld [vmem:[#allocation2 + $0x1e0] sm:$0xff]
  %v914 = vld [vmem:[#allocation2 + $0x1e8] sm:$0xff]
  %v915 = vld [vmem:[#allocation2 + $0x1f0] sm:$0xff]
  %v916 = vld [vmem:[#allocation2 + $0x1f8] sm:$0xff]
  %v917 = vmax.f32 %v909, %v913
  %v918 = vmax.f32 %v910, %v914
  %v919 = vmax.f32 %v911, %v915
  %v920 = vmax.f32 %v912, %v916
  %v921 = vadd.f32 %v917, %v793
  %v922 = vadd.f32 %v918, %v794
  %v923 = vadd.f32 %v919, %v795
  %v924 = vadd.f32 %v920, %v796
  %v925 = vmax.f32 %v921, 0.0
  %v926 = vmax.f32 %v922, 0.0
  %v927 = vmax.f32 %v923, 0.0
  %v928 = vmax.f32 %v924, 0.0
  %v929 = vpack.c.bf16 %v926, %v925
  %v930 = vpack.c.bf16 %v928, %v927
  %v933 = vunpack.c.l.b16 %v929
  %v934 = vunpack.c.h.b16 %v929
  %v935 = vunpack.c.l.b16 %v930
  %v936 = vunpack.c.h.b16 %v930
  %v937 = vpack.c.b16 %v933, %v933
  %v938 = vpack.c.b16 %v934, %v934
  %v939 = vpack.c.b16 %v935, %v935
  %v940 = vpack.c.b16 %v936, %v936
  %vm945 = vcmask 519168
  %946 = vst.msk [vmem:[%s4] sm:$0xf] %vm945, %v937
  %947 = vst.msk [vmem:[%s4 + $0x4] sm:$0xf] %vm945, %v938
  %948 = vst.msk [vmem:[%s4 + $0x8] sm:$0xf] %vm945, %v939
  %949 = vst.msk [vmem:[%s4 + $0xc] sm:$0xf] %vm945, %v940
  // Predicated region
  $region18: #{point_transformer_cls_forward.6} parent=0 // pred_check
    _
  $region19: #{point_transformer_cls_forward.6} parent=0 // pred_check_branch
    %951 = sbr.rel (0) target = $region21
  $region20: #{point_transformer_cls_forward.6} parent=0 // pred_region
    _
  $region21: #{point_transformer_cls_forward.6} parent=0 // pred_fallthru
    _
  // Predicated region
  $region22: #{point_transformer_cls_forward.6} parent=0 // pred_check
    _
  $region23: #{point_transformer_cls_forward.6} parent=0 // pred_check_branch
    %953 = sbr.rel (0) target = $region25
  $region24: #{point_transformer_cls_forward.6} parent=0 // pred_region
    _
  $region25: #{point_transformer_cls_forward.6} parent=0 // pred_fallthru
    _

// kernel: point_transformer_cls_forward.7
$region0: #{point_transformer_cls_forward.7}
  #allocation0 [shape = 'u32[]', space=smem, size = 0x4, offset = 0x4, fixed_abs, tag = 'smem constant byte address 0x4 - core index']
  #allocation1 [shape = 'u32[144,128]{1,0:T(1,128)}', space=vmem, size = 0x12000, scoped, tag = 'internal scratch']
  #allocation2 [shape = 'f32[256,128]{1,0:T(8,128)}', space=vmem, size = 0x20000, scoped, tag = 'scratch operand']
  %s0 = inlined_call_operand.vmem [shape: bf16[256,80], index: 0, kind: input, shape index: {}]
  %s1 = inlined_call_operand.vmem [shape: bf16[16,80], index: 1, kind: input, shape index: {}]
  %s2 = inlined_call_operand.vmem [shape: bf16[80,128], index: 2, kind: input, shape index: {}]
  %s3 = inlined_call_operand.vmem [shape: f32[1,128], index: 3, kind: input, shape index: {}]
  %s4 = inlined_call_operand.vmem [shape: f32[128,128], index: 4, kind: input, shape index: {}]
  %s5 = inlined_call_operand.vmem [shape: f32[1,128], index: 5, kind: input, shape index: {}]
  %s6 = inlined_call_operand.vmem [shape: f32[128,64], index: 6, kind: input, shape index: {}]
  %s7 = inlined_call_operand.vmem [shape: f32[1,64], index: 7, kind: input, shape index: {}]
  %s8 = inlined_call_operand.vmem [shape: f32[64,40], index: 8, kind: input, shape index: {}]
  %s9 = inlined_call_operand.vmem [shape: f32[1,40], index: 9, kind: input, shape index: {}]
  %s10 = inlined_call_operand.hbm [shape: f32[2,40], index: 10, kind: output, shape index: {}]
  %s11 = sld [smem:[#allocation0]]
  $region50: #{point_transformer_cls_forward.7} parent=0
    _
  %s13 = ssub.s32 1, %s11
  %s14 = scalar_select 0, %s13, %s11
  $region1: #{point_transformer_cls_forward.7} parent=0
    #allocation3 [shape = 'u8[1024]{0}', space=vmem, size = 0x400, scoped, tag = 'output window, operand 0, single buffered']
    #allocation4 [shape = 's32[1]{0}', space=sflag, size = 0x4, scoped, tag = 'scoped memory for point_transformer_cls_forward.7']
    %15 = vsyncpa [#allocation4], 0
    // Predicated region
    $region2: #{point_transformer_cls_forward.7} parent=1 // pred_check
      _
    $region3: #{point_transformer_cls_forward.7} parent=1 // pred_check_branch
      %17 = sbr.rel (0) target = $region5
    $region4: #{point_transformer_cls_forward.7} parent=1 // pred_region
      _
    $region5: #{point_transformer_cls_forward.7} parent=1 // pred_fallthru
      _
    // Predicated region
    $region6: #{point_transformer_cls_forward.7} parent=1 // pred_check
      _
    $region7: #{point_transformer_cls_forward.7} parent=1 // pred_check_branch
      %19 = sbr.rel (0) target = $region9
    $region8: #{point_transformer_cls_forward.7} parent=1 // pred_region
      _
    $region9: #{point_transformer_cls_forward.7} parent=1 // pred_fallthru
      _
    // Predicated region
    $region10: #{point_transformer_cls_forward.7} parent=1 // pred_check
      _
    $region11: #{point_transformer_cls_forward.7} parent=1 // pred_check_branch
      %21 = sbr.rel (0) target = $region13
    $region12: #{point_transformer_cls_forward.7} parent=1 // pred_region
      _
    $region13: #{point_transformer_cls_forward.7} parent=1 // pred_fallthru
      _
    // Predicated region
    $region14: #{point_transformer_cls_forward.7} parent=1 // pred_check
      _
    $region15: #{point_transformer_cls_forward.7} parent=1 // pred_check_branch
      %23 = sbr.rel (0) target = $region17
    $region16: #{point_transformer_cls_forward.7} parent=1 // pred_region
      _
    $region17: #{point_transformer_cls_forward.7} parent=1 // pred_fallthru
      _
    // Predicated region
    $region18: #{point_transformer_cls_forward.7} parent=1 // pred_check
      _
    $region19: #{point_transformer_cls_forward.7} parent=1 // pred_check_branch
      %25 = sbr.rel (0) target = $region21
    $region20: #{point_transformer_cls_forward.7} parent=1 // pred_region
      _
    $region21: #{point_transformer_cls_forward.7} parent=1 // pred_fallthru
      _
    // Predicated region
    $region22: #{point_transformer_cls_forward.7} parent=1 // pred_check
      _
    $region23: #{point_transformer_cls_forward.7} parent=1 // pred_check_branch
      %27 = sbr.rel (0) target = $region25
    $region24: #{point_transformer_cls_forward.7} parent=1 // pred_region
      _
    $region25: #{point_transformer_cls_forward.7} parent=1 // pred_fallthru
      _
    // Predicated region
    $region26: #{point_transformer_cls_forward.7} parent=1 // pred_check
      _
    $region27: #{point_transformer_cls_forward.7} parent=1 // pred_check_branch
      %29 = sbr.rel (0) target = $region29
    $region28: #{point_transformer_cls_forward.7} parent=1 // pred_region
      _
    $region29: #{point_transformer_cls_forward.7} parent=1 // pred_fallthru
      _
    // Predicated region
    $region30: #{point_transformer_cls_forward.7} parent=1 // pred_check
      _
    $region31: #{point_transformer_cls_forward.7} parent=1 // pred_check_branch
      %31 = sbr.rel (0) target = $region33
    $region32: #{point_transformer_cls_forward.7} parent=1 // pred_region
      _
    $region33: #{point_transformer_cls_forward.7} parent=1 // pred_fallthru
      _
    // Predicated region
    $region34: #{point_transformer_cls_forward.7} parent=1 // pred_check
      _
    $region35: #{point_transformer_cls_forward.7} parent=1 // pred_check_branch
      %33 = sbr.rel (0) target = $region37
    $region36: #{point_transformer_cls_forward.7} parent=1 // pred_region
      _
    $region37: #{point_transformer_cls_forward.7} parent=1 // pred_fallthru
      _
    // Predicated region
    $region38: #{point_transformer_cls_forward.7} parent=1 // pred_check
      _
    $region39: #{point_transformer_cls_forward.7} parent=1 // pred_check_branch
      %35 = sbr.rel (0) target = $region41
    $region40: #{point_transformer_cls_forward.7} parent=1 // pred_region
      _
    $region41: #{point_transformer_cls_forward.7} parent=1 // pred_fallthru
      _
    %v37 = vld [vmem:[%s2] sm:$0xf]
    %v38 = vld [vmem:[%s2 + $0x4] sm:$0xf]
    %v39 = vld [vmem:[%s2 + $0x8] sm:$0xf]
    %v40 = vld [vmem:[%s2 + $0xc] sm:$0xf]
    %v41 = vld [vmem:[%s2 + $0x10] sm:$0xf]
    %v42 = vld [vmem:[%s2 + $0x14] sm:$0xf]
    %v43 = vld [vmem:[%s2 + $0x18] sm:$0xf]
    %v44 = vld [vmem:[%s2 + $0x1c] sm:$0xf]
    %v45 = vld [vmem:[%s2 + $0x20] sm:$0xf]
    %v46 = vld [vmem:[%s2 + $0x24] sm:$0xf]
    %v47 = vld [vmem:[%s0] sm:$0xf]
    %v48 = vld [vmem:[%s0 + $0x4] sm:$0xf]
    %v49 = vld [vmem:[%s0 + $0x8] sm:$0xf]
    %v50 = vld [vmem:[%s0 + $0xc] sm:$0xf]
    %v51 = vld [vmem:[%s0 + $0x10] sm:$0xf]
    %v52 = vld [vmem:[%s0 + $0x14] sm:$0xf]
    %v53 = vld [vmem:[%s0 + $0x18] sm:$0xf]
    %v54 = vld [vmem:[%s0 + $0x1c] sm:$0xf]
    %v55 = vld [vmem:[%s0 + $0x20] sm:$0xf]
    %v56 = vld [vmem:[%s0 + $0x24] sm:$0xf]
    %v57 = vld [vmem:[%s0 + $0x28] sm:$0xf]
    %v58 = vld [vmem:[%s0 + $0x2c] sm:$0xf]
    %v59 = vld [vmem:[%s0 + $0x30] sm:$0xf]
    %v60 = vld [vmem:[%s0 + $0x34] sm:$0xf]
    %v61 = vld [vmem:[%s0 + $0x38] sm:$0xf]
    %v62 = vld [vmem:[%s0 + $0x3c] sm:$0xf]
    %v63 = vld [vmem:[%s0 + $0x40] sm:$0xf]
    %v64 = vld [vmem:[%s0 + $0x44] sm:$0xf]
    %v65 = vld [vmem:[%s0 + $0x48] sm:$0xf]
    %v66 = vld [vmem:[%s0 + $0x4c] sm:$0xf]
    %v67 = vld [vmem:[%s0 + $0x50] sm:$0xf]
    %v68 = vld [vmem:[%s0 + $0x54] sm:$0xf]
    %v69 = vld [vmem:[%s0 + $0x58] sm:$0xf]
    %v70 = vld [vmem:[%s0 + $0x5c] sm:$0xf]
    %v71 = vld [vmem:[%s0 + $0x60] sm:$0xf]
    %v72 = vld [vmem:[%s0 + $0x64] sm:$0xf]
    %v73 = vld [vmem:[%s0 + $0x68] sm:$0xf]
    %v74 = vld [vmem:[%s0 + $0x6c] sm:$0xf]
    %v75 = vld [vmem:[%s0 + $0x70] sm:$0xf]
    %v76 = vld [vmem:[%s0 + $0x74] sm:$0xf]
    %v77 = vld [vmem:[%s0 + $0x78] sm:$0xf]
    %v78 = vld [vmem:[%s0 + $0x7c] sm:$0xf]
    %v111 = vunpack.c.l.b16 %v47
    %v112 = vunpack.c.l.b16 %v48
    %v113 = vunpack.c.l.b16 %v49
    %v114 = vunpack.c.l.b16 %v50
    %v115 = vunpack.c.l.b16 %v51
    %v116 = vunpack.c.l.b16 %v52
    %v117 = vunpack.c.l.b16 %v53
    %v118 = vunpack.c.l.b16 %v54
    %v119 = vunpack.c.l.b16 %v55
    %v120 = vunpack.c.l.b16 %v56
    %v121 = vunpack.c.l.b16 %v57
    %v122 = vunpack.c.l.b16 %v58
    %v123 = vunpack.c.l.b16 %v59
    %v124 = vunpack.c.l.b16 %v60
    %v125 = vunpack.c.l.b16 %v61
    %v126 = vunpack.c.l.b16 %v62
    %v127 = vunpack.c.l.b16 %v63
    %v128 = vunpack.c.l.b16 %v64
    %v129 = vunpack.c.l.b16 %v65
    %v130 = vunpack.c.l.b16 %v66
    %v131 = vunpack.c.l.b16 %v67
    %v132 = vunpack.c.l.b16 %v68
    %v133 = vunpack.c.l.b16 %v69
    %v134 = vunpack.c.l.b16 %v70
    %v135 = vunpack.c.l.b16 %v71
    %v136 = vunpack.c.l.b16 %v72
    %v137 = vunpack.c.l.b16 %v73
    %v138 = vunpack.c.l.b16 %v74
    %v139 = vunpack.c.l.b16 %v75
    %v140 = vunpack.c.l.b16 %v76
    %v141 = vunpack.c.l.b16 %v77
    %v142 = vunpack.c.l.b16 %v78
    %v143 = vpack.c.b16 %v112, %v111
    %v144 = vpack.c.b16 %v114, %v113
    %v145 = vpack.c.b16 %v116, %v115
    %v146 = vpack.c.b16 %v118, %v117
    %v147 = vpack.c.b16 %v120, %v119
    %v148 = vpack.c.b16 %v122, %v121
    %v149 = vpack.c.b16 %v124, %v123
    %v150 = vpack.c.b16 %v126, %v125
    %v151 = vpack.c.b16 %v128, %v127
    %v152 = vpack.c.b16 %v130, %v129
    %v153 = vpack.c.b16 %v132, %v131
    %v154 = vpack.c.b16 %v134, %v133
    %v155 = vpack.c.b16 %v136, %v135
    %v156 = vpack.c.b16 %v138, %v137
    %v157 = vpack.c.b16 %v140, %v139
    %v158 = vpack.c.b16 %v142, %v141
    %v169 = vunpack.c.l.b16 %v37
    %v170 = vunpack.c.l.b16 %v38
    %v171 = vunpack.c.l.b16 %v39
    %v172 = vunpack.c.l.b16 %v40
    %v173 = vunpack.c.l.b16 %v41
    %v174 = vunpack.c.l.b16 %v42
    %v175 = vunpack.c.l.b16 %v43
    %v176 = vunpack.c.l.b16 %v44
    %v177 = vunpack.c.l.b16 %v45
    %v178 = vunpack.c.l.b16 %v46
    %v179 = vpack.c.b16 %v170, %v169
    %v180 = vpack.c.b16 %v172, %v171
    %v181 = vpack.c.b16 %v174, %v173
    %v182 = vpack.c.b16 %v176, %v175
    %v183 = vpack.c.b16 %v178, %v177
    %vm189 = vcmask 654336
    %v191 = vsel %vm189, %v143, 0
    %v194 = vsel %vm189, %v144, 0
    %v197 = vsel %vm189, %v145, 0
    %v200 = vsel %vm189, %v146, 0
    %v203 = vsel %vm189, %v147, 0
    %v206 = vsel %vm189, %v148, 0
    %v209 = vsel %vm189, %v149, 0
    %v212 = vsel %vm189, %v150, 0
    %v215 = vsel %vm189, %v151, 0
    %v218 = vsel %vm189, %v152, 0
    %v221 = vsel %vm189, %v153, 0
    %v224 = vsel %vm189, %v154, 0
    %v227 = vsel %vm189, %v155, 0
    %v230 = vsel %vm189, %v156, 0
    %v233 = vsel %vm189, %v157, 0
    %v236 = vsel %vm189, %v158, 0
    %238 = vmatprep.subr.bf16.mxu0 0
    %239 = vmatpush1.bf16.msra.mxu0 %v179
    %240 = vmatprep.subr.bf16.mxu0 0
    %241 = vmatpush1.bf16.msra.mxu0 %v180
    %242 = vmatprep.subr.bf16.mxu0 0
    %243 = vmatpush1.bf16.msra.mxu0 %v181
    %244 = vmatprep.subr.bf16.mxu0 0
    %245 = vmatpush1.bf16.msra.mxu0 %v182
    %246 = vmatprep.subr.bf16.mxu0 0
    %247 = vmatpush1.bf16.msra.mxu0 %v183
    %248 = vmatprep.subr.bf16.mxu0 0
    %249 = vmatpush1.bf16.msra.mxu0 0
    %250 = vmatprep.subr.bf16.mxu0 0
    %251 = vmatpush1.bf16.msra.mxu0 0
    %252 = vmatprep.subr.bf16.mxu0 0
    %253 = vmatpush1.bf16.msra.mxu0 0
    %254 = vmatprep.subr.bf16.mxu0 0
    %255 = vmatpush1.bf16.msra.mxu0 0
    %256 = vmatprep.subr.bf16.mxu0 0
    %257 = vmatpush1.bf16.msra.mxu0 0
    %258 = vmatprep.subr.bf16.mxu0 0
    %259 = vmatpush1.bf16.msra.mxu0 0
    %260 = vmatprep.subr.bf16.mxu0 0
    %261 = vmatpush1.bf16.msra.mxu0 0
    %262 = vmatprep.subr.bf16.mxu0 0
    %263 = vmatpush1.bf16.msra.mxu0 0
    %264 = vmatprep.subr.bf16.mxu0 0
    %265 = vmatpush1.bf16.msra.mxu0 0
    %266 = vmatprep.subr.bf16.mxu0 0
    %267 = vmatpush1.bf16.msra.mxu0 0
    %268 = vmatprep.subr.bf16.mxu0 0
    %269 = vmatpush1.bf16.msra.mxu0 0
    %270 = vmatprep.mubr.bf16.mxu0 0
    %271 = vmatmul.mubr.bf16.gmra.mrb[0].mxu0 %v191
    %v272 = vpop.f32.mrb[0].mxu0
    %v273 = vadd.f32 0.0, %v272
    %v274 = vpop.f32.mrb[0].mxu0
    %v275 = vpop.f32.mrb[0].mxu0
    %v276 = vadd.f32 0.0, %v275
    %v277 = vpop.f32.mrb[0].mxu0
    %278 = vmatprep.mubr.bf16.mxu0 0
    %279 = vmatmul.mubr.bf16.gmra.mrb[0].mxu0 %v194
    %v280 = vpop.f32.mrb[0].mxu0
    %v281 = vadd.f32 0.0, %v280
    %v282 = vpop.f32.mrb[0].mxu0
    %v283 = vpop.f32.mrb[0].mxu0
    %v284 = vadd.f32 0.0, %v283
    %v285 = vpop.f32.mrb[0].mxu0
    %286 = vmatprep.mubr.bf16.mxu0 0
    %287 = vmatmul.mubr.bf16.gmra.mrb[0].mxu0 %v197
    %v288 = vpop.f32.mrb[0].mxu0
    %v289 = vadd.f32 0.0, %v288
    %v290 = vpop.f32.mrb[0].mxu0
    %v291 = vpop.f32.mrb[0].mxu0
    %v292 = vadd.f32 0.0, %v291
    %v293 = vpop.f32.mrb[0].mxu0
    %294 = vmatprep.mubr.bf16.mxu0 0
    %295 = vmatmul.mubr.bf16.gmra.mrb[0].mxu0 %v200
    %v296 = vpop.f32.mrb[0].mxu0
    %v297 = vadd.f32 0.0, %v296
    %v298 = vpop.f32.mrb[0].mxu0
    %v299 = vpop.f32.mrb[0].mxu0
    %v300 = vadd.f32 0.0, %v299
    %v301 = vpop.f32.mrb[0].mxu0
    %302 = vmatprep.mubr.bf16.mxu0 0
    %303 = vmatmul.mubr.bf16.gmra.mrb[0].mxu0 %v203
    %v304 = vpop.f32.mrb[0].mxu0
    %v305 = vadd.f32 0.0, %v304
    %v306 = vpop.f32.mrb[0].mxu0
    %v307 = vpop.f32.mrb[0].mxu0
    %v308 = vadd.f32 0.0, %v307
    %v309 = vpop.f32.mrb[0].mxu0
    %310 = vmatprep.mubr.bf16.mxu0 0
    %311 = vmatmul.mubr.bf16.gmra.mrb[0].mxu0 %v206
    %v312 = vpop.f32.mrb[0].mxu0
    %v313 = vadd.f32 0.0, %v312
    %v314 = vpop.f32.mrb[0].mxu0
    %v315 = vpop.f32.mrb[0].mxu0
    %v316 = vadd.f32 0.0, %v315
    %v317 = vpop.f32.mrb[0].mxu0
    %318 = vmatprep.mubr.bf16.mxu0 0
    %319 = vmatmul.mubr.bf16.gmra.mrb[0].mxu0 %v209
    %v320 = vpop.f32.mrb[0].mxu0
    %v321 = vadd.f32 0.0, %v320
    %v322 = vpop.f32.mrb[0].mxu0
    %v323 = vpop.f32.mrb[0].mxu0
    %v324 = vadd.f32 0.0, %v323
    %v325 = vpop.f32.mrb[0].mxu0
    %326 = vmatprep.mubr.bf16.mxu0 0
    %327 = vmatmul.mubr.bf16.gmra.mrb[0].mxu0 %v212
    %v328 = vpop.f32.mrb[0].mxu0
    %v329 = vadd.f32 0.0, %v328
    %v330 = vpop.f32.mrb[0].mxu0
    %v331 = vpop.f32.mrb[0].mxu0
    %v332 = vadd.f32 0.0, %v331
    %v333 = vpop.f32.mrb[0].mxu0
    %334 = vmatprep.mubr.bf16.mxu0 0
    %335 = vmatmul.mubr.bf16.gmra.mrb[0].mxu0 %v215
    %v336 = vpop.f32.mrb[0].mxu0
    %v337 = vadd.f32 0.0, %v336
    %v338 = vpop.f32.mrb[0].mxu0
    %v339 = vpop.f32.mrb[0].mxu0
    %v340 = vadd.f32 0.0, %v339
    %v341 = vpop.f32.mrb[0].mxu0
    %342 = vmatprep.mubr.bf16.mxu0 0
    %343 = vmatmul.mubr.bf16.gmra.mrb[0].mxu0 %v218
    %v344 = vpop.f32.mrb[0].mxu0
    %v345 = vadd.f32 0.0, %v344
    %v346 = vpop.f32.mrb[0].mxu0
    %v347 = vpop.f32.mrb[0].mxu0
    %v348 = vadd.f32 0.0, %v347
    %v349 = vpop.f32.mrb[0].mxu0
    %350 = vmatprep.mubr.bf16.mxu0 0
    %351 = vmatmul.mubr.bf16.gmra.mrb[0].mxu0 %v221
    %v352 = vpop.f32.mrb[0].mxu0
    %v353 = vadd.f32 0.0, %v352
    %v354 = vpop.f32.mrb[0].mxu0
    %v355 = vpop.f32.mrb[0].mxu0
    %v356 = vadd.f32 0.0, %v355
    %v357 = vpop.f32.mrb[0].mxu0
    %358 = vmatprep.mubr.bf16.mxu0 0
    %359 = vmatmul.mubr.bf16.gmra.mrb[0].mxu0 %v224
    %v360 = vpop.f32.mrb[0].mxu0
    %v361 = vadd.f32 0.0, %v360
    %v362 = vpop.f32.mrb[0].mxu0
    %v363 = vpop.f32.mrb[0].mxu0
    %v364 = vadd.f32 0.0, %v363
    %v365 = vpop.f32.mrb[0].mxu0
    %366 = vmatprep.mubr.bf16.mxu0 0
    %367 = vmatmul.mubr.bf16.gmra.mrb[0].mxu0 %v227
    %v368 = vpop.f32.mrb[0].mxu0
    %v369 = vadd.f32 0.0, %v368
    %v370 = vpop.f32.mrb[0].mxu0
    %v371 = vpop.f32.mrb[0].mxu0
    %v372 = vadd.f32 0.0, %v371
    %v373 = vpop.f32.mrb[0].mxu0
    %374 = vmatprep.mubr.bf16.mxu0 0
    %375 = vmatmul.mubr.bf16.gmra.mrb[0].mxu0 %v230
    %v376 = vpop.f32.mrb[0].mxu0
    %v377 = vadd.f32 0.0, %v376
    %v378 = vpop.f32.mrb[0].mxu0
    %v379 = vpop.f32.mrb[0].mxu0
    %v380 = vadd.f32 0.0, %v379
    %v381 = vpop.f32.mrb[0].mxu0
    %382 = vmatprep.mubr.bf16.mxu0 0
    %383 = vmatmul.mubr.bf16.gmra.mrb[0].mxu0 %v233
    %v384 = vpop.f32.mrb[0].mxu0
    %v385 = vadd.f32 0.0, %v384
    %v386 = vpop.f32.mrb[0].mxu0
    %v387 = vpop.f32.mrb[0].mxu0
    %v388 = vadd.f32 0.0, %v387
    %v389 = vpop.f32.mrb[0].mxu0
    %390 = vmatprep.mubr.bf16.mxu0 0
    %391 = vmatmul.mubr.bf16.gmra.mrb[0].mxu0 %v236
    %v392 = vpop.f32.mrb[0].mxu0
    %v393 = vadd.f32 0.0, %v392
    %v394 = vpop.f32.mrb[0].mxu0
    %v395 = vpop.f32.mrb[0].mxu0
    %v396 = vadd.f32 0.0, %v395
    %v397 = vpop.f32.mrb[0].mxu0
    %398 = vdwg.mxu0
    %399 = vst [vmem:[#allocation2] sm:$0xff] %v273
    %400 = vst [vmem:[#allocation2 + $0x8] sm:$0xff] %v276
    %401 = vst [vmem:[#allocation2 + $0x10] sm:$0xff] %v281
    %402 = vst [vmem:[#allocation2 + $0x18] sm:$0xff] %v284
    %403 = vst [vmem:[#allocation2 + $0x20] sm:$0xff] %v289
    %404 = vst [vmem:[#allocation2 + $0x28] sm:$0xff] %v292
    %405 = vst [vmem:[#allocation2 + $0x30] sm:$0xff] %v297
    %406 = vst [vmem:[#allocation2 + $0x38] sm:$0xff] %v300
    %407 = vst [vmem:[#allocation2 + $0x40] sm:$0xff] %v305
    %408 = vst [vmem:[#allocation2 + $0x48] sm:$0xff] %v308
    %409 = vst [vmem:[#allocation2 + $0x50] sm:$0xff] %v313
    %410 = vst [vmem:[#allocation2 + $0x58] sm:$0xff] %v316
    %411 = vst [vmem:[#allocation2 + $0x60] sm:$0xff] %v321
    %412 = vst [vmem:[#allocation2 + $0x68] sm:$0xff] %v324
    %413 = vst [vmem:[#allocation2 + $0x70] sm:$0xff] %v329
    %414 = vst [vmem:[#allocation2 + $0x78] sm:$0xff] %v332
    %415 = vst [vmem:[#allocation2 + $0x80] sm:$0xff] %v337
    %416 = vst [vmem:[#allocation2 + $0x88] sm:$0xff] %v340
    %417 = vst [vmem:[#allocation2 + $0x90] sm:$0xff] %v345
    %418 = vst [vmem:[#allocation2 + $0x98] sm:$0xff] %v348
    %419 = vst [vmem:[#allocation2 + $0xa0] sm:$0xff] %v353
    %420 = vst [vmem:[#allocation2 + $0xa8] sm:$0xff] %v356
    %421 = vst [vmem:[#allocation2 + $0xb0] sm:$0xff] %v361
    %422 = vst [vmem:[#allocation2 + $0xb8] sm:$0xff] %v364
    %423 = vst [vmem:[#allocation2 + $0xc0] sm:$0xff] %v369
    %424 = vst [vmem:[#allocation2 + $0xc8] sm:$0xff] %v372
    %425 = vst [vmem:[#allocation2 + $0xd0] sm:$0xff] %v377
    %426 = vst [vmem:[#allocation2 + $0xd8] sm:$0xff] %v380
    %427 = vst [vmem:[#allocation2 + $0xe0] sm:$0xff] %v385
    %428 = vst [vmem:[#allocation2 + $0xe8] sm:$0xff] %v388
    %429 = vst [vmem:[#allocation2 + $0xf0] sm:$0xff] %v393
    %430 = vst [vmem:[#allocation2 + $0xf8] sm:$0xff] %v396
    %v431 = vld [vmem:[%s3] sm:$0x1]
    %v432 = vld [vmem:[%s1] sm:$0xf]
    %v433 = vld [vmem:[%s1 + $0x4] sm:$0xf]
    %v436 = vunpack.c.l.b16 %v432
    %v437 = vunpack.c.l.b16 %v433
    %v438 = vpack.c.b16 %v437, %v436
    %v440 = vsel %vm189, %v438, 0
    %442 = vmatprep.subr.bf16.mxu0 0
    %443 = vmatpush1.bf16.msra.mxu0 %v179
    %444 = vmatprep.subr.bf16.mxu0 0
    %445 = vmatpush1.bf16.msra.mxu0 %v180
    %446 = vmatprep.subr.bf16.mxu0 0
    %447 = vmatpush1.bf16.msra.mxu0 %v181
    %448 = vmatprep.subr.bf16.mxu0 0
    %449 = vmatpush1.bf16.msra.mxu0 %v182
    %450 = vmatprep.subr.bf16.mxu0 0
    %451 = vmatpush1.bf16.msra.mxu0 %v183
    %452 = vmatprep.subr.bf16.mxu0 0
    %453 = vmatpush1.bf16.msra.mxu0 0
    %454 = vmatprep.subr.bf16.mxu0 0
    %455 = vmatpush1.bf16.msra.mxu0 0
    %456 = vmatprep.subr.bf16.mxu0 0
    %457 = vmatpush1.bf16.msra.mxu0 0
    %458 = vmatprep.subr.bf16.mxu0 0
    %459 = vmatpush1.bf16.msra.mxu0 0
    %460 = vmatprep.subr.bf16.mxu0 0
    %461 = vmatpush1.bf16.msra.mxu0 0
    %462 = vmatprep.subr.bf16.mxu0 0
    %463 = vmatpush1.bf16.msra.mxu0 0
    %464 = vmatprep.subr.bf16.mxu0 0
    %465 = vmatpush1.bf16.msra.mxu0 0
    %466 = vmatprep.subr.bf16.mxu0 0
    %467 = vmatpush1.bf16.msra.mxu0 0
    %468 = vmatprep.subr.bf16.mxu0 0
    %469 = vmatpush1.bf16.msra.mxu0 0
    %470 = vmatprep.subr.bf16.mxu0 0
    %471 = vmatpush1.bf16.msra.mxu0 0
    %472 = vmatprep.subr.bf16.mxu0 0
    %473 = vmatpush1.bf16.msra.mxu0 0
    %474 = vmatprep.mubr.bf16.mxu0 0
    %475 = vmatmul.mubr.bf16.gmra.mrb[0].mxu0 %v440
    %v476 = vpop.f32.mrb[0].mxu0
    %v477 = vadd.f32 0.0, %v476
    %v478 = vpop.f32.mrb[0].mxu0
    %v479 = vpop.f32.mrb[0].mxu0
    %v480 = vadd.f32 0.0, %v479
    %v481 = vpop.f32.mrb[0].mxu0
    %482 = vdwg.mxu0
    %v484 = vlaneseq
    %v485 = vshrl.u32 %v484, 7
    %v486 = vsub.s32 0, %v485
    %v487 = vrot.slane %v431, %v486
    %v489 = vsub.f32 %v487, %v477
    %v490 = vsub.f32 %v487, %v480
    %v491 = vld [vmem:[#allocation2] sm:$0xff]
    %v492 = vld [vmem:[#allocation2 + $0x8] sm:$0xff]
    %v493 = vld [vmem:[#allocation2 + $0x10] sm:$0xff]
    %v494 = vld [vmem:[#allocation2 + $0x18] sm:$0xff]
    %v495 = vmax.f32 %v491, %v493
    %v496 = vmax.f32 %v492, %v494
    %v497 = vld [vmem:[#allocation2 + $0x20] sm:$0xff]
    %v498 = vld [vmem:[#allocation2 + $0x28] sm:$0xff]
    %v499 = vmax.f32 %v495, %v497
    %v500 = vmax.f32 %v496, %v498
    %v501 = vld [vmem:[#allocation2 + $0x30] sm:$0xff]
    %v502 = vld [vmem:[#allocation2 + $0x38] sm:$0xff]
    %v503 = vmax.f32 %v499, %v501
    %v504 = vmax.f32 %v500, %v502
    %v505 = vld [vmem:[#allocation2 + $0x40] sm:$0xff]
    %v506 = vld [vmem:[#allocation2 + $0x48] sm:$0xff]
    %v507 = vmax.f32 %v503, %v505
    %v508 = vmax.f32 %v504, %v506
    %v509 = vld [vmem:[#allocation2 + $0x50] sm:$0xff]
    %v510 = vld [vmem:[#allocation2 + $0x58] sm:$0xff]
    %v511 = vmax.f32 %v507, %v509
    %v512 = vmax.f32 %v508, %v510
    %v513 = vld [vmem:[#allocation2 + $0x60] sm:$0xff]
    %v514 = vld [vmem:[#allocation2 + $0x68] sm:$0xff]
    %v515 = vmax.f32 %v511, %v513
    %v516 = vmax.f32 %v512, %v514
    %v517 = vld [vmem:[#allocation2 + $0x70] sm:$0xff]
    %v518 = vld [vmem:[#allocation2 + $0x78] sm:$0xff]
    %v519 = vmax.f32 %v515, %v517
    %v520 = vmax.f32 %v516, %v518
    %v521 = vld [vmem:[#allocation2 + $0x80] sm:$0xff]
    %v522 = vld [vmem:[#allocation2 + $0x88] sm:$0xff]
    %v523 = vmax.f32 %v519, %v521
    %v524 = vmax.f32 %v520, %v522
    %v525 = vld [vmem:[#allocation2 + $0x90] sm:$0xff]
    %v526 = vld [vmem:[#allocation2 + $0x98] sm:$0xff]
    %v527 = vmax.f32 %v523, %v525
    %v528 = vmax.f32 %v524, %v526
    %v529 = vld [vmem:[#allocation2 + $0xa0] sm:$0xff]
    %v530 = vld [vmem:[#allocation2 + $0xa8] sm:$0xff]
    %v531 = vmax.f32 %v527, %v529
    %v532 = vmax.f32 %v528, %v530
    %v533 = vld [vmem:[#allocation2 + $0xb0] sm:$0xff]
    %v534 = vld [vmem:[#allocation2 + $0xb8] sm:$0xff]
    %v535 = vmax.f32 %v531, %v533
    %v536 = vmax.f32 %v532, %v534
    %v537 = vld [vmem:[#allocation2 + $0xc0] sm:$0xff]
    %v538 = vld [vmem:[#allocation2 + $0xc8] sm:$0xff]
    %v539 = vmax.f32 %v535, %v537
    %v540 = vmax.f32 %v536, %v538
    %v541 = vld [vmem:[#allocation2 + $0xd0] sm:$0xff]
    %v542 = vld [vmem:[#allocation2 + $0xd8] sm:$0xff]
    %v543 = vmax.f32 %v539, %v541
    %v544 = vmax.f32 %v540, %v542
    %v545 = vld [vmem:[#allocation2 + $0xe0] sm:$0xff]
    %v546 = vld [vmem:[#allocation2 + $0xe8] sm:$0xff]
    %v547 = vmax.f32 %v543, %v545
    %v548 = vmax.f32 %v544, %v546
    %v549 = vld [vmem:[#allocation2 + $0xf0] sm:$0xff]
    %v550 = vld [vmem:[#allocation2 + $0xf8] sm:$0xff]
    %v551 = vmax.f32 %v547, %v549
    %v552 = vmax.f32 %v548, %v550
    %v553 = vadd.f32 %v551, %v489
    %v554 = vadd.f32 %v552, %v490
    %v555 = vmax.f32 %v553, 0.0
    %v556 = vmax.f32 %v554, 0.0
    %v557 = vrot.slane %v555, 4
    %v558 = vmax.f32 %v555, %v557
    %v559 = vrot.slane %v558, 2
    %v560 = vmax.f32 %v558, %v559
    %v561 = vrot.slane %v560, 1
    %v562 = vmax.f32 %v560, %v561
    %v563 = vrot.slane %v556, 4
    %v564 = vmax.f32 %v556, %v563
    %v565 = vrot.slane %v564, 2
    %v566 = vmax.f32 %v564, %v565
    %v567 = vrot.slane %v566, 1
    %v568 = vmax.f32 %v566, %v567
    %v569 = vld [vmem:[%s4] sm:$0xff]
    %v570 = vld [vmem:[%s4 + $0x8] sm:$0xff]
    %v571 = vld [vmem:[%s4 + $0x10] sm:$0xff]
    %v572 = vld [vmem:[%s4 + $0x18] sm:$0xff]
    %v573 = vld [vmem:[%s4 + $0x20] sm:$0xff]
    %v574 = vld [vmem:[%s4 + $0x28] sm:$0xff]
    %v575 = vld [vmem:[%s4 + $0x30] sm:$0xff]
    %v576 = vld [vmem:[%s4 + $0x38] sm:$0xff]
    %v577 = vld [vmem:[%s4 + $0x40] sm:$0xff]
    %v578 = vld [vmem:[%s4 + $0x48] sm:$0xff]
    %v579 = vld [vmem:[%s4 + $0x50] sm:$0xff]
    %v580 = vld [vmem:[%s4 + $0x58] sm:$0xff]
    %v581 = vld [vmem:[%s4 + $0x60] sm:$0xff]
    %v582 = vld [vmem:[%s4 + $0x68] sm:$0xff]
    %v583 = vld [vmem:[%s4 + $0x70] sm:$0xff]
    %v584 = vld [vmem:[%s4 + $0x78] sm:$0xff]
    %v585 = vld [vmem:[%s5] sm:$0x1]
    %v587 = vlaneseq
    %v588 = vshrl.u32 %v587, 7
    %v589 = vsub.s32 0, %v588
    %v590 = vrot.slane %v585, %v589
    %vm594 = vcmask 1041409
    %v595 = vsel %vm594, %v568, %v562
    %597 = vmatprep.subr.mxu0 0.0
    %598 = vmatpush1.msra.mxu0 %v569
    %599 = vmatprep.subr.mxu0 0.0
    %600 = vmatpush1.msra.mxu0 %v570
    %601 = vmatprep.subr.mxu0 0.0
    %602 = vmatpush1.msra.mxu0 %v571
    %603 = vmatprep.subr.mxu0 0.0
    %604 = vmatpush1.msra.mxu0 %v572
    %605 = vmatprep.subr.mxu0 0.0
    %606 = vmatpush1.msra.mxu0 %v573
    %607 = vmatprep.subr.mxu0 0.0
    %608 = vmatpush1.msra.mxu0 %v574
    %609 = vmatprep.subr.mxu0 0.0
    %610 = vmatpush1.msra.mxu0 %v575
    %611 = vmatprep.subr.mxu0 0.0
    %612 = vmatpush1.msra.mxu0 %v576
    %613 = vmatprep.subr.mxu0 0.0
    %614 = vmatpush1.msra.mxu0 %v577
    %615 = vmatprep.subr.mxu0 0.0
    %616 = vmatpush1.msra.mxu0 %v578
    %617 = vmatprep.subr.mxu0 0.0
    %618 = vmatpush1.msra.mxu0 %v579
    %619 = vmatprep.subr.mxu0 0.0
    %620 = vmatpush1.msra.mxu0 %v580
    %621 = vmatprep.subr.mxu0 0.0
    %622 = vmatpush1.msra.mxu0 %v581
    %623 = vmatprep.subr.mxu0 0.0
    %624 = vmatpush1.msra.mxu0 %v582
    %625 = vmatprep.subr.mxu0 0.0
    %626 = vmatpush1.msra.mxu0 %v583
    %627 = vmatprep.subr.mxu0 0.0
    %628 = vmatpush1.msra.mxu0 %v584
    %629 = vmatprep.subr.mxu0 0.0
    %630 = vmatpush1.msra.mxu0 0.0
    %631 = vmatprep.subr.mxu0 0.0
    %632 = vmatpush1.msra.mxu0 0.0
    %633 = vmatprep.subr.mxu0 0.0
    %634 = vmatpush1.msra.mxu0 0.0
    %635 = vmatprep.subr.mxu0 0.0
    %636 = vmatpush1.msra.mxu0 0.0
    %637 = vmatprep.subr.mxu0 0.0
    %638 = vmatpush1.msra.mxu0 0.0
    %639 = vmatprep.subr.mxu0 0.0
    %640 = vmatpush1.msra.mxu0 0.0
    %641 = vmatprep.subr.mxu0 0.0
    %642 = vmatpush1.msra.mxu0 0.0
    %643 = vmatprep.subr.mxu0 0.0
    %644 = vmatpush1.msra.mxu0 0.0
    %645 = vmatprep.subr.mxu0 0.0
    %646 = vmatpush1.msra.mxu0 0.0
    %647 = vmatprep.subr.mxu0 0.0
    %648 = vmatpush1.msra.mxu0 0.0
    %649 = vmatprep.subr.mxu0 0.0
    %650 = vmatpush1.msra.mxu0 0.0
    %651 = vmatprep.subr.mxu0 0.0
    %652 = vmatpush1.msra.mxu0 0.0
    %653 = vmatprep.subr.mxu0 0.0
    %654 = vmatpush1.msra.mxu0 0.0
    %655 = vmatprep.subr.mxu0 0.0
    %656 = vmatpush1.msra.mxu0 0.0
    %657 = vmatprep.subr.mxu0 0.0
    %658 = vmatpush1.msra.mxu0 0.0
    %659 = vmatprep.subr.mxu0 0.0
    %660 = vmatpush1.msra.mxu0 0.0
    %661 = vmatprep.mubr.f32.mxu0 0.0
    %662 = vmatmul.mubr.f32.gmra.mrb[0].mxu0 %v595
    %v663 = vpop.f32.mrb[0].mxu0
    %v664 = vadd.f32 %v590, %v663
    %v665 = vpop.f32.mrb[0].mxu0
    %666 = vdwg.mxu0
    %v667 = vmax.f32 %v664, 0.0
    %v668 = vld [vmem:[%s6] sm:$0xff]
    %v669 = vld [vmem:[%s6 + $0x8] sm:$0xff]
    %v670 = vld [vmem:[%s6 + $0x10] sm:$0xff]
    %v671 = vld [vmem:[%s6 + $0x18] sm:$0xff]
    %v672 = vld [vmem:[%s6 + $0x20] sm:$0xff]
    %v673 = vld [vmem:[%s6 + $0x28] sm:$0xff]
    %v674 = vld [vmem:[%s6 + $0x30] sm:$0xff]
    %v675 = vld [vmem:[%s6 + $0x38] sm:$0xff]
    %v676 = vld [vmem:[%s6 + $0x40] sm:$0xff]
    %v677 = vld [vmem:[%s6 + $0x48] sm:$0xff]
    %v678 = vld [vmem:[%s6 + $0x50] sm:$0xff]
    %v679 = vld [vmem:[%s6 + $0x58] sm:$0xff]
    %v680 = vld [vmem:[%s6 + $0x60] sm:$0xff]
    %v681 = vld [vmem:[%s6 + $0x68] sm:$0xff]
    %v682 = vld [vmem:[%s6 + $0x70] sm:$0xff]
    %v683 = vld [vmem:[%s6 + $0x78] sm:$0xff]
    %v684 = vld [vmem:[%s7] sm:$0x1]
    %v686 = vlaneseq
    %v687 = vshrl.u32 %v686, 7
    %v688 = vsub.s32 0, %v687
    %v689 = vrot.slane %v684, %v688
    %691 = vmatprep.subr.mxu0 0.0
    %692 = vmatpush1.msra.mxu0 %v668
    %693 = vmatprep.subr.mxu0 0.0
    %694 = vmatpush1.msra.mxu0 %v669
    %695 = vmatprep.subr.mxu0 0.0
    %696 = vmatpush1.msra.mxu0 %v670
    %697 = vmatprep.subr.mxu0 0.0
    %698 = vmatpush1.msra.mxu0 %v671
    %699 = vmatprep.subr.mxu0 0.0
    %700 = vmatpush1.msra.mxu0 %v672
    %701 = vmatprep.subr.mxu0 0.0
    %702 = vmatpush1.msra.mxu0 %v673
    %703 = vmatprep.subr.mxu0 0.0
    %704 = vmatpush1.msra.mxu0 %v674
    %705 = vmatprep.subr.mxu0 0.0
    %706 = vmatpush1.msra.mxu0 %v675
    %707 = vmatprep.subr.mxu0 0.0
    %708 = vmatpush1.msra.mxu0 %v676
    %709 = vmatprep.subr.mxu0 0.0
    %710 = vmatpush1.msra.mxu0 %v677
    %711 = vmatprep.subr.mxu0 0.0
    %712 = vmatpush1.msra.mxu0 %v678
    %713 = vmatprep.subr.mxu0 0.0
    %714 = vmatpush1.msra.mxu0 %v679
    %715 = vmatprep.subr.mxu0 0.0
    %716 = vmatpush1.msra.mxu0 %v680
    %717 = vmatprep.subr.mxu0 0.0
    %718 = vmatpush1.msra.mxu0 %v681
    %719 = vmatprep.subr.mxu0 0.0
    %720 = vmatpush1.msra.mxu0 %v682
    %721 = vmatprep.subr.mxu0 0.0
    %722 = vmatpush1.msra.mxu0 %v683
    %723 = vmatprep.subr.mxu0 0.0
    %724 = vmatpush1.msra.mxu0 0.0
    %725 = vmatprep.subr.mxu0 0.0
    %726 = vmatpush1.msra.mxu0 0.0
    %727 = vmatprep.subr.mxu0 0.0
    %728 = vmatpush1.msra.mxu0 0.0
    %729 = vmatprep.subr.mxu0 0.0
    %730 = vmatpush1.msra.mxu0 0.0
    %731 = vmatprep.subr.mxu0 0.0
    %732 = vmatpush1.msra.mxu0 0.0
    %733 = vmatprep.subr.mxu0 0.0
    %734 = vmatpush1.msra.mxu0 0.0
    %735 = vmatprep.subr.mxu0 0.0
    %736 = vmatpush1.msra.mxu0 0.0
    %737 = vmatprep.subr.mxu0 0.0
    %738 = vmatpush1.msra.mxu0 0.0
    %739 = vmatprep.subr.mxu0 0.0
    %740 = vmatpush1.msra.mxu0 0.0
    %741 = vmatprep.subr.mxu0 0.0
    %742 = vmatpush1.msra.mxu0 0.0
    %743 = vmatprep.subr.mxu0 0.0
    %744 = vmatpush1.msra.mxu0 0.0
    %745 = vmatprep.subr.mxu0 0.0
    %746 = vmatpush1.msra.mxu0 0.0
    %747 = vmatprep.subr.mxu0 0.0
    %748 = vmatpush1.msra.mxu0 0.0
    %749 = vmatprep.subr.mxu0 0.0
    %750 = vmatpush1.msra.mxu0 0.0
    %751 = vmatprep.subr.mxu0 0.0
    %752 = vmatpush1.msra.mxu0 0.0
    %753 = vmatprep.subr.mxu0 0.0
    %754 = vmatpush1.msra.mxu0 0.0
    %755 = vmatprep.mubr.f32.mxu0 0.0
    %756 = vmatmul.mubr.f32.gmra.mrb[0].mxu0 %v667
    %v757 = vpop.f32.mrb[0].mxu0
    %v758 = vadd.f32 %v689, %v757
    %v759 = vpop.f32.mrb[0].mxu0
    %760 = vdwg.mxu0
    %v761 = vmax.f32 %v758, 0.0
    %v762 = vld [vmem:[%s8] sm:$0xff]
    %v763 = vld [vmem:[%s8 + $0x8] sm:$0xff]
    %v764 = vld [vmem:[%s8 + $0x10] sm:$0xff]
    %v765 = vld [vmem:[%s8 + $0x18] sm:$0xff]
    %v766 = vld [vmem:[%s8 + $0x20] sm:$0xff]
    %v767 = vld [vmem:[%s8 + $0x28] sm:$0xff]
    %v768 = vld [vmem:[%s8 + $0x30] sm:$0xff]
    %v769 = vld [vmem:[%s8 + $0x38] sm:$0xff]
    %v770 = vld [vmem:[%s9] sm:$0x1]
    %v772 = vlaneseq
    %v773 = vshrl.u32 %v772, 7
    %v774 = vsub.s32 0, %v773
    %v775 = vrot.slane %v770, %v774
    %vm777 = vcmask 523264
    %v779 = vsel %vm777, %v761, 0
    %781 = vmatprep.subr.mxu0 0.0
    %782 = vmatpush1.msra.mxu0 %v762
    %783 = vmatprep.subr.mxu0 0.0
    %784 = vmatpush1.msra.mxu0 %v763
    %785 = vmatprep.subr.mxu0 0.0
    %786 = vmatpush1.msra.mxu0 %v764
    %787 = vmatprep.subr.mxu0 0.0
    %788 = vmatpush1.msra.mxu0 %v765
    %789 = vmatprep.subr.mxu0 0.0
    %790 = vmatpush1.msra.mxu0 %v766
    %791 = vmatprep.subr.mxu0 0.0
    %792 = vmatpush1.msra.mxu0 %v767
    %793 = vmatprep.subr.mxu0 0.0
    %794 = vmatpush1.msra.mxu0 %v768
    %795 = vmatprep.subr.mxu0 0.0
    %796 = vmatpush1.msra.mxu0 %v769
    %797 = vmatprep.subr.mxu0 0.0
    %798 = vmatpush1.msra.mxu0 0.0
    %799 = vmatprep.subr.mxu0 0.0
    %800 = vmatpush1.msra.mxu0 0.0
    %801 = vmatprep.subr.mxu0 0.0
    %802 = vmatpush1.msra.mxu0 0.0
    %803 = vmatprep.subr.mxu0 0.0
    %804 = vmatpush1.msra.mxu0 0.0
    %805 = vmatprep.subr.mxu0 0.0
    %806 = vmatpush1.msra.mxu0 0.0
    %807 = vmatprep.subr.mxu0 0.0
    %808 = vmatpush1.msra.mxu0 0.0
    %809 = vmatprep.subr.mxu0 0.0
    %810 = vmatpush1.msra.mxu0 0.0
    %811 = vmatprep.subr.mxu0 0.0
    %812 = vmatpush1.msra.mxu0 0.0
    %813 = vmatprep.subr.mxu0 0.0
    %814 = vmatpush1.msra.mxu0 0.0
    %815 = vmatprep.subr.mxu0 0.0
    %816 = vmatpush1.msra.mxu0 0.0
    %817 = vmatprep.subr.mxu0 0.0
    %818 = vmatpush1.msra.mxu0 0.0
    %819 = vmatprep.subr.mxu0 0.0
    %820 = vmatpush1.msra.mxu0 0.0
    %821 = vmatprep.subr.mxu0 0.0
    %822 = vmatpush1.msra.mxu0 0.0
    %823 = vmatprep.subr.mxu0 0.0
    %824 = vmatpush1.msra.mxu0 0.0
    %825 = vmatprep.subr.mxu0 0.0
    %826 = vmatpush1.msra.mxu0 0.0
    %827 = vmatprep.subr.mxu0 0.0
    %828 = vmatpush1.msra.mxu0 0.0
    %829 = vmatprep.subr.mxu0 0.0
    %830 = vmatpush1.msra.mxu0 0.0
    %831 = vmatprep.subr.mxu0 0.0
    %832 = vmatpush1.msra.mxu0 0.0
    %833 = vmatprep.subr.mxu0 0.0
    %834 = vmatpush1.msra.mxu0 0.0
    %835 = vmatprep.subr.mxu0 0.0
    %836 = vmatpush1.msra.mxu0 0.0
    %837 = vmatprep.subr.mxu0 0.0
    %838 = vmatpush1.msra.mxu0 0.0
    %839 = vmatprep.subr.mxu0 0.0
    %840 = vmatpush1.msra.mxu0 0.0
    %841 = vmatprep.subr.mxu0 0.0
    %842 = vmatpush1.msra.mxu0 0.0
    %843 = vmatprep.subr.mxu0 0.0
    %844 = vmatpush1.msra.mxu0 0.0
    %845 = vmatprep.mubr.f32.mxu0 0.0
    %846 = vmatmul.mubr.f32.gmra.mrb[0].mxu0 %v779
    %v847 = vpop.f32.mrb[0].mxu0
    %v848 = vadd.f32 %v775, %v847
    %v849 = vpop.f32.mrb[0].mxu0
    %850 = vdwg.mxu0
    %vm851 = vcmask 320512
    %852 = vst.msk [vmem:[#allocation3] sm:$0x3] %vm851, %v848
    // Predicated region
    $region42: #{point_transformer_cls_forward.7} parent=1 // pred_check
      _
    $region43: #{point_transformer_cls_forward.7} parent=1 // pred_check_branch
      %854 = sbr.rel (0) target = $region45
    $region44: #{point_transformer_cls_forward.7} parent=1 // pred_region
      %s856 = ssub.s32 32, 32
      %857 = vsyncadd [#allocation4], %s856
      %s859 = sshll.u32 [#allocation3], 4
      %s860 = int_to_ptr.vmem [resolvable:$true] %s859
      %862 = dma.vmem_to_hbm [thread:$0]  %s860, 32, %s10, [#allocation4]
    $region45: #{point_transformer_cls_forward.7} parent=1 // pred_fallthru
      _
    // Predicated region
    $region46: #{point_transformer_cls_forward.7} parent=1 // pred_check
      _
    $region47: #{point_transformer_cls_forward.7} parent=1 // pred_check_branch
      %864 = sbr.rel (0) target = $region49
    $region48: #{point_transformer_cls_forward.7} parent=1 // pred_region
      %865 = dma.done [#allocation4], 32
    $region49: #{point_transformer_cls_forward.7} parent=1 // pred_fallthru
      _
    %866 = vsyncpa [#allocation4], 1

</llo_original>
